<compile_context>
chip_gen: v6e
topology: v6e:2x2x1
jax: 0.10.0
libtpu: 0.0.40
codegen_flags: <defaults>
</compile_context>

<pallas_src>
import jax
import jax.numpy as jnp
from jax import lax
from jax.experimental import pallas as pl
from jax.experimental.pallas import tpu as pltpu


# ---------------------------------------------------------------------------
# Pallas kernel: [optional 2x2 pre-pool] -> 3x3 same conv -> bias -> ReLU
#                -> [optional 2x2 post-pool]
# ---------------------------------------------------------------------------
def _make_conv_kernel(prepool: bool, postpool: bool, hs: int):
    """Builds a kernel for one (batch-block, Cout-tile) grid step.

    x_ref     : [bb, Hin, Win, Cin]   f32/bf16  (Hin=2*Ho, Win=2*Wo if prepool)
    w_ref     : [3, 3*Cin, ct]        bf16      tap-major: w[dx, dy*Cin + cin, co]
    b_ref     : [1, ct]               f32
    o_ref     : [bb, Hout, Wout, ct]  f32/bf16  (Hout=Ho//2 if postpool)
    patch_ref : [bb, Ho, Wo+2, 3*Cin] bf16 VMEM scratch (zero-halo, dy-stacked input)
    """

    def kernel(x_ref, w_ref, b_ref, o_ref, patch_ref):
        bb = o_ref.shape[0]
        ct = o_ref.shape[-1]
        _, Ho, Wp2, cin3 = patch_ref.shape
        Wo = Wp2 - 2
        cin = cin3 // 3

        # Build patch only once per batch block (Cout axis is 'arbitrary', c=0 first).
        @pl.when(pl.program_id(1) == 0)
        def _build_patch():
            x = x_ref[...]
            if prepool:
                # Fused nn.MaxPool2d(2, 2) of the previous layer's (ReLU'd) output.
                xa = jnp.maximum(x[:, 0::2], x[:, 1::2])
                x = jnp.maximum(xa[:, :, 0::2, :], xa[:, :, 1::2, :])
            xb = x.astype(jnp.bfloat16)                        # MXU operands in bf16

            # Zero only the halo; the interior is fully overwritten below.
            col0 = jnp.zeros((bb, Ho, 1, cin3), jnp.bfloat16)
            patch_ref[:, :, 0:1, :] = col0                     # left padded column
            patch_ref[:, :, Wo + 1:Wo + 2, :] = col0           # right padded column
            row0 = jnp.zeros((bb, 1, Wo + 2, cin), jnp.bfloat16)
            patch_ref[:, 0:1, :, 0:cin] = row0                 # dy=0 top halo row
            patch_ref[:, Ho - 1:Ho, :, 2 * cin:] = row0        # dy=2 bottom halo row

            # dy-stacked interior: patch[n,h,wp,dy*Cin+c] == xpad[n,h+dy,wp,c]
            patch_ref[:, 1:, 1:Wo + 1, 0:cin] = xb[:, :Ho - 1]        # dy = 0
            patch_ref[:, :, 1:Wo + 1, cin:2 * cin] = xb                # dy = 1
            patch_ref[:, :Ho - 1, 1:Wo + 1, 2 * cin:] = xb[:, 1:]      # dy = 2

        bias = b_ref[...].reshape(1, 1, 1, ct)

        # Row strips keep the f32 accumulator bounded.
        for h0 in range(0, Ho, hs):
            acc = None
            for dx in range(3):
                # dx-shifted, exactly Wo-wide bf16 slice -> no wasted MXU columns.
                p = patch_ref[:, h0:h0 + hs, dx:dx + Wo, :].reshape(bb * hs * Wo, cin3)
                z = jnp.dot(p, w_ref[dx], preferred_element_type=jnp.float32)
                acc = z if acc is None else acc + z
            acc = acc.reshape(bb, hs, Wo, ct)
            acc = jnp.maximum(acc + bias, 0.0)                 # bias + ReLU in f32
            if postpool:
                # Fused producer-side nn.MaxPool2d(2, 2): write the pooled map only.
                pa = jnp.maximum(acc[:, 0::2], acc[:, 1::2])
                pa = jnp.maximum(pa[:, :, 0::2, :], pa[:, :, 1::2, :])
                o_ref[:, h0 // 2:(h0 + hs) // 2] = pa.astype(o_ref.dtype)
            else:
                o_ref[:, h0:h0 + hs] = acc.astype(o_ref.dtype)

    return kernel


# ---------------------------------------------------------------------------
# Wrapper around pallas_call
# ---------------------------------------------------------------------------
def conv3x3_relu(x, w3, b2, *, prepool=False, postpool=False, out_dtype=jnp.float32):
    """x: [N,Hin,Win,Cin_x] NHWC;  w3: [3, 3*Cin, Cout] bf16;  b2: [1, Cout] f32.

    Computes (postpool?) ReLU(conv3x3_same((prepool? maxpool2x2(x) : x)) + b).
    """
    N, Hin, Win, Cin_x = x.shape
    Cin = w3.shape[1] // 3
    Cout = w3.shape[-1]
    if Cin_x < Cin:                                   # layer 0: pad 3 -> 8 channels
        x = jnp.pad(x, ((0, 0), (0, 0), (0, 0), (0, Cin - Cin_x)))

    if prepool:
        assert Hin % 2 == 0 and Win % 2 == 0, "maxpool2x2 needs even H/W"
        Ho, Wo = Hin // 2, Win // 2
    else:
        Ho, Wo = Hin, Win
    if postpool:
        assert Ho % 2 == 0 and Wo % 2 == 0, "maxpool2x2 needs even H/W"
        Hout, Wout = Ho // 2, Wo // 2
    else:
        Hout, Wout = Ho, Wo

    # Fold batch into the matmul M dimension when the spatial tile is tiny.
    bb = 1 if Ho * Wo >= 64 else min(N, 16)
    while N % bb != 0:
        bb -= 1
    nb = N // bb

    # Cout tiling: <=256 lanes per tile (keeps the per-step weight block modest).
    ct = min(Cout, 256)
    assert Cout % ct == 0
    nc = Cout // ct

    # Row-strip size: keep the f32 conv accumulator strip around <=512 KB.
    per_row_bytes = bb * Wo * ct * 4
    hs = max(1, min(Ho, (512 * 1024) // max(per_row_bytes, 1)))

    def _ok(h):
        return Ho % h == 0 and (not postpool or h % 2 == 0)

    while hs > 1 and not _ok(hs):
        hs -= 1
    if not _ok(hs):
        hs = Ho   # safe fallback (Ho is even whenever postpool)

    kernel = _make_conv_kernel(prepool, postpool, hs)

    grid_spec = pltpu.PrefetchScalarGridSpec(
        num_scalar_prefetch=0,
        grid=(nb, nc),
        in_specs=[
            pl.BlockSpec((bb, Hin, Win, Cin), lambda n, c: (n, 0, 0, 0)),
            pl.BlockSpec((3, 3 * Cin, ct), lambda n, c: (0, 0, c)),
            pl.BlockSpec((1, ct), lambda n, c: (0, c)),
        ],
        out_specs=pl.BlockSpec((bb, Hout, Wout, ct), lambda n, c: (n, 0, 0, c)),
        scratch_shapes=[pltpu.VMEM((bb, Ho, Wo + 2, 3 * Cin), jnp.bfloat16)],
    )

    return pl.pallas_call(
        kernel,
        out_shape=jax.ShapeDtypeStruct((N, Hout, Wout, Cout), out_dtype),
        grid_spec=grid_spec,
        compiler_params=pltpu.CompilerParams(
            # Cout axis MUST be sequential ('arbitrary') for the c==0 patch hoist.
            dimension_semantics=("parallel", "arbitrary"),
            vmem_limit_bytes=48 * 1024 * 1024,
        ),
    )(x, w3, b2)


# ---------------------------------------------------------------------------
# VGG16 configuration (convs of features[0:16], [16:23], [23:-1])
# ---------------------------------------------------------------------------
_VGG16_CONV_CFG = [
    (3, 64), (64, 64),
    (64, 128), (128, 128),
    (128, 256), (256, 256), (256, 256),
    (256, 512), (512, 512), (512, 512),
    (512, 512), (512, 512), (512, 512),
]

# Per conv: (prepool, postpool, tap).  VGG16 pools (features idx 4, 9, 16, 23) are
# fused producer-side (postpool) after convs 1 and 3 (non-tapped boundaries) and
# consumer-side (prepool) before convs 7 and 10 (the unpooled taps a/b are returned).
_LAYER_CFG = [
    (False, False, False),   # 0
    (False, True,  False),   # 1  (+pool @ features[4])
    (False, False, False),   # 2
    (False, True,  False),   # 3  (+pool @ features[9])
    (False, False, False),   # 4
    (False, False, False),   # 5
    (False, False, True),    # 6  -> preact_a (end of features[0:16])
    (True,  False, False),   # 7  (pool @ features[16] fused as prepool)
    (False, False, False),   # 8
    (False, False, True),    # 9  -> preact_b (end of features[16:23])
    (True,  False, False),   # 10 (pool @ features[23] fused as prepool)
    (False, False, False),   # 11
    (False, False, True),    # 12 -> preact_c (end of features[23:-1])
]


def init_vgg16_params(key):
    """He-style deterministic init with exact VGG16 conv shapes (HWIO weights)."""
    params = []
    for cin, cout in _VGG16_CONV_CFG:
        key, kw, kb = jax.random.split(key, 3)
        scale = (2.0 / (9.0 * cin)) ** 0.5
        w = scale * jax.random.normal(kw, (3, 3, cin, cout), jnp.float32)
        b = 0.01 * jax.random.normal(kb, (cout,), jnp.float32)
        params.append((w, b))
    return params


def prepare_params(params):
    """HWIO f32 -> kernel layout: bf16 [3(dx), 3*Cin(dy-major), Cout] + f32 [1,Cout] bias.

    Cin is zero-padded up to a multiple of 8 (only affects layer 0: 3 -> 8)."""
    prepped = []
    for w, b in params:
        cin, cout = w.shape[2], w.shape[3]
        cin_p = max(8, ((cin + 7) // 8) * 8)
        if cin_p != cin:
            w = jnp.pad(w, ((0, 0), (0, 0), (0, cin_p - cin), (0, 0)))
        w3 = jnp.transpose(w, (1, 0, 2, 3)).reshape(3, 3 * cin_p, cout).astype(jnp.bfloat16)
        prepped.append((w3, b.reshape(1, cout).astype(jnp.float32)))
    return prepped


def vgg_encoder_forward(x_nchw, prepared):
    """Returns (preact_a, preact_b, preact_c) in NCHW, matching the PyTorch module."""
    x = jnp.transpose(x_nchw, (0, 2, 3, 1)).astype(jnp.float32)   # NCHW -> NHWC
    outs = []
    for i, (w3, b2) in enumerate(prepared):
        prepool, postpool, tap = _LAYER_CFG[i]
        out_dtype = jnp.float32 if tap else jnp.bfloat16           # taps stay f32
        x = conv3x3_relu(x, w3, b2, prepool=prepool, postpool=postpool,
                         out_dtype=out_dtype)
        if tap:
            outs.append(x)
    to_nchw = lambda t: jnp.transpose(t, (0, 3, 1, 2))
    return tuple(to_nchw(t) for t in outs)


# ---------------------------------------------------------------------------
# Pure-JAX reference with the same dtype handling (for validation)
# ---------------------------------------------------------------------------
def _ref_pool(t):
    return lax.reduce_window(t, jnp.array(-jnp.inf, t.dtype), lax.max,
                             (1, 2, 2, 1), (1, 2, 2, 1), "VALID")


def _ref_forward(x_nchw, params):
    x = jnp.transpose(x_nchw, (0, 2, 3, 1)).astype(jnp.float32)
    outs = []
    for i, (w, b) in enumerate(params):
        prepool, postpool, tap = _LAYER_CFG[i]
        if prepool:
            x = _ref_pool(x)
        xq = x.astype(jnp.bfloat16).astype(jnp.float32)
        wq = w.astype(jnp.bfloat16).astype(jnp.float32)
        y = lax.conv_general_dilated(xq, wq, (1, 1), "SAME",
                                     dimension_numbers=("NHWC", "HWIO", "NHWC"),
                                     precision=lax.Precision.HIGHEST)
        y = jnp.maximum(y + b.reshape(1, 1, 1, -1), 0.0)
        if postpool:
            y = _ref_pool(y)
        x = y.astype(jnp.float32 if tap else jnp.bfloat16)
        if tap:
            outs.append(x)
    to_nchw = lambda t: jnp.transpose(t, (0, 3, 1, 2))
    return tuple(to_nchw(t) for t in outs)


# ---------------------------------------------------------------------------
if __name__ == "__main__":
    key = jax.random.PRNGKey(0)
    kx, kp = jax.random.split(key)

    # Small shapes consistent with the module: VGG expects 3 input channels.
    x = jax.random.normal(kx, (2, 3, 32, 32), jnp.float32)        # NCHW, like PyTorch
    params = init_vgg16_params(kp)
    prepared = prepare_params(params)

    # --- tight sanity check of the conv kernel (layer 0) vs a bf16-quantized ref ---
    x_nhwc = jnp.transpose(x, (0, 2, 3, 1))
    w0, b0 = params[0]
    xq = x_nhwc.astype(jnp.bfloat16).astype(jnp.float32)
    wq = w0.astype(jnp.bfloat16).astype(jnp.float32)
    ref0 = lax.conv_general_dilated(xq, wq, (1, 1), "SAME",
                                    dimension_numbers=("NHWC", "HWIO", "NHWC"),
                                    precision=lax.Precision.HIGHEST)
    ref0 = jnp.maximum(ref0 + b0.reshape(1, 1, 1, -1), 0.0)
    out0 = conv3x3_relu(x_nhwc, prepared[0][0], prepared[0][1],
                        prepool=False, postpool=False, out_dtype=jnp.float32)
    max_err0 = float(jnp.max(jnp.abs(out0 - ref0)))
    tol0 = 2e-3 * (1.0 + float(jnp.max(jnp.abs(ref0))))
    assert max_err0 < tol0, f"conv kernel mismatch: max_err={max_err0} tol={tol0}"

    # --- full VGGEncoder forward (Pallas) vs pure-JAX reference ---
    fwd = jax.jit(lambda inp: vgg_encoder_forward(inp, prepared))
    preact_a, preact_b, preact_c = fwd(x)
    jax.block_until_ready((preact_a, preact_b, preact_c))

    ref_a, ref_b, ref_c = _ref_forward(x, params)
    for name, got, ref in (("a", preact_a, ref_a), ("b", preact_b, ref_b),
                           ("c", preact_c, ref_c)):
        err = float(jnp.max(jnp.abs(got - ref)))
        tol = 3e-2 * (1.0 + float(jnp.max(jnp.abs(ref))))
        assert err < tol, f"preact_{name} mismatch: max_err={err} tol={tol}"

    assert preact_a.shape == (2, 256, 8, 8), preact_a.shape      # H/4,  256 ch
    assert preact_b.shape == (2, 512, 4, 4), preact_b.shape      # H/8,  512 ch
    assert preact_c.shape == (2, 512, 2, 2), preact_c.shape      # H/16, 512 ch
    assert preact_a.dtype == preact_b.dtype == preact_c.dtype == jnp.float32

    print("KERNEL_OK")
</pallas_src>

<mosaic_0001>
module attributes {stable_mosaic.version = 11 : i64} {
  func.func @kernel(%arg0: i32, %arg1: i32, %arg2: memref<1x32x32x8xf32, #tpu.memory_space<vmem>>, %arg3: memref<3x24x64xbf16, #tpu.memory_space<vmem>>, %arg4: memref<1x64xf32, #tpu.memory_space<vmem>>, %arg5: memref<1x32x32x64xf32, #tpu.memory_space<vmem>>, %arg6: memref<1x32x34x24xbf16, #tpu.memory_space<vmem>>) attributes {dimension_semantics = [#tpu.dimension_semantics<parallel>, #tpu.dimension_semantics<arbitrary>], iteration_bounds = array<i64: 2, 1>, scalar_prefetch = 0 : i64, scratch_operands = 1 : i64, tpu.core_type = #tpu.core_type<tc>, window_params = [{transform_indices = @transform_0, window_bounds = array<i64: 1, 32, 32, 8>}, {transform_indices = @transform_1, window_bounds = array<i64: 3, 24, 64>}, {transform_indices = @transform_2, window_bounds = array<i64: 1, 64>}, {transform_indices = @transform_3, window_bounds = array<i64: 1, 32, 32, 64>}]} {
    %c0_i32 = arith.constant 0 : i32
    %0 = arith.cmpi eq, %arg1, %c0_i32 : i32
    %1 = arith.extui %0 : i1 to i32
    %c0_i32_0 = arith.constant 0 : i32
    %2 = arith.cmpi ne, %1, %c0_i32_0 : i32
    scf.if %2 {
      %c0_28 = arith.constant 0 : index
      %c0_29 = arith.constant 0 : index
      %c0_30 = arith.constant 0 : index
      %c0_31 = arith.constant 0 : index
      %28 = vector.load %arg2[%c0_28, %c0_29, %c0_30, %c0_31] : memref<1x32x32x8xf32, #tpu.memory_space<vmem>>, vector<1x32x32x8xf32>
      %29 = arith.truncf %28 : vector<1x32x32x8xf32> to vector<1x32x32x8xbf16>
      %cst_32 = arith.constant 0.000000e+00 : bf16
      %30 = vector.broadcast %cst_32 : bf16 to vector<1x32x1x24xbf16>
      %c0_33 = arith.constant 0 : index
      %c0_34 = arith.constant 0 : index
      %c0_35 = arith.constant 0 : index
      %c0_36 = arith.constant 0 : index
      %31 = vector.load %arg6[%c0_33, %c0_34, %c0_35, %c0_36] : memref<1x32x34x24xbf16, #tpu.memory_space<vmem>>, vector<1x32x1x24xbf16>
      tpu.vector_store %arg6[%c0_33, %c0_34, %c0_35, %c0_36], %30 {strides = array<i32>} : memref<1x32x34x24xbf16, #tpu.memory_space<vmem>>, vector<1x32x1x24xbf16>,
      %c0_37 = arith.constant 0 : index
      %c0_38 = arith.constant 0 : index
      %c33 = arith.constant 33 : index
      %c0_39 = arith.constant 0 : index
      %32 = vector.load %arg6[%c0_37, %c0_38, %c33, %c0_39] : memref<1x32x34x24xbf16, #tpu.memory_space<vmem>>, vector<1x32x1x24xbf16>
      tpu.vector_store %arg6[%c0_37, %c0_38, %c33, %c0_39], %30 {strides = array<i32>} : memref<1x32x34x24xbf16, #tpu.memory_space<vmem>>, vector<1x32x1x24xbf16>,
      %cst_40 = arith.constant 0.000000e+00 : bf16
      %33 = vector.broadcast %cst_40 : bf16 to vector<1x1x34x8xbf16>
      %c0_41 = arith.constant 0 : index
      %c0_42 = arith.constant 0 : index
      %c0_43 = arith.constant 0 : index
      %c0_44 = arith.constant 0 : index
      %34 = vector.load %arg6[%c0_41, %c0_42, %c0_43, %c0_44] : memref<1x32x34x24xbf16, #tpu.memory_space<vmem>>, vector<1x1x34x8xbf16>
      tpu.vector_store %arg6[%c0_41, %c0_42, %c0_43, %c0_44], %33 {strides = array<i32>} : memref<1x32x34x24xbf16, #tpu.memory_space<vmem>>, vector<1x1x34x8xbf16>,
      %c0_45 = arith.constant 0 : index
      %c31 = arith.constant 31 : index
      %c0_46 = arith.constant 0 : index
      %c16 = arith.constant 16 : index
      %35 = vector.load %arg6[%c0_45, %c31, %c0_46, %c16] : memref<1x32x34x24xbf16, #tpu.memory_space<vmem>>, vector<1x1x34x8xbf16>
      tpu.vector_store %arg6[%c0_45, %c31, %c0_46, %c16], %33 {strides = array<i32>} : memref<1x32x34x24xbf16, #tpu.memory_space<vmem>>, vector<1x1x34x8xbf16>,
      %36 = vector.extract_strided_slice %29 {offsets = [0, 0, 0, 0], sizes = [1, 31, 32, 8], strides = [1, 1, 1, 1]} : vector<1x32x32x8xbf16> to vector<1x31x32x8xbf16>
      %c0_47 = arith.constant 0 : index
      %c1_48 = arith.constant 1 : index
      %c1_49 = arith.constant 1 : index
      %c0_50 = arith.constant 0 : index
      %37 = vector.load %arg6[%c0_47, %c1_48, %c1_49, %c0_50] : memref<1x32x34x24xbf16, #tpu.memory_space<vmem>>, vector<1x31x32x8xbf16>
      tpu.vector_store %arg6[%c0_47, %c1_48, %c1_49, %c0_50], %36 {strides = array<i32>} : memref<1x32x34x24xbf16, #tpu.memory_space<vmem>>, vector<1x31x32x8xbf16>,
      %c0_51 = arith.constant 0 : index
      %c0_52 = arith.constant 0 : index
      %c1_53 = arith.constant 1 : index
      %c8 = arith.constant 8 : index
      %38 = vector.load %arg6[%c0_51, %c0_52, %c1_53, %c8] : memref<1x32x34x24xbf16, #tpu.memory_space<vmem>>, vector<1x32x32x8xbf16>
      tpu.vector_store %arg6[%c0_51, %c0_52, %c1_53, %c8], %29 {strides = array<i32>} : memref<1x32x34x24xbf16, #tpu.memory_space<vmem>>, vector<1x32x32x8xbf16>,
      %39 = vector.extract_strided_slice %29 {offsets = [0, 1, 0, 0], sizes = [1, 31, 32, 8], strides = [1, 1, 1, 1]} : vector<1x32x32x8xbf16> to vector<1x31x32x8xbf16>
      %c0_54 = arith.constant 0 : index
      %c0_55 = arith.constant 0 : index
      %c1_56 = arith.constant 1 : index
      %c16_57 = arith.constant 16 : index
      %40 = vector.load %arg6[%c0_54, %c0_55, %c1_56, %c16_57] : memref<1x32x34x24xbf16, #tpu.memory_space<vmem>>, vector<1x31x32x8xbf16>
      tpu.vector_store %arg6[%c0_54, %c0_55, %c1_56, %c16_57], %39 {strides = array<i32>} : memref<1x32x34x24xbf16, #tpu.memory_space<vmem>>, vector<1x31x32x8xbf16>,
    } else {
    }
    %c0 = arith.constant 0 : index
    %c0_1 = arith.constant 0 : index
    %3 = vector.load %arg4[%c0, %c0_1] : memref<1x64xf32, #tpu.memory_space<vmem>>, vector<1x64xf32>
    %4 = vector.shape_cast %3 : vector<1x64xf32> to vector<1x1x1x64xf32>
    %c0_2 = arith.constant 0 : index
    %c0_3 = arith.constant 0 : index
    %c0_4 = arith.constant 0 : index
    %c0_5 = arith.constant 0 : index
    %5 = vector.load %arg6[%c0_2, %c0_3, %c0_4, %c0_5] : memref<1x32x34x24xbf16, #tpu.memory_space<vmem>>, vector<1x32x32x24xbf16>
    %6 = vector.shape_cast %5 : vector<1x32x32x24xbf16> to vector<1024x24xbf16>
    %c0_6 = arith.constant 0 : index
    %c0_7 = arith.constant 0 : index
    %c0_8 = arith.constant 0 : index
    %7 = vector.load %arg3[%c0_6, %c0_7, %c0_8] : memref<3x24x64xbf16, #tpu.memory_space<vmem>>, vector<1x24x64xbf16>
    %8 = vector.shape_cast %7 : vector<1x24x64xbf16> to vector<24x64xbf16>
    %cst = arith.constant dense<0.000000e+00> : vector<1024x64xf32>
    %9 = tpu.matmul %6, %8, %cst {dimension_numbers = #tpu.dot_dimension_numbers<[1], [0], [0], [1], [0, 0, 1, 1], [], []>} : vector<1024x24xbf16>, vector<24x64xbf16>, vector<1024x64xf32> -> vector<1024x64xf32>
    %c0_9 = arith.constant 0 : index
    %c0_10 = arith.constant 0 : index
    %c1 = arith.constant 1 : index
    %c0_11 = arith.constant 0 : index
    %10 = vector.load %arg6[%c0_9, %c0_10, %c1, %c0_11] : memref<1x32x34x24xbf16, #tpu.memory_space<vmem>>, vector<1x32x32x24xbf16>
    %11 = vector.shape_cast %10 : vector<1x32x32x24xbf16> to vector<1024x24xbf16>
    %c1_12 = arith.constant 1 : index
    %c0_13 = arith.constant 0 : index
    %c0_14 = arith.constant 0 : index
    %12 = vector.load %arg3[%c1_12, %c0_13, %c0_14] : memref<3x24x64xbf16, #tpu.memory_space<vmem>>, vector<1x24x64xbf16>
    %13 = vector.shape_cast %12 : vector<1x24x64xbf16> to vector<24x64xbf16>
    %cst_15 = arith.constant dense<0.000000e+00> : vector<1024x64xf32>
    %14 = tpu.matmul %11, %13, %cst_15 {dimension_numbers = #tpu.dot_dimension_numbers<[1], [0], [0], [1], [0, 0, 1, 1], [], []>} : vector<1024x24xbf16>, vector<24x64xbf16>, vector<1024x64xf32> -> vector<1024x64xf32>
    %15 = arith.addf %9, %14 : vector<1024x64xf32>
    %c0_16 = arith.constant 0 : index
    %c0_17 = arith.constant 0 : index
    %c2 = arith.constant 2 : index
    %c0_18 = arith.constant 0 : index
    %16 = vector.load %arg6[%c0_16, %c0_17, %c2, %c0_18] : memref<1x32x34x24xbf16, #tpu.memory_space<vmem>>, vector<1x32x32x24xbf16>
    %17 = vector.shape_cast %16 : vector<1x32x32x24xbf16> to vector<1024x24xbf16>
    %c2_19 = arith.constant 2 : index
    %c0_20 = arith.constant 0 : index
    %c0_21 = arith.constant 0 : index
    %18 = vector.load %arg3[%c2_19, %c0_20, %c0_21] : memref<3x24x64xbf16, #tpu.memory_space<vmem>>, vector<1x24x64xbf16>
    %19 = vector.shape_cast %18 : vector<1x24x64xbf16> to vector<24x64xbf16>
    %cst_22 = arith.constant dense<0.000000e+00> : vector<1024x64xf32>
    %20 = tpu.matmul %17, %19, %cst_22 {dimension_numbers = #tpu.dot_dimension_numbers<[1], [0], [0], [1], [0, 0, 1, 1], [], []>} : vector<1024x24xbf16>, vector<24x64xbf16>, vector<1024x64xf32> -> vector<1024x64xf32>
    %21 = arith.addf %15, %20 : vector<1024x64xf32>
    %22 = vector.shape_cast %21 : vector<1024x64xf32> to vector<1x32x32x64xf32>
    %23 = vector.broadcast %4 : vector<1x1x1x64xf32> to vector<1x32x32x64xf32>
    %24 = arith.addf %22, %23 : vector<1x32x32x64xf32>
    %cst_23 = arith.constant 0.000000e+00 : f32
    %25 = vector.broadcast %cst_23 : f32 to vector<1x32x32x64xf32>
    %26 = arith.maximumf %24, %25 : vector<1x32x32x64xf32>
    %c0_24 = arith.constant 0 : index
    %c0_25 = arith.constant 0 : index
    %c0_26 = arith.constant 0 : index
    %c0_27 = arith.constant 0 : index
    %27 = vector.load %arg5[%c0_24, %c0_25, %c0_26, %c0_27] : memref<1x32x32x64xf32, #tpu.memory_space<vmem>>, vector<1x32x32x64xf32>
    tpu.vector_store %arg5[%c0_24, %c0_25, %c0_26, %c0_27], %26 {strides = array<i32>} : memref<1x32x32x64xf32, #tpu.memory_space<vmem>>, vector<1x32x32x64xf32>,
    return
  }
  func.func @transform_0(%arg0: i32, %arg1: i32) -> (i32, i32, i32, i32) {
    %c0_i32 = arith.constant 0 : i32
    %c0_i32_0 = arith.constant 0 : i32
    %c0_i32_1 = arith.constant 0 : i32
    %c0_i32_2 = arith.constant 0 : i32
    return %arg0, %c0_i32, %c0_i32_0, %c0_i32_1 : i32, i32, i32, i32
  }
  func.func @transform_1(%arg0: i32, %arg1: i32) -> (i32, i32, i32) {
    %c0_i32 = arith.constant 0 : i32
    %c0_i32_0 = arith.constant 0 : i32
    %c0_i32_1 = arith.constant 0 : i32
    return %c0_i32, %c0_i32_0, %arg1 : i32, i32, i32
  }
  func.func @transform_2(%arg0: i32, %arg1: i32) -> (i32, i32) {
    %c0_i32 = arith.constant 0 : i32
    %c0_i32_0 = arith.constant 0 : i32
    return %c0_i32, %arg1 : i32, i32
  }
  func.func @transform_3(%arg0: i32, %arg1: i32) -> (i32, i32, i32, i32) {
    %c0_i32 = arith.constant 0 : i32
    %c0_i32_0 = arith.constant 0 : i32
    %c0_i32_1 = arith.constant 0 : i32
    return %arg0, %c0_i32, %c0_i32_0, %arg1 : i32, i32, i32, i32
  }
}

</mosaic_0001>

<llo_original>
// kernel: tpu_custom_call.1
$region0: #{tpu_custom_call.1}
  #allocation0 [shape = 'u32[]', space=smem, size = 0x4, offset = 0x4, fixed_abs, tag = 'smem constant byte address 0x4 - core index']
  #allocation1 [shape = 'u32[144,128]{1,0:T(1,128)}', space=vmem, size = 0x12000, scoped, tag = 'internal scratch']
  #allocation2 [shape = 'bf16[1,32,34,24]{3,2,1,0:T(8,128)(2,1)}', space=vmem, size = 0x50000, scoped, tag = 'scratch operand']
  %s0 = inlined_call_operand.vmem [shape: f32[2,32,32,8], index: 0, kind: input, shape index: {}]
  %s1 = inlined_call_operand.vmem [shape: bf16[3,24,64], index: 1, kind: input, shape index: {}]
  %s2 = inlined_call_operand.vmem [shape: f32[1,64], index: 2, kind: input, shape index: {}]
  %s3 = inlined_call_operand.hbm [shape: f32[2,32,32,64], index: 3, kind: output, shape index: {}]
  %s4 = sld [smem:[#allocation0]]
  $region49: #{tpu_custom_call.1} parent=0
    _
  %s6 = ssub.s32 1, %s4
  %s7 = scalar_select 0, %s6, %s4
  $region1: #{tpu_custom_call.1} parent=0
    #allocation3 [shape = 'u8[1048576]{0}', space=vmem, size = 0x100000, scoped, tag = 'output window, operand 0']
    #allocation4 [shape = 's32[2]{0}', space=sflag, size = 0x8, scoped, tag = 'scoped memory for tpu_custom_call.1']
    %8 = vsyncpa [#allocation4], 0
    %s9 = scalar_lea.sflag [#allocation4], 1
    %10 = vsyncpa %s9, 0
    loop: start=0, step=1, limit=4
    $region2: #{tpu_custom_call.1} parent=1 // loop_pre_header
      _
    $region3: #{tpu_custom_call.1} parent=1 // loop_header
      %s12 = sphi 0, %s16
      %p13 = scmp.ge.s32.totalorder %s12, 4
      %s19 = sphi 0, %s31
      %s20 = sphi 0, %s27
      %s21 = sphi 0, %s19
      %s22 = sphi 0, %s20
      %s23 = sphi 0, %s21
      %s24 = sphi 0, %s22
      %s34 = sphi 0, %s36
      %s37 = sphi 0, %s34
      %s38 = sphi 0, %s37
      %s54 = sphi 0, %s38
      %s60 = sphi 0, %s62
      %s63 = sphi 0, %s60
      %s64 = sphi 0, %s63
      %s80 = sphi 0, %s64
      %s86 = sphi 0, %s88
      %s89 = sphi 0, %s86
      %s90 = sphi 0, %s89
      %s106 = sphi 0, %s90
      %s114 = sphi 0, %s116
      %s117 = sphi 0, %s114
      %s118 = sphi 0, %s117
      %s134 = sphi 0, %s118
    $region4: #{tpu_custom_call.1} parent=1 // loop_header_branch
      %15 = sbr.rel (%p13) target = $region8
    $region5: #{tpu_custom_call.1} parent=1 // loop_body
      %s17 = ssub.s32 %s12, 1
      %s18 = ssub.s32 %s12, 2
      %s25 = sadd.s32 1, %s20
      %p26 = scmp.ge.s32.totalorder %s25, 1
      %s27 = scalar_select %p26, 0, %s25
      %s28 = sadd.s32 1, %s19
      %s29 = scalar_select %p26, %s28, %s19
      %p30 = scmp.ge.s32.totalorder %s29, 2
      %s31 = scalar_select %p30, 0, %s29
      %s32 = ssub.s32 %s19, %s31
      %p33 = scmp.eq.s32.totalorder %s32, 0
      %s35 = sadd.s32 %s34, 1
      %s36 = scalar_select %p33, %s34, %s35
      %p39 = pneg %p33
      %p40 = scmp.eq.s32.totalorder %s12, 1
      %p41 = por %p39, %p40
      %p42 = scmp.ne.s32.totalorder %s34, %s37
      %p43 = scmp.eq.s32.totalorder %s12, 0
      %p44 = por %p42, %p43
      %p45 = scmp.ne.s32.totalorder %s34, %s37
      %p46 = scmp.eq.s32.totalorder %s17, 1
      %p47 = por %p45, %p46
      %p48 = scmp.ne.s32.totalorder %s37, %s38
      %p49 = scmp.eq.s32.totalorder %s17, 0
      %p50 = por %p48, %p49
      %p51 = scmp.ne.s32.totalorder %s37, %s38
      %p52 = scmp.eq.s32.totalorder %s18, 1
      %p53 = por %p51, %p52
      %p55 = scmp.ne.s32.totalorder %s38, %s54
      %p56 = scmp.eq.s32.totalorder %s18, 0
      %p57 = por %p55, %p56
      %s58 = ssub.s32 %s20, %s27
      %p59 = scmp.eq.s32.totalorder %s58, 0
      %s61 = sadd.s32 %s60, 1
      %s62 = scalar_select %p59, %s60, %s61
      %p65 = pneg %p59
      %p66 = scmp.eq.s32.totalorder %s12, 1
      %p67 = por %p65, %p66
      %p68 = scmp.ne.s32.totalorder %s60, %s63
      %p69 = scmp.eq.s32.totalorder %s12, 0
      %p70 = por %p68, %p69
      %p71 = scmp.ne.s32.totalorder %s60, %s63
      %p72 = scmp.eq.s32.totalorder %s17, 1
      %p73 = por %p71, %p72
      %p74 = scmp.ne.s32.totalorder %s63, %s64
      %p75 = scmp.eq.s32.totalorder %s17, 0
      %p76 = por %p74, %p75
      %p77 = scmp.ne.s32.totalorder %s63, %s64
      %p78 = scmp.eq.s32.totalorder %s18, 1
      %p79 = por %p77, %p78
      %p81 = scmp.ne.s32.totalorder %s64, %s80
      %p82 = scmp.eq.s32.totalorder %s18, 0
      %p83 = por %p81, %p82
      %s84 = ssub.s32 %s20, %s27
      %p85 = scmp.eq.s32.totalorder %s84, 0
      %s87 = sadd.s32 %s86, 1
      %s88 = scalar_select %p85, %s86, %s87
      %p91 = pneg %p85
      %p92 = scmp.eq.s32.totalorder %s12, 1
      %p93 = por %p91, %p92
      %p94 = scmp.ne.s32.totalorder %s86, %s89
      %p95 = scmp.eq.s32.totalorder %s12, 0
      %p96 = por %p94, %p95
      %p97 = scmp.ne.s32.totalorder %s86, %s89
      %p98 = scmp.eq.s32.totalorder %s17, 1
      %p99 = por %p97, %p98
      %p100 = scmp.ne.s32.totalorder %s89, %s90
      %p101 = scmp.eq.s32.totalorder %s17, 0
      %p102 = por %p100, %p101
      %p103 = scmp.ne.s32.totalorder %s89, %s90
      %p104 = scmp.eq.s32.totalorder %s18, 1
      %p105 = por %p103, %p104
      %p107 = scmp.ne.s32.totalorder %s90, %s106
      %p108 = scmp.eq.s32.totalorder %s18, 0
      %p109 = por %p107, %p108
      %s110 = ssub.s32 %s19, %s31
      %s111 = ssub.s32 %s20, %s27
      %s112 = sor.u32 %s110, %s111
      %p113 = scmp.eq.s32.totalorder %s112, 0
      %s115 = sadd.s32 %s114, 1
      %s116 = scalar_select %p113, %s114, %s115
      %p119 = pneg %p113
      %p120 = scmp.eq.s32.totalorder %s12, 1
      %p121 = por %p119, %p120
      %p122 = scmp.ne.s32.totalorder %s114, %s117
      %p123 = scmp.eq.s32.totalorder %s12, 0
      %p124 = por %p122, %p123
      %p125 = scmp.ne.s32.totalorder %s114, %s117
      %p126 = scmp.eq.s32.totalorder %s17, 1
      %p127 = por %p125, %p126
      %p128 = scmp.ne.s32.totalorder %s117, %s118
      %p129 = scmp.eq.s32.totalorder %s17, 0
      %p130 = por %p128, %p129
      %p131 = scmp.ne.s32.totalorder %s117, %s118
      %p132 = scmp.eq.s32.totalorder %s18, 1
      %p133 = por %p131, %p132
      %p135 = scmp.ne.s32.totalorder %s118, %s134
      %p136 = scmp.eq.s32.totalorder %s18, 0
      %p137 = por %p135, %p136
      %p138 = scmp.le.s32.totalorder 1, %s12
      %p139 = scmp.lt.s32.totalorder %s12, 3
      %p140 = pnand %p138, %p139
      %p141 = pneg %p140
      // Predicated region
      $region9: #{tpu_custom_call.1} parent=5 // pred_check
        _
      $region10: #{tpu_custom_call.1} parent=5 // pred_check_branch
        %143 = sbr.rel (%p140) target = $region12
      $region11: #{tpu_custom_call.1} parent=5 // pred_region
        %s144 = ssub.s32 %s12, 1
        // Predicated region
        $region13: #{tpu_custom_call.1} parent=11 // pred_check
          %p145 = pneg %p76
        $region14: #{tpu_custom_call.1} parent=11 // pred_check_branch
          %147 = sbr.rel (%p145) target = $region16
        $region15: #{tpu_custom_call.1} parent=11 // pred_region
          %p148 = scmp.lt.s32.totalorder %s22, 0
          %s149 = scalar_select %p148, %s22, 0
          %s150 = smul.addr %s149, 4
          %s151 = scalar_lea.vmem %s1, %s150
        $region16: #{tpu_custom_call.1} parent=11 // pred_fallthru
          _
        // Predicated region
        $region17: #{tpu_custom_call.1} parent=11 // pred_check
          %p152 = pneg %p102
        $region18: #{tpu_custom_call.1} parent=11 // pred_check_branch
          %154 = sbr.rel (%p152) target = $region20
        $region19: #{tpu_custom_call.1} parent=11 // pred_region
          %p155 = scmp.lt.s32.totalorder %s22, 0
          %s156 = scalar_select %p155, %s22, 0
          %s157 = scalar_lea.vmem %s2, %s156
        $region20: #{tpu_custom_call.1} parent=11 // pred_fallthru
          _
      $region12: #{tpu_custom_call.1} parent=5 // pred_fallthru
        _
      %p158 = scmp.lt.s32.totalorder %s12, 2
      // Predicated region
      $region21: #{tpu_custom_call.1} parent=5 // pred_check
        %p159 = pneg %p158
      $region22: #{tpu_custom_call.1} parent=5 // pred_check_branch
        %161 = sbr.rel (%p159) target = $region24
      $region23: #{tpu_custom_call.1} parent=5 // pred_region
        // Predicated region
        $region25: #{tpu_custom_call.1} parent=23 // pred_check
          %p162 = pneg %p44
        $region26: #{tpu_custom_call.1} parent=23 // pred_check_branch
          %164 = sbr.rel (%p162) target = $region28
        $region27: #{tpu_custom_call.1} parent=23 // pred_region
          %p165 = scmp.lt.s32.totalorder %s19, 1
          %s166 = scalar_select %p165, %s19, 1
          %s167 = smul.addr %s166, 128
          %s168 = smul.addr %s167, 8
          %s169 = scalar_lea.vmem %s0, %s168
        $region28: #{tpu_custom_call.1} parent=23 // pred_fallthru
          _
      $region24: #{tpu_custom_call.1} parent=5 // pred_fallthru
        _
      %p170 = scmp.le.s32.totalorder 1, %s12
      %p171 = scmp.lt.s32.totalorder %s12, 3
      %p172 = pnand %p170, %p171
      %p173 = pneg %p172
      // Predicated region
      $region29: #{tpu_custom_call.1} parent=5 // pred_check
        _
      $region30: #{tpu_custom_call.1} parent=5 // pred_check_branch
        %175 = sbr.rel (%p172) target = $region32
      $region31: #{tpu_custom_call.1} parent=5 // pred_region
        %s176 = ssub.s32 %s12, 1
        %p177 = scmp.lt.s32.totalorder %s21, 1
        %s178 = scalar_select %p177, %s21, 1
        %s179 = smul.addr %s178, 128
        %s180 = smul.addr %s179, 8
        %s181 = scalar_lea.vmem %s0, %s180
        %p182 = pneg %p50
        %p183 = pneg %p47
        %p184 = scmp.lt.s32.totalorder %s22, 0
        %s185 = scalar_select %p184, %s22, 0
        %s186 = smul.addr %s185, 4
        %s187 = scalar_lea.vmem %s1, %s186
        %p188 = pneg %p76
        %p189 = pneg %p73
        %p190 = scmp.lt.s32.totalorder %s22, 0
        %s191 = scalar_select %p190, %s22, 0
        %s192 = scalar_lea.vmem %s2, %s191
        %p193 = pneg %p102
        %p194 = pneg %p99
        %p195 = pneg %p130
        %p196 = pneg %p127
        %s197 = sand.u32 %s117, 1
        %s198 = scalar_lea.sflag [#allocation4], %s197
        %s199 = sand.u32 %s117, 1
        %s200 = smul.addr %s199, 1024
        %s201 = scalar_lea.vmem [#allocation3], %s200
        %p202 = scmp.lt.s32.totalorder %s21, 1
        %s203 = scalar_select %p202, %s21, 1
        %s204 = smul.addr %s203, 128
        %s205 = smul.addr %s204, 8
        %s206 = scalar_lea.vmem %s0, %s205
        %p207 = scmp.lt.s32.totalorder %s22, 0
        %s208 = scalar_select %p207, %s22, 0
        %s209 = smul.addr %s208, 4
        %s210 = scalar_lea.vmem %s1, %s209
        %p211 = scmp.lt.s32.totalorder %s22, 0
        %s212 = scalar_select %p211, %s22, 0
        %s213 = scalar_lea.vmem %s2, %s212
        %p215 = scmp.eq.s32.totalorder %s22, 0
        // Predicated region
        $region33: #{tpu_custom_call.1} parent=31 // pred_check
          %p216 = pneg %p215
        $region34: #{tpu_custom_call.1} parent=31 // pred_check_branch
          %218 = sbr.rel (%p216) target = $region36
        $region35: #{tpu_custom_call.1} parent=31 // pred_region
          %v219 = vld [vmem:[%s206] sm:$0xff]
          %v220 = vld [vmem:[%s206 + $0x8] sm:$0xff]
          %v221 = vld [vmem:[%s206 + $0x10] sm:$0xff]
          %v222 = vld [vmem:[%s206 + $0x18] sm:$0xff]
          %v223 = vld [vmem:[%s206 + $0x20] sm:$0xff]
          %v224 = vld [vmem:[%s206 + $0x28] sm:$0xff]
          %v225 = vld [vmem:[%s206 + $0x30] sm:$0xff]
          %v226 = vld [vmem:[%s206 + $0x38] sm:$0xff]
          %v227 = vld [vmem:[%s206 + $0x40] sm:$0xff]
          %v228 = vld [vmem:[%s206 + $0x48] sm:$0xff]
          %v229 = vld [vmem:[%s206 + $0x50] sm:$0xff]
          %v230 = vld [vmem:[%s206 + $0x58] sm:$0xff]
          %v231 = vld [vmem:[%s206 + $0x60] sm:$0xff]
          %v232 = vld [vmem:[%s206 + $0x68] sm:$0xff]
          %v233 = vld [vmem:[%s206 + $0x70] sm:$0xff]
          %v234 = vld [vmem:[%s206 + $0x78] sm:$0xff]
          %v235 = vld [vmem:[%s206 + $0x80] sm:$0xff]
          %v236 = vld [vmem:[%s206 + $0x88] sm:$0xff]
          %v237 = vld [vmem:[%s206 + $0x90] sm:$0xff]
          %v238 = vld [vmem:[%s206 + $0x98] sm:$0xff]
          %v239 = vld [vmem:[%s206 + $0xa0] sm:$0xff]
          %v240 = vld [vmem:[%s206 + $0xa8] sm:$0xff]
          %v241 = vld [vmem:[%s206 + $0xb0] sm:$0xff]
          %v242 = vld [vmem:[%s206 + $0xb8] sm:$0xff]
          %v243 = vld [vmem:[%s206 + $0xc0] sm:$0xff]
          %v244 = vld [vmem:[%s206 + $0xc8] sm:$0xff]
          %v245 = vld [vmem:[%s206 + $0xd0] sm:$0xff]
          %v246 = vld [vmem:[%s206 + $0xd8] sm:$0xff]
          %v247 = vld [vmem:[%s206 + $0xe0] sm:$0xff]
          %v248 = vld [vmem:[%s206 + $0xe8] sm:$0xff]
          %v249 = vld [vmem:[%s206 + $0xf0] sm:$0xff]
          %v250 = vld [vmem:[%s206 + $0xf8] sm:$0xff]
          %v251 = vld [vmem:[%s206 + $0x100] sm:$0xff]
          %v252 = vld [vmem:[%s206 + $0x108] sm:$0xff]
          %v253 = vld [vmem:[%s206 + $0x110] sm:$0xff]
          %v254 = vld [vmem:[%s206 + $0x118] sm:$0xff]
          %v255 = vld [vmem:[%s206 + $0x120] sm:$0xff]
          %v256 = vld [vmem:[%s206 + $0x128] sm:$0xff]
          %v257 = vld [vmem:[%s206 + $0x130] sm:$0xff]
          %v258 = vld [vmem:[%s206 + $0x138] sm:$0xff]
          %v259 = vld [vmem:[%s206 + $0x140] sm:$0xff]
          %v260 = vld [vmem:[%s206 + $0x148] sm:$0xff]
          %v261 = vld [vmem:[%s206 + $0x150] sm:$0xff]
          %v262 = vld [vmem:[%s206 + $0x158] sm:$0xff]
          %v263 = vld [vmem:[%s206 + $0x160] sm:$0xff]
          %v264 = vld [vmem:[%s206 + $0x168] sm:$0xff]
          %v265 = vld [vmem:[%s206 + $0x170] sm:$0xff]
          %v266 = vld [vmem:[%s206 + $0x178] sm:$0xff]
          %v267 = vld [vmem:[%s206 + $0x180] sm:$0xff]
          %v268 = vld [vmem:[%s206 + $0x188] sm:$0xff]
          %v269 = vld [vmem:[%s206 + $0x190] sm:$0xff]
          %v270 = vld [vmem:[%s206 + $0x198] sm:$0xff]
          %v271 = vld [vmem:[%s206 + $0x1a0] sm:$0xff]
          %v272 = vld [vmem:[%s206 + $0x1a8] sm:$0xff]
          %v273 = vld [vmem:[%s206 + $0x1b0] sm:$0xff]
          %v274 = vld [vmem:[%s206 + $0x1b8] sm:$0xff]
          %v275 = vld [vmem:[%s206 + $0x1c0] sm:$0xff]
          %v276 = vld [vmem:[%s206 + $0x1c8] sm:$0xff]
          %v277 = vld [vmem:[%s206 + $0x1d0] sm:$0xff]
          %v278 = vld [vmem:[%s206 + $0x1d8] sm:$0xff]
          %v279 = vld [vmem:[%s206 + $0x1e0] sm:$0xff]
          %v280 = vld [vmem:[%s206 + $0x1e8] sm:$0xff]
          %v281 = vld [vmem:[%s206 + $0x1f0] sm:$0xff]
          %v282 = vld [vmem:[%s206 + $0x1f8] sm:$0xff]
          %v283 = vld [vmem:[%s206 + $0x200] sm:$0xff]
          %v284 = vld [vmem:[%s206 + $0x208] sm:$0xff]
          %v285 = vld [vmem:[%s206 + $0x210] sm:$0xff]
          %v286 = vld [vmem:[%s206 + $0x218] sm:$0xff]
          %v287 = vld [vmem:[%s206 + $0x220] sm:$0xff]
          %v288 = vld [vmem:[%s206 + $0x228] sm:$0xff]
          %v289 = vld [vmem:[%s206 + $0x230] sm:$0xff]
          %v290 = vld [vmem:[%s206 + $0x238] sm:$0xff]
          %v291 = vld [vmem:[%s206 + $0x240] sm:$0xff]
          %v292 = vld [vmem:[%s206 + $0x248] sm:$0xff]
          %v293 = vld [vmem:[%s206 + $0x250] sm:$0xff]
          %v294 = vld [vmem:[%s206 + $0x258] sm:$0xff]
          %v295 = vld [vmem:[%s206 + $0x260] sm:$0xff]
          %v296 = vld [vmem:[%s206 + $0x268] sm:$0xff]
          %v297 = vld [vmem:[%s206 + $0x270] sm:$0xff]
          %v298 = vld [vmem:[%s206 + $0x278] sm:$0xff]
          %v299 = vld [vmem:[%s206 + $0x280] sm:$0xff]
          %v300 = vld [vmem:[%s206 + $0x288] sm:$0xff]
          %v301 = vld [vmem:[%s206 + $0x290] sm:$0xff]
          %v302 = vld [vmem:[%s206 + $0x298] sm:$0xff]
          %v303 = vld [vmem:[%s206 + $0x2a0] sm:$0xff]
          %v304 = vld [vmem:[%s206 + $0x2a8] sm:$0xff]
          %v305 = vld [vmem:[%s206 + $0x2b0] sm:$0xff]
          %v306 = vld [vmem:[%s206 + $0x2b8] sm:$0xff]
          %v307 = vld [vmem:[%s206 + $0x2c0] sm:$0xff]
          %v308 = vld [vmem:[%s206 + $0x2c8] sm:$0xff]
          %v309 = vld [vmem:[%s206 + $0x2d0] sm:$0xff]
          %v310 = vld [vmem:[%s206 + $0x2d8] sm:$0xff]
          %v311 = vld [vmem:[%s206 + $0x2e0] sm:$0xff]
          %v312 = vld [vmem:[%s206 + $0x2e8] sm:$0xff]
          %v313 = vld [vmem:[%s206 + $0x2f0] sm:$0xff]
          %v314 = vld [vmem:[%s206 + $0x2f8] sm:$0xff]
          %v315 = vld [vmem:[%s206 + $0x300] sm:$0xff]
          %v316 = vld [vmem:[%s206 + $0x308] sm:$0xff]
          %v317 = vld [vmem:[%s206 + $0x310] sm:$0xff]
          %v318 = vld [vmem:[%s206 + $0x318] sm:$0xff]
          %v319 = vld [vmem:[%s206 + $0x320] sm:$0xff]
          %v320 = vld [vmem:[%s206 + $0x328] sm:$0xff]
          %v321 = vld [vmem:[%s206 + $0x330] sm:$0xff]
          %v322 = vld [vmem:[%s206 + $0x338] sm:$0xff]
          %v323 = vld [vmem:[%s206 + $0x340] sm:$0xff]
          %v324 = vld [vmem:[%s206 + $0x348] sm:$0xff]
          %v325 = vld [vmem:[%s206 + $0x350] sm:$0xff]
          %v326 = vld [vmem:[%s206 + $0x358] sm:$0xff]
          %v327 = vld [vmem:[%s206 + $0x360] sm:$0xff]
          %v328 = vld [vmem:[%s206 + $0x368] sm:$0xff]
          %v329 = vld [vmem:[%s206 + $0x370] sm:$0xff]
          %v330 = vld [vmem:[%s206 + $0x378] sm:$0xff]
          %v331 = vld [vmem:[%s206 + $0x380] sm:$0xff]
          %v332 = vld [vmem:[%s206 + $0x388] sm:$0xff]
          %v333 = vld [vmem:[%s206 + $0x390] sm:$0xff]
          %v334 = vld [vmem:[%s206 + $0x398] sm:$0xff]
          %v335 = vld [vmem:[%s206 + $0x3a0] sm:$0xff]
          %v336 = vld [vmem:[%s206 + $0x3a8] sm:$0xff]
          %v337 = vld [vmem:[%s206 + $0x3b0] sm:$0xff]
          %v338 = vld [vmem:[%s206 + $0x3b8] sm:$0xff]
          %v339 = vld [vmem:[%s206 + $0x3c0] sm:$0xff]
          %v340 = vld [vmem:[%s206 + $0x3c8] sm:$0xff]
          %v341 = vld [vmem:[%s206 + $0x3d0] sm:$0xff]
          %v342 = vld [vmem:[%s206 + $0x3d8] sm:$0xff]
          %v343 = vld [vmem:[%s206 + $0x3e0] sm:$0xff]
          %v344 = vld [vmem:[%s206 + $0x3e8] sm:$0xff]
          %v345 = vld [vmem:[%s206 + $0x3f0] sm:$0xff]
          %v346 = vld [vmem:[%s206 + $0x3f8] sm:$0xff]
          %v347 = vpack.c.bf16 %v220, %v219
          %v348 = vpack.c.bf16 %v222, %v221
          %v349 = vpack.c.bf16 %v224, %v223
          %v350 = vpack.c.bf16 %v226, %v225
          %v351 = vpack.c.bf16 %v228, %v227
          %v352 = vpack.c.bf16 %v230, %v229
          %v353 = vpack.c.bf16 %v232, %v231
          %v354 = vpack.c.bf16 %v234, %v233
          %v355 = vpack.c.bf16 %v236, %v235
          %v356 = vpack.c.bf16 %v238, %v237
          %v357 = vpack.c.bf16 %v240, %v239
          %v358 = vpack.c.bf16 %v242, %v241
          %v359 = vpack.c.bf16 %v244, %v243
          %v360 = vpack.c.bf16 %v246, %v245
          %v361 = vpack.c.bf16 %v248, %v247
          %v362 = vpack.c.bf16 %v250, %v249
          %v363 = vpack.c.bf16 %v252, %v251
          %v364 = vpack.c.bf16 %v254, %v253
          %v365 = vpack.c.bf16 %v256, %v255
          %v366 = vpack.c.bf16 %v258, %v257
          %v367 = vpack.c.bf16 %v260, %v259
          %v368 = vpack.c.bf16 %v262, %v261
          %v369 = vpack.c.bf16 %v264, %v263
          %v370 = vpack.c.bf16 %v266, %v265
          %v371 = vpack.c.bf16 %v268, %v267
          %v372 = vpack.c.bf16 %v270, %v269
          %v373 = vpack.c.bf16 %v272, %v271
          %v374 = vpack.c.bf16 %v274, %v273
          %v375 = vpack.c.bf16 %v276, %v275
          %v376 = vpack.c.bf16 %v278, %v277
          %v377 = vpack.c.bf16 %v280, %v279
          %v378 = vpack.c.bf16 %v282, %v281
          %v379 = vpack.c.bf16 %v284, %v283
          %v380 = vpack.c.bf16 %v286, %v285
          %v381 = vpack.c.bf16 %v288, %v287
          %v382 = vpack.c.bf16 %v290, %v289
          %v383 = vpack.c.bf16 %v292, %v291
          %v384 = vpack.c.bf16 %v294, %v293
          %v385 = vpack.c.bf16 %v296, %v295
          %v386 = vpack.c.bf16 %v298, %v297
          %v387 = vpack.c.bf16 %v300, %v299
          %v388 = vpack.c.bf16 %v302, %v301
          %v389 = vpack.c.bf16 %v304, %v303
          %v390 = vpack.c.bf16 %v306, %v305
          %v391 = vpack.c.bf16 %v308, %v307
          %v392 = vpack.c.bf16 %v310, %v309
          %v393 = vpack.c.bf16 %v312, %v311
          %v394 = vpack.c.bf16 %v314, %v313
          %v395 = vpack.c.bf16 %v316, %v315
          %v396 = vpack.c.bf16 %v318, %v317
          %v397 = vpack.c.bf16 %v320, %v319
          %v398 = vpack.c.bf16 %v322, %v321
          %v399 = vpack.c.bf16 %v324, %v323
          %v400 = vpack.c.bf16 %v326, %v325
          %v401 = vpack.c.bf16 %v328, %v327
          %v402 = vpack.c.bf16 %v330, %v329
          %v403 = vpack.c.bf16 %v332, %v331
          %v404 = vpack.c.bf16 %v334, %v333
          %v405 = vpack.c.bf16 %v336, %v335
          %v406 = vpack.c.bf16 %v338, %v337
          %v407 = vpack.c.bf16 %v340, %v339
          %v408 = vpack.c.bf16 %v342, %v341
          %v409 = vpack.c.bf16 %v344, %v343
          %v410 = vpack.c.bf16 %v346, %v345
          %vm411 = vcmask 188416
          %vm412 = vsmask.f32 256
          %vm413 = vmand %vm411, %vm412
          %v414 = vld [vmem:[#allocation2] sm:$0x1]
          %v415 = vsel %vm413, 0, %v414
          %416 = vst [vmem:[#allocation2] sm:$0x1] %v415
          %v417 = vld [vmem:[#allocation2 + $0x14] sm:$0x1]
          %v418 = vsel %vm413, 0, %v417
          %419 = vst [vmem:[#allocation2 + $0x14] sm:$0x1] %v418
          %v420 = vld [vmem:[#allocation2 + $0x28] sm:$0x1]
          %v421 = vsel %vm413, 0, %v420
          %422 = vst [vmem:[#allocation2 + $0x28] sm:$0x1] %v421
          %v423 = vld [vmem:[#allocation2 + $0x3c] sm:$0x1]
          %v424 = vsel %vm413, 0, %v423
          %425 = vst [vmem:[#allocation2 + $0x3c] sm:$0x1] %v424
          %v426 = vld [vmem:[#allocation2 + $0x50] sm:$0x1]
          %v427 = vsel %vm413, 0, %v426
          %428 = vst [vmem:[#allocation2 + $0x50] sm:$0x1] %v427
          %v429 = vld [vmem:[#allocation2 + $0x64] sm:$0x1]
          %v430 = vsel %vm413, 0, %v429
          %431 = vst [vmem:[#allocation2 + $0x64] sm:$0x1] %v430
          %v432 = vld [vmem:[#allocation2 + $0x78] sm:$0x1]
          %v433 = vsel %vm413, 0, %v432
          %434 = vst [vmem:[#allocation2 + $0x78] sm:$0x1] %v433
          %v435 = vld [vmem:[#allocation2 + $0x8c] sm:$0x1]
          %v436 = vsel %vm413, 0, %v435
          %437 = vst [vmem:[#allocation2 + $0x8c] sm:$0x1] %v436
          %v438 = vld [vmem:[#allocation2 + $0xa0] sm:$0x1]
          %v439 = vsel %vm413, 0, %v438
          %440 = vst [vmem:[#allocation2 + $0xa0] sm:$0x1] %v439
          %v441 = vld [vmem:[#allocation2 + $0xb4] sm:$0x1]
          %v442 = vsel %vm413, 0, %v441
          %443 = vst [vmem:[#allocation2 + $0xb4] sm:$0x1] %v442
          %v444 = vld [vmem:[#allocation2 + $0xc8] sm:$0x1]
          %v445 = vsel %vm413, 0, %v444
          %446 = vst [vmem:[#allocation2 + $0xc8] sm:$0x1] %v445
          %v447 = vld [vmem:[#allocation2 + $0xdc] sm:$0x1]
          %v448 = vsel %vm413, 0, %v447
          %449 = vst [vmem:[#allocation2 + $0xdc] sm:$0x1] %v448
          %v450 = vld [vmem:[#allocation2 + $0xf0] sm:$0x1]
          %v451 = vsel %vm413, 0, %v450
          %452 = vst [vmem:[#allocation2 + $0xf0] sm:$0x1] %v451
          %v453 = vld [vmem:[#allocation2 + $0x104] sm:$0x1]
          %v454 = vsel %vm413, 0, %v453
          %455 = vst [vmem:[#allocation2 + $0x104] sm:$0x1] %v454
          %v456 = vld [vmem:[#allocation2 + $0x118] sm:$0x1]
          %v457 = vsel %vm413, 0, %v456
          %458 = vst [vmem:[#allocation2 + $0x118] sm:$0x1] %v457
          %v459 = vld [vmem:[#allocation2 + $0x12c] sm:$0x1]
          %v460 = vsel %vm413, 0, %v459
          %461 = vst [vmem:[#allocation2 + $0x12c] sm:$0x1] %v460
          %v462 = vld [vmem:[#allocation2 + $0x140] sm:$0x1]
          %v463 = vsel %vm413, 0, %v462
          %464 = vst [vmem:[#allocation2 + $0x140] sm:$0x1] %v463
          %v465 = vld [vmem:[#allocation2 + $0x154] sm:$0x1]
          %v466 = vsel %vm413, 0, %v465
          %467 = vst [vmem:[#allocation2 + $0x154] sm:$0x1] %v466
          %v468 = vld [vmem:[#allocation2 + $0x168] sm:$0x1]
          %v469 = vsel %vm413, 0, %v468
          %470 = vst [vmem:[#allocation2 + $0x168] sm:$0x1] %v469
          %v471 = vld [vmem:[#allocation2 + $0x17c] sm:$0x1]
          %v472 = vsel %vm413, 0, %v471
          %473 = vst [vmem:[#allocation2 + $0x17c] sm:$0x1] %v472
          %v474 = vld [vmem:[#allocation2 + $0x190] sm:$0x1]
          %v475 = vsel %vm413, 0, %v474
          %476 = vst [vmem:[#allocation2 + $0x190] sm:$0x1] %v475
          %v477 = vld [vmem:[#allocation2 + $0x1a4] sm:$0x1]
          %v478 = vsel %vm413, 0, %v477
          %479 = vst [vmem:[#allocation2 + $0x1a4] sm:$0x1] %v478
          %v480 = vld [vmem:[#allocation2 + $0x1b8] sm:$0x1]
          %v481 = vsel %vm413, 0, %v480
          %482 = vst [vmem:[#allocation2 + $0x1b8] sm:$0x1] %v481
          %v483 = vld [vmem:[#allocation2 + $0x1cc] sm:$0x1]
          %v484 = vsel %vm413, 0, %v483
          %485 = vst [vmem:[#allocation2 + $0x1cc] sm:$0x1] %v484
          %v486 = vld [vmem:[#allocation2 + $0x1e0] sm:$0x1]
          %v487 = vsel %vm413, 0, %v486
          %488 = vst [vmem:[#allocation2 + $0x1e0] sm:$0x1] %v487
          %v489 = vld [vmem:[#allocation2 + $0x1f4] sm:$0x1]
          %v490 = vsel %vm413, 0, %v489
          %491 = vst [vmem:[#allocation2 + $0x1f4] sm:$0x1] %v490
          %v492 = vld [vmem:[#allocation2 + $0x208] sm:$0x1]
          %v493 = vsel %vm413, 0, %v492
          %494 = vst [vmem:[#allocation2 + $0x208] sm:$0x1] %v493
          %v495 = vld [vmem:[#allocation2 + $0x21c] sm:$0x1]
          %v496 = vsel %vm413, 0, %v495
          %497 = vst [vmem:[#allocation2 + $0x21c] sm:$0x1] %v496
          %v498 = vld [vmem:[#allocation2 + $0x230] sm:$0x1]
          %v499 = vsel %vm413, 0, %v498
          %500 = vst [vmem:[#allocation2 + $0x230] sm:$0x1] %v499
          %v501 = vld [vmem:[#allocation2 + $0x244] sm:$0x1]
          %v502 = vsel %vm413, 0, %v501
          %503 = vst [vmem:[#allocation2 + $0x244] sm:$0x1] %v502
          %v504 = vld [vmem:[#allocation2 + $0x258] sm:$0x1]
          %v505 = vsel %vm413, 0, %v504
          %506 = vst [vmem:[#allocation2 + $0x258] sm:$0x1] %v505
          %v507 = vld [vmem:[#allocation2 + $0x26c] sm:$0x1]
          %v508 = vsel %vm413, 0, %v507
          %509 = vst [vmem:[#allocation2 + $0x26c] sm:$0x1] %v508
          %vm510 = vsmask.f32 7938
          %vm511 = vmand %vm411, %vm510
          %v512 = vld [vmem:[#allocation2 + $0x10] sm:$0x1]
          %v513 = vsel %vm511, 0, %v512
          %514 = vst [vmem:[#allocation2 + $0x10] sm:$0x1] %v513
          %v515 = vld [vmem:[#allocation2 + $0x24] sm:$0x1]
          %v516 = vsel %vm511, 0, %v515
          %517 = vst [vmem:[#allocation2 + $0x24] sm:$0x1] %v516
          %v518 = vld [vmem:[#allocation2 + $0x38] sm:$0x1]
          %v519 = vsel %vm511, 0, %v518
          %520 = vst [vmem:[#allocation2 + $0x38] sm:$0x1] %v519
          %v521 = vld [vmem:[#allocation2 + $0x4c] sm:$0x1]
          %v522 = vsel %vm511, 0, %v521
          %523 = vst [vmem:[#allocation2 + $0x4c] sm:$0x1] %v522
          %v524 = vld [vmem:[#allocation2 + $0x60] sm:$0x1]
          %v525 = vsel %vm511, 0, %v524
          %526 = vst [vmem:[#allocation2 + $0x60] sm:$0x1] %v525
          %v527 = vld [vmem:[#allocation2 + $0x74] sm:$0x1]
          %v528 = vsel %vm511, 0, %v527
          %529 = vst [vmem:[#allocation2 + $0x74] sm:$0x1] %v528
          %v530 = vld [vmem:[#allocation2 + $0x88] sm:$0x1]
          %v531 = vsel %vm511, 0, %v530
          %532 = vst [vmem:[#allocation2 + $0x88] sm:$0x1] %v531
          %v533 = vld [vmem:[#allocation2 + $0x9c] sm:$0x1]
          %v534 = vsel %vm511, 0, %v533
          %535 = vst [vmem:[#allocation2 + $0x9c] sm:$0x1] %v534
          %v536 = vld [vmem:[#allocation2 + $0xb0] sm:$0x1]
          %v537 = vsel %vm511, 0, %v536
          %538 = vst [vmem:[#allocation2 + $0xb0] sm:$0x1] %v537
          %v539 = vld [vmem:[#allocation2 + $0xc4] sm:$0x1]
          %v540 = vsel %vm511, 0, %v539
          %541 = vst [vmem:[#allocation2 + $0xc4] sm:$0x1] %v540
          %v542 = vld [vmem:[#allocation2 + $0xd8] sm:$0x1]
          %v543 = vsel %vm511, 0, %v542
          %544 = vst [vmem:[#allocation2 + $0xd8] sm:$0x1] %v543
          %v545 = vld [vmem:[#allocation2 + $0xec] sm:$0x1]
          %v546 = vsel %vm511, 0, %v545
          %547 = vst [vmem:[#allocation2 + $0xec] sm:$0x1] %v546
          %v548 = vld [vmem:[#allocation2 + $0x100] sm:$0x1]
          %v549 = vsel %vm511, 0, %v548
          %550 = vst [vmem:[#allocation2 + $0x100] sm:$0x1] %v549
          %v551 = vld [vmem:[#allocation2 + $0x114] sm:$0x1]
          %v552 = vsel %vm511, 0, %v551
          %553 = vst [vmem:[#allocation2 + $0x114] sm:$0x1] %v552
          %v554 = vld [vmem:[#allocation2 + $0x128] sm:$0x1]
          %v555 = vsel %vm511, 0, %v554
          %556 = vst [vmem:[#allocation2 + $0x128] sm:$0x1] %v555
          %v557 = vld [vmem:[#allocation2 + $0x13c] sm:$0x1]
          %v558 = vsel %vm511, 0, %v557
          %559 = vst [vmem:[#allocation2 + $0x13c] sm:$0x1] %v558
          %v560 = vld [vmem:[#allocation2 + $0x150] sm:$0x1]
          %v561 = vsel %vm511, 0, %v560
          %562 = vst [vmem:[#allocation2 + $0x150] sm:$0x1] %v561
          %v563 = vld [vmem:[#allocation2 + $0x164] sm:$0x1]
          %v564 = vsel %vm511, 0, %v563
          %565 = vst [vmem:[#allocation2 + $0x164] sm:$0x1] %v564
          %v566 = vld [vmem:[#allocation2 + $0x178] sm:$0x1]
          %v567 = vsel %vm511, 0, %v566
          %568 = vst [vmem:[#allocation2 + $0x178] sm:$0x1] %v567
          %v569 = vld [vmem:[#allocation2 + $0x18c] sm:$0x1]
          %v570 = vsel %vm511, 0, %v569
          %571 = vst [vmem:[#allocation2 + $0x18c] sm:$0x1] %v570
          %v572 = vld [vmem:[#allocation2 + $0x1a0] sm:$0x1]
          %v573 = vsel %vm511, 0, %v572
          %574 = vst [vmem:[#allocation2 + $0x1a0] sm:$0x1] %v573
          %v575 = vld [vmem:[#allocation2 + $0x1b4] sm:$0x1]
          %v576 = vsel %vm511, 0, %v575
          %577 = vst [vmem:[#allocation2 + $0x1b4] sm:$0x1] %v576
          %v578 = vld [vmem:[#allocation2 + $0x1c8] sm:$0x1]
          %v579 = vsel %vm511, 0, %v578
          %580 = vst [vmem:[#allocation2 + $0x1c8] sm:$0x1] %v579
          %v581 = vld [vmem:[#allocation2 + $0x1dc] sm:$0x1]
          %v582 = vsel %vm511, 0, %v581
          %583 = vst [vmem:[#allocation2 + $0x1dc] sm:$0x1] %v582
          %v584 = vld [vmem:[#allocation2 + $0x1f0] sm:$0x1]
          %v585 = vsel %vm511, 0, %v584
          %586 = vst [vmem:[#allocation2 + $0x1f0] sm:$0x1] %v585
          %v587 = vld [vmem:[#allocation2 + $0x204] sm:$0x1]
          %v588 = vsel %vm511, 0, %v587
          %589 = vst [vmem:[#allocation2 + $0x204] sm:$0x1] %v588
          %v590 = vld [vmem:[#allocation2 + $0x218] sm:$0x1]
          %v591 = vsel %vm511, 0, %v590
          %592 = vst [vmem:[#allocation2 + $0x218] sm:$0x1] %v591
          %v593 = vld [vmem:[#allocation2 + $0x22c] sm:$0x1]
          %v594 = vsel %vm511, 0, %v593
          %595 = vst [vmem:[#allocation2 + $0x22c] sm:$0x1] %v594
          %v596 = vld [vmem:[#allocation2 + $0x240] sm:$0x1]
          %v597 = vsel %vm511, 0, %v596
          %598 = vst [vmem:[#allocation2 + $0x240] sm:$0x1] %v597
          %v599 = vld [vmem:[#allocation2 + $0x254] sm:$0x1]
          %v600 = vsel %vm511, 0, %v599
          %601 = vst [vmem:[#allocation2 + $0x254] sm:$0x1] %v600
          %v602 = vld [vmem:[#allocation2 + $0x268] sm:$0x1]
          %v603 = vsel %vm511, 0, %v602
          %604 = vst [vmem:[#allocation2 + $0x268] sm:$0x1] %v603
          %v605 = vld [vmem:[#allocation2 + $0x27c] sm:$0x1]
          %v606 = vsel %vm511, 0, %v605
          %607 = vst [vmem:[#allocation2 + $0x27c] sm:$0x1] %v606
          %vm608 = vcmask 60416
          %609 = vst.msk [vmem:[#allocation2] sm:$0xf] %vm608, 0
          %610 = vst.msk [vmem:[#allocation2 + $0x4] sm:$0xf] %vm608, 0
          %611 = vst.msk [vmem:[#allocation2 + $0x8] sm:$0xf] %vm608, 0
          %612 = vst.msk [vmem:[#allocation2 + $0xc] sm:$0xf] %vm608, 0
          %vm613 = vcmask 57344
          %614 = vst.msk [vmem:[#allocation2 + $0x10] sm:$0x1] %vm613, 0
          %s615 = scalar_lea.vmem [#allocation2], 620
          %vm616 = vcmask 191616
          %617 = vst.msk [vmem:[%s615] sm:$0xf] %vm616, 0
          %618 = vst.msk [vmem:[%s615 + $0x4] sm:$0xf] %vm616, 0
          %619 = vst.msk [vmem:[%s615 + $0x8] sm:$0xf] %vm616, 0
          %620 = vst.msk [vmem:[%s615 + $0xc] sm:$0xf] %vm616, 0
          %vm621 = vcmask 188544
          %622 = vst.msk [vmem:[%s615 + $0x10] sm:$0x1] %vm621, 0
          %v685 = vunpack.c.l.b16 %v347
          %v686 = vunpack.c.h.b16 %v347
          %v687 = vunpack.c.l.b16 %v348
          %v688 = vunpack.c.h.b16 %v348
          %v689 = vunpack.c.l.b16 %v349
          %v690 = vunpack.c.h.b16 %v349
          %v691 = vunpack.c.l.b16 %v350
          %v692 = vunpack.c.h.b16 %v350
          %v693 = vunpack.c.l.b16 %v351
          %v694 = vunpack.c.h.b16 %v351
          %v695 = vunpack.c.l.b16 %v352
          %v696 = vunpack.c.h.b16 %v352
          %v697 = vunpack.c.l.b16 %v353
          %v698 = vunpack.c.h.b16 %v353
          %v699 = vunpack.c.l.b16 %v354
          %v700 = vunpack.c.h.b16 %v354
          %v701 = vunpack.c.l.b16 %v355
          %v702 = vunpack.c.h.b16 %v355
          %v703 = vunpack.c.l.b16 %v356
          %v704 = vunpack.c.h.b16 %v356
          %v705 = vunpack.c.l.b16 %v357
          %v706 = vunpack.c.h.b16 %v357
          %v707 = vunpack.c.l.b16 %v358
          %v708 = vunpack.c.h.b16 %v358
          %v709 = vunpack.c.l.b16 %v359
          %v710 = vunpack.c.h.b16 %v359
          %v711 = vunpack.c.l.b16 %v360
          %v712 = vunpack.c.h.b16 %v360
          %v713 = vunpack.c.l.b16 %v361
          %v714 = vunpack.c.h.b16 %v361
          %v715 = vunpack.c.l.b16 %v362
          %v716 = vunpack.c.h.b16 %v362
          %v717 = vunpack.c.l.b16 %v363
          %v718 = vunpack.c.h.b16 %v363
          %v719 = vunpack.c.l.b16 %v364
          %v720 = vunpack.c.h.b16 %v364
          %v721 = vunpack.c.l.b16 %v365
          %v722 = vunpack.c.h.b16 %v365
          %v723 = vunpack.c.l.b16 %v366
          %v724 = vunpack.c.h.b16 %v366
          %v725 = vunpack.c.l.b16 %v367
          %v726 = vunpack.c.h.b16 %v367
          %v727 = vunpack.c.l.b16 %v368
          %v728 = vunpack.c.h.b16 %v368
          %v729 = vunpack.c.l.b16 %v369
          %v730 = vunpack.c.h.b16 %v369
          %v731 = vunpack.c.l.b16 %v370
          %v732 = vunpack.c.h.b16 %v370
          %v733 = vunpack.c.l.b16 %v371
          %v734 = vunpack.c.h.b16 %v371
          %v735 = vunpack.c.l.b16 %v372
          %v736 = vunpack.c.h.b16 %v372
          %v737 = vunpack.c.l.b16 %v373
          %v738 = vunpack.c.h.b16 %v373
          %v739 = vunpack.c.l.b16 %v374
          %v740 = vunpack.c.h.b16 %v374
          %v741 = vunpack.c.l.b16 %v375
          %v742 = vunpack.c.h.b16 %v375
          %v743 = vunpack.c.l.b16 %v376
          %v744 = vunpack.c.h.b16 %v376
          %v745 = vunpack.c.l.b16 %v377
          %v746 = vunpack.c.h.b16 %v377
          %v747 = vunpack.c.l.b16 %v378
          %v748 = vunpack.c.h.b16 %v378
          %v749 = vunpack.c.l.b16 %v379
          %v750 = vunpack.c.h.b16 %v379
          %v751 = vunpack.c.l.b16 %v380
          %v752 = vunpack.c.h.b16 %v380
          %v753 = vunpack.c.l.b16 %v381
          %v754 = vunpack.c.h.b16 %v381
          %v755 = vunpack.c.l.b16 %v382
          %v756 = vunpack.c.h.b16 %v382
          %v757 = vunpack.c.l.b16 %v383
          %v758 = vunpack.c.h.b16 %v383
          %v759 = vunpack.c.l.b16 %v384
          %v760 = vunpack.c.h.b16 %v384
          %v761 = vunpack.c.l.b16 %v385
          %v762 = vunpack.c.h.b16 %v385
          %v763 = vunpack.c.l.b16 %v386
          %v764 = vunpack.c.h.b16 %v386
          %v765 = vunpack.c.l.b16 %v387
          %v766 = vunpack.c.h.b16 %v387
          %v767 = vunpack.c.l.b16 %v388
          %v768 = vunpack.c.h.b16 %v388
          %v769 = vunpack.c.l.b16 %v389
          %v770 = vunpack.c.h.b16 %v389
          %v771 = vunpack.c.l.b16 %v390
          %v772 = vunpack.c.h.b16 %v390
          %v773 = vunpack.c.l.b16 %v391
          %v774 = vunpack.c.h.b16 %v391
          %v775 = vunpack.c.l.b16 %v392
          %v776 = vunpack.c.h.b16 %v392
          %v777 = vunpack.c.l.b16 %v393
          %v778 = vunpack.c.h.b16 %v393
          %v779 = vunpack.c.l.b16 %v394
          %v780 = vunpack.c.h.b16 %v394
          %v781 = vunpack.c.l.b16 %v395
          %v782 = vunpack.c.h.b16 %v395
          %v783 = vunpack.c.l.b16 %v396
          %v784 = vunpack.c.h.b16 %v396
          %v785 = vunpack.c.l.b16 %v397
          %v786 = vunpack.c.h.b16 %v397
          %v787 = vunpack.c.l.b16 %v398
          %v788 = vunpack.c.h.b16 %v398
          %v789 = vunpack.c.l.b16 %v399
          %v790 = vunpack.c.h.b16 %v399
          %v791 = vunpack.c.l.b16 %v400
          %v792 = vunpack.c.h.b16 %v400
          %v793 = vunpack.c.l.b16 %v401
          %v794 = vunpack.c.h.b16 %v401
          %v795 = vunpack.c.l.b16 %v402
          %v796 = vunpack.c.h.b16 %v402
          %v797 = vunpack.c.l.b16 %v403
          %v798 = vunpack.c.h.b16 %v403
          %v799 = vunpack.c.l.b16 %v404
          %v800 = vunpack.c.h.b16 %v404
          %v801 = vunpack.c.l.b16 %v405
          %v802 = vunpack.c.h.b16 %v405
          %v803 = vunpack.c.l.b16 %v406
          %v804 = vunpack.c.h.b16 %v406
          %v805 = vunpack.c.l.b16 %v407
          %v806 = vunpack.c.h.b16 %v407
          %v807 = vunpack.c.l.b16 %v408
          %v808 = vunpack.c.h.b16 %v408
          %v809 = vpack.c.b16 %v685, %v685
          %v810 = vpack.c.b16 %v686, %v686
          %v811 = vpack.c.b16 %v687, %v687
          %v812 = vpack.c.b16 %v688, %v688
          %v813 = vpack.c.b16 %v689, %v689
          %v814 = vpack.c.b16 %v690, %v690
          %v815 = vpack.c.b16 %v691, %v691
          %v816 = vpack.c.b16 %v692, %v692
          %v817 = vpack.c.b16 %v693, %v693
          %v818 = vpack.c.b16 %v694, %v694
          %v819 = vpack.c.b16 %v695, %v695
          %v820 = vpack.c.b16 %v696, %v696
          %v821 = vpack.c.b16 %v697, %v697
          %v822 = vpack.c.b16 %v698, %v698
          %v823 = vpack.c.b16 %v699, %v699
          %v824 = vpack.c.b16 %v700, %v700
          %v825 = vpack.c.b16 %v701, %v701
          %v826 = vpack.c.b16 %v702, %v702
          %v827 = vpack.c.b16 %v703, %v703
          %v828 = vpack.c.b16 %v704, %v704
          %v829 = vpack.c.b16 %v705, %v705
          %v830 = vpack.c.b16 %v706, %v706
          %v831 = vpack.c.b16 %v707, %v707
          %v832 = vpack.c.b16 %v708, %v708
          %v833 = vpack.c.b16 %v709, %v709
          %v834 = vpack.c.b16 %v710, %v710
          %v835 = vpack.c.b16 %v711, %v711
          %v836 = vpack.c.b16 %v712, %v712
          %v837 = vpack.c.b16 %v713, %v713
          %v838 = vpack.c.b16 %v714, %v714
          %v839 = vpack.c.b16 %v715, %v715
          %v840 = vpack.c.b16 %v716, %v716
          %v841 = vpack.c.b16 %v717, %v717
          %v842 = vpack.c.b16 %v718, %v718
          %v843 = vpack.c.b16 %v719, %v719
          %v844 = vpack.c.b16 %v720, %v720
          %v845 = vpack.c.b16 %v721, %v721
          %v846 = vpack.c.b16 %v722, %v722
          %v847 = vpack.c.b16 %v723, %v723
          %v848 = vpack.c.b16 %v724, %v724
          %v849 = vpack.c.b16 %v725, %v725
          %v850 = vpack.c.b16 %v726, %v726
          %v851 = vpack.c.b16 %v727, %v727
          %v852 = vpack.c.b16 %v728, %v728
          %v853 = vpack.c.b16 %v729, %v729
          %v854 = vpack.c.b16 %v730, %v730
          %v855 = vpack.c.b16 %v731, %v731
          %v856 = vpack.c.b16 %v732, %v732
          %v857 = vpack.c.b16 %v733, %v733
          %v858 = vpack.c.b16 %v734, %v734
          %v859 = vpack.c.b16 %v735, %v735
          %v860 = vpack.c.b16 %v736, %v736
          %v861 = vpack.c.b16 %v737, %v737
          %v862 = vpack.c.b16 %v738, %v738
          %v863 = vpack.c.b16 %v739, %v739
          %v864 = vpack.c.b16 %v740, %v740
          %v865 = vpack.c.b16 %v741, %v741
          %v866 = vpack.c.b16 %v742, %v742
          %v867 = vpack.c.b16 %v743, %v743
          %v868 = vpack.c.b16 %v744, %v744
          %v869 = vpack.c.b16 %v745, %v745
          %v870 = vpack.c.b16 %v746, %v746
          %v871 = vpack.c.b16 %v747, %v747
          %v872 = vpack.c.b16 %v748, %v748
          %v873 = vpack.c.b16 %v749, %v749
          %v874 = vpack.c.b16 %v750, %v750
          %v875 = vpack.c.b16 %v751, %v751
          %v876 = vpack.c.b16 %v752, %v752
          %v877 = vpack.c.b16 %v753, %v753
          %v878 = vpack.c.b16 %v754, %v754
          %v879 = vpack.c.b16 %v755, %v755
          %v880 = vpack.c.b16 %v756, %v756
          %v881 = vpack.c.b16 %v757, %v757
          %v882 = vpack.c.b16 %v758, %v758
          %v883 = vpack.c.b16 %v759, %v759
          %v884 = vpack.c.b16 %v760, %v760
          %v885 = vpack.c.b16 %v761, %v761
          %v886 = vpack.c.b16 %v762, %v762
          %v887 = vpack.c.b16 %v763, %v763
          %v888 = vpack.c.b16 %v764, %v764
          %v889 = vpack.c.b16 %v765, %v765
          %v890 = vpack.c.b16 %v766, %v766
          %v891 = vpack.c.b16 %v767, %v767
          %v892 = vpack.c.b16 %v768, %v768
          %v893 = vpack.c.b16 %v769, %v769
          %v894 = vpack.c.b16 %v770, %v770
          %v895 = vpack.c.b16 %v771, %v771
          %v896 = vpack.c.b16 %v772, %v772
          %v897 = vpack.c.b16 %v773, %v773
          %v898 = vpack.c.b16 %v774, %v774
          %v899 = vpack.c.b16 %v775, %v775
          %v900 = vpack.c.b16 %v776, %v776
          %v901 = vpack.c.b16 %v777, %v777
          %v902 = vpack.c.b16 %v778, %v778
          %v903 = vpack.c.b16 %v779, %v779
          %v904 = vpack.c.b16 %v780, %v780
          %v905 = vpack.c.b16 %v781, %v781
          %v906 = vpack.c.b16 %v782, %v782
          %v907 = vpack.c.b16 %v783, %v783
          %v908 = vpack.c.b16 %v784, %v784
          %v909 = vpack.c.b16 %v785, %v785
          %v910 = vpack.c.b16 %v786, %v786
          %v911 = vpack.c.b16 %v787, %v787
          %v912 = vpack.c.b16 %v788, %v788
          %v913 = vpack.c.b16 %v789, %v789
          %v914 = vpack.c.b16 %v790, %v790
          %v915 = vpack.c.b16 %v791, %v791
          %v916 = vpack.c.b16 %v792, %v792
          %v917 = vpack.c.b16 %v793, %v793
          %v918 = vpack.c.b16 %v794, %v794
          %v919 = vpack.c.b16 %v795, %v795
          %v920 = vpack.c.b16 %v796, %v796
          %v921 = vpack.c.b16 %v797, %v797
          %v922 = vpack.c.b16 %v798, %v798
          %v923 = vpack.c.b16 %v799, %v799
          %v924 = vpack.c.b16 %v800, %v800
          %v925 = vpack.c.b16 %v801, %v801
          %v926 = vpack.c.b16 %v802, %v802
          %v927 = vpack.c.b16 %v803, %v803
          %v928 = vpack.c.b16 %v804, %v804
          %v929 = vpack.c.b16 %v805, %v805
          %v930 = vpack.c.b16 %v806, %v806
          %v931 = vpack.c.b16 %v807, %v807
          %v932 = vpack.c.b16 %v808, %v808
          %vm933 = vsmask.f32 4368
          %vm934 = vmor %vm412, %vm933
          %v936 = vshrl.u32 %v809, 16
          %v938 = vrot.slane %v936, 7
          %v939 = vshll.u32 %v809, 16
          %v941 = vor.u32 %v938, %v939
          %v942 = vrot.slane %v938, 4
          %v944 = vshrl.u32 %v810, 16
          %v946 = vrot.slane %v944, 7
          %v947 = vshll.u32 %v810, 16
          %v949 = vor.u32 %v946, %v947
          %v950 = vsel %vm934, %v942, %v949
          %v951 = vrot.slane %v946, 4
          %v953 = vshrl.u32 %v811, 16
          %v955 = vrot.slane %v953, 7
          %v956 = vshll.u32 %v811, 16
          %v958 = vor.u32 %v955, %v956
          %v959 = vsel %vm934, %v951, %v958
          %v960 = vrot.slane %v955, 4
          %v962 = vshrl.u32 %v812, 16
          %v964 = vrot.slane %v962, 7
          %v965 = vshll.u32 %v812, 16
          %v967 = vor.u32 %v964, %v965
          %v968 = vsel %vm934, %v960, %v967
          %v969 = vrot.slane %v964, 4
          %v971 = vshrl.u32 %v813, 16
          %v973 = vrot.slane %v971, 7
          %v974 = vshll.u32 %v813, 16
          %v976 = vor.u32 %v973, %v974
          %v977 = vrot.slane %v973, 4
          %v979 = vshrl.u32 %v814, 16
          %v981 = vrot.slane %v979, 7
          %v982 = vshll.u32 %v814, 16
          %v984 = vor.u32 %v981, %v982
          %v985 = vsel %vm934, %v977, %v984
          %v986 = vrot.slane %v981, 4
          %v988 = vshrl.u32 %v815, 16
          %v990 = vrot.slane %v988, 7
          %v991 = vshll.u32 %v815, 16
          %v993 = vor.u32 %v990, %v991
          %v994 = vsel %vm934, %v986, %v993
          %v995 = vrot.slane %v990, 4
          %v997 = vshrl.u32 %v816, 16
          %v999 = vrot.slane %v997, 7
          %v1000 = vshll.u32 %v816, 16
          %v1002 = vor.u32 %v999, %v1000
          %v1003 = vsel %vm934, %v995, %v1002
          %v1004 = vrot.slane %v999, 4
          %v1006 = vshrl.u32 %v817, 16
          %v1008 = vrot.slane %v1006, 7
          %v1009 = vshll.u32 %v817, 16
          %v1011 = vor.u32 %v1008, %v1009
          %v1012 = vrot.slane %v1008, 4
          %v1014 = vshrl.u32 %v818, 16
          %v1016 = vrot.slane %v1014, 7
          %v1017 = vshll.u32 %v818, 16
          %v1019 = vor.u32 %v1016, %v1017
          %v1020 = vsel %vm934, %v1012, %v1019
          %v1021 = vrot.slane %v1016, 4
          %v1023 = vshrl.u32 %v819, 16
          %v1025 = vrot.slane %v1023, 7
          %v1026 = vshll.u32 %v819, 16
          %v1028 = vor.u32 %v1025, %v1026
          %v1029 = vsel %vm934, %v1021, %v1028
          %v1030 = vrot.slane %v1025, 4
          %v1032 = vshrl.u32 %v820, 16
          %v1034 = vrot.slane %v1032, 7
          %v1035 = vshll.u32 %v820, 16
          %v1037 = vor.u32 %v1034, %v1035
          %v1038 = vsel %vm934, %v1030, %v1037
          %v1039 = vrot.slane %v1034, 4
          %v1041 = vshrl.u32 %v821, 16
          %v1043 = vrot.slane %v1041, 7
          %v1044 = vshll.u32 %v821, 16
          %v1046 = vor.u32 %v1043, %v1044
          %v1047 = vrot.slane %v1043, 4
          %v1049 = vshrl.u32 %v822, 16
          %v1051 = vrot.slane %v1049, 7
          %v1052 = vshll.u32 %v822, 16
          %v1054 = vor.u32 %v1051, %v1052
          %v1055 = vsel %vm934, %v1047, %v1054
          %v1056 = vrot.slane %v1051, 4
          %v1058 = vshrl.u32 %v823, 16
          %v1060 = vrot.slane %v1058, 7
          %v1061 = vshll.u32 %v823, 16
          %v1063 = vor.u32 %v1060, %v1061
          %v1064 = vsel %vm934, %v1056, %v1063
          %v1065 = vrot.slane %v1060, 4
          %v1067 = vshrl.u32 %v824, 16
          %v1069 = vrot.slane %v1067, 7
          %v1070 = vshll.u32 %v824, 16
          %v1072 = vor.u32 %v1069, %v1070
          %v1073 = vsel %vm934, %v1065, %v1072
          %v1074 = vrot.slane %v1069, 4
          %v1076 = vshrl.u32 %v825, 16
          %v1078 = vrot.slane %v1076, 7
          %v1079 = vshll.u32 %v825, 16
          %v1081 = vor.u32 %v1078, %v1079
          %v1082 = vrot.slane %v1078, 4
          %v1084 = vshrl.u32 %v826, 16
          %v1086 = vrot.slane %v1084, 7
          %v1087 = vshll.u32 %v826, 16
          %v1089 = vor.u32 %v1086, %v1087
          %v1090 = vsel %vm934, %v1082, %v1089
          %v1091 = vrot.slane %v1086, 4
          %v1093 = vshrl.u32 %v827, 16
          %v1095 = vrot.slane %v1093, 7
          %v1096 = vshll.u32 %v827, 16
          %v1098 = vor.u32 %v1095, %v1096
          %v1099 = vsel %vm934, %v1091, %v1098
          %v1100 = vrot.slane %v1095, 4
          %v1102 = vshrl.u32 %v828, 16
          %v1104 = vrot.slane %v1102, 7
          %v1105 = vshll.u32 %v828, 16
          %v1107 = vor.u32 %v1104, %v1105
          %v1108 = vsel %vm934, %v1100, %v1107
          %v1109 = vrot.slane %v1104, 4
          %v1111 = vshrl.u32 %v829, 16
          %v1113 = vrot.slane %v1111, 7
          %v1114 = vshll.u32 %v829, 16
          %v1116 = vor.u32 %v1113, %v1114
          %v1117 = vrot.slane %v1113, 4
          %v1119 = vshrl.u32 %v830, 16
          %v1121 = vrot.slane %v1119, 7
          %v1122 = vshll.u32 %v830, 16
          %v1124 = vor.u32 %v1121, %v1122
          %v1125 = vsel %vm934, %v1117, %v1124
          %v1126 = vrot.slane %v1121, 4
          %v1128 = vshrl.u32 %v831, 16
          %v1130 = vrot.slane %v1128, 7
          %v1131 = vshll.u32 %v831, 16
          %v1133 = vor.u32 %v1130, %v1131
          %v1134 = vsel %vm934, %v1126, %v1133
          %v1135 = vrot.slane %v1130, 4
          %v1137 = vshrl.u32 %v832, 16
          %v1139 = vrot.slane %v1137, 7
          %v1140 = vshll.u32 %v832, 16
          %v1142 = vor.u32 %v1139, %v1140
          %v1143 = vsel %vm934, %v1135, %v1142
          %v1144 = vrot.slane %v1139, 4
          %v1146 = vshrl.u32 %v833, 16
          %v1148 = vrot.slane %v1146, 7
          %v1149 = vshll.u32 %v833, 16
          %v1151 = vor.u32 %v1148, %v1149
          %v1152 = vrot.slane %v1148, 4
          %v1154 = vshrl.u32 %v834, 16
          %v1156 = vrot.slane %v1154, 7
          %v1157 = vshll.u32 %v834, 16
          %v1159 = vor.u32 %v1156, %v1157
          %v1160 = vsel %vm934, %v1152, %v1159
          %v1161 = vrot.slane %v1156, 4
          %v1163 = vshrl.u32 %v835, 16
          %v1165 = vrot.slane %v1163, 7
          %v1166 = vshll.u32 %v835, 16
          %v1168 = vor.u32 %v1165, %v1166
          %v1169 = vsel %vm934, %v1161, %v1168
          %v1170 = vrot.slane %v1165, 4
          %v1172 = vshrl.u32 %v836, 16
          %v1174 = vrot.slane %v1172, 7
          %v1175 = vshll.u32 %v836, 16
          %v1177 = vor.u32 %v1174, %v1175
          %v1178 = vsel %vm934, %v1170, %v1177
          %v1179 = vrot.slane %v1174, 4
          %v1181 = vshrl.u32 %v837, 16
          %v1183 = vrot.slane %v1181, 7
          %v1184 = vshll.u32 %v837, 16
          %v1186 = vor.u32 %v1183, %v1184
          %v1187 = vrot.slane %v1183, 4
          %v1189 = vshrl.u32 %v838, 16
          %v1191 = vrot.slane %v1189, 7
          %v1192 = vshll.u32 %v838, 16
          %v1194 = vor.u32 %v1191, %v1192
          %v1195 = vsel %vm934, %v1187, %v1194
          %v1196 = vrot.slane %v1191, 4
          %v1198 = vshrl.u32 %v839, 16
          %v1200 = vrot.slane %v1198, 7
          %v1201 = vshll.u32 %v839, 16
          %v1203 = vor.u32 %v1200, %v1201
          %v1204 = vsel %vm934, %v1196, %v1203
          %v1205 = vrot.slane %v1200, 4
          %v1207 = vshrl.u32 %v840, 16
          %v1209 = vrot.slane %v1207, 7
          %v1210 = vshll.u32 %v840, 16
          %v1212 = vor.u32 %v1209, %v1210
          %v1213 = vsel %vm934, %v1205, %v1212
          %v1214 = vrot.slane %v1209, 4
          %v1216 = vshrl.u32 %v841, 16
          %v1218 = vrot.slane %v1216, 7
          %v1219 = vshll.u32 %v841, 16
          %v1221 = vor.u32 %v1218, %v1219
          %v1222 = vrot.slane %v1218, 4
          %v1224 = vshrl.u32 %v842, 16
          %v1226 = vrot.slane %v1224, 7
          %v1227 = vshll.u32 %v842, 16
          %v1229 = vor.u32 %v1226, %v1227
          %v1230 = vsel %vm934, %v1222, %v1229
          %v1231 = vrot.slane %v1226, 4
          %v1233 = vshrl.u32 %v843, 16
          %v1235 = vrot.slane %v1233, 7
          %v1236 = vshll.u32 %v843, 16
          %v1238 = vor.u32 %v1235, %v1236
          %v1239 = vsel %vm934, %v1231, %v1238
          %v1240 = vrot.slane %v1235, 4
          %v1242 = vshrl.u32 %v844, 16
          %v1244 = vrot.slane %v1242, 7
          %v1245 = vshll.u32 %v844, 16
          %v1247 = vor.u32 %v1244, %v1245
          %v1248 = vsel %vm934, %v1240, %v1247
          %v1249 = vrot.slane %v1244, 4
          %v1251 = vshrl.u32 %v845, 16
          %v1253 = vrot.slane %v1251, 7
          %v1254 = vshll.u32 %v845, 16
          %v1256 = vor.u32 %v1253, %v1254
          %v1257 = vrot.slane %v1253, 4
          %v1259 = vshrl.u32 %v846, 16
          %v1261 = vrot.slane %v1259, 7
          %v1262 = vshll.u32 %v846, 16
          %v1264 = vor.u32 %v1261, %v1262
          %v1265 = vsel %vm934, %v1257, %v1264
          %v1266 = vrot.slane %v1261, 4
          %v1268 = vshrl.u32 %v847, 16
          %v1270 = vrot.slane %v1268, 7
          %v1271 = vshll.u32 %v847, 16
          %v1273 = vor.u32 %v1270, %v1271
          %v1274 = vsel %vm934, %v1266, %v1273
          %v1275 = vrot.slane %v1270, 4
          %v1277 = vshrl.u32 %v848, 16
          %v1279 = vrot.slane %v1277, 7
          %v1280 = vshll.u32 %v848, 16
          %v1282 = vor.u32 %v1279, %v1280
          %v1283 = vsel %vm934, %v1275, %v1282
          %v1284 = vrot.slane %v1279, 4
          %v1286 = vshrl.u32 %v849, 16
          %v1288 = vrot.slane %v1286, 7
          %v1289 = vshll.u32 %v849, 16
          %v1291 = vor.u32 %v1288, %v1289
          %v1292 = vrot.slane %v1288, 4
          %v1294 = vshrl.u32 %v850, 16
          %v1296 = vrot.slane %v1294, 7
          %v1297 = vshll.u32 %v850, 16
          %v1299 = vor.u32 %v1296, %v1297
          %v1300 = vsel %vm934, %v1292, %v1299
          %v1301 = vrot.slane %v1296, 4
          %v1303 = vshrl.u32 %v851, 16
          %v1305 = vrot.slane %v1303, 7
          %v1306 = vshll.u32 %v851, 16
          %v1308 = vor.u32 %v1305, %v1306
          %v1309 = vsel %vm934, %v1301, %v1308
          %v1310 = vrot.slane %v1305, 4
          %v1312 = vshrl.u32 %v852, 16
          %v1314 = vrot.slane %v1312, 7
          %v1315 = vshll.u32 %v852, 16
          %v1317 = vor.u32 %v1314, %v1315
          %v1318 = vsel %vm934, %v1310, %v1317
          %v1319 = vrot.slane %v1314, 4
          %v1321 = vshrl.u32 %v853, 16
          %v1323 = vrot.slane %v1321, 7
          %v1324 = vshll.u32 %v853, 16
          %v1326 = vor.u32 %v1323, %v1324
          %v1327 = vrot.slane %v1323, 4
          %v1329 = vshrl.u32 %v854, 16
          %v1331 = vrot.slane %v1329, 7
          %v1332 = vshll.u32 %v854, 16
          %v1334 = vor.u32 %v1331, %v1332
          %v1335 = vsel %vm934, %v1327, %v1334
          %v1336 = vrot.slane %v1331, 4
          %v1338 = vshrl.u32 %v855, 16
          %v1340 = vrot.slane %v1338, 7
          %v1341 = vshll.u32 %v855, 16
          %v1343 = vor.u32 %v1340, %v1341
          %v1344 = vsel %vm934, %v1336, %v1343
          %v1345 = vrot.slane %v1340, 4
          %v1347 = vshrl.u32 %v856, 16
          %v1349 = vrot.slane %v1347, 7
          %v1350 = vshll.u32 %v856, 16
          %v1352 = vor.u32 %v1349, %v1350
          %v1353 = vsel %vm934, %v1345, %v1352
          %v1354 = vrot.slane %v1349, 4
          %v1356 = vshrl.u32 %v857, 16
          %v1358 = vrot.slane %v1356, 7
          %v1359 = vshll.u32 %v857, 16
          %v1361 = vor.u32 %v1358, %v1359
          %v1362 = vrot.slane %v1358, 4
          %v1364 = vshrl.u32 %v858, 16
          %v1366 = vrot.slane %v1364, 7
          %v1367 = vshll.u32 %v858, 16
          %v1369 = vor.u32 %v1366, %v1367
          %v1370 = vsel %vm934, %v1362, %v1369
          %v1371 = vrot.slane %v1366, 4
          %v1373 = vshrl.u32 %v859, 16
          %v1375 = vrot.slane %v1373, 7
          %v1376 = vshll.u32 %v859, 16
          %v1378 = vor.u32 %v1375, %v1376
          %v1379 = vsel %vm934, %v1371, %v1378
          %v1380 = vrot.slane %v1375, 4
          %v1382 = vshrl.u32 %v860, 16
          %v1384 = vrot.slane %v1382, 7
          %v1385 = vshll.u32 %v860, 16
          %v1387 = vor.u32 %v1384, %v1385
          %v1388 = vsel %vm934, %v1380, %v1387
          %v1389 = vrot.slane %v1384, 4
          %v1391 = vshrl.u32 %v861, 16
          %v1393 = vrot.slane %v1391, 7
          %v1394 = vshll.u32 %v861, 16
          %v1396 = vor.u32 %v1393, %v1394
          %v1397 = vrot.slane %v1393, 4
          %v1399 = vshrl.u32 %v862, 16
          %v1401 = vrot.slane %v1399, 7
          %v1402 = vshll.u32 %v862, 16
          %v1404 = vor.u32 %v1401, %v1402
          %v1405 = vsel %vm934, %v1397, %v1404
          %v1406 = vrot.slane %v1401, 4
          %v1408 = vshrl.u32 %v863, 16
          %v1410 = vrot.slane %v1408, 7
          %v1411 = vshll.u32 %v863, 16
          %v1413 = vor.u32 %v1410, %v1411
          %v1414 = vsel %vm934, %v1406, %v1413
          %v1415 = vrot.slane %v1410, 4
          %v1417 = vshrl.u32 %v864, 16
          %v1419 = vrot.slane %v1417, 7
          %v1420 = vshll.u32 %v864, 16
          %v1422 = vor.u32 %v1419, %v1420
          %v1423 = vsel %vm934, %v1415, %v1422
          %v1424 = vrot.slane %v1419, 4
          %v1426 = vshrl.u32 %v865, 16
          %v1428 = vrot.slane %v1426, 7
          %v1429 = vshll.u32 %v865, 16
          %v1431 = vor.u32 %v1428, %v1429
          %v1432 = vrot.slane %v1428, 4
          %v1434 = vshrl.u32 %v866, 16
          %v1436 = vrot.slane %v1434, 7
          %v1437 = vshll.u32 %v866, 16
          %v1439 = vor.u32 %v1436, %v1437
          %v1440 = vsel %vm934, %v1432, %v1439
          %v1441 = vrot.slane %v1436, 4
          %v1443 = vshrl.u32 %v867, 16
          %v1445 = vrot.slane %v1443, 7
          %v1446 = vshll.u32 %v867, 16
          %v1448 = vor.u32 %v1445, %v1446
          %v1449 = vsel %vm934, %v1441, %v1448
          %v1450 = vrot.slane %v1445, 4
          %v1452 = vshrl.u32 %v868, 16
          %v1454 = vrot.slane %v1452, 7
          %v1455 = vshll.u32 %v868, 16
          %v1457 = vor.u32 %v1454, %v1455
          %v1458 = vsel %vm934, %v1450, %v1457
          %v1459 = vrot.slane %v1454, 4
          %v1461 = vshrl.u32 %v869, 16
          %v1463 = vrot.slane %v1461, 7
          %v1464 = vshll.u32 %v869, 16
          %v1466 = vor.u32 %v1463, %v1464
          %v1467 = vrot.slane %v1463, 4
          %v1469 = vshrl.u32 %v870, 16
          %v1471 = vrot.slane %v1469, 7
          %v1472 = vshll.u32 %v870, 16
          %v1474 = vor.u32 %v1471, %v1472
          %v1475 = vsel %vm934, %v1467, %v1474
          %v1476 = vrot.slane %v1471, 4
          %v1478 = vshrl.u32 %v871, 16
          %v1480 = vrot.slane %v1478, 7
          %v1481 = vshll.u32 %v871, 16
          %v1483 = vor.u32 %v1480, %v1481
          %v1484 = vsel %vm934, %v1476, %v1483
          %v1485 = vrot.slane %v1480, 4
          %v1487 = vshrl.u32 %v872, 16
          %v1489 = vrot.slane %v1487, 7
          %v1490 = vshll.u32 %v872, 16
          %v1492 = vor.u32 %v1489, %v1490
          %v1493 = vsel %vm934, %v1485, %v1492
          %v1494 = vrot.slane %v1489, 4
          %v1496 = vshrl.u32 %v873, 16
          %v1498 = vrot.slane %v1496, 7
          %v1499 = vshll.u32 %v873, 16
          %v1501 = vor.u32 %v1498, %v1499
          %v1502 = vrot.slane %v1498, 4
          %v1504 = vshrl.u32 %v874, 16
          %v1506 = vrot.slane %v1504, 7
          %v1507 = vshll.u32 %v874, 16
          %v1509 = vor.u32 %v1506, %v1507
          %v1510 = vsel %vm934, %v1502, %v1509
          %v1511 = vrot.slane %v1506, 4
          %v1513 = vshrl.u32 %v875, 16
          %v1515 = vrot.slane %v1513, 7
          %v1516 = vshll.u32 %v875, 16
          %v1518 = vor.u32 %v1515, %v1516
          %v1519 = vsel %vm934, %v1511, %v1518
          %v1520 = vrot.slane %v1515, 4
          %v1522 = vshrl.u32 %v876, 16
          %v1524 = vrot.slane %v1522, 7
          %v1525 = vshll.u32 %v876, 16
          %v1527 = vor.u32 %v1524, %v1525
          %v1528 = vsel %vm934, %v1520, %v1527
          %v1529 = vrot.slane %v1524, 4
          %v1531 = vshrl.u32 %v877, 16
          %v1533 = vrot.slane %v1531, 7
          %v1534 = vshll.u32 %v877, 16
          %v1536 = vor.u32 %v1533, %v1534
          %v1537 = vrot.slane %v1533, 4
          %v1539 = vshrl.u32 %v878, 16
          %v1541 = vrot.slane %v1539, 7
          %v1542 = vshll.u32 %v878, 16
          %v1544 = vor.u32 %v1541, %v1542
          %v1545 = vsel %vm934, %v1537, %v1544
          %v1546 = vrot.slane %v1541, 4
          %v1548 = vshrl.u32 %v879, 16
          %v1550 = vrot.slane %v1548, 7
          %v1551 = vshll.u32 %v879, 16
          %v1553 = vor.u32 %v1550, %v1551
          %v1554 = vsel %vm934, %v1546, %v1553
          %v1555 = vrot.slane %v1550, 4
          %v1557 = vshrl.u32 %v880, 16
          %v1559 = vrot.slane %v1557, 7
          %v1560 = vshll.u32 %v880, 16
          %v1562 = vor.u32 %v1559, %v1560
          %v1563 = vsel %vm934, %v1555, %v1562
          %v1564 = vrot.slane %v1559, 4
          %v1566 = vshrl.u32 %v881, 16
          %v1568 = vrot.slane %v1566, 7
          %v1569 = vshll.u32 %v881, 16
          %v1571 = vor.u32 %v1568, %v1569
          %v1572 = vrot.slane %v1568, 4
          %v1574 = vshrl.u32 %v882, 16
          %v1576 = vrot.slane %v1574, 7
          %v1577 = vshll.u32 %v882, 16
          %v1579 = vor.u32 %v1576, %v1577
          %v1580 = vsel %vm934, %v1572, %v1579
          %v1581 = vrot.slane %v1576, 4
          %v1583 = vshrl.u32 %v883, 16
          %v1585 = vrot.slane %v1583, 7
          %v1586 = vshll.u32 %v883, 16
          %v1588 = vor.u32 %v1585, %v1586
          %v1589 = vsel %vm934, %v1581, %v1588
          %v1590 = vrot.slane %v1585, 4
          %v1592 = vshrl.u32 %v884, 16
          %v1594 = vrot.slane %v1592, 7
          %v1595 = vshll.u32 %v884, 16
          %v1597 = vor.u32 %v1594, %v1595
          %v1598 = vsel %vm934, %v1590, %v1597
          %v1599 = vrot.slane %v1594, 4
          %v1601 = vshrl.u32 %v885, 16
          %v1603 = vrot.slane %v1601, 7
          %v1604 = vshll.u32 %v885, 16
          %v1606 = vor.u32 %v1603, %v1604
          %v1607 = vrot.slane %v1603, 4
          %v1609 = vshrl.u32 %v886, 16
          %v1611 = vrot.slane %v1609, 7
          %v1612 = vshll.u32 %v886, 16
          %v1614 = vor.u32 %v1611, %v1612
          %v1615 = vsel %vm934, %v1607, %v1614
          %v1616 = vrot.slane %v1611, 4
          %v1618 = vshrl.u32 %v887, 16
          %v1620 = vrot.slane %v1618, 7
          %v1621 = vshll.u32 %v887, 16
          %v1623 = vor.u32 %v1620, %v1621
          %v1624 = vsel %vm934, %v1616, %v1623
          %v1625 = vrot.slane %v1620, 4
          %v1627 = vshrl.u32 %v888, 16
          %v1629 = vrot.slane %v1627, 7
          %v1630 = vshll.u32 %v888, 16
          %v1632 = vor.u32 %v1629, %v1630
          %v1633 = vsel %vm934, %v1625, %v1632
          %v1634 = vrot.slane %v1629, 4
          %v1636 = vshrl.u32 %v889, 16
          %v1638 = vrot.slane %v1636, 7
          %v1639 = vshll.u32 %v889, 16
          %v1641 = vor.u32 %v1638, %v1639
          %v1642 = vrot.slane %v1638, 4
          %v1644 = vshrl.u32 %v890, 16
          %v1646 = vrot.slane %v1644, 7
          %v1647 = vshll.u32 %v890, 16
          %v1649 = vor.u32 %v1646, %v1647
          %v1650 = vsel %vm934, %v1642, %v1649
          %v1651 = vrot.slane %v1646, 4
          %v1653 = vshrl.u32 %v891, 16
          %v1655 = vrot.slane %v1653, 7
          %v1656 = vshll.u32 %v891, 16
          %v1658 = vor.u32 %v1655, %v1656
          %v1659 = vsel %vm934, %v1651, %v1658
          %v1660 = vrot.slane %v1655, 4
          %v1662 = vshrl.u32 %v892, 16
          %v1664 = vrot.slane %v1662, 7
          %v1665 = vshll.u32 %v892, 16
          %v1667 = vor.u32 %v1664, %v1665
          %v1668 = vsel %vm934, %v1660, %v1667
          %v1669 = vrot.slane %v1664, 4
          %v1671 = vshrl.u32 %v893, 16
          %v1673 = vrot.slane %v1671, 7
          %v1674 = vshll.u32 %v893, 16
          %v1676 = vor.u32 %v1673, %v1674
          %v1677 = vrot.slane %v1673, 4
          %v1679 = vshrl.u32 %v894, 16
          %v1681 = vrot.slane %v1679, 7
          %v1682 = vshll.u32 %v894, 16
          %v1684 = vor.u32 %v1681, %v1682
          %v1685 = vsel %vm934, %v1677, %v1684
          %v1686 = vrot.slane %v1681, 4
          %v1688 = vshrl.u32 %v895, 16
          %v1690 = vrot.slane %v1688, 7
          %v1691 = vshll.u32 %v895, 16
          %v1693 = vor.u32 %v1690, %v1691
          %v1694 = vsel %vm934, %v1686, %v1693
          %v1695 = vrot.slane %v1690, 4
          %v1697 = vshrl.u32 %v896, 16
          %v1699 = vrot.slane %v1697, 7
          %v1700 = vshll.u32 %v896, 16
          %v1702 = vor.u32 %v1699, %v1700
          %v1703 = vsel %vm934, %v1695, %v1702
          %v1704 = vrot.slane %v1699, 4
          %v1706 = vshrl.u32 %v897, 16
          %v1708 = vrot.slane %v1706, 7
          %v1709 = vshll.u32 %v897, 16
          %v1711 = vor.u32 %v1708, %v1709
          %v1712 = vrot.slane %v1708, 4
          %v1714 = vshrl.u32 %v898, 16
          %v1716 = vrot.slane %v1714, 7
          %v1717 = vshll.u32 %v898, 16
          %v1719 = vor.u32 %v1716, %v1717
          %v1720 = vsel %vm934, %v1712, %v1719
          %v1721 = vrot.slane %v1716, 4
          %v1723 = vshrl.u32 %v899, 16
          %v1725 = vrot.slane %v1723, 7
          %v1726 = vshll.u32 %v899, 16
          %v1728 = vor.u32 %v1725, %v1726
          %v1729 = vsel %vm934, %v1721, %v1728
          %v1730 = vrot.slane %v1725, 4
          %v1732 = vshrl.u32 %v900, 16
          %v1734 = vrot.slane %v1732, 7
          %v1735 = vshll.u32 %v900, 16
          %v1737 = vor.u32 %v1734, %v1735
          %v1738 = vsel %vm934, %v1730, %v1737
          %v1739 = vrot.slane %v1734, 4
          %v1741 = vshrl.u32 %v901, 16
          %v1743 = vrot.slane %v1741, 7
          %v1744 = vshll.u32 %v901, 16
          %v1746 = vor.u32 %v1743, %v1744
          %v1747 = vrot.slane %v1743, 4
          %v1749 = vshrl.u32 %v902, 16
          %v1751 = vrot.slane %v1749, 7
          %v1752 = vshll.u32 %v902, 16
          %v1754 = vor.u32 %v1751, %v1752
          %v1755 = vsel %vm934, %v1747, %v1754
          %v1756 = vrot.slane %v1751, 4
          %v1758 = vshrl.u32 %v903, 16
          %v1760 = vrot.slane %v1758, 7
          %v1761 = vshll.u32 %v903, 16
          %v1763 = vor.u32 %v1760, %v1761
          %v1764 = vsel %vm934, %v1756, %v1763
          %v1765 = vrot.slane %v1760, 4
          %v1767 = vshrl.u32 %v904, 16
          %v1769 = vrot.slane %v1767, 7
          %v1770 = vshll.u32 %v904, 16
          %v1772 = vor.u32 %v1769, %v1770
          %v1773 = vsel %vm934, %v1765, %v1772
          %v1774 = vrot.slane %v1769, 4
          %v1776 = vshrl.u32 %v905, 16
          %v1778 = vrot.slane %v1776, 7
          %v1779 = vshll.u32 %v905, 16
          %v1781 = vor.u32 %v1778, %v1779
          %v1782 = vrot.slane %v1778, 4
          %v1784 = vshrl.u32 %v906, 16
          %v1786 = vrot.slane %v1784, 7
          %v1787 = vshll.u32 %v906, 16
          %v1789 = vor.u32 %v1786, %v1787
          %v1790 = vsel %vm934, %v1782, %v1789
          %v1791 = vrot.slane %v1786, 4
          %v1793 = vshrl.u32 %v907, 16
          %v1795 = vrot.slane %v1793, 7
          %v1796 = vshll.u32 %v907, 16
          %v1798 = vor.u32 %v1795, %v1796
          %v1799 = vsel %vm934, %v1791, %v1798
          %v1800 = vrot.slane %v1795, 4
          %v1802 = vshrl.u32 %v908, 16
          %v1804 = vrot.slane %v1802, 7
          %v1805 = vshll.u32 %v908, 16
          %v1807 = vor.u32 %v1804, %v1805
          %v1808 = vsel %vm934, %v1800, %v1807
          %v1809 = vrot.slane %v1804, 4
          %v1811 = vshrl.u32 %v909, 16
          %v1813 = vrot.slane %v1811, 7
          %v1814 = vshll.u32 %v909, 16
          %v1816 = vor.u32 %v1813, %v1814
          %v1817 = vrot.slane %v1813, 4
          %v1819 = vshrl.u32 %v910, 16
          %v1821 = vrot.slane %v1819, 7
          %v1822 = vshll.u32 %v910, 16
          %v1824 = vor.u32 %v1821, %v1822
          %v1825 = vsel %vm934, %v1817, %v1824
          %v1826 = vrot.slane %v1821, 4
          %v1828 = vshrl.u32 %v911, 16
          %v1830 = vrot.slane %v1828, 7
          %v1831 = vshll.u32 %v911, 16
          %v1833 = vor.u32 %v1830, %v1831
          %v1834 = vsel %vm934, %v1826, %v1833
          %v1835 = vrot.slane %v1830, 4
          %v1837 = vshrl.u32 %v912, 16
          %v1839 = vrot.slane %v1837, 7
          %v1840 = vshll.u32 %v912, 16
          %v1842 = vor.u32 %v1839, %v1840
          %v1843 = vsel %vm934, %v1835, %v1842
          %v1844 = vrot.slane %v1839, 4
          %v1846 = vshrl.u32 %v913, 16
          %v1848 = vrot.slane %v1846, 7
          %v1849 = vshll.u32 %v913, 16
          %v1851 = vor.u32 %v1848, %v1849
          %v1852 = vrot.slane %v1848, 4
          %v1854 = vshrl.u32 %v914, 16
          %v1856 = vrot.slane %v1854, 7
          %v1857 = vshll.u32 %v914, 16
          %v1859 = vor.u32 %v1856, %v1857
          %v1860 = vsel %vm934, %v1852, %v1859
          %v1861 = vrot.slane %v1856, 4
          %v1863 = vshrl.u32 %v915, 16
          %v1865 = vrot.slane %v1863, 7
          %v1866 = vshll.u32 %v915, 16
          %v1868 = vor.u32 %v1865, %v1866
          %v1869 = vsel %vm934, %v1861, %v1868
          %v1870 = vrot.slane %v1865, 4
          %v1872 = vshrl.u32 %v916, 16
          %v1874 = vrot.slane %v1872, 7
          %v1875 = vshll.u32 %v916, 16
          %v1877 = vor.u32 %v1874, %v1875
          %v1878 = vsel %vm934, %v1870, %v1877
          %v1879 = vrot.slane %v1874, 4
          %v1881 = vshrl.u32 %v917, 16
          %v1883 = vrot.slane %v1881, 7
          %v1884 = vshll.u32 %v917, 16
          %v1886 = vor.u32 %v1883, %v1884
          %v1887 = vrot.slane %v1883, 4
          %v1889 = vshrl.u32 %v918, 16
          %v1891 = vrot.slane %v1889, 7
          %v1892 = vshll.u32 %v918, 16
          %v1894 = vor.u32 %v1891, %v1892
          %v1895 = vsel %vm934, %v1887, %v1894
          %v1896 = vrot.slane %v1891, 4
          %v1898 = vshrl.u32 %v919, 16
          %v1900 = vrot.slane %v1898, 7
          %v1901 = vshll.u32 %v919, 16
          %v1903 = vor.u32 %v1900, %v1901
          %v1904 = vsel %vm934, %v1896, %v1903
          %v1905 = vrot.slane %v1900, 4
          %v1907 = vshrl.u32 %v920, 16
          %v1909 = vrot.slane %v1907, 7
          %v1910 = vshll.u32 %v920, 16
          %v1912 = vor.u32 %v1909, %v1910
          %v1913 = vsel %vm934, %v1905, %v1912
          %v1914 = vrot.slane %v1909, 4
          %v1916 = vshrl.u32 %v921, 16
          %v1918 = vrot.slane %v1916, 7
          %v1919 = vshll.u32 %v921, 16
          %v1921 = vor.u32 %v1918, %v1919
          %v1922 = vrot.slane %v1918, 4
          %v1924 = vshrl.u32 %v922, 16
          %v1926 = vrot.slane %v1924, 7
          %v1927 = vshll.u32 %v922, 16
          %v1929 = vor.u32 %v1926, %v1927
          %v1930 = vsel %vm934, %v1922, %v1929
          %v1931 = vrot.slane %v1926, 4
          %v1933 = vshrl.u32 %v923, 16
          %v1935 = vrot.slane %v1933, 7
          %v1936 = vshll.u32 %v923, 16
          %v1938 = vor.u32 %v1935, %v1936
          %v1939 = vsel %vm934, %v1931, %v1938
          %v1940 = vrot.slane %v1935, 4
          %v1942 = vshrl.u32 %v924, 16
          %v1944 = vrot.slane %v1942, 7
          %v1945 = vshll.u32 %v924, 16
          %v1947 = vor.u32 %v1944, %v1945
          %v1948 = vsel %vm934, %v1940, %v1947
          %v1949 = vrot.slane %v1944, 4
          %v1951 = vshrl.u32 %v925, 16
          %v1953 = vrot.slane %v1951, 7
          %v1954 = vshll.u32 %v925, 16
          %v1956 = vor.u32 %v1953, %v1954
          %v1957 = vrot.slane %v1953, 4
          %v1959 = vshrl.u32 %v926, 16
          %v1961 = vrot.slane %v1959, 7
          %v1962 = vshll.u32 %v926, 16
          %v1964 = vor.u32 %v1961, %v1962
          %v1965 = vsel %vm934, %v1957, %v1964
          %v1966 = vrot.slane %v1961, 4
          %v1968 = vshrl.u32 %v927, 16
          %v1970 = vrot.slane %v1968, 7
          %v1971 = vshll.u32 %v927, 16
          %v1973 = vor.u32 %v1970, %v1971
          %v1974 = vsel %vm934, %v1966, %v1973
          %v1975 = vrot.slane %v1970, 4
          %v1977 = vshrl.u32 %v928, 16
          %v1979 = vrot.slane %v1977, 7
          %v1980 = vshll.u32 %v928, 16
          %v1982 = vor.u32 %v1979, %v1980
          %v1983 = vsel %vm934, %v1975, %v1982
          %v1984 = vrot.slane %v1979, 4
          %v1986 = vshrl.u32 %v929, 16
          %v1988 = vrot.slane %v1986, 7
          %v1989 = vshll.u32 %v929, 16
          %v1991 = vor.u32 %v1988, %v1989
          %v1992 = vrot.slane %v1988, 4
          %v1994 = vshrl.u32 %v930, 16
          %v1996 = vrot.slane %v1994, 7
          %v1997 = vshll.u32 %v930, 16
          %v1999 = vor.u32 %v1996, %v1997
          %v2000 = vsel %vm934, %v1992, %v1999
          %v2001 = vrot.slane %v1996, 4
          %v2003 = vshrl.u32 %v931, 16
          %v2005 = vrot.slane %v2003, 7
          %v2006 = vshll.u32 %v931, 16
          %v2008 = vor.u32 %v2005, %v2006
          %v2009 = vsel %vm934, %v2001, %v2008
          %v2010 = vrot.slane %v2005, 4
          %v2012 = vshrl.u32 %v932, 16
          %v2014 = vrot.slane %v2012, 7
          %v2015 = vshll.u32 %v932, 16
          %v2017 = vor.u32 %v2014, %v2015
          %v2018 = vsel %vm934, %v2010, %v2017
          %v2019 = vrot.slane %v2014, 4
          %s2175 = scalar_lea.vmem [#allocation2], 20
          %vm2176 = vcmask 60416
          %vm2177 = vmand %vm2176, %vm510
          %v2178 = vld [vmem:[%s2175] sm:$0xf]
          %v2179 = vsel %vm2177, %v941, %v2178
          %2180 = vst [vmem:[%s2175] sm:$0xf] %v2179
          %2181 = vst.msk [vmem:[%s2175 + $0x4] sm:$0xf] %vm608, %v950
          %2182 = vst.msk [vmem:[%s2175 + $0x8] sm:$0xf] %vm608, %v959
          %2183 = vst.msk [vmem:[%s2175 + $0xc] sm:$0xf] %vm608, %v968
          %vm2184 = vcmask 57344
          %vm2185 = vmand %vm2184, %vm412
          %v2186 = vld [vmem:[%s2175 + $0x10] sm:$0x1]
          %v2187 = vsel %vm2185, %v969, %v2186
          %2188 = vst [vmem:[%s2175 + $0x10] sm:$0x1] %v2187
          %v2189 = vld [vmem:[%s2175 + $0x14] sm:$0xf]
          %v2190 = vsel %vm2177, %v976, %v2189
          %2191 = vst [vmem:[%s2175 + $0x14] sm:$0xf] %v2190
          %2192 = vst.msk [vmem:[%s2175 + $0x18] sm:$0xf] %vm608, %v985
          %2193 = vst.msk [vmem:[%s2175 + $0x1c] sm:$0xf] %vm608, %v994
          %2194 = vst.msk [vmem:[%s2175 + $0x20] sm:$0xf] %vm608, %v1003
          %v2195 = vld [vmem:[%s2175 + $0x24] sm:$0x1]
          %v2196 = vsel %vm2185, %v1004, %v2195
          %2197 = vst [vmem:[%s2175 + $0x24] sm:$0x1] %v2196
          %v2198 = vld [vmem:[%s2175 + $0x28] sm:$0xf]
          %v2199 = vsel %vm2177, %v1011, %v2198
          %2200 = vst [vmem:[%s2175 + $0x28] sm:$0xf] %v2199
          %2201 = vst.msk [vmem:[%s2175 + $0x2c] sm:$0xf] %vm608, %v1020
          %2202 = vst.msk [vmem:[%s2175 + $0x30] sm:$0xf] %vm608, %v1029
          %2203 = vst.msk [vmem:[%s2175 + $0x34] sm:$0xf] %vm608, %v1038
          %v2204 = vld [vmem:[%s2175 + $0x38] sm:$0x1]
          %v2205 = vsel %vm2185, %v1039, %v2204
          %2206 = vst [vmem:[%s2175 + $0x38] sm:$0x1] %v2205
          %v2207 = vld [vmem:[%s2175 + $0x3c] sm:$0xf]
          %v2208 = vsel %vm2177, %v1046, %v2207
          %2209 = vst [vmem:[%s2175 + $0x3c] sm:$0xf] %v2208
          %2210 = vst.msk [vmem:[%s2175 + $0x40] sm:$0xf] %vm608, %v1055
          %2211 = vst.msk [vmem:[%s2175 + $0x44] sm:$0xf] %vm608, %v1064
          %2212 = vst.msk [vmem:[%s2175 + $0x48] sm:$0xf] %vm608, %v1073
          %v2213 = vld [vmem:[%s2175 + $0x4c] sm:$0x1]
          %v2214 = vsel %vm2185, %v1074, %v2213
          %2215 = vst [vmem:[%s2175 + $0x4c] sm:$0x1] %v2214
          %v2216 = vld [vmem:[%s2175 + $0x50] sm:$0xf]
          %v2217 = vsel %vm2177, %v1081, %v2216
          %2218 = vst [vmem:[%s2175 + $0x50] sm:$0xf] %v2217
          %2219 = vst.msk [vmem:[%s2175 + $0x54] sm:$0xf] %vm608, %v1090
          %2220 = vst.msk [vmem:[%s2175 + $0x58] sm:$0xf] %vm608, %v1099
          %2221 = vst.msk [vmem:[%s2175 + $0x5c] sm:$0xf] %vm608, %v1108
          %v2222 = vld [vmem:[%s2175 + $0x60] sm:$0x1]
          %v2223 = vsel %vm2185, %v1109, %v2222
          %2224 = vst [vmem:[%s2175 + $0x60] sm:$0x1] %v2223
          %v2225 = vld [vmem:[%s2175 + $0x64] sm:$0xf]
          %v2226 = vsel %vm2177, %v1116, %v2225
          %2227 = vst [vmem:[%s2175 + $0x64] sm:$0xf] %v2226
          %2228 = vst.msk [vmem:[%s2175 + $0x68] sm:$0xf] %vm608, %v1125
          %2229 = vst.msk [vmem:[%s2175 + $0x6c] sm:$0xf] %vm608, %v1134
          %2230 = vst.msk [vmem:[%s2175 + $0x70] sm:$0xf] %vm608, %v1143
          %v2231 = vld [vmem:[%s2175 + $0x74] sm:$0x1]
          %v2232 = vsel %vm2185, %v1144, %v2231
          %2233 = vst [vmem:[%s2175 + $0x74] sm:$0x1] %v2232
          %v2234 = vld [vmem:[%s2175 + $0x78] sm:$0xf]
          %v2235 = vsel %vm2177, %v1151, %v2234
          %2236 = vst [vmem:[%s2175 + $0x78] sm:$0xf] %v2235
          %2237 = vst.msk [vmem:[%s2175 + $0x7c] sm:$0xf] %vm608, %v1160
          %2238 = vst.msk [vmem:[%s2175 + $0x80] sm:$0xf] %vm608, %v1169
          %2239 = vst.msk [vmem:[%s2175 + $0x84] sm:$0xf] %vm608, %v1178
          %v2240 = vld [vmem:[%s2175 + $0x88] sm:$0x1]
          %v2241 = vsel %vm2185, %v1179, %v2240
          %2242 = vst [vmem:[%s2175 + $0x88] sm:$0x1] %v2241
          %v2243 = vld [vmem:[%s2175 + $0x8c] sm:$0xf]
          %v2244 = vsel %vm2177, %v1186, %v2243
          %2245 = vst [vmem:[%s2175 + $0x8c] sm:$0xf] %v2244
          %2246 = vst.msk [vmem:[%s2175 + $0x90] sm:$0xf] %vm608, %v1195
          %2247 = vst.msk [vmem:[%s2175 + $0x94] sm:$0xf] %vm608, %v1204
          %2248 = vst.msk [vmem:[%s2175 + $0x98] sm:$0xf] %vm608, %v1213
          %v2249 = vld [vmem:[%s2175 + $0x9c] sm:$0x1]
          %v2250 = vsel %vm2185, %v1214, %v2249
          %2251 = vst [vmem:[%s2175 + $0x9c] sm:$0x1] %v2250
          %v2252 = vld [vmem:[%s2175 + $0xa0] sm:$0xf]
          %v2253 = vsel %vm2177, %v1221, %v2252
          %2254 = vst [vmem:[%s2175 + $0xa0] sm:$0xf] %v2253
          %2255 = vst.msk [vmem:[%s2175 + $0xa4] sm:$0xf] %vm608, %v1230
          %2256 = vst.msk [vmem:[%s2175 + $0xa8] sm:$0xf] %vm608, %v1239
          %2257 = vst.msk [vmem:[%s2175 + $0xac] sm:$0xf] %vm608, %v1248
          %v2258 = vld [vmem:[%s2175 + $0xb0] sm:$0x1]
          %v2259 = vsel %vm2185, %v1249, %v2258
          %2260 = vst [vmem:[%s2175 + $0xb0] sm:$0x1] %v2259
          %v2261 = vld [vmem:[%s2175 + $0xb4] sm:$0xf]
          %v2262 = vsel %vm2177, %v1256, %v2261
          %2263 = vst [vmem:[%s2175 + $0xb4] sm:$0xf] %v2262
          %2264 = vst.msk [vmem:[%s2175 + $0xb8] sm:$0xf] %vm608, %v1265
          %2265 = vst.msk [vmem:[%s2175 + $0xbc] sm:$0xf] %vm608, %v1274
          %2266 = vst.msk [vmem:[%s2175 + $0xc0] sm:$0xf] %vm608, %v1283
          %v2267 = vld [vmem:[%s2175 + $0xc4] sm:$0x1]
          %v2268 = vsel %vm2185, %v1284, %v2267
          %2269 = vst [vmem:[%s2175 + $0xc4] sm:$0x1] %v2268
          %v2270 = vld [vmem:[%s2175 + $0xc8] sm:$0xf]
          %v2271 = vsel %vm2177, %v1291, %v2270
          %2272 = vst [vmem:[%s2175 + $0xc8] sm:$0xf] %v2271
          %2273 = vst.msk [vmem:[%s2175 + $0xcc] sm:$0xf] %vm608, %v1300
          %2274 = vst.msk [vmem:[%s2175 + $0xd0] sm:$0xf] %vm608, %v1309
          %2275 = vst.msk [vmem:[%s2175 + $0xd4] sm:$0xf] %vm608, %v1318
          %v2276 = vld [vmem:[%s2175 + $0xd8] sm:$0x1]
          %v2277 = vsel %vm2185, %v1319, %v2276
          %2278 = vst [vmem:[%s2175 + $0xd8] sm:$0x1] %v2277
          %v2279 = vld [vmem:[%s2175 + $0xdc] sm:$0xf]
          %v2280 = vsel %vm2177, %v1326, %v2279
          %2281 = vst [vmem:[%s2175 + $0xdc] sm:$0xf] %v2280
          %2282 = vst.msk [vmem:[%s2175 + $0xe0] sm:$0xf] %vm608, %v1335
          %2283 = vst.msk [vmem:[%s2175 + $0xe4] sm:$0xf] %vm608, %v1344
          %2284 = vst.msk [vmem:[%s2175 + $0xe8] sm:$0xf] %vm608, %v1353
          %v2285 = vld [vmem:[%s2175 + $0xec] sm:$0x1]
          %v2286 = vsel %vm2185, %v1354, %v2285
          %2287 = vst [vmem:[%s2175 + $0xec] sm:$0x1] %v2286
          %v2288 = vld [vmem:[%s2175 + $0xf0] sm:$0xf]
          %v2289 = vsel %vm2177, %v1361, %v2288
          %2290 = vst [vmem:[%s2175 + $0xf0] sm:$0xf] %v2289
          %2291 = vst.msk [vmem:[%s2175 + $0xf4] sm:$0xf] %vm608, %v1370
          %2292 = vst.msk [vmem:[%s2175 + $0xf8] sm:$0xf] %vm608, %v1379
          %2293 = vst.msk [vmem:[%s2175 + $0xfc] sm:$0xf] %vm608, %v1388
          %v2294 = vld [vmem:[%s2175 + $0x100] sm:$0x1]
          %v2295 = vsel %vm2185, %v1389, %v2294
          %2296 = vst [vmem:[%s2175 + $0x100] sm:$0x1] %v2295
          %v2297 = vld [vmem:[%s2175 + $0x104] sm:$0xf]
          %v2298 = vsel %vm2177, %v1396, %v2297
          %2299 = vst [vmem:[%s2175 + $0x104] sm:$0xf] %v2298
          %2300 = vst.msk [vmem:[%s2175 + $0x108] sm:$0xf] %vm608, %v1405
          %2301 = vst.msk [vmem:[%s2175 + $0x10c] sm:$0xf] %vm608, %v1414
          %2302 = vst.msk [vmem:[%s2175 + $0x110] sm:$0xf] %vm608, %v1423
          %v2303 = vld [vmem:[%s2175 + $0x114] sm:$0x1]
          %v2304 = vsel %vm2185, %v1424, %v2303
          %2305 = vst [vmem:[%s2175 + $0x114] sm:$0x1] %v2304
          %v2306 = vld [vmem:[%s2175 + $0x118] sm:$0xf]
          %v2307 = vsel %vm2177, %v1431, %v2306
          %2308 = vst [vmem:[%s2175 + $0x118] sm:$0xf] %v2307
          %2309 = vst.msk [vmem:[%s2175 + $0x11c] sm:$0xf] %vm608, %v1440
          %2310 = vst.msk [vmem:[%s2175 + $0x120] sm:$0xf] %vm608, %v1449
          %2311 = vst.msk [vmem:[%s2175 + $0x124] sm:$0xf] %vm608, %v1458
          %v2312 = vld [vmem:[%s2175 + $0x128] sm:$0x1]
          %v2313 = vsel %vm2185, %v1459, %v2312
          %2314 = vst [vmem:[%s2175 + $0x128] sm:$0x1] %v2313
          %v2315 = vld [vmem:[%s2175 + $0x12c] sm:$0xf]
          %v2316 = vsel %vm2177, %v1466, %v2315
          %2317 = vst [vmem:[%s2175 + $0x12c] sm:$0xf] %v2316
          %2318 = vst.msk [vmem:[%s2175 + $0x130] sm:$0xf] %vm608, %v1475
          %2319 = vst.msk [vmem:[%s2175 + $0x134] sm:$0xf] %vm608, %v1484
          %2320 = vst.msk [vmem:[%s2175 + $0x138] sm:$0xf] %vm608, %v1493
          %v2321 = vld [vmem:[%s2175 + $0x13c] sm:$0x1]
          %v2322 = vsel %vm2185, %v1494, %v2321
          %2323 = vst [vmem:[%s2175 + $0x13c] sm:$0x1] %v2322
          %v2324 = vld [vmem:[%s2175 + $0x140] sm:$0xf]
          %v2325 = vsel %vm2177, %v1501, %v2324
          %2326 = vst [vmem:[%s2175 + $0x140] sm:$0xf] %v2325
          %2327 = vst.msk [vmem:[%s2175 + $0x144] sm:$0xf] %vm608, %v1510
          %2328 = vst.msk [vmem:[%s2175 + $0x148] sm:$0xf] %vm608, %v1519
          %2329 = vst.msk [vmem:[%s2175 + $0x14c] sm:$0xf] %vm608, %v1528
          %v2330 = vld [vmem:[%s2175 + $0x150] sm:$0x1]
          %v2331 = vsel %vm2185, %v1529, %v2330
          %2332 = vst [vmem:[%s2175 + $0x150] sm:$0x1] %v2331
          %v2333 = vld [vmem:[%s2175 + $0x154] sm:$0xf]
          %v2334 = vsel %vm2177, %v1536, %v2333
          %2335 = vst [vmem:[%s2175 + $0x154] sm:$0xf] %v2334
          %2336 = vst.msk [vmem:[%s2175 + $0x158] sm:$0xf] %vm608, %v1545
          %2337 = vst.msk [vmem:[%s2175 + $0x15c] sm:$0xf] %vm608, %v1554
          %2338 = vst.msk [vmem:[%s2175 + $0x160] sm:$0xf] %vm608, %v1563
          %v2339 = vld [vmem:[%s2175 + $0x164] sm:$0x1]
          %v2340 = vsel %vm2185, %v1564, %v2339
          %2341 = vst [vmem:[%s2175 + $0x164] sm:$0x1] %v2340
          %v2342 = vld [vmem:[%s2175 + $0x168] sm:$0xf]
          %v2343 = vsel %vm2177, %v1571, %v2342
          %2344 = vst [vmem:[%s2175 + $0x168] sm:$0xf] %v2343
          %2345 = vst.msk [vmem:[%s2175 + $0x16c] sm:$0xf] %vm608, %v1580
          %2346 = vst.msk [vmem:[%s2175 + $0x170] sm:$0xf] %vm608, %v1589
          %2347 = vst.msk [vmem:[%s2175 + $0x174] sm:$0xf] %vm608, %v1598
          %v2348 = vld [vmem:[%s2175 + $0x178] sm:$0x1]
          %v2349 = vsel %vm2185, %v1599, %v2348
          %2350 = vst [vmem:[%s2175 + $0x178] sm:$0x1] %v2349
          %v2351 = vld [vmem:[%s2175 + $0x17c] sm:$0xf]
          %v2352 = vsel %vm2177, %v1606, %v2351
          %2353 = vst [vmem:[%s2175 + $0x17c] sm:$0xf] %v2352
          %2354 = vst.msk [vmem:[%s2175 + $0x180] sm:$0xf] %vm608, %v1615
          %2355 = vst.msk [vmem:[%s2175 + $0x184] sm:$0xf] %vm608, %v1624
          %2356 = vst.msk [vmem:[%s2175 + $0x188] sm:$0xf] %vm608, %v1633
          %v2357 = vld [vmem:[%s2175 + $0x18c] sm:$0x1]
          %v2358 = vsel %vm2185, %v1634, %v2357
          %2359 = vst [vmem:[%s2175 + $0x18c] sm:$0x1] %v2358
          %v2360 = vld [vmem:[%s2175 + $0x190] sm:$0xf]
          %v2361 = vsel %vm2177, %v1641, %v2360
          %2362 = vst [vmem:[%s2175 + $0x190] sm:$0xf] %v2361
          %2363 = vst.msk [vmem:[%s2175 + $0x194] sm:$0xf] %vm608, %v1650
          %2364 = vst.msk [vmem:[%s2175 + $0x198] sm:$0xf] %vm608, %v1659
          %2365 = vst.msk [vmem:[%s2175 + $0x19c] sm:$0xf] %vm608, %v1668
          %v2366 = vld [vmem:[%s2175 + $0x1a0] sm:$0x1]
          %v2367 = vsel %vm2185, %v1669, %v2366
          %2368 = vst [vmem:[%s2175 + $0x1a0] sm:$0x1] %v2367
          %v2369 = vld [vmem:[%s2175 + $0x1a4] sm:$0xf]
          %v2370 = vsel %vm2177, %v1676, %v2369
          %2371 = vst [vmem:[%s2175 + $0x1a4] sm:$0xf] %v2370
          %2372 = vst.msk [vmem:[%s2175 + $0x1a8] sm:$0xf] %vm608, %v1685
          %2373 = vst.msk [vmem:[%s2175 + $0x1ac] sm:$0xf] %vm608, %v1694
          %2374 = vst.msk [vmem:[%s2175 + $0x1b0] sm:$0xf] %vm608, %v1703
          %v2375 = vld [vmem:[%s2175 + $0x1b4] sm:$0x1]
          %v2376 = vsel %vm2185, %v1704, %v2375
          %2377 = vst [vmem:[%s2175 + $0x1b4] sm:$0x1] %v2376
          %v2378 = vld [vmem:[%s2175 + $0x1b8] sm:$0xf]
          %v2379 = vsel %vm2177, %v1711, %v2378
          %2380 = vst [vmem:[%s2175 + $0x1b8] sm:$0xf] %v2379
          %2381 = vst.msk [vmem:[%s2175 + $0x1bc] sm:$0xf] %vm608, %v1720
          %2382 = vst.msk [vmem:[%s2175 + $0x1c0] sm:$0xf] %vm608, %v1729
          %2383 = vst.msk [vmem:[%s2175 + $0x1c4] sm:$0xf] %vm608, %v1738
          %v2384 = vld [vmem:[%s2175 + $0x1c8] sm:$0x1]
          %v2385 = vsel %vm2185, %v1739, %v2384
          %2386 = vst [vmem:[%s2175 + $0x1c8] sm:$0x1] %v2385
          %v2387 = vld [vmem:[%s2175 + $0x1cc] sm:$0xf]
          %v2388 = vsel %vm2177, %v1746, %v2387
          %2389 = vst [vmem:[%s2175 + $0x1cc] sm:$0xf] %v2388
          %2390 = vst.msk [vmem:[%s2175 + $0x1d0] sm:$0xf] %vm608, %v1755
          %2391 = vst.msk [vmem:[%s2175 + $0x1d4] sm:$0xf] %vm608, %v1764
          %2392 = vst.msk [vmem:[%s2175 + $0x1d8] sm:$0xf] %vm608, %v1773
          %v2393 = vld [vmem:[%s2175 + $0x1dc] sm:$0x1]
          %v2394 = vsel %vm2185, %v1774, %v2393
          %2395 = vst [vmem:[%s2175 + $0x1dc] sm:$0x1] %v2394
          %v2396 = vld [vmem:[%s2175 + $0x1e0] sm:$0xf]
          %v2397 = vsel %vm2177, %v1781, %v2396
          %2398 = vst [vmem:[%s2175 + $0x1e0] sm:$0xf] %v2397
          %2399 = vst.msk [vmem:[%s2175 + $0x1e4] sm:$0xf] %vm608, %v1790
          %2400 = vst.msk [vmem:[%s2175 + $0x1e8] sm:$0xf] %vm608, %v1799
          %2401 = vst.msk [vmem:[%s2175 + $0x1ec] sm:$0xf] %vm608, %v1808
          %v2402 = vld [vmem:[%s2175 + $0x1f0] sm:$0x1]
          %v2403 = vsel %vm2185, %v1809, %v2402
          %2404 = vst [vmem:[%s2175 + $0x1f0] sm:$0x1] %v2403
          %v2405 = vld [vmem:[%s2175 + $0x1f4] sm:$0xf]
          %v2406 = vsel %vm2177, %v1816, %v2405
          %2407 = vst [vmem:[%s2175 + $0x1f4] sm:$0xf] %v2406
          %2408 = vst.msk [vmem:[%s2175 + $0x1f8] sm:$0xf] %vm608, %v1825
          %2409 = vst.msk [vmem:[%s2175 + $0x1fc] sm:$0xf] %vm608, %v1834
          %2410 = vst.msk [vmem:[%s2175 + $0x200] sm:$0xf] %vm608, %v1843
          %v2411 = vld [vmem:[%s2175 + $0x204] sm:$0x1]
          %v2412 = vsel %vm2185, %v1844, %v2411
          %2413 = vst [vmem:[%s2175 + $0x204] sm:$0x1] %v2412
          %v2414 = vld [vmem:[%s2175 + $0x208] sm:$0xf]
          %v2415 = vsel %vm2177, %v1851, %v2414
          %2416 = vst [vmem:[%s2175 + $0x208] sm:$0xf] %v2415
          %2417 = vst.msk [vmem:[%s2175 + $0x20c] sm:$0xf] %vm608, %v1860
          %2418 = vst.msk [vmem:[%s2175 + $0x210] sm:$0xf] %vm608, %v1869
          %2419 = vst.msk [vmem:[%s2175 + $0x214] sm:$0xf] %vm608, %v1878
          %v2420 = vld [vmem:[%s2175 + $0x218] sm:$0x1]
          %v2421 = vsel %vm2185, %v1879, %v2420
          %2422 = vst [vmem:[%s2175 + $0x218] sm:$0x1] %v2421
          %v2423 = vld [vmem:[%s2175 + $0x21c] sm:$0xf]
          %v2424 = vsel %vm2177, %v1886, %v2423
          %2425 = vst [vmem:[%s2175 + $0x21c] sm:$0xf] %v2424
          %2426 = vst.msk [vmem:[%s2175 + $0x220] sm:$0xf] %vm608, %v1895
          %2427 = vst.msk [vmem:[%s2175 + $0x224] sm:$0xf] %vm608, %v1904
          %2428 = vst.msk [vmem:[%s2175 + $0x228] sm:$0xf] %vm608, %v1913
          %v2429 = vld [vmem:[%s2175 + $0x22c] sm:$0x1]
          %v2430 = vsel %vm2185, %v1914, %v2429
          %2431 = vst [vmem:[%s2175 + $0x22c] sm:$0x1] %v2430
          %v2432 = vld [vmem:[%s2175 + $0x230] sm:$0xf]
          %v2433 = vsel %vm2177, %v1921, %v2432
          %2434 = vst [vmem:[%s2175 + $0x230] sm:$0xf] %v2433
          %2435 = vst.msk [vmem:[%s2175 + $0x234] sm:$0xf] %vm608, %v1930
          %2436 = vst.msk [vmem:[%s2175 + $0x238] sm:$0xf] %vm608, %v1939
          %2437 = vst.msk [vmem:[%s2175 + $0x23c] sm:$0xf] %vm608, %v1948
          %v2438 = vld [vmem:[%s2175 + $0x240] sm:$0x1]
          %v2439 = vsel %vm2185, %v1949, %v2438
          %2440 = vst [vmem:[%s2175 + $0x240] sm:$0x1] %v2439
          %v2441 = vld [vmem:[%s2175 + $0x244] sm:$0xf]
          %v2442 = vsel %vm2177, %v1956, %v2441
          %2443 = vst [vmem:[%s2175 + $0x244] sm:$0xf] %v2442
          %2444 = vst.msk [vmem:[%s2175 + $0x248] sm:$0xf] %vm608, %v1965
          %2445 = vst.msk [vmem:[%s2175 + $0x24c] sm:$0xf] %vm608, %v1974
          %2446 = vst.msk [vmem:[%s2175 + $0x250] sm:$0xf] %vm608, %v1983
          %v2447 = vld [vmem:[%s2175 + $0x254] sm:$0x1]
          %v2448 = vsel %vm2185, %v1984, %v2447
          %2449 = vst [vmem:[%s2175 + $0x254] sm:$0x1] %v2448
          %v2450 = vld [vmem:[%s2175 + $0x258] sm:$0xf]
          %v2451 = vsel %vm2177, %v1991, %v2450
          %2452 = vst [vmem:[%s2175 + $0x258] sm:$0xf] %v2451
          %2453 = vst.msk [vmem:[%s2175 + $0x25c] sm:$0xf] %vm608, %v2000
          %2454 = vst.msk [vmem:[%s2175 + $0x260] sm:$0xf] %vm608, %v2009
          %2455 = vst.msk [vmem:[%s2175 + $0x264] sm:$0xf] %vm608, %v2018
          %v2456 = vld [vmem:[%s2175 + $0x268] sm:$0x1]
          %v2457 = vsel %vm2185, %v2019, %v2456
          %2458 = vst [vmem:[%s2175 + $0x268] sm:$0x1] %v2457
          %v2461 = vunpack.c.l.b16 %v409
          %v2462 = vunpack.c.h.b16 %v409
          %v2463 = vunpack.c.l.b16 %v410
          %v2464 = vunpack.c.h.b16 %v410
          %v2465 = vpack.c.b16 %v2461, %v2461
          %v2466 = vpack.c.b16 %v2462, %v2462
          %v2467 = vpack.c.b16 %v2463, %v2463
          %v2468 = vpack.c.b16 %v2464, %v2464
          %v2470 = vshrl.u32 %v2465, 16
          %v2472 = vrot.slane %v2470, 7
          %v2473 = vshll.u32 %v2465, 16
          %v2475 = vor.u32 %v2472, %v2473
          %v2476 = vrot.slane %v2472, 4
          %v2478 = vshrl.u32 %v2466, 16
          %v2480 = vrot.slane %v2478, 7
          %v2481 = vshll.u32 %v2466, 16
          %v2483 = vor.u32 %v2480, %v2481
          %v2484 = vsel %vm934, %v2476, %v2483
          %v2485 = vrot.slane %v2480, 4
          %v2487 = vshrl.u32 %v2467, 16
          %v2489 = vrot.slane %v2487, 7
          %v2490 = vshll.u32 %v2467, 16
          %v2492 = vor.u32 %v2489, %v2490
          %v2493 = vsel %vm934, %v2485, %v2492
          %v2494 = vrot.slane %v2489, 4
          %v2496 = vshrl.u32 %v2468, 16
          %v2498 = vrot.slane %v2496, 7
          %v2499 = vshll.u32 %v2468, 16
          %v2501 = vor.u32 %v2498, %v2499
          %v2502 = vsel %vm934, %v2494, %v2501
          %v2503 = vrot.slane %v2498, 4
          %2504 = vrot.lane.b32.xlu0 %v941, 8
          %v2505 = vpop.permute.xlu0 %2504
          %2506 = vrot.lane.b32.xlu0 %v950, 8
          %v2507 = vpop.permute.xlu0 %2506
          %2508 = vrot.lane.b32.xlu0 %v959, 8
          %v2509 = vpop.permute.xlu0 %2508
          %2510 = vrot.lane.b32.xlu0 %v968, 8
          %v2511 = vpop.permute.xlu0 %2510
          %2512 = vrot.lane.b32.xlu0 %v969, 8
          %v2513 = vpop.permute.xlu0 %2512
          %2514 = vrot.lane.b32.xlu0 %v976, 8
          %v2515 = vpop.permute.xlu0 %2514
          %2516 = vrot.lane.b32.xlu0 %v985, 8
          %v2517 = vpop.permute.xlu0 %2516
          %2518 = vrot.lane.b32.xlu0 %v994, 8
          %v2519 = vpop.permute.xlu0 %2518
          %2520 = vrot.lane.b32.xlu0 %v1003, 8
          %v2521 = vpop.permute.xlu0 %2520
          %2522 = vrot.lane.b32.xlu0 %v1004, 8
          %v2523 = vpop.permute.xlu0 %2522
          %2524 = vrot.lane.b32.xlu0 %v1011, 8
          %v2525 = vpop.permute.xlu0 %2524
          %2526 = vrot.lane.b32.xlu0 %v1020, 8
          %v2527 = vpop.permute.xlu0 %2526
          %2528 = vrot.lane.b32.xlu0 %v1029, 8
          %v2529 = vpop.permute.xlu0 %2528
          %2530 = vrot.lane.b32.xlu0 %v1038, 8
          %v2531 = vpop.permute.xlu0 %2530
          %2532 = vrot.lane.b32.xlu0 %v1039, 8
          %v2533 = vpop.permute.xlu0 %2532
          %2534 = vrot.lane.b32.xlu0 %v1046, 8
          %v2535 = vpop.permute.xlu0 %2534
          %2536 = vrot.lane.b32.xlu0 %v1055, 8
          %v2537 = vpop.permute.xlu0 %2536
          %2538 = vrot.lane.b32.xlu0 %v1064, 8
          %v2539 = vpop.permute.xlu0 %2538
          %2540 = vrot.lane.b32.xlu0 %v1073, 8
          %v2541 = vpop.permute.xlu0 %2540
          %2542 = vrot.lane.b32.xlu0 %v1074, 8
          %v2543 = vpop.permute.xlu0 %2542
          %2544 = vrot.lane.b32.xlu0 %v1081, 8
          %v2545 = vpop.permute.xlu0 %2544
          %2546 = vrot.lane.b32.xlu0 %v1090, 8
          %v2547 = vpop.permute.xlu0 %2546
          %2548 = vrot.lane.b32.xlu0 %v1099, 8
          %v2549 = vpop.permute.xlu0 %2548
          %2550 = vrot.lane.b32.xlu0 %v1108, 8
          %v2551 = vpop.permute.xlu0 %2550
          %2552 = vrot.lane.b32.xlu0 %v1109, 8
          %v2553 = vpop.permute.xlu0 %2552
          %2554 = vrot.lane.b32.xlu0 %v1116, 8
          %v2555 = vpop.permute.xlu0 %2554
          %2556 = vrot.lane.b32.xlu0 %v1125, 8
          %v2557 = vpop.permute.xlu0 %2556
          %2558 = vrot.lane.b32.xlu0 %v1134, 8
          %v2559 = vpop.permute.xlu0 %2558
          %2560 = vrot.lane.b32.xlu0 %v1143, 8
          %v2561 = vpop.permute.xlu0 %2560
          %2562 = vrot.lane.b32.xlu0 %v1144, 8
          %v2563 = vpop.permute.xlu0 %2562
          %2564 = vrot.lane.b32.xlu0 %v1151, 8
          %v2565 = vpop.permute.xlu0 %2564
          %2566 = vrot.lane.b32.xlu0 %v1160, 8
          %v2567 = vpop.permute.xlu0 %2566
          %2568 = vrot.lane.b32.xlu0 %v1169, 8
          %v2569 = vpop.permute.xlu0 %2568
          %2570 = vrot.lane.b32.xlu0 %v1178, 8
          %v2571 = vpop.permute.xlu0 %2570
          %2572 = vrot.lane.b32.xlu0 %v1179, 8
          %v2573 = vpop.permute.xlu0 %2572
          %2574 = vrot.lane.b32.xlu0 %v1186, 8
          %v2575 = vpop.permute.xlu0 %2574
          %2576 = vrot.lane.b32.xlu0 %v1195, 8
          %v2577 = vpop.permute.xlu0 %2576
          %2578 = vrot.lane.b32.xlu0 %v1204, 8
          %v2579 = vpop.permute.xlu0 %2578
          %2580 = vrot.lane.b32.xlu0 %v1213, 8
          %v2581 = vpop.permute.xlu0 %2580
          %2582 = vrot.lane.b32.xlu0 %v1214, 8
          %v2583 = vpop.permute.xlu0 %2582
          %2584 = vrot.lane.b32.xlu0 %v1221, 8
          %v2585 = vpop.permute.xlu0 %2584
          %2586 = vrot.lane.b32.xlu0 %v1230, 8
          %v2587 = vpop.permute.xlu0 %2586
          %2588 = vrot.lane.b32.xlu0 %v1239, 8
          %v2589 = vpop.permute.xlu0 %2588
          %2590 = vrot.lane.b32.xlu0 %v1248, 8
          %v2591 = vpop.permute.xlu0 %2590
          %2592 = vrot.lane.b32.xlu0 %v1249, 8
          %v2593 = vpop.permute.xlu0 %2592
          %2594 = vrot.lane.b32.xlu0 %v1256, 8
          %v2595 = vpop.permute.xlu0 %2594
          %2596 = vrot.lane.b32.xlu0 %v1265, 8
          %v2597 = vpop.permute.xlu0 %2596
          %2598 = vrot.lane.b32.xlu0 %v1274, 8
          %v2599 = vpop.permute.xlu0 %2598
          %2600 = vrot.lane.b32.xlu0 %v1283, 8
          %v2601 = vpop.permute.xlu0 %2600
          %2602 = vrot.lane.b32.xlu0 %v1284, 8
          %v2603 = vpop.permute.xlu0 %2602
          %2604 = vrot.lane.b32.xlu0 %v1291, 8
          %v2605 = vpop.permute.xlu0 %2604
          %2606 = vrot.lane.b32.xlu0 %v1300, 8
          %v2607 = vpop.permute.xlu0 %2606
          %2608 = vrot.lane.b32.xlu0 %v1309, 8
          %v2609 = vpop.permute.xlu0 %2608
          %2610 = vrot.lane.b32.xlu0 %v1318, 8
          %v2611 = vpop.permute.xlu0 %2610
          %2612 = vrot.lane.b32.xlu0 %v1319, 8
          %v2613 = vpop.permute.xlu0 %2612
          %2614 = vrot.lane.b32.xlu0 %v1326, 8
          %v2615 = vpop.permute.xlu0 %2614
          %2616 = vrot.lane.b32.xlu0 %v1335, 8
          %v2617 = vpop.permute.xlu0 %2616
          %2618 = vrot.lane.b32.xlu0 %v1344, 8
          %v2619 = vpop.permute.xlu0 %2618
          %2620 = vrot.lane.b32.xlu0 %v1353, 8
          %v2621 = vpop.permute.xlu0 %2620
          %2622 = vrot.lane.b32.xlu0 %v1354, 8
          %v2623 = vpop.permute.xlu0 %2622
          %2624 = vrot.lane.b32.xlu0 %v1361, 8
          %v2625 = vpop.permute.xlu0 %2624
          %2626 = vrot.lane.b32.xlu0 %v1370, 8
          %v2627 = vpop.permute.xlu0 %2626
          %2628 = vrot.lane.b32.xlu0 %v1379, 8
          %v2629 = vpop.permute.xlu0 %2628
          %2630 = vrot.lane.b32.xlu0 %v1388, 8
          %v2631 = vpop.permute.xlu0 %2630
          %2632 = vrot.lane.b32.xlu0 %v1389, 8
          %v2633 = vpop.permute.xlu0 %2632
          %2634 = vrot.lane.b32.xlu0 %v1396, 8
          %v2635 = vpop.permute.xlu0 %2634
          %2636 = vrot.lane.b32.xlu0 %v1405, 8
          %v2637 = vpop.permute.xlu0 %2636
          %2638 = vrot.lane.b32.xlu0 %v1414, 8
          %v2639 = vpop.permute.xlu0 %2638
          %2640 = vrot.lane.b32.xlu0 %v1423, 8
          %v2641 = vpop.permute.xlu0 %2640
          %2642 = vrot.lane.b32.xlu0 %v1424, 8
          %v2643 = vpop.permute.xlu0 %2642
          %2644 = vrot.lane.b32.xlu0 %v1431, 8
          %v2645 = vpop.permute.xlu0 %2644
          %2646 = vrot.lane.b32.xlu0 %v1440, 8
          %v2647 = vpop.permute.xlu0 %2646
          %2648 = vrot.lane.b32.xlu0 %v1449, 8
          %v2649 = vpop.permute.xlu0 %2648
          %2650 = vrot.lane.b32.xlu0 %v1458, 8
          %v2651 = vpop.permute.xlu0 %2650
          %2652 = vrot.lane.b32.xlu0 %v1459, 8
          %v2653 = vpop.permute.xlu0 %2652
          %2654 = vrot.lane.b32.xlu0 %v1466, 8
          %v2655 = vpop.permute.xlu0 %2654
          %2656 = vrot.lane.b32.xlu0 %v1475, 8
          %v2657 = vpop.permute.xlu0 %2656
          %2658 = vrot.lane.b32.xlu0 %v1484, 8
          %v2659 = vpop.permute.xlu0 %2658
          %2660 = vrot.lane.b32.xlu0 %v1493, 8
          %v2661 = vpop.permute.xlu0 %2660
          %2662 = vrot.lane.b32.xlu0 %v1494, 8
          %v2663 = vpop.permute.xlu0 %2662
          %2664 = vrot.lane.b32.xlu0 %v1501, 8
          %v2665 = vpop.permute.xlu0 %2664
          %2666 = vrot.lane.b32.xlu0 %v1510, 8
          %v2667 = vpop.permute.xlu0 %2666
          %2668 = vrot.lane.b32.xlu0 %v1519, 8
          %v2669 = vpop.permute.xlu0 %2668
          %2670 = vrot.lane.b32.xlu0 %v1528, 8
          %v2671 = vpop.permute.xlu0 %2670
          %2672 = vrot.lane.b32.xlu0 %v1529, 8
          %v2673 = vpop.permute.xlu0 %2672
          %2674 = vrot.lane.b32.xlu0 %v1536, 8
          %v2675 = vpop.permute.xlu0 %2674
          %2676 = vrot.lane.b32.xlu0 %v1545, 8
          %v2677 = vpop.permute.xlu0 %2676
          %2678 = vrot.lane.b32.xlu0 %v1554, 8
          %v2679 = vpop.permute.xlu0 %2678
          %2680 = vrot.lane.b32.xlu0 %v1563, 8
          %v2681 = vpop.permute.xlu0 %2680
          %2682 = vrot.lane.b32.xlu0 %v1564, 8
          %v2683 = vpop.permute.xlu0 %2682
          %2684 = vrot.lane.b32.xlu0 %v1571, 8
          %v2685 = vpop.permute.xlu0 %2684
          %2686 = vrot.lane.b32.xlu0 %v1580, 8
          %v2687 = vpop.permute.xlu0 %2686
          %2688 = vrot.lane.b32.xlu0 %v1589, 8
          %v2689 = vpop.permute.xlu0 %2688
          %2690 = vrot.lane.b32.xlu0 %v1598, 8
          %v2691 = vpop.permute.xlu0 %2690
          %2692 = vrot.lane.b32.xlu0 %v1599, 8
          %v2693 = vpop.permute.xlu0 %2692
          %2694 = vrot.lane.b32.xlu0 %v1606, 8
          %v2695 = vpop.permute.xlu0 %2694
          %2696 = vrot.lane.b32.xlu0 %v1615, 8
          %v2697 = vpop.permute.xlu0 %2696
          %2698 = vrot.lane.b32.xlu0 %v1624, 8
          %v2699 = vpop.permute.xlu0 %2698
          %2700 = vrot.lane.b32.xlu0 %v1633, 8
          %v2701 = vpop.permute.xlu0 %2700
          %2702 = vrot.lane.b32.xlu0 %v1634, 8
          %v2703 = vpop.permute.xlu0 %2702
          %2704 = vrot.lane.b32.xlu0 %v1641, 8
          %v2705 = vpop.permute.xlu0 %2704
          %2706 = vrot.lane.b32.xlu0 %v1650, 8
          %v2707 = vpop.permute.xlu0 %2706
          %2708 = vrot.lane.b32.xlu0 %v1659, 8
          %v2709 = vpop.permute.xlu0 %2708
          %2710 = vrot.lane.b32.xlu0 %v1668, 8
          %v2711 = vpop.permute.xlu0 %2710
          %2712 = vrot.lane.b32.xlu0 %v1669, 8
          %v2713 = vpop.permute.xlu0 %2712
          %2714 = vrot.lane.b32.xlu0 %v1676, 8
          %v2715 = vpop.permute.xlu0 %2714
          %2716 = vrot.lane.b32.xlu0 %v1685, 8
          %v2717 = vpop.permute.xlu0 %2716
          %2718 = vrot.lane.b32.xlu0 %v1694, 8
          %v2719 = vpop.permute.xlu0 %2718
          %2720 = vrot.lane.b32.xlu0 %v1703, 8
          %v2721 = vpop.permute.xlu0 %2720
          %2722 = vrot.lane.b32.xlu0 %v1704, 8
          %v2723 = vpop.permute.xlu0 %2722
          %2724 = vrot.lane.b32.xlu0 %v1711, 8
          %v2725 = vpop.permute.xlu0 %2724
          %2726 = vrot.lane.b32.xlu0 %v1720, 8
          %v2727 = vpop.permute.xlu0 %2726
          %2728 = vrot.lane.b32.xlu0 %v1729, 8
          %v2729 = vpop.permute.xlu0 %2728
          %2730 = vrot.lane.b32.xlu0 %v1738, 8
          %v2731 = vpop.permute.xlu0 %2730
          %2732 = vrot.lane.b32.xlu0 %v1739, 8
          %v2733 = vpop.permute.xlu0 %2732
          %2734 = vrot.lane.b32.xlu0 %v1746, 8
          %v2735 = vpop.permute.xlu0 %2734
          %2736 = vrot.lane.b32.xlu0 %v1755, 8
          %v2737 = vpop.permute.xlu0 %2736
          %2738 = vrot.lane.b32.xlu0 %v1764, 8
          %v2739 = vpop.permute.xlu0 %2738
          %2740 = vrot.lane.b32.xlu0 %v1773, 8
          %v2741 = vpop.permute.xlu0 %2740
          %2742 = vrot.lane.b32.xlu0 %v1774, 8
          %v2743 = vpop.permute.xlu0 %2742
          %2744 = vrot.lane.b32.xlu0 %v1781, 8
          %v2745 = vpop.permute.xlu0 %2744
          %2746 = vrot.lane.b32.xlu0 %v1790, 8
          %v2747 = vpop.permute.xlu0 %2746
          %2748 = vrot.lane.b32.xlu0 %v1799, 8
          %v2749 = vpop.permute.xlu0 %2748
          %2750 = vrot.lane.b32.xlu0 %v1808, 8
          %v2751 = vpop.permute.xlu0 %2750
          %2752 = vrot.lane.b32.xlu0 %v1809, 8
          %v2753 = vpop.permute.xlu0 %2752
          %2754 = vrot.lane.b32.xlu0 %v1816, 8
          %v2755 = vpop.permute.xlu0 %2754
          %2756 = vrot.lane.b32.xlu0 %v1825, 8
          %v2757 = vpop.permute.xlu0 %2756
          %2758 = vrot.lane.b32.xlu0 %v1834, 8
          %v2759 = vpop.permute.xlu0 %2758
          %2760 = vrot.lane.b32.xlu0 %v1843, 8
          %v2761 = vpop.permute.xlu0 %2760
          %2762 = vrot.lane.b32.xlu0 %v1844, 8
          %v2763 = vpop.permute.xlu0 %2762
          %2764 = vrot.lane.b32.xlu0 %v1851, 8
          %v2765 = vpop.permute.xlu0 %2764
          %2766 = vrot.lane.b32.xlu0 %v1860, 8
          %v2767 = vpop.permute.xlu0 %2766
          %2768 = vrot.lane.b32.xlu0 %v1869, 8
          %v2769 = vpop.permute.xlu0 %2768
          %2770 = vrot.lane.b32.xlu0 %v1878, 8
          %v2771 = vpop.permute.xlu0 %2770
          %2772 = vrot.lane.b32.xlu0 %v1879, 8
          %v2773 = vpop.permute.xlu0 %2772
          %2774 = vrot.lane.b32.xlu0 %v1886, 8
          %v2775 = vpop.permute.xlu0 %2774
          %2776 = vrot.lane.b32.xlu0 %v1895, 8
          %v2777 = vpop.permute.xlu0 %2776
          %2778 = vrot.lane.b32.xlu0 %v1904, 8
          %v2779 = vpop.permute.xlu0 %2778
          %2780 = vrot.lane.b32.xlu0 %v1913, 8
          %v2781 = vpop.permute.xlu0 %2780
          %2782 = vrot.lane.b32.xlu0 %v1914, 8
          %v2783 = vpop.permute.xlu0 %2782
          %2784 = vrot.lane.b32.xlu0 %v1921, 8
          %v2785 = vpop.permute.xlu0 %2784
          %2786 = vrot.lane.b32.xlu0 %v1930, 8
          %v2787 = vpop.permute.xlu0 %2786
          %2788 = vrot.lane.b32.xlu0 %v1939, 8
          %v2789 = vpop.permute.xlu0 %2788
          %2790 = vrot.lane.b32.xlu0 %v1948, 8
          %v2791 = vpop.permute.xlu0 %2790
          %2792 = vrot.lane.b32.xlu0 %v1949, 8
          %v2793 = vpop.permute.xlu0 %2792
          %2794 = vrot.lane.b32.xlu0 %v1956, 8
          %v2795 = vpop.permute.xlu0 %2794
          %2796 = vrot.lane.b32.xlu0 %v1965, 8
          %v2797 = vpop.permute.xlu0 %2796
          %2798 = vrot.lane.b32.xlu0 %v1974, 8
          %v2799 = vpop.permute.xlu0 %2798
          %2800 = vrot.lane.b32.xlu0 %v1983, 8
          %v2801 = vpop.permute.xlu0 %2800
          %2802 = vrot.lane.b32.xlu0 %v1984, 8
          %v2803 = vpop.permute.xlu0 %2802
          %2804 = vrot.lane.b32.xlu0 %v1991, 8
          %v2805 = vpop.permute.xlu0 %2804
          %2806 = vrot.lane.b32.xlu0 %v2000, 8
          %v2807 = vpop.permute.xlu0 %2806
          %2808 = vrot.lane.b32.xlu0 %v2009, 8
          %v2809 = vpop.permute.xlu0 %2808
          %2810 = vrot.lane.b32.xlu0 %v2018, 8
          %v2811 = vpop.permute.xlu0 %2810
          %2812 = vrot.lane.b32.xlu0 %v2019, 8
          %v2813 = vpop.permute.xlu0 %2812
          %2814 = vrot.lane.b32.xlu0 %v2475, 8
          %v2815 = vpop.permute.xlu0 %2814
          %2816 = vrot.lane.b32.xlu0 %v2484, 8
          %v2817 = vpop.permute.xlu0 %2816
          %2818 = vrot.lane.b32.xlu0 %v2493, 8
          %v2819 = vpop.permute.xlu0 %2818
          %2820 = vrot.lane.b32.xlu0 %v2502, 8
          %v2821 = vpop.permute.xlu0 %2820
          %2822 = vrot.lane.b32.xlu0 %v2503, 8
          %v2823 = vpop.permute.xlu0 %2822
          %vm2984 = vcmask 126016
          %vm2985 = vmand %vm2984, %vm510
          %v2986 = vld [vmem:[#allocation2] sm:$0xf]
          %v2987 = vsel %vm2985, %v2505, %v2986
          %2988 = vst [vmem:[#allocation2] sm:$0xf] %v2987
          %vm2989 = vcmask 126016
          %2990 = vst.msk [vmem:[#allocation2 + $0x4] sm:$0xf] %vm2989, %v2507
          %2991 = vst.msk [vmem:[#allocation2 + $0x8] sm:$0xf] %vm2989, %v2509
          %2992 = vst.msk [vmem:[#allocation2 + $0xc] sm:$0xf] %vm2989, %v2511
          %vm2993 = vcmask 122944
          %vm2994 = vmand %vm2993, %vm412
          %v2995 = vld [vmem:[#allocation2 + $0x10] sm:$0x1]
          %v2996 = vsel %vm2994, %v2513, %v2995
          %2997 = vst [vmem:[#allocation2 + $0x10] sm:$0x1] %v2996
          %v2998 = vld [vmem:[#allocation2 + $0x14] sm:$0xf]
          %v2999 = vsel %vm2985, %v2515, %v2998
          %3000 = vst [vmem:[#allocation2 + $0x14] sm:$0xf] %v2999
          %3001 = vst.msk [vmem:[#allocation2 + $0x18] sm:$0xf] %vm2989, %v2517
          %3002 = vst.msk [vmem:[#allocation2 + $0x1c] sm:$0xf] %vm2989, %v2519
          %3003 = vst.msk [vmem:[#allocation2 + $0x20] sm:$0xf] %vm2989, %v2521
          %v3004 = vld [vmem:[#allocation2 + $0x24] sm:$0x1]
          %v3005 = vsel %vm2994, %v2523, %v3004
          %3006 = vst [vmem:[#allocation2 + $0x24] sm:$0x1] %v3005
          %v3007 = vld [vmem:[#allocation2 + $0x28] sm:$0xf]
          %v3008 = vsel %vm2985, %v2525, %v3007
          %3009 = vst [vmem:[#allocation2 + $0x28] sm:$0xf] %v3008
          %3010 = vst.msk [vmem:[#allocation2 + $0x2c] sm:$0xf] %vm2989, %v2527
          %3011 = vst.msk [vmem:[#allocation2 + $0x30] sm:$0xf] %vm2989, %v2529
          %3012 = vst.msk [vmem:[#allocation2 + $0x34] sm:$0xf] %vm2989, %v2531
          %v3013 = vld [vmem:[#allocation2 + $0x38] sm:$0x1]
          %v3014 = vsel %vm2994, %v2533, %v3013
          %3015 = vst [vmem:[#allocation2 + $0x38] sm:$0x1] %v3014
          %v3016 = vld [vmem:[#allocation2 + $0x3c] sm:$0xf]
          %v3017 = vsel %vm2985, %v2535, %v3016
          %3018 = vst [vmem:[#allocation2 + $0x3c] sm:$0xf] %v3017
          %3019 = vst.msk [vmem:[#allocation2 + $0x40] sm:$0xf] %vm2989, %v2537
          %3020 = vst.msk [vmem:[#allocation2 + $0x44] sm:$0xf] %vm2989, %v2539
          %3021 = vst.msk [vmem:[#allocation2 + $0x48] sm:$0xf] %vm2989, %v2541
          %v3022 = vld [vmem:[#allocation2 + $0x4c] sm:$0x1]
          %v3023 = vsel %vm2994, %v2543, %v3022
          %3024 = vst [vmem:[#allocation2 + $0x4c] sm:$0x1] %v3023
          %v3025 = vld [vmem:[#allocation2 + $0x50] sm:$0xf]
          %v3026 = vsel %vm2985, %v2545, %v3025
          %3027 = vst [vmem:[#allocation2 + $0x50] sm:$0xf] %v3026
          %3028 = vst.msk [vmem:[#allocation2 + $0x54] sm:$0xf] %vm2989, %v2547
          %3029 = vst.msk [vmem:[#allocation2 + $0x58] sm:$0xf] %vm2989, %v2549
          %3030 = vst.msk [vmem:[#allocation2 + $0x5c] sm:$0xf] %vm2989, %v2551
          %v3031 = vld [vmem:[#allocation2 + $0x60] sm:$0x1]
          %v3032 = vsel %vm2994, %v2553, %v3031
          %3033 = vst [vmem:[#allocation2 + $0x60] sm:$0x1] %v3032
          %v3034 = vld [vmem:[#allocation2 + $0x64] sm:$0xf]
          %v3035 = vsel %vm2985, %v2555, %v3034
          %3036 = vst [vmem:[#allocation2 + $0x64] sm:$0xf] %v3035
          %3037 = vst.msk [vmem:[#allocation2 + $0x68] sm:$0xf] %vm2989, %v2557
          %3038 = vst.msk [vmem:[#allocation2 + $0x6c] sm:$0xf] %vm2989, %v2559
          %3039 = vst.msk [vmem:[#allocation2 + $0x70] sm:$0xf] %vm2989, %v2561
          %v3040 = vld [vmem:[#allocation2 + $0x74] sm:$0x1]
          %v3041 = vsel %vm2994, %v2563, %v3040
          %3042 = vst [vmem:[#allocation2 + $0x74] sm:$0x1] %v3041
          %v3043 = vld [vmem:[#allocation2 + $0x78] sm:$0xf]
          %v3044 = vsel %vm2985, %v2565, %v3043
          %3045 = vst [vmem:[#allocation2 + $0x78] sm:$0xf] %v3044
          %3046 = vst.msk [vmem:[#allocation2 + $0x7c] sm:$0xf] %vm2989, %v2567
          %3047 = vst.msk [vmem:[#allocation2 + $0x80] sm:$0xf] %vm2989, %v2569
          %3048 = vst.msk [vmem:[#allocation2 + $0x84] sm:$0xf] %vm2989, %v2571
          %v3049 = vld [vmem:[#allocation2 + $0x88] sm:$0x1]
          %v3050 = vsel %vm2994, %v2573, %v3049
          %3051 = vst [vmem:[#allocation2 + $0x88] sm:$0x1] %v3050
          %v3052 = vld [vmem:[#allocation2 + $0x8c] sm:$0xf]
          %v3053 = vsel %vm2985, %v2575, %v3052
          %3054 = vst [vmem:[#allocation2 + $0x8c] sm:$0xf] %v3053
          %3055 = vst.msk [vmem:[#allocation2 + $0x90] sm:$0xf] %vm2989, %v2577
          %3056 = vst.msk [vmem:[#allocation2 + $0x94] sm:$0xf] %vm2989, %v2579
          %3057 = vst.msk [vmem:[#allocation2 + $0x98] sm:$0xf] %vm2989, %v2581
          %v3058 = vld [vmem:[#allocation2 + $0x9c] sm:$0x1]
          %v3059 = vsel %vm2994, %v2583, %v3058
          %3060 = vst [vmem:[#allocation2 + $0x9c] sm:$0x1] %v3059
          %v3061 = vld [vmem:[#allocation2 + $0xa0] sm:$0xf]
          %v3062 = vsel %vm2985, %v2585, %v3061
          %3063 = vst [vmem:[#allocation2 + $0xa0] sm:$0xf] %v3062
          %3064 = vst.msk [vmem:[#allocation2 + $0xa4] sm:$0xf] %vm2989, %v2587
          %3065 = vst.msk [vmem:[#allocation2 + $0xa8] sm:$0xf] %vm2989, %v2589
          %3066 = vst.msk [vmem:[#allocation2 + $0xac] sm:$0xf] %vm2989, %v2591
          %v3067 = vld [vmem:[#allocation2 + $0xb0] sm:$0x1]
          %v3068 = vsel %vm2994, %v2593, %v3067
          %3069 = vst [vmem:[#allocation2 + $0xb0] sm:$0x1] %v3068
          %v3070 = vld [vmem:[#allocation2 + $0xb4] sm:$0xf]
          %v3071 = vsel %vm2985, %v2595, %v3070
          %3072 = vst [vmem:[#allocation2 + $0xb4] sm:$0xf] %v3071
          %3073 = vst.msk [vmem:[#allocation2 + $0xb8] sm:$0xf] %vm2989, %v2597
          %3074 = vst.msk [vmem:[#allocation2 + $0xbc] sm:$0xf] %vm2989, %v2599
          %3075 = vst.msk [vmem:[#allocation2 + $0xc0] sm:$0xf] %vm2989, %v2601
          %v3076 = vld [vmem:[#allocation2 + $0xc4] sm:$0x1]
          %v3077 = vsel %vm2994, %v2603, %v3076
          %3078 = vst [vmem:[#allocation2 + $0xc4] sm:$0x1] %v3077
          %v3079 = vld [vmem:[#allocation2 + $0xc8] sm:$0xf]
          %v3080 = vsel %vm2985, %v2605, %v3079
          %3081 = vst [vmem:[#allocation2 + $0xc8] sm:$0xf] %v3080
          %3082 = vst.msk [vmem:[#allocation2 + $0xcc] sm:$0xf] %vm2989, %v2607
          %3083 = vst.msk [vmem:[#allocation2 + $0xd0] sm:$0xf] %vm2989, %v2609
          %3084 = vst.msk [vmem:[#allocation2 + $0xd4] sm:$0xf] %vm2989, %v2611
          %v3085 = vld [vmem:[#allocation2 + $0xd8] sm:$0x1]
          %v3086 = vsel %vm2994, %v2613, %v3085
          %3087 = vst [vmem:[#allocation2 + $0xd8] sm:$0x1] %v3086
          %v3088 = vld [vmem:[#allocation2 + $0xdc] sm:$0xf]
          %v3089 = vsel %vm2985, %v2615, %v3088
          %3090 = vst [vmem:[#allocation2 + $0xdc] sm:$0xf] %v3089
          %3091 = vst.msk [vmem:[#allocation2 + $0xe0] sm:$0xf] %vm2989, %v2617
          %3092 = vst.msk [vmem:[#allocation2 + $0xe4] sm:$0xf] %vm2989, %v2619
          %3093 = vst.msk [vmem:[#allocation2 + $0xe8] sm:$0xf] %vm2989, %v2621
          %v3094 = vld [vmem:[#allocation2 + $0xec] sm:$0x1]
          %v3095 = vsel %vm2994, %v2623, %v3094
          %3096 = vst [vmem:[#allocation2 + $0xec] sm:$0x1] %v3095
          %v3097 = vld [vmem:[#allocation2 + $0xf0] sm:$0xf]
          %v3098 = vsel %vm2985, %v2625, %v3097
          %3099 = vst [vmem:[#allocation2 + $0xf0] sm:$0xf] %v3098
          %3100 = vst.msk [vmem:[#allocation2 + $0xf4] sm:$0xf] %vm2989, %v2627
          %3101 = vst.msk [vmem:[#allocation2 + $0xf8] sm:$0xf] %vm2989, %v2629
          %3102 = vst.msk [vmem:[#allocation2 + $0xfc] sm:$0xf] %vm2989, %v2631
          %v3103 = vld [vmem:[#allocation2 + $0x100] sm:$0x1]
          %v3104 = vsel %vm2994, %v2633, %v3103
          %3105 = vst [vmem:[#allocation2 + $0x100] sm:$0x1] %v3104
          %v3106 = vld [vmem:[#allocation2 + $0x104] sm:$0xf]
          %v3107 = vsel %vm2985, %v2635, %v3106
          %3108 = vst [vmem:[#allocation2 + $0x104] sm:$0xf] %v3107
          %3109 = vst.msk [vmem:[#allocation2 + $0x108] sm:$0xf] %vm2989, %v2637
          %3110 = vst.msk [vmem:[#allocation2 + $0x10c] sm:$0xf] %vm2989, %v2639
          %3111 = vst.msk [vmem:[#allocation2 + $0x110] sm:$0xf] %vm2989, %v2641
          %v3112 = vld [vmem:[#allocation2 + $0x114] sm:$0x1]
          %v3113 = vsel %vm2994, %v2643, %v3112
          %3114 = vst [vmem:[#allocation2 + $0x114] sm:$0x1] %v3113
          %v3115 = vld [vmem:[#allocation2 + $0x118] sm:$0xf]
          %v3116 = vsel %vm2985, %v2645, %v3115
          %3117 = vst [vmem:[#allocation2 + $0x118] sm:$0xf] %v3116
          %3118 = vst.msk [vmem:[#allocation2 + $0x11c] sm:$0xf] %vm2989, %v2647
          %3119 = vst.msk [vmem:[#allocation2 + $0x120] sm:$0xf] %vm2989, %v2649
          %3120 = vst.msk [vmem:[#allocation2 + $0x124] sm:$0xf] %vm2989, %v2651
          %v3121 = vld [vmem:[#allocation2 + $0x128] sm:$0x1]
          %v3122 = vsel %vm2994, %v2653, %v3121
          %3123 = vst [vmem:[#allocation2 + $0x128] sm:$0x1] %v3122
          %v3124 = vld [vmem:[#allocation2 + $0x12c] sm:$0xf]
          %v3125 = vsel %vm2985, %v2655, %v3124
          %3126 = vst [vmem:[#allocation2 + $0x12c] sm:$0xf] %v3125
          %3127 = vst.msk [vmem:[#allocation2 + $0x130] sm:$0xf] %vm2989, %v2657
          %3128 = vst.msk [vmem:[#allocation2 + $0x134] sm:$0xf] %vm2989, %v2659
          %3129 = vst.msk [vmem:[#allocation2 + $0x138] sm:$0xf] %vm2989, %v2661
          %v3130 = vld [vmem:[#allocation2 + $0x13c] sm:$0x1]
          %v3131 = vsel %vm2994, %v2663, %v3130
          %3132 = vst [vmem:[#allocation2 + $0x13c] sm:$0x1] %v3131
          %v3133 = vld [vmem:[#allocation2 + $0x140] sm:$0xf]
          %v3134 = vsel %vm2985, %v2665, %v3133
          %3135 = vst [vmem:[#allocation2 + $0x140] sm:$0xf] %v3134
          %3136 = vst.msk [vmem:[#allocation2 + $0x144] sm:$0xf] %vm2989, %v2667
          %3137 = vst.msk [vmem:[#allocation2 + $0x148] sm:$0xf] %vm2989, %v2669
          %3138 = vst.msk [vmem:[#allocation2 + $0x14c] sm:$0xf] %vm2989, %v2671
          %v3139 = vld [vmem:[#allocation2 + $0x150] sm:$0x1]
          %v3140 = vsel %vm2994, %v2673, %v3139
          %3141 = vst [vmem:[#allocation2 + $0x150] sm:$0x1] %v3140
          %v3142 = vld [vmem:[#allocation2 + $0x154] sm:$0xf]
          %v3143 = vsel %vm2985, %v2675, %v3142
          %3144 = vst [vmem:[#allocation2 + $0x154] sm:$0xf] %v3143
          %3145 = vst.msk [vmem:[#allocation2 + $0x158] sm:$0xf] %vm2989, %v2677
          %3146 = vst.msk [vmem:[#allocation2 + $0x15c] sm:$0xf] %vm2989, %v2679
          %3147 = vst.msk [vmem:[#allocation2 + $0x160] sm:$0xf] %vm2989, %v2681
          %v3148 = vld [vmem:[#allocation2 + $0x164] sm:$0x1]
          %v3149 = vsel %vm2994, %v2683, %v3148
          %3150 = vst [vmem:[#allocation2 + $0x164] sm:$0x1] %v3149
          %v3151 = vld [vmem:[#allocation2 + $0x168] sm:$0xf]
          %v3152 = vsel %vm2985, %v2685, %v3151
          %3153 = vst [vmem:[#allocation2 + $0x168] sm:$0xf] %v3152
          %3154 = vst.msk [vmem:[#allocation2 + $0x16c] sm:$0xf] %vm2989, %v2687
          %3155 = vst.msk [vmem:[#allocation2 + $0x170] sm:$0xf] %vm2989, %v2689
          %3156 = vst.msk [vmem:[#allocation2 + $0x174] sm:$0xf] %vm2989, %v2691
          %v3157 = vld [vmem:[#allocation2 + $0x178] sm:$0x1]
          %v3158 = vsel %vm2994, %v2693, %v3157
          %3159 = vst [vmem:[#allocation2 + $0x178] sm:$0x1] %v3158
          %v3160 = vld [vmem:[#allocation2 + $0x17c] sm:$0xf]
          %v3161 = vsel %vm2985, %v2695, %v3160
          %3162 = vst [vmem:[#allocation2 + $0x17c] sm:$0xf] %v3161
          %3163 = vst.msk [vmem:[#allocation2 + $0x180] sm:$0xf] %vm2989, %v2697
          %3164 = vst.msk [vmem:[#allocation2 + $0x184] sm:$0xf] %vm2989, %v2699
          %3165 = vst.msk [vmem:[#allocation2 + $0x188] sm:$0xf] %vm2989, %v2701
          %v3166 = vld [vmem:[#allocation2 + $0x18c] sm:$0x1]
          %v3167 = vsel %vm2994, %v2703, %v3166
          %3168 = vst [vmem:[#allocation2 + $0x18c] sm:$0x1] %v3167
          %v3169 = vld [vmem:[#allocation2 + $0x190] sm:$0xf]
          %v3170 = vsel %vm2985, %v2705, %v3169
          %3171 = vst [vmem:[#allocation2 + $0x190] sm:$0xf] %v3170
          %3172 = vst.msk [vmem:[#allocation2 + $0x194] sm:$0xf] %vm2989, %v2707
          %3173 = vst.msk [vmem:[#allocation2 + $0x198] sm:$0xf] %vm2989, %v2709
          %3174 = vst.msk [vmem:[#allocation2 + $0x19c] sm:$0xf] %vm2989, %v2711
          %v3175 = vld [vmem:[#allocation2 + $0x1a0] sm:$0x1]
          %v3176 = vsel %vm2994, %v2713, %v3175
          %3177 = vst [vmem:[#allocation2 + $0x1a0] sm:$0x1] %v3176
          %v3178 = vld [vmem:[#allocation2 + $0x1a4] sm:$0xf]
          %v3179 = vsel %vm2985, %v2715, %v3178
          %3180 = vst [vmem:[#allocation2 + $0x1a4] sm:$0xf] %v3179
          %3181 = vst.msk [vmem:[#allocation2 + $0x1a8] sm:$0xf] %vm2989, %v2717
          %3182 = vst.msk [vmem:[#allocation2 + $0x1ac] sm:$0xf] %vm2989, %v2719
          %3183 = vst.msk [vmem:[#allocation2 + $0x1b0] sm:$0xf] %vm2989, %v2721
          %v3184 = vld [vmem:[#allocation2 + $0x1b4] sm:$0x1]
          %v3185 = vsel %vm2994, %v2723, %v3184
          %3186 = vst [vmem:[#allocation2 + $0x1b4] sm:$0x1] %v3185
          %v3187 = vld [vmem:[#allocation2 + $0x1b8] sm:$0xf]
          %v3188 = vsel %vm2985, %v2725, %v3187
          %3189 = vst [vmem:[#allocation2 + $0x1b8] sm:$0xf] %v3188
          %3190 = vst.msk [vmem:[#allocation2 + $0x1bc] sm:$0xf] %vm2989, %v2727
          %3191 = vst.msk [vmem:[#allocation2 + $0x1c0] sm:$0xf] %vm2989, %v2729
          %3192 = vst.msk [vmem:[#allocation2 + $0x1c4] sm:$0xf] %vm2989, %v2731
          %v3193 = vld [vmem:[#allocation2 + $0x1c8] sm:$0x1]
          %v3194 = vsel %vm2994, %v2733, %v3193
          %3195 = vst [vmem:[#allocation2 + $0x1c8] sm:$0x1] %v3194
          %v3196 = vld [vmem:[#allocation2 + $0x1cc] sm:$0xf]
          %v3197 = vsel %vm2985, %v2735, %v3196
          %3198 = vst [vmem:[#allocation2 + $0x1cc] sm:$0xf] %v3197
          %3199 = vst.msk [vmem:[#allocation2 + $0x1d0] sm:$0xf] %vm2989, %v2737
          %3200 = vst.msk [vmem:[#allocation2 + $0x1d4] sm:$0xf] %vm2989, %v2739
          %3201 = vst.msk [vmem:[#allocation2 + $0x1d8] sm:$0xf] %vm2989, %v2741
          %v3202 = vld [vmem:[#allocation2 + $0x1dc] sm:$0x1]
          %v3203 = vsel %vm2994, %v2743, %v3202
          %3204 = vst [vmem:[#allocation2 + $0x1dc] sm:$0x1] %v3203
          %v3205 = vld [vmem:[#allocation2 + $0x1e0] sm:$0xf]
          %v3206 = vsel %vm2985, %v2745, %v3205
          %3207 = vst [vmem:[#allocation2 + $0x1e0] sm:$0xf] %v3206
          %3208 = vst.msk [vmem:[#allocation2 + $0x1e4] sm:$0xf] %vm2989, %v2747
          %3209 = vst.msk [vmem:[#allocation2 + $0x1e8] sm:$0xf] %vm2989, %v2749
          %3210 = vst.msk [vmem:[#allocation2 + $0x1ec] sm:$0xf] %vm2989, %v2751
          %v3211 = vld [vmem:[#allocation2 + $0x1f0] sm:$0x1]
          %v3212 = vsel %vm2994, %v2753, %v3211
          %3213 = vst [vmem:[#allocation2 + $0x1f0] sm:$0x1] %v3212
          %v3214 = vld [vmem:[#allocation2 + $0x1f4] sm:$0xf]
          %v3215 = vsel %vm2985, %v2755, %v3214
          %3216 = vst [vmem:[#allocation2 + $0x1f4] sm:$0xf] %v3215
          %3217 = vst.msk [vmem:[#allocation2 + $0x1f8] sm:$0xf] %vm2989, %v2757
          %3218 = vst.msk [vmem:[#allocation2 + $0x1fc] sm:$0xf] %vm2989, %v2759
          %3219 = vst.msk [vmem:[#allocation2 + $0x200] sm:$0xf] %vm2989, %v2761
          %v3220 = vld [vmem:[#allocation2 + $0x204] sm:$0x1]
          %v3221 = vsel %vm2994, %v2763, %v3220
          %3222 = vst [vmem:[#allocation2 + $0x204] sm:$0x1] %v3221
          %v3223 = vld [vmem:[#allocation2 + $0x208] sm:$0xf]
          %v3224 = vsel %vm2985, %v2765, %v3223
          %3225 = vst [vmem:[#allocation2 + $0x208] sm:$0xf] %v3224
          %3226 = vst.msk [vmem:[#allocation2 + $0x20c] sm:$0xf] %vm2989, %v2767
          %3227 = vst.msk [vmem:[#allocation2 + $0x210] sm:$0xf] %vm2989, %v2769
          %3228 = vst.msk [vmem:[#allocation2 + $0x214] sm:$0xf] %vm2989, %v2771
          %v3229 = vld [vmem:[#allocation2 + $0x218] sm:$0x1]
          %v3230 = vsel %vm2994, %v2773, %v3229
          %3231 = vst [vmem:[#allocation2 + $0x218] sm:$0x1] %v3230
          %v3232 = vld [vmem:[#allocation2 + $0x21c] sm:$0xf]
          %v3233 = vsel %vm2985, %v2775, %v3232
          %3234 = vst [vmem:[#allocation2 + $0x21c] sm:$0xf] %v3233
          %3235 = vst.msk [vmem:[#allocation2 + $0x220] sm:$0xf] %vm2989, %v2777
          %3236 = vst.msk [vmem:[#allocation2 + $0x224] sm:$0xf] %vm2989, %v2779
          %3237 = vst.msk [vmem:[#allocation2 + $0x228] sm:$0xf] %vm2989, %v2781
          %v3238 = vld [vmem:[#allocation2 + $0x22c] sm:$0x1]
          %v3239 = vsel %vm2994, %v2783, %v3238
          %3240 = vst [vmem:[#allocation2 + $0x22c] sm:$0x1] %v3239
          %v3241 = vld [vmem:[#allocation2 + $0x230] sm:$0xf]
          %v3242 = vsel %vm2985, %v2785, %v3241
          %3243 = vst [vmem:[#allocation2 + $0x230] sm:$0xf] %v3242
          %3244 = vst.msk [vmem:[#allocation2 + $0x234] sm:$0xf] %vm2989, %v2787
          %3245 = vst.msk [vmem:[#allocation2 + $0x238] sm:$0xf] %vm2989, %v2789
          %3246 = vst.msk [vmem:[#allocation2 + $0x23c] sm:$0xf] %vm2989, %v2791
          %v3247 = vld [vmem:[#allocation2 + $0x240] sm:$0x1]
          %v3248 = vsel %vm2994, %v2793, %v3247
          %3249 = vst [vmem:[#allocation2 + $0x240] sm:$0x1] %v3248
          %v3250 = vld [vmem:[#allocation2 + $0x244] sm:$0xf]
          %v3251 = vsel %vm2985, %v2795, %v3250
          %3252 = vst [vmem:[#allocation2 + $0x244] sm:$0xf] %v3251
          %3253 = vst.msk [vmem:[#allocation2 + $0x248] sm:$0xf] %vm2989, %v2797
          %3254 = vst.msk [vmem:[#allocation2 + $0x24c] sm:$0xf] %vm2989, %v2799
          %3255 = vst.msk [vmem:[#allocation2 + $0x250] sm:$0xf] %vm2989, %v2801
          %v3256 = vld [vmem:[#allocation2 + $0x254] sm:$0x1]
          %v3257 = vsel %vm2994, %v2803, %v3256
          %3258 = vst [vmem:[#allocation2 + $0x254] sm:$0x1] %v3257
          %v3259 = vld [vmem:[#allocation2 + $0x258] sm:$0xf]
          %v3260 = vsel %vm2985, %v2805, %v3259
          %3261 = vst [vmem:[#allocation2 + $0x258] sm:$0xf] %v3260
          %3262 = vst.msk [vmem:[#allocation2 + $0x25c] sm:$0xf] %vm2989, %v2807
          %3263 = vst.msk [vmem:[#allocation2 + $0x260] sm:$0xf] %vm2989, %v2809
          %3264 = vst.msk [vmem:[#allocation2 + $0x264] sm:$0xf] %vm2989, %v2811
          %v3265 = vld [vmem:[#allocation2 + $0x268] sm:$0x1]
          %v3266 = vsel %vm2994, %v2813, %v3265
          %3267 = vst [vmem:[#allocation2 + $0x268] sm:$0x1] %v3266
          %v3268 = vld [vmem:[#allocation2 + $0x26c] sm:$0xf]
          %v3269 = vsel %vm2985, %v2815, %v3268
          %3270 = vst [vmem:[#allocation2 + $0x26c] sm:$0xf] %v3269
          %3271 = vst.msk [vmem:[#allocation2 + $0x270] sm:$0xf] %vm2989, %v2817
          %3272 = vst.msk [vmem:[#allocation2 + $0x274] sm:$0xf] %vm2989, %v2819
          %3273 = vst.msk [vmem:[#allocation2 + $0x278] sm:$0xf] %vm2989, %v2821
          %v3274 = vld [vmem:[#allocation2 + $0x27c] sm:$0x1]
          %v3275 = vsel %vm2994, %v2823, %v3274
          %3276 = vst [vmem:[#allocation2 + $0x27c] sm:$0x1] %v3275
          %3277 = vrot.lane.b32.xlu0 %v976, 16
          %v3278 = vpop.permute.xlu0 %3277
          %3279 = vrot.lane.b32.xlu0 %v985, 16
          %v3280 = vpop.permute.xlu0 %3279
          %3281 = vrot.lane.b32.xlu0 %v994, 16
          %v3282 = vpop.permute.xlu0 %3281
          %3283 = vrot.lane.b32.xlu0 %v1003, 16
          %v3284 = vpop.permute.xlu0 %3283
          %3285 = vrot.lane.b32.xlu0 %v1004, 16
          %v3286 = vpop.permute.xlu0 %3285
          %3287 = vrot.lane.b32.xlu0 %v1011, 16
          %v3288 = vpop.permute.xlu0 %3287
          %3289 = vrot.lane.b32.xlu0 %v1020, 16
          %v3290 = vpop.permute.xlu0 %3289
          %3291 = vrot.lane.b32.xlu0 %v1029, 16
          %v3292 = vpop.permute.xlu0 %3291
          %3293 = vrot.lane.b32.xlu0 %v1038, 16
          %v3294 = vpop.permute.xlu0 %3293
          %3295 = vrot.lane.b32.xlu0 %v1039, 16
          %v3296 = vpop.permute.xlu0 %3295
          %3297 = vrot.lane.b32.xlu0 %v1046, 16
          %v3298 = vpop.permute.xlu0 %3297
          %3299 = vrot.lane.b32.xlu0 %v1055, 16
          %v3300 = vpop.permute.xlu0 %3299
          %3301 = vrot.lane.b32.xlu0 %v1064, 16
          %v3302 = vpop.permute.xlu0 %3301
          %3303 = vrot.lane.b32.xlu0 %v1073, 16
          %v3304 = vpop.permute.xlu0 %3303
          %3305 = vrot.lane.b32.xlu0 %v1074, 16
          %v3306 = vpop.permute.xlu0 %3305
          %3307 = vrot.lane.b32.xlu0 %v1081, 16
          %v3308 = vpop.permute.xlu0 %3307
          %3309 = vrot.lane.b32.xlu0 %v1090, 16
          %v3310 = vpop.permute.xlu0 %3309
          %3311 = vrot.lane.b32.xlu0 %v1099, 16
          %v3312 = vpop.permute.xlu0 %3311
          %3313 = vrot.lane.b32.xlu0 %v1108, 16
          %v3314 = vpop.permute.xlu0 %3313
          %3315 = vrot.lane.b32.xlu0 %v1109, 16
          %v3316 = vpop.permute.xlu0 %3315
          %3317 = vrot.lane.b32.xlu0 %v1116, 16
          %v3318 = vpop.permute.xlu0 %3317
          %3319 = vrot.lane.b32.xlu0 %v1125, 16
          %v3320 = vpop.permute.xlu0 %3319
          %3321 = vrot.lane.b32.xlu0 %v1134, 16
          %v3322 = vpop.permute.xlu0 %3321
          %3323 = vrot.lane.b32.xlu0 %v1143, 16
          %v3324 = vpop.permute.xlu0 %3323
          %3325 = vrot.lane.b32.xlu0 %v1144, 16
          %v3326 = vpop.permute.xlu0 %3325
          %3327 = vrot.lane.b32.xlu0 %v1151, 16
          %v3328 = vpop.permute.xlu0 %3327
          %3329 = vrot.lane.b32.xlu0 %v1160, 16
          %v3330 = vpop.permute.xlu0 %3329
          %3331 = vrot.lane.b32.xlu0 %v1169, 16
          %v3332 = vpop.permute.xlu0 %3331
          %3333 = vrot.lane.b32.xlu0 %v1178, 16
          %v3334 = vpop.permute.xlu0 %3333
          %3335 = vrot.lane.b32.xlu0 %v1179, 16
          %v3336 = vpop.permute.xlu0 %3335
          %3337 = vrot.lane.b32.xlu0 %v1186, 16
          %v3338 = vpop.permute.xlu0 %3337
          %3339 = vrot.lane.b32.xlu0 %v1195, 16
          %v3340 = vpop.permute.xlu0 %3339
          %3341 = vrot.lane.b32.xlu0 %v1204, 16
          %v3342 = vpop.permute.xlu0 %3341
          %3343 = vrot.lane.b32.xlu0 %v1213, 16
          %v3344 = vpop.permute.xlu0 %3343
          %3345 = vrot.lane.b32.xlu0 %v1214, 16
          %v3346 = vpop.permute.xlu0 %3345
          %3347 = vrot.lane.b32.xlu0 %v1221, 16
          %v3348 = vpop.permute.xlu0 %3347
          %3349 = vrot.lane.b32.xlu0 %v1230, 16
          %v3350 = vpop.permute.xlu0 %3349
          %3351 = vrot.lane.b32.xlu0 %v1239, 16
          %v3352 = vpop.permute.xlu0 %3351
          %3353 = vrot.lane.b32.xlu0 %v1248, 16
          %v3354 = vpop.permute.xlu0 %3353
          %3355 = vrot.lane.b32.xlu0 %v1249, 16
          %v3356 = vpop.permute.xlu0 %3355
          %3357 = vrot.lane.b32.xlu0 %v1256, 16
          %v3358 = vpop.permute.xlu0 %3357
          %3359 = vrot.lane.b32.xlu0 %v1265, 16
          %v3360 = vpop.permute.xlu0 %3359
          %3361 = vrot.lane.b32.xlu0 %v1274, 16
          %v3362 = vpop.permute.xlu0 %3361
          %3363 = vrot.lane.b32.xlu0 %v1283, 16
          %v3364 = vpop.permute.xlu0 %3363
          %3365 = vrot.lane.b32.xlu0 %v1284, 16
          %v3366 = vpop.permute.xlu0 %3365
          %3367 = vrot.lane.b32.xlu0 %v1291, 16
          %v3368 = vpop.permute.xlu0 %3367
          %3369 = vrot.lane.b32.xlu0 %v1300, 16
          %v3370 = vpop.permute.xlu0 %3369
          %3371 = vrot.lane.b32.xlu0 %v1309, 16
          %v3372 = vpop.permute.xlu0 %3371
          %3373 = vrot.lane.b32.xlu0 %v1318, 16
          %v3374 = vpop.permute.xlu0 %3373
          %3375 = vrot.lane.b32.xlu0 %v1319, 16
          %v3376 = vpop.permute.xlu0 %3375
          %3377 = vrot.lane.b32.xlu0 %v1326, 16
          %v3378 = vpop.permute.xlu0 %3377
          %3379 = vrot.lane.b32.xlu0 %v1335, 16
          %v3380 = vpop.permute.xlu0 %3379
          %3381 = vrot.lane.b32.xlu0 %v1344, 16
          %v3382 = vpop.permute.xlu0 %3381
          %3383 = vrot.lane.b32.xlu0 %v1353, 16
          %v3384 = vpop.permute.xlu0 %3383
          %3385 = vrot.lane.b32.xlu0 %v1354, 16
          %v3386 = vpop.permute.xlu0 %3385
          %3387 = vrot.lane.b32.xlu0 %v1361, 16
          %v3388 = vpop.permute.xlu0 %3387
          %3389 = vrot.lane.b32.xlu0 %v1370, 16
          %v3390 = vpop.permute.xlu0 %3389
          %3391 = vrot.lane.b32.xlu0 %v1379, 16
          %v3392 = vpop.permute.xlu0 %3391
          %3393 = vrot.lane.b32.xlu0 %v1388, 16
          %v3394 = vpop.permute.xlu0 %3393
          %3395 = vrot.lane.b32.xlu0 %v1389, 16
          %v3396 = vpop.permute.xlu0 %3395
          %3397 = vrot.lane.b32.xlu0 %v1396, 16
          %v3398 = vpop.permute.xlu0 %3397
          %3399 = vrot.lane.b32.xlu0 %v1405, 16
          %v3400 = vpop.permute.xlu0 %3399
          %3401 = vrot.lane.b32.xlu0 %v1414, 16
          %v3402 = vpop.permute.xlu0 %3401
          %3403 = vrot.lane.b32.xlu0 %v1423, 16
          %v3404 = vpop.permute.xlu0 %3403
          %3405 = vrot.lane.b32.xlu0 %v1424, 16
          %v3406 = vpop.permute.xlu0 %3405
          %3407 = vrot.lane.b32.xlu0 %v1431, 16
          %v3408 = vpop.permute.xlu0 %3407
          %3409 = vrot.lane.b32.xlu0 %v1440, 16
          %v3410 = vpop.permute.xlu0 %3409
          %3411 = vrot.lane.b32.xlu0 %v1449, 16
          %v3412 = vpop.permute.xlu0 %3411
          %3413 = vrot.lane.b32.xlu0 %v1458, 16
          %v3414 = vpop.permute.xlu0 %3413
          %3415 = vrot.lane.b32.xlu0 %v1459, 16
          %v3416 = vpop.permute.xlu0 %3415
          %3417 = vrot.lane.b32.xlu0 %v1466, 16
          %v3418 = vpop.permute.xlu0 %3417
          %3419 = vrot.lane.b32.xlu0 %v1475, 16
          %v3420 = vpop.permute.xlu0 %3419
          %3421 = vrot.lane.b32.xlu0 %v1484, 16
          %v3422 = vpop.permute.xlu0 %3421
          %3423 = vrot.lane.b32.xlu0 %v1493, 16
          %v3424 = vpop.permute.xlu0 %3423
          %3425 = vrot.lane.b32.xlu0 %v1494, 16
          %v3426 = vpop.permute.xlu0 %3425
          %3427 = vrot.lane.b32.xlu0 %v1501, 16
          %v3428 = vpop.permute.xlu0 %3427
          %3429 = vrot.lane.b32.xlu0 %v1510, 16
          %v3430 = vpop.permute.xlu0 %3429
          %3431 = vrot.lane.b32.xlu0 %v1519, 16
          %v3432 = vpop.permute.xlu0 %3431
          %3433 = vrot.lane.b32.xlu0 %v1528, 16
          %v3434 = vpop.permute.xlu0 %3433
          %3435 = vrot.lane.b32.xlu0 %v1529, 16
          %v3436 = vpop.permute.xlu0 %3435
          %3437 = vrot.lane.b32.xlu0 %v1536, 16
          %v3438 = vpop.permute.xlu0 %3437
          %3439 = vrot.lane.b32.xlu0 %v1545, 16
          %v3440 = vpop.permute.xlu0 %3439
          %3441 = vrot.lane.b32.xlu0 %v1554, 16
          %v3442 = vpop.permute.xlu0 %3441
          %3443 = vrot.lane.b32.xlu0 %v1563, 16
          %v3444 = vpop.permute.xlu0 %3443
          %3445 = vrot.lane.b32.xlu0 %v1564, 16
          %v3446 = vpop.permute.xlu0 %3445
          %3447 = vrot.lane.b32.xlu0 %v1571, 16
          %v3448 = vpop.permute.xlu0 %3447
          %3449 = vrot.lane.b32.xlu0 %v1580, 16
          %v3450 = vpop.permute.xlu0 %3449
          %3451 = vrot.lane.b32.xlu0 %v1589, 16
          %v3452 = vpop.permute.xlu0 %3451
          %3453 = vrot.lane.b32.xlu0 %v1598, 16
          %v3454 = vpop.permute.xlu0 %3453
          %3455 = vrot.lane.b32.xlu0 %v1599, 16
          %v3456 = vpop.permute.xlu0 %3455
          %3457 = vrot.lane.b32.xlu0 %v1606, 16
          %v3458 = vpop.permute.xlu0 %3457
          %3459 = vrot.lane.b32.xlu0 %v1615, 16
          %v3460 = vpop.permute.xlu0 %3459
          %3461 = vrot.lane.b32.xlu0 %v1624, 16
          %v3462 = vpop.permute.xlu0 %3461
          %3463 = vrot.lane.b32.xlu0 %v1633, 16
          %v3464 = vpop.permute.xlu0 %3463
          %3465 = vrot.lane.b32.xlu0 %v1634, 16
          %v3466 = vpop.permute.xlu0 %3465
          %3467 = vrot.lane.b32.xlu0 %v1641, 16
          %v3468 = vpop.permute.xlu0 %3467
          %3469 = vrot.lane.b32.xlu0 %v1650, 16
          %v3470 = vpop.permute.xlu0 %3469
          %3471 = vrot.lane.b32.xlu0 %v1659, 16
          %v3472 = vpop.permute.xlu0 %3471
          %3473 = vrot.lane.b32.xlu0 %v1668, 16
          %v3474 = vpop.permute.xlu0 %3473
          %3475 = vrot.lane.b32.xlu0 %v1669, 16
          %v3476 = vpop.permute.xlu0 %3475
          %3477 = vrot.lane.b32.xlu0 %v1676, 16
          %v3478 = vpop.permute.xlu0 %3477
          %3479 = vrot.lane.b32.xlu0 %v1685, 16
          %v3480 = vpop.permute.xlu0 %3479
          %3481 = vrot.lane.b32.xlu0 %v1694, 16
          %v3482 = vpop.permute.xlu0 %3481
          %3483 = vrot.lane.b32.xlu0 %v1703, 16
          %v3484 = vpop.permute.xlu0 %3483
          %3485 = vrot.lane.b32.xlu0 %v1704, 16
          %v3486 = vpop.permute.xlu0 %3485
          %3487 = vrot.lane.b32.xlu0 %v1711, 16
          %v3488 = vpop.permute.xlu0 %3487
          %3489 = vrot.lane.b32.xlu0 %v1720, 16
          %v3490 = vpop.permute.xlu0 %3489
          %3491 = vrot.lane.b32.xlu0 %v1729, 16
          %v3492 = vpop.permute.xlu0 %3491
          %3493 = vrot.lane.b32.xlu0 %v1738, 16
          %v3494 = vpop.permute.xlu0 %3493
          %3495 = vrot.lane.b32.xlu0 %v1739, 16
          %v3496 = vpop.permute.xlu0 %3495
          %3497 = vrot.lane.b32.xlu0 %v1746, 16
          %v3498 = vpop.permute.xlu0 %3497
          %3499 = vrot.lane.b32.xlu0 %v1755, 16
          %v3500 = vpop.permute.xlu0 %3499
          %3501 = vrot.lane.b32.xlu0 %v1764, 16
          %v3502 = vpop.permute.xlu0 %3501
          %3503 = vrot.lane.b32.xlu0 %v1773, 16
          %v3504 = vpop.permute.xlu0 %3503
          %3505 = vrot.lane.b32.xlu0 %v1774, 16
          %v3506 = vpop.permute.xlu0 %3505
          %3507 = vrot.lane.b32.xlu0 %v1781, 16
          %v3508 = vpop.permute.xlu0 %3507
          %3509 = vrot.lane.b32.xlu0 %v1790, 16
          %v3510 = vpop.permute.xlu0 %3509
          %3511 = vrot.lane.b32.xlu0 %v1799, 16
          %v3512 = vpop.permute.xlu0 %3511
          %3513 = vrot.lane.b32.xlu0 %v1808, 16
          %v3514 = vpop.permute.xlu0 %3513
          %3515 = vrot.lane.b32.xlu0 %v1809, 16
          %v3516 = vpop.permute.xlu0 %3515
          %3517 = vrot.lane.b32.xlu0 %v1816, 16
          %v3518 = vpop.permute.xlu0 %3517
          %3519 = vrot.lane.b32.xlu0 %v1825, 16
          %v3520 = vpop.permute.xlu0 %3519
          %3521 = vrot.lane.b32.xlu0 %v1834, 16
          %v3522 = vpop.permute.xlu0 %3521
          %3523 = vrot.lane.b32.xlu0 %v1843, 16
          %v3524 = vpop.permute.xlu0 %3523
          %3525 = vrot.lane.b32.xlu0 %v1844, 16
          %v3526 = vpop.permute.xlu0 %3525
          %3527 = vrot.lane.b32.xlu0 %v1851, 16
          %v3528 = vpop.permute.xlu0 %3527
          %3529 = vrot.lane.b32.xlu0 %v1860, 16
          %v3530 = vpop.permute.xlu0 %3529
          %3531 = vrot.lane.b32.xlu0 %v1869, 16
          %v3532 = vpop.permute.xlu0 %3531
          %3533 = vrot.lane.b32.xlu0 %v1878, 16
          %v3534 = vpop.permute.xlu0 %3533
          %3535 = vrot.lane.b32.xlu0 %v1879, 16
          %v3536 = vpop.permute.xlu0 %3535
          %3537 = vrot.lane.b32.xlu0 %v1886, 16
          %v3538 = vpop.permute.xlu0 %3537
          %3539 = vrot.lane.b32.xlu0 %v1895, 16
          %v3540 = vpop.permute.xlu0 %3539
          %3541 = vrot.lane.b32.xlu0 %v1904, 16
          %v3542 = vpop.permute.xlu0 %3541
          %3543 = vrot.lane.b32.xlu0 %v1913, 16
          %v3544 = vpop.permute.xlu0 %3543
          %3545 = vrot.lane.b32.xlu0 %v1914, 16
          %v3546 = vpop.permute.xlu0 %3545
          %3547 = vrot.lane.b32.xlu0 %v1921, 16
          %v3548 = vpop.permute.xlu0 %3547
          %3549 = vrot.lane.b32.xlu0 %v1930, 16
          %v3550 = vpop.permute.xlu0 %3549
          %3551 = vrot.lane.b32.xlu0 %v1939, 16
          %v3552 = vpop.permute.xlu0 %3551
          %3553 = vrot.lane.b32.xlu0 %v1948, 16
          %v3554 = vpop.permute.xlu0 %3553
          %3555 = vrot.lane.b32.xlu0 %v1949, 16
          %v3556 = vpop.permute.xlu0 %3555
          %3557 = vrot.lane.b32.xlu0 %v1956, 16
          %v3558 = vpop.permute.xlu0 %3557
          %3559 = vrot.lane.b32.xlu0 %v1965, 16
          %v3560 = vpop.permute.xlu0 %3559
          %3561 = vrot.lane.b32.xlu0 %v1974, 16
          %v3562 = vpop.permute.xlu0 %3561
          %3563 = vrot.lane.b32.xlu0 %v1983, 16
          %v3564 = vpop.permute.xlu0 %3563
          %3565 = vrot.lane.b32.xlu0 %v1984, 16
          %v3566 = vpop.permute.xlu0 %3565
          %3567 = vrot.lane.b32.xlu0 %v1991, 16
          %v3568 = vpop.permute.xlu0 %3567
          %3569 = vrot.lane.b32.xlu0 %v2000, 16
          %v3570 = vpop.permute.xlu0 %3569
          %3571 = vrot.lane.b32.xlu0 %v2009, 16
          %v3572 = vpop.permute.xlu0 %3571
          %3573 = vrot.lane.b32.xlu0 %v2018, 16
          %v3574 = vpop.permute.xlu0 %3573
          %3575 = vrot.lane.b32.xlu0 %v2019, 16
          %v3576 = vpop.permute.xlu0 %3575
          %3577 = vrot.lane.b32.xlu0 %v2475, 16
          %v3578 = vpop.permute.xlu0 %3577
          %3579 = vrot.lane.b32.xlu0 %v2484, 16
          %v3580 = vpop.permute.xlu0 %3579
          %3581 = vrot.lane.b32.xlu0 %v2493, 16
          %v3582 = vpop.permute.xlu0 %3581
          %3583 = vrot.lane.b32.xlu0 %v2502, 16
          %v3584 = vpop.permute.xlu0 %3583
          %3585 = vrot.lane.b32.xlu0 %v2503, 16
          %v3586 = vpop.permute.xlu0 %3585
          %vm3742 = vcmask 191616
          %vm3743 = vmand %vm3742, %vm510
          %v3744 = vld [vmem:[#allocation2] sm:$0xf]
          %v3745 = vsel %vm3743, %v3278, %v3744
          %3746 = vst [vmem:[#allocation2] sm:$0xf] %v3745
          %3747 = vst.msk [vmem:[#allocation2 + $0x4] sm:$0xf] %vm616, %v3280
          %3748 = vst.msk [vmem:[#allocation2 + $0x8] sm:$0xf] %vm616, %v3282
          %3749 = vst.msk [vmem:[#allocation2 + $0xc] sm:$0xf] %vm616, %v3284
          %vm3750 = vcmask 188544
          %vm3751 = vmand %vm3750, %vm412
          %v3752 = vld [vmem:[#allocation2 + $0x10] sm:$0x1]
          %v3753 = vsel %vm3751, %v3286, %v3752
          %3754 = vst [vmem:[#allocation2 + $0x10] sm:$0x1] %v3753
          %v3755 = vld [vmem:[#allocation2 + $0x14] sm:$0xf]
          %v3756 = vsel %vm3743, %v3288, %v3755
          %3757 = vst [vmem:[#allocation2 + $0x14] sm:$0xf] %v3756
          %3758 = vst.msk [vmem:[#allocation2 + $0x18] sm:$0xf] %vm616, %v3290
          %3759 = vst.msk [vmem:[#allocation2 + $0x1c] sm:$0xf] %vm616, %v3292
          %3760 = vst.msk [vmem:[#allocation2 + $0x20] sm:$0xf] %vm616, %v3294
          %v3761 = vld [vmem:[#allocation2 + $0x24] sm:$0x1]
          %v3762 = vsel %vm3751, %v3296, %v3761
          %3763 = vst [vmem:[#allocation2 + $0x24] sm:$0x1] %v3762
          %v3764 = vld [vmem:[#allocation2 + $0x28] sm:$0xf]
          %v3765 = vsel %vm3743, %v3298, %v3764
          %3766 = vst [vmem:[#allocation2 + $0x28] sm:$0xf] %v3765
          %3767 = vst.msk [vmem:[#allocation2 + $0x2c] sm:$0xf] %vm616, %v3300
          %3768 = vst.msk [vmem:[#allocation2 + $0x30] sm:$0xf] %vm616, %v3302
          %3769 = vst.msk [vmem:[#allocation2 + $0x34] sm:$0xf] %vm616, %v3304
          %v3770 = vld [vmem:[#allocation2 + $0x38] sm:$0x1]
          %v3771 = vsel %vm3751, %v3306, %v3770
          %3772 = vst [vmem:[#allocation2 + $0x38] sm:$0x1] %v3771
          %v3773 = vld [vmem:[#allocation2 + $0x3c] sm:$0xf]
          %v3774 = vsel %vm3743, %v3308, %v3773
          %3775 = vst [vmem:[#allocation2 + $0x3c] sm:$0xf] %v3774
          %3776 = vst.msk [vmem:[#allocation2 + $0x40] sm:$0xf] %vm616, %v3310
          %3777 = vst.msk [vmem:[#allocation2 + $0x44] sm:$0xf] %vm616, %v3312
          %3778 = vst.msk [vmem:[#allocation2 + $0x48] sm:$0xf] %vm616, %v3314
          %v3779 = vld [vmem:[#allocation2 + $0x4c] sm:$0x1]
          %v3780 = vsel %vm3751, %v3316, %v3779
          %3781 = vst [vmem:[#allocation2 + $0x4c] sm:$0x1] %v3780
          %v3782 = vld [vmem:[#allocation2 + $0x50] sm:$0xf]
          %v3783 = vsel %vm3743, %v3318, %v3782
          %3784 = vst [vmem:[#allocation2 + $0x50] sm:$0xf] %v3783
          %3785 = vst.msk [vmem:[#allocation2 + $0x54] sm:$0xf] %vm616, %v3320
          %3786 = vst.msk [vmem:[#allocation2 + $0x58] sm:$0xf] %vm616, %v3322
          %3787 = vst.msk [vmem:[#allocation2 + $0x5c] sm:$0xf] %vm616, %v3324
          %v3788 = vld [vmem:[#allocation2 + $0x60] sm:$0x1]
          %v3789 = vsel %vm3751, %v3326, %v3788
          %3790 = vst [vmem:[#allocation2 + $0x60] sm:$0x1] %v3789
          %v3791 = vld [vmem:[#allocation2 + $0x64] sm:$0xf]
          %v3792 = vsel %vm3743, %v3328, %v3791
          %3793 = vst [vmem:[#allocation2 + $0x64] sm:$0xf] %v3792
          %3794 = vst.msk [vmem:[#allocation2 + $0x68] sm:$0xf] %vm616, %v3330
          %3795 = vst.msk [vmem:[#allocation2 + $0x6c] sm:$0xf] %vm616, %v3332
          %3796 = vst.msk [vmem:[#allocation2 + $0x70] sm:$0xf] %vm616, %v3334
          %v3797 = vld [vmem:[#allocation2 + $0x74] sm:$0x1]
          %v3798 = vsel %vm3751, %v3336, %v3797
          %3799 = vst [vmem:[#allocation2 + $0x74] sm:$0x1] %v3798
          %v3800 = vld [vmem:[#allocation2 + $0x78] sm:$0xf]
          %v3801 = vsel %vm3743, %v3338, %v3800
          %3802 = vst [vmem:[#allocation2 + $0x78] sm:$0xf] %v3801
          %3803 = vst.msk [vmem:[#allocation2 + $0x7c] sm:$0xf] %vm616, %v3340
          %3804 = vst.msk [vmem:[#allocation2 + $0x80] sm:$0xf] %vm616, %v3342
          %3805 = vst.msk [vmem:[#allocation2 + $0x84] sm:$0xf] %vm616, %v3344
          %v3806 = vld [vmem:[#allocation2 + $0x88] sm:$0x1]
          %v3807 = vsel %vm3751, %v3346, %v3806
          %3808 = vst [vmem:[#allocation2 + $0x88] sm:$0x1] %v3807
          %v3809 = vld [vmem:[#allocation2 + $0x8c] sm:$0xf]
          %v3810 = vsel %vm3743, %v3348, %v3809
          %3811 = vst [vmem:[#allocation2 + $0x8c] sm:$0xf] %v3810
          %3812 = vst.msk [vmem:[#allocation2 + $0x90] sm:$0xf] %vm616, %v3350
          %3813 = vst.msk [vmem:[#allocation2 + $0x94] sm:$0xf] %vm616, %v3352
          %3814 = vst.msk [vmem:[#allocation2 + $0x98] sm:$0xf] %vm616, %v3354
          %v3815 = vld [vmem:[#allocation2 + $0x9c] sm:$0x1]
          %v3816 = vsel %vm3751, %v3356, %v3815
          %3817 = vst [vmem:[#allocation2 + $0x9c] sm:$0x1] %v3816
          %v3818 = vld [vmem:[#allocation2 + $0xa0] sm:$0xf]
          %v3819 = vsel %vm3743, %v3358, %v3818
          %3820 = vst [vmem:[#allocation2 + $0xa0] sm:$0xf] %v3819
          %3821 = vst.msk [vmem:[#allocation2 + $0xa4] sm:$0xf] %vm616, %v3360
          %3822 = vst.msk [vmem:[#allocation2 + $0xa8] sm:$0xf] %vm616, %v3362
          %3823 = vst.msk [vmem:[#allocation2 + $0xac] sm:$0xf] %vm616, %v3364
          %v3824 = vld [vmem:[#allocation2 + $0xb0] sm:$0x1]
          %v3825 = vsel %vm3751, %v3366, %v3824
          %3826 = vst [vmem:[#allocation2 + $0xb0] sm:$0x1] %v3825
          %v3827 = vld [vmem:[#allocation2 + $0xb4] sm:$0xf]
          %v3828 = vsel %vm3743, %v3368, %v3827
          %3829 = vst [vmem:[#allocation2 + $0xb4] sm:$0xf] %v3828
          %3830 = vst.msk [vmem:[#allocation2 + $0xb8] sm:$0xf] %vm616, %v3370
          %3831 = vst.msk [vmem:[#allocation2 + $0xbc] sm:$0xf] %vm616, %v3372
          %3832 = vst.msk [vmem:[#allocation2 + $0xc0] sm:$0xf] %vm616, %v3374
          %v3833 = vld [vmem:[#allocation2 + $0xc4] sm:$0x1]
          %v3834 = vsel %vm3751, %v3376, %v3833
          %3835 = vst [vmem:[#allocation2 + $0xc4] sm:$0x1] %v3834
          %v3836 = vld [vmem:[#allocation2 + $0xc8] sm:$0xf]
          %v3837 = vsel %vm3743, %v3378, %v3836
          %3838 = vst [vmem:[#allocation2 + $0xc8] sm:$0xf] %v3837
          %3839 = vst.msk [vmem:[#allocation2 + $0xcc] sm:$0xf] %vm616, %v3380
          %3840 = vst.msk [vmem:[#allocation2 + $0xd0] sm:$0xf] %vm616, %v3382
          %3841 = vst.msk [vmem:[#allocation2 + $0xd4] sm:$0xf] %vm616, %v3384
          %v3842 = vld [vmem:[#allocation2 + $0xd8] sm:$0x1]
          %v3843 = vsel %vm3751, %v3386, %v3842
          %3844 = vst [vmem:[#allocation2 + $0xd8] sm:$0x1] %v3843
          %v3845 = vld [vmem:[#allocation2 + $0xdc] sm:$0xf]
          %v3846 = vsel %vm3743, %v3388, %v3845
          %3847 = vst [vmem:[#allocation2 + $0xdc] sm:$0xf] %v3846
          %3848 = vst.msk [vmem:[#allocation2 + $0xe0] sm:$0xf] %vm616, %v3390
          %3849 = vst.msk [vmem:[#allocation2 + $0xe4] sm:$0xf] %vm616, %v3392
          %3850 = vst.msk [vmem:[#allocation2 + $0xe8] sm:$0xf] %vm616, %v3394
          %v3851 = vld [vmem:[#allocation2 + $0xec] sm:$0x1]
          %v3852 = vsel %vm3751, %v3396, %v3851
          %3853 = vst [vmem:[#allocation2 + $0xec] sm:$0x1] %v3852
          %v3854 = vld [vmem:[#allocation2 + $0xf0] sm:$0xf]
          %v3855 = vsel %vm3743, %v3398, %v3854
          %3856 = vst [vmem:[#allocation2 + $0xf0] sm:$0xf] %v3855
          %3857 = vst.msk [vmem:[#allocation2 + $0xf4] sm:$0xf] %vm616, %v3400
          %3858 = vst.msk [vmem:[#allocation2 + $0xf8] sm:$0xf] %vm616, %v3402
          %3859 = vst.msk [vmem:[#allocation2 + $0xfc] sm:$0xf] %vm616, %v3404
          %v3860 = vld [vmem:[#allocation2 + $0x100] sm:$0x1]
          %v3861 = vsel %vm3751, %v3406, %v3860
          %3862 = vst [vmem:[#allocation2 + $0x100] sm:$0x1] %v3861
          %v3863 = vld [vmem:[#allocation2 + $0x104] sm:$0xf]
          %v3864 = vsel %vm3743, %v3408, %v3863
          %3865 = vst [vmem:[#allocation2 + $0x104] sm:$0xf] %v3864
          %3866 = vst.msk [vmem:[#allocation2 + $0x108] sm:$0xf] %vm616, %v3410
          %3867 = vst.msk [vmem:[#allocation2 + $0x10c] sm:$0xf] %vm616, %v3412
          %3868 = vst.msk [vmem:[#allocation2 + $0x110] sm:$0xf] %vm616, %v3414
          %v3869 = vld [vmem:[#allocation2 + $0x114] sm:$0x1]
          %v3870 = vsel %vm3751, %v3416, %v3869
          %3871 = vst [vmem:[#allocation2 + $0x114] sm:$0x1] %v3870
          %v3872 = vld [vmem:[#allocation2 + $0x118] sm:$0xf]
          %v3873 = vsel %vm3743, %v3418, %v3872
          %3874 = vst [vmem:[#allocation2 + $0x118] sm:$0xf] %v3873
          %3875 = vst.msk [vmem:[#allocation2 + $0x11c] sm:$0xf] %vm616, %v3420
          %3876 = vst.msk [vmem:[#allocation2 + $0x120] sm:$0xf] %vm616, %v3422
          %3877 = vst.msk [vmem:[#allocation2 + $0x124] sm:$0xf] %vm616, %v3424
          %v3878 = vld [vmem:[#allocation2 + $0x128] sm:$0x1]
          %v3879 = vsel %vm3751, %v3426, %v3878
          %3880 = vst [vmem:[#allocation2 + $0x128] sm:$0x1] %v3879
          %v3881 = vld [vmem:[#allocation2 + $0x12c] sm:$0xf]
          %v3882 = vsel %vm3743, %v3428, %v3881
          %3883 = vst [vmem:[#allocation2 + $0x12c] sm:$0xf] %v3882
          %3884 = vst.msk [vmem:[#allocation2 + $0x130] sm:$0xf] %vm616, %v3430
          %3885 = vst.msk [vmem:[#allocation2 + $0x134] sm:$0xf] %vm616, %v3432
          %3886 = vst.msk [vmem:[#allocation2 + $0x138] sm:$0xf] %vm616, %v3434
          %v3887 = vld [vmem:[#allocation2 + $0x13c] sm:$0x1]
          %v3888 = vsel %vm3751, %v3436, %v3887
          %3889 = vst [vmem:[#allocation2 + $0x13c] sm:$0x1] %v3888
          %v3890 = vld [vmem:[#allocation2 + $0x140] sm:$0xf]
          %v3891 = vsel %vm3743, %v3438, %v3890
          %3892 = vst [vmem:[#allocation2 + $0x140] sm:$0xf] %v3891
          %3893 = vst.msk [vmem:[#allocation2 + $0x144] sm:$0xf] %vm616, %v3440
          %3894 = vst.msk [vmem:[#allocation2 + $0x148] sm:$0xf] %vm616, %v3442
          %3895 = vst.msk [vmem:[#allocation2 + $0x14c] sm:$0xf] %vm616, %v3444
          %v3896 = vld [vmem:[#allocation2 + $0x150] sm:$0x1]
          %v3897 = vsel %vm3751, %v3446, %v3896
          %3898 = vst [vmem:[#allocation2 + $0x150] sm:$0x1] %v3897
          %v3899 = vld [vmem:[#allocation2 + $0x154] sm:$0xf]
          %v3900 = vsel %vm3743, %v3448, %v3899
          %3901 = vst [vmem:[#allocation2 + $0x154] sm:$0xf] %v3900
          %3902 = vst.msk [vmem:[#allocation2 + $0x158] sm:$0xf] %vm616, %v3450
          %3903 = vst.msk [vmem:[#allocation2 + $0x15c] sm:$0xf] %vm616, %v3452
          %3904 = vst.msk [vmem:[#allocation2 + $0x160] sm:$0xf] %vm616, %v3454
          %v3905 = vld [vmem:[#allocation2 + $0x164] sm:$0x1]
          %v3906 = vsel %vm3751, %v3456, %v3905
          %3907 = vst [vmem:[#allocation2 + $0x164] sm:$0x1] %v3906
          %v3908 = vld [vmem:[#allocation2 + $0x168] sm:$0xf]
          %v3909 = vsel %vm3743, %v3458, %v3908
          %3910 = vst [vmem:[#allocation2 + $0x168] sm:$0xf] %v3909
          %3911 = vst.msk [vmem:[#allocation2 + $0x16c] sm:$0xf] %vm616, %v3460
          %3912 = vst.msk [vmem:[#allocation2 + $0x170] sm:$0xf] %vm616, %v3462
          %3913 = vst.msk [vmem:[#allocation2 + $0x174] sm:$0xf] %vm616, %v3464
          %v3914 = vld [vmem:[#allocation2 + $0x178] sm:$0x1]
          %v3915 = vsel %vm3751, %v3466, %v3914
          %3916 = vst [vmem:[#allocation2 + $0x178] sm:$0x1] %v3915
          %v3917 = vld [vmem:[#allocation2 + $0x17c] sm:$0xf]
          %v3918 = vsel %vm3743, %v3468, %v3917
          %3919 = vst [vmem:[#allocation2 + $0x17c] sm:$0xf] %v3918
          %3920 = vst.msk [vmem:[#allocation2 + $0x180] sm:$0xf] %vm616, %v3470
          %3921 = vst.msk [vmem:[#allocation2 + $0x184] sm:$0xf] %vm616, %v3472
          %3922 = vst.msk [vmem:[#allocation2 + $0x188] sm:$0xf] %vm616, %v3474
          %v3923 = vld [vmem:[#allocation2 + $0x18c] sm:$0x1]
          %v3924 = vsel %vm3751, %v3476, %v3923
          %3925 = vst [vmem:[#allocation2 + $0x18c] sm:$0x1] %v3924
          %v3926 = vld [vmem:[#allocation2 + $0x190] sm:$0xf]
          %v3927 = vsel %vm3743, %v3478, %v3926
          %3928 = vst [vmem:[#allocation2 + $0x190] sm:$0xf] %v3927
          %3929 = vst.msk [vmem:[#allocation2 + $0x194] sm:$0xf] %vm616, %v3480
          %3930 = vst.msk [vmem:[#allocation2 + $0x198] sm:$0xf] %vm616, %v3482
          %3931 = vst.msk [vmem:[#allocation2 + $0x19c] sm:$0xf] %vm616, %v3484
          %v3932 = vld [vmem:[#allocation2 + $0x1a0] sm:$0x1]
          %v3933 = vsel %vm3751, %v3486, %v3932
          %3934 = vst [vmem:[#allocation2 + $0x1a0] sm:$0x1] %v3933
          %v3935 = vld [vmem:[#allocation2 + $0x1a4] sm:$0xf]
          %v3936 = vsel %vm3743, %v3488, %v3935
          %3937 = vst [vmem:[#allocation2 + $0x1a4] sm:$0xf] %v3936
          %3938 = vst.msk [vmem:[#allocation2 + $0x1a8] sm:$0xf] %vm616, %v3490
          %3939 = vst.msk [vmem:[#allocation2 + $0x1ac] sm:$0xf] %vm616, %v3492
          %3940 = vst.msk [vmem:[#allocation2 + $0x1b0] sm:$0xf] %vm616, %v3494
          %v3941 = vld [vmem:[#allocation2 + $0x1b4] sm:$0x1]
          %v3942 = vsel %vm3751, %v3496, %v3941
          %3943 = vst [vmem:[#allocation2 + $0x1b4] sm:$0x1] %v3942
          %v3944 = vld [vmem:[#allocation2 + $0x1b8] sm:$0xf]
          %v3945 = vsel %vm3743, %v3498, %v3944
          %3946 = vst [vmem:[#allocation2 + $0x1b8] sm:$0xf] %v3945
          %3947 = vst.msk [vmem:[#allocation2 + $0x1bc] sm:$0xf] %vm616, %v3500
          %3948 = vst.msk [vmem:[#allocation2 + $0x1c0] sm:$0xf] %vm616, %v3502
          %3949 = vst.msk [vmem:[#allocation2 + $0x1c4] sm:$0xf] %vm616, %v3504
          %v3950 = vld [vmem:[#allocation2 + $0x1c8] sm:$0x1]
          %v3951 = vsel %vm3751, %v3506, %v3950
          %3952 = vst [vmem:[#allocation2 + $0x1c8] sm:$0x1] %v3951
          %v3953 = vld [vmem:[#allocation2 + $0x1cc] sm:$0xf]
          %v3954 = vsel %vm3743, %v3508, %v3953
          %3955 = vst [vmem:[#allocation2 + $0x1cc] sm:$0xf] %v3954
          %3956 = vst.msk [vmem:[#allocation2 + $0x1d0] sm:$0xf] %vm616, %v3510
          %3957 = vst.msk [vmem:[#allocation2 + $0x1d4] sm:$0xf] %vm616, %v3512
          %3958 = vst.msk [vmem:[#allocation2 + $0x1d8] sm:$0xf] %vm616, %v3514
          %v3959 = vld [vmem:[#allocation2 + $0x1dc] sm:$0x1]
          %v3960 = vsel %vm3751, %v3516, %v3959
          %3961 = vst [vmem:[#allocation2 + $0x1dc] sm:$0x1] %v3960
          %v3962 = vld [vmem:[#allocation2 + $0x1e0] sm:$0xf]
          %v3963 = vsel %vm3743, %v3518, %v3962
          %3964 = vst [vmem:[#allocation2 + $0x1e0] sm:$0xf] %v3963
          %3965 = vst.msk [vmem:[#allocation2 + $0x1e4] sm:$0xf] %vm616, %v3520
          %3966 = vst.msk [vmem:[#allocation2 + $0x1e8] sm:$0xf] %vm616, %v3522
          %3967 = vst.msk [vmem:[#allocation2 + $0x1ec] sm:$0xf] %vm616, %v3524
          %v3968 = vld [vmem:[#allocation2 + $0x1f0] sm:$0x1]
          %v3969 = vsel %vm3751, %v3526, %v3968
          %3970 = vst [vmem:[#allocation2 + $0x1f0] sm:$0x1] %v3969
          %v3971 = vld [vmem:[#allocation2 + $0x1f4] sm:$0xf]
          %v3972 = vsel %vm3743, %v3528, %v3971
          %3973 = vst [vmem:[#allocation2 + $0x1f4] sm:$0xf] %v3972
          %3974 = vst.msk [vmem:[#allocation2 + $0x1f8] sm:$0xf] %vm616, %v3530
          %3975 = vst.msk [vmem:[#allocation2 + $0x1fc] sm:$0xf] %vm616, %v3532
          %3976 = vst.msk [vmem:[#allocation2 + $0x200] sm:$0xf] %vm616, %v3534
          %v3977 = vld [vmem:[#allocation2 + $0x204] sm:$0x1]
          %v3978 = vsel %vm3751, %v3536, %v3977
          %3979 = vst [vmem:[#allocation2 + $0x204] sm:$0x1] %v3978
          %v3980 = vld [vmem:[#allocation2 + $0x208] sm:$0xf]
          %v3981 = vsel %vm3743, %v3538, %v3980
          %3982 = vst [vmem:[#allocation2 + $0x208] sm:$0xf] %v3981
          %3983 = vst.msk [vmem:[#allocation2 + $0x20c] sm:$0xf] %vm616, %v3540
          %3984 = vst.msk [vmem:[#allocation2 + $0x210] sm:$0xf] %vm616, %v3542
          %3985 = vst.msk [vmem:[#allocation2 + $0x214] sm:$0xf] %vm616, %v3544
          %v3986 = vld [vmem:[#allocation2 + $0x218] sm:$0x1]
          %v3987 = vsel %vm3751, %v3546, %v3986
          %3988 = vst [vmem:[#allocation2 + $0x218] sm:$0x1] %v3987
          %v3989 = vld [vmem:[#allocation2 + $0x21c] sm:$0xf]
          %v3990 = vsel %vm3743, %v3548, %v3989
          %3991 = vst [vmem:[#allocation2 + $0x21c] sm:$0xf] %v3990
          %3992 = vst.msk [vmem:[#allocation2 + $0x220] sm:$0xf] %vm616, %v3550
          %3993 = vst.msk [vmem:[#allocation2 + $0x224] sm:$0xf] %vm616, %v3552
          %3994 = vst.msk [vmem:[#allocation2 + $0x228] sm:$0xf] %vm616, %v3554
          %v3995 = vld [vmem:[#allocation2 + $0x22c] sm:$0x1]
          %v3996 = vsel %vm3751, %v3556, %v3995
          %3997 = vst [vmem:[#allocation2 + $0x22c] sm:$0x1] %v3996
          %v3998 = vld [vmem:[#allocation2 + $0x230] sm:$0xf]
          %v3999 = vsel %vm3743, %v3558, %v3998
          %4000 = vst [vmem:[#allocation2 + $0x230] sm:$0xf] %v3999
          %4001 = vst.msk [vmem:[#allocation2 + $0x234] sm:$0xf] %vm616, %v3560
          %4002 = vst.msk [vmem:[#allocation2 + $0x238] sm:$0xf] %vm616, %v3562
          %4003 = vst.msk [vmem:[#allocation2 + $0x23c] sm:$0xf] %vm616, %v3564
          %v4004 = vld [vmem:[#allocation2 + $0x240] sm:$0x1]
          %v4005 = vsel %vm3751, %v3566, %v4004
          %4006 = vst [vmem:[#allocation2 + $0x240] sm:$0x1] %v4005
          %v4007 = vld [vmem:[#allocation2 + $0x244] sm:$0xf]
          %v4008 = vsel %vm3743, %v3568, %v4007
          %4009 = vst [vmem:[#allocation2 + $0x244] sm:$0xf] %v4008
          %4010 = vst.msk [vmem:[#allocation2 + $0x248] sm:$0xf] %vm616, %v3570
          %4011 = vst.msk [vmem:[#allocation2 + $0x24c] sm:$0xf] %vm616, %v3572
          %4012 = vst.msk [vmem:[#allocation2 + $0x250] sm:$0xf] %vm616, %v3574
          %v4013 = vld [vmem:[#allocation2 + $0x254] sm:$0x1]
          %v4014 = vsel %vm3751, %v3576, %v4013
          %4015 = vst [vmem:[#allocation2 + $0x254] sm:$0x1] %v4014
          %v4016 = vld [vmem:[#allocation2 + $0x258] sm:$0xf]
          %v4017 = vsel %vm3743, %v3578, %v4016
          %4018 = vst [vmem:[#allocation2 + $0x258] sm:$0xf] %v4017
          %4019 = vst.msk [vmem:[#allocation2 + $0x25c] sm:$0xf] %vm616, %v3580
          %4020 = vst.msk [vmem:[#allocation2 + $0x260] sm:$0xf] %vm616, %v3582
          %4021 = vst.msk [vmem:[#allocation2 + $0x264] sm:$0xf] %vm616, %v3584
          %v4022 = vld [vmem:[#allocation2 + $0x268] sm:$0x1]
          %v4023 = vsel %vm3751, %v3586, %v4022
          %4024 = vst [vmem:[#allocation2 + $0x268] sm:$0x1] %v4023
        $region36: #{tpu_custom_call.1} parent=31 // pred_fallthru
          _
        %v4025 = vld [vmem:[%s213] sm:$0x1]
        %v4026 = vld [vmem:[#allocation2] sm:$0xf]
        %v4027 = vld [vmem:[#allocation2 + $0x4] sm:$0xf]
        %v4028 = vld [vmem:[#allocation2 + $0x8] sm:$0xf]
        %v4029 = vld [vmem:[#allocation2 + $0xc] sm:$0xf]
        %v4030 = vld [vmem:[#allocation2 + $0x14] sm:$0xf]
        %v4031 = vld [vmem:[#allocation2 + $0x18] sm:$0xf]
        %v4032 = vld [vmem:[#allocation2 + $0x1c] sm:$0xf]
        %v4033 = vld [vmem:[#allocation2 + $0x20] sm:$0xf]
        %v4034 = vld [vmem:[#allocation2 + $0x28] sm:$0xf]
        %v4035 = vld [vmem:[#allocation2 + $0x2c] sm:$0xf]
        %v4036 = vld [vmem:[#allocation2 + $0x30] sm:$0xf]
        %v4037 = vld [vmem:[#allocation2 + $0x34] sm:$0xf]
        %v4038 = vld [vmem:[#allocation2 + $0x3c] sm:$0xf]
        %v4039 = vld [vmem:[#allocation2 + $0x40] sm:$0xf]
        %v4040 = vld [vmem:[#allocation2 + $0x44] sm:$0xf]
        %v4041 = vld [vmem:[#allocation2 + $0x48] sm:$0xf]
        %v4042 = vld [vmem:[#allocation2 + $0x50] sm:$0xf]
        %v4043 = vld [vmem:[#allocation2 + $0x54] sm:$0xf]
        %v4044 = vld [vmem:[#allocation2 + $0x58] sm:$0xf]
        %v4045 = vld [vmem:[#allocation2 + $0x5c] sm:$0xf]
        %v4046 = vld [vmem:[#allocation2 + $0x64] sm:$0xf]
        %v4047 = vld [vmem:[#allocation2 + $0x68] sm:$0xf]
        %v4048 = vld [vmem:[#allocation2 + $0x6c] sm:$0xf]
        %v4049 = vld [vmem:[#allocation2 + $0x70] sm:$0xf]
        %v4050 = vld [vmem:[#allocation2 + $0x78] sm:$0xf]
        %v4051 = vld [vmem:[#allocation2 + $0x7c] sm:$0xf]
        %v4052 = vld [vmem:[#allocation2 + $0x80] sm:$0xf]
        %v4053 = vld [vmem:[#allocation2 + $0x84] sm:$0xf]
        %v4054 = vld [vmem:[#allocation2 + $0x8c] sm:$0xf]
        %v4055 = vld [vmem:[#allocation2 + $0x90] sm:$0xf]
        %v4056 = vld [vmem:[#allocation2 + $0x94] sm:$0xf]
        %v4057 = vld [vmem:[#allocation2 + $0x98] sm:$0xf]
        %v4058 = vld [vmem:[#allocation2 + $0xa0] sm:$0xf]
        %v4059 = vld [vmem:[#allocation2 + $0xa4] sm:$0xf]
        %v4060 = vld [vmem:[#allocation2 + $0xa8] sm:$0xf]
        %v4061 = vld [vmem:[#allocation2 + $0xac] sm:$0xf]
        %v4062 = vld [vmem:[#allocation2 + $0xb4] sm:$0xf]
        %v4063 = vld [vmem:[#allocation2 + $0xb8] sm:$0xf]
        %v4064 = vld [vmem:[#allocation2 + $0xbc] sm:$0xf]
        %v4065 = vld [vmem:[#allocation2 + $0xc0] sm:$0xf]
        %v4066 = vld [vmem:[#allocation2 + $0xc8] sm:$0xf]
        %v4067 = vld [vmem:[#allocation2 + $0xcc] sm:$0xf]
        %v4068 = vld [vmem:[#allocation2 + $0xd0] sm:$0xf]
        %v4069 = vld [vmem:[#allocation2 + $0xd4] sm:$0xf]
        %v4070 = vld [vmem:[#allocation2 + $0xdc] sm:$0xf]
        %v4071 = vld [vmem:[#allocation2 + $0xe0] sm:$0xf]
        %v4072 = vld [vmem:[#allocation2 + $0xe4] sm:$0xf]
        %v4073 = vld [vmem:[#allocation2 + $0xe8] sm:$0xf]
        %v4074 = vld [vmem:[#allocation2 + $0xf0] sm:$0xf]
        %v4075 = vld [vmem:[#allocation2 + $0xf4] sm:$0xf]
        %v4076 = vld [vmem:[#allocation2 + $0xf8] sm:$0xf]
        %v4077 = vld [vmem:[#allocation2 + $0xfc] sm:$0xf]
        %v4078 = vld [vmem:[#allocation2 + $0x104] sm:$0xf]
        %v4079 = vld [vmem:[#allocation2 + $0x108] sm:$0xf]
        %v4080 = vld [vmem:[#allocation2 + $0x10c] sm:$0xf]
        %v4081 = vld [vmem:[#allocation2 + $0x110] sm:$0xf]
        %v4082 = vld [vmem:[#allocation2 + $0x118] sm:$0xf]
        %v4083 = vld [vmem:[#allocation2 + $0x11c] sm:$0xf]
        %v4084 = vld [vmem:[#allocation2 + $0x120] sm:$0xf]
        %v4085 = vld [vmem:[#allocation2 + $0x124] sm:$0xf]
        %v4086 = vld [vmem:[#allocation2 + $0x12c] sm:$0xf]
        %v4087 = vld [vmem:[#allocation2 + $0x130] sm:$0xf]
        %v4088 = vld [vmem:[#allocation2 + $0x134] sm:$0xf]
        %v4089 = vld [vmem:[#allocation2 + $0x138] sm:$0xf]
        %v4090 = vld [vmem:[#allocation2 + $0x140] sm:$0xf]
        %v4091 = vld [vmem:[#allocation2 + $0x144] sm:$0xf]
        %v4092 = vld [vmem:[#allocation2 + $0x148] sm:$0xf]
        %v4093 = vld [vmem:[#allocation2 + $0x14c] sm:$0xf]
        %v4094 = vld [vmem:[#allocation2 + $0x154] sm:$0xf]
        %v4095 = vld [vmem:[#allocation2 + $0x158] sm:$0xf]
        %v4096 = vld [vmem:[#allocation2 + $0x15c] sm:$0xf]
        %v4097 = vld [vmem:[#allocation2 + $0x160] sm:$0xf]
        %v4098 = vld [vmem:[#allocation2 + $0x168] sm:$0xf]
        %v4099 = vld [vmem:[#allocation2 + $0x16c] sm:$0xf]
        %v4100 = vld [vmem:[#allocation2 + $0x170] sm:$0xf]
        %v4101 = vld [vmem:[#allocation2 + $0x174] sm:$0xf]
        %v4102 = vld [vmem:[#allocation2 + $0x17c] sm:$0xf]
        %v4103 = vld [vmem:[#allocation2 + $0x180] sm:$0xf]
        %v4104 = vld [vmem:[#allocation2 + $0x184] sm:$0xf]
        %v4105 = vld [vmem:[#allocation2 + $0x188] sm:$0xf]
        %v4106 = vld [vmem:[#allocation2 + $0x190] sm:$0xf]
        %v4107 = vld [vmem:[#allocation2 + $0x194] sm:$0xf]
        %v4108 = vld [vmem:[#allocation2 + $0x198] sm:$0xf]
        %v4109 = vld [vmem:[#allocation2 + $0x19c] sm:$0xf]
        %v4110 = vld [vmem:[#allocation2 + $0x1a4] sm:$0xf]
        %v4111 = vld [vmem:[#allocation2 + $0x1a8] sm:$0xf]
        %v4112 = vld [vmem:[#allocation2 + $0x1ac] sm:$0xf]
        %v4113 = vld [vmem:[#allocation2 + $0x1b0] sm:$0xf]
        %v4114 = vld [vmem:[#allocation2 + $0x1b8] sm:$0xf]
        %v4115 = vld [vmem:[#allocation2 + $0x1bc] sm:$0xf]
        %v4116 = vld [vmem:[#allocation2 + $0x1c0] sm:$0xf]
        %v4117 = vld [vmem:[#allocation2 + $0x1c4] sm:$0xf]
        %v4118 = vld [vmem:[#allocation2 + $0x1cc] sm:$0xf]
        %v4119 = vld [vmem:[#allocation2 + $0x1d0] sm:$0xf]
        %v4120 = vld [vmem:[#allocation2 + $0x1d4] sm:$0xf]
        %v4121 = vld [vmem:[#allocation2 + $0x1d8] sm:$0xf]
        %v4122 = vld [vmem:[#allocation2 + $0x1e0] sm:$0xf]
        %v4123 = vld [vmem:[#allocation2 + $0x1e4] sm:$0xf]
        %v4124 = vld [vmem:[#allocation2 + $0x1e8] sm:$0xf]
        %v4125 = vld [vmem:[#allocation2 + $0x1ec] sm:$0xf]
        %v4126 = vld [vmem:[#allocation2 + $0x1f4] sm:$0xf]
        %v4127 = vld [vmem:[#allocation2 + $0x1f8] sm:$0xf]
        %v4128 = vld [vmem:[#allocation2 + $0x1fc] sm:$0xf]
        %v4129 = vld [vmem:[#allocation2 + $0x200] sm:$0xf]
        %v4130 = vld [vmem:[#allocation2 + $0x208] sm:$0xf]
        %v4131 = vld [vmem:[#allocation2 + $0x20c] sm:$0xf]
        %v4132 = vld [vmem:[#allocation2 + $0x210] sm:$0xf]
        %v4133 = vld [vmem:[#allocation2 + $0x214] sm:$0xf]
        %v4134 = vld [vmem:[#allocation2 + $0x21c] sm:$0xf]
        %v4135 = vld [vmem:[#allocation2 + $0x220] sm:$0xf]
        %v4136 = vld [vmem:[#allocation2 + $0x224] sm:$0xf]
        %v4137 = vld [vmem:[#allocation2 + $0x228] sm:$0xf]
        %v4138 = vld [vmem:[#allocation2 + $0x230] sm:$0xf]
        %v4139 = vld [vmem:[#allocation2 + $0x234] sm:$0xf]
        %v4140 = vld [vmem:[#allocation2 + $0x238] sm:$0xf]
        %v4141 = vld [vmem:[#allocation2 + $0x23c] sm:$0xf]
        %v4142 = vld [vmem:[#allocation2 + $0x244] sm:$0xf]
        %v4143 = vld [vmem:[#allocation2 + $0x248] sm:$0xf]
        %v4144 = vld [vmem:[#allocation2 + $0x24c] sm:$0xf]
        %v4145 = vld [vmem:[#allocation2 + $0x250] sm:$0xf]
        %v4146 = vld [vmem:[#allocation2 + $0x258] sm:$0xf]
        %v4147 = vld [vmem:[#allocation2 + $0x25c] sm:$0xf]
        %v4148 = vld [vmem:[#allocation2 + $0x260] sm:$0xf]
        %v4149 = vld [vmem:[#allocation2 + $0x264] sm:$0xf]
        %v4150 = vld [vmem:[#allocation2 + $0x26c] sm:$0xf]
        %v4151 = vld [vmem:[#allocation2 + $0x270] sm:$0xf]
        %v4152 = vld [vmem:[#allocation2 + $0x274] sm:$0xf]
        %v4153 = vld [vmem:[#allocation2 + $0x278] sm:$0xf]
        %v4154 = vld [vmem:[%s210] sm:$0xf]
        %v4155 = vld [vmem:[%s210 + $0x4] sm:$0xf]
        %v4156 = vld [vmem:[%s210 + $0x8] sm:$0xf]
        %v4157 = vld [vmem:[#allocation2 + $0x10] sm:$0x1]
        %v4158 = vld [vmem:[#allocation2 + $0x24] sm:$0x1]
        %v4159 = vld [vmem:[#allocation2 + $0x38] sm:$0x1]
        %v4160 = vld [vmem:[#allocation2 + $0x4c] sm:$0x1]
        %v4161 = vld [vmem:[#allocation2 + $0x60] sm:$0x1]
        %v4162 = vld [vmem:[#allocation2 + $0x74] sm:$0x1]
        %v4163 = vld [vmem:[#allocation2 + $0x88] sm:$0x1]
        %v4164 = vld [vmem:[#allocation2 + $0x9c] sm:$0x1]
        %v4165 = vld [vmem:[#allocation2 + $0xb0] sm:$0x1]
        %v4166 = vld [vmem:[#allocation2 + $0xc4] sm:$0x1]
        %v4167 = vld [vmem:[#allocation2 + $0xd8] sm:$0x1]
        %v4168 = vld [vmem:[#allocation2 + $0xec] sm:$0x1]
        %v4169 = vld [vmem:[#allocation2 + $0x100] sm:$0x1]
        %v4170 = vld [vmem:[#allocation2 + $0x114] sm:$0x1]
        %v4171 = vld [vmem:[#allocation2 + $0x128] sm:$0x1]
        %v4172 = vld [vmem:[#allocation2 + $0x13c] sm:$0x1]
        %v4173 = vld [vmem:[#allocation2 + $0x150] sm:$0x1]
        %v4174 = vld [vmem:[#allocation2 + $0x164] sm:$0x1]
        %v4175 = vld [vmem:[#allocation2 + $0x178] sm:$0x1]
        %v4176 = vld [vmem:[#allocation2 + $0x18c] sm:$0x1]
        %v4177 = vld [vmem:[#allocation2 + $0x1a0] sm:$0x1]
        %v4178 = vld [vmem:[#allocation2 + $0x1b4] sm:$0x1]
        %v4179 = vld [vmem:[#allocation2 + $0x1c8] sm:$0x1]
        %v4180 = vld [vmem:[#allocation2 + $0x1dc] sm:$0x1]
        %v4181 = vld [vmem:[#allocation2 + $0x1f0] sm:$0x1]
        %v4182 = vld [vmem:[#allocation2 + $0x204] sm:$0x1]
        %v4183 = vld [vmem:[#allocation2 + $0x218] sm:$0x1]
        %v4184 = vld [vmem:[#allocation2 + $0x22c] sm:$0x1]
        %v4185 = vld [vmem:[#allocation2 + $0x240] sm:$0x1]
        %v4186 = vld [vmem:[#allocation2 + $0x254] sm:$0x1]
        %v4187 = vld [vmem:[#allocation2 + $0x268] sm:$0x1]
        %v4188 = vld [vmem:[#allocation2 + $0x27c] sm:$0x1]
        %vm4189 = vsmask.f32 3328
        %vm4190 = vsmask.f32 7440
        %vm4191 = vmor %vm4189, %vm4190
        %v4193 = vshrl.u32 %v4026, 16
        %v4195 = vrot.slane %v4193, 4
        %v4196 = vshll.u32 %v4026, 16
        %v4198 = vrot.slane %v4196, 5
        %v4199 = vor.u32 %v4195, %v4198
        %v4200 = vrot.slane %v4199, 4
        %v4202 = vshll.u32 %v4027, 16
        %v4204 = vrot.slane %v4202, 5
        %v4205 = vsel %vm4191, %v4200, %v4204
        %v4206 = vshrl.u32 %v4027, 16
        %v4208 = vrot.slane %v4206, 4
        %v4209 = vor.u32 %v4208, %v4204
        %v4210 = vrot.slane %v4209, 4
        %v4212 = vshll.u32 %v4028, 16
        %v4214 = vrot.slane %v4212, 5
        %v4215 = vsel %vm4191, %v4210, %v4214
        %v4216 = vshrl.u32 %v4028, 16
        %v4218 = vrot.slane %v4216, 4
        %v4219 = vor.u32 %v4218, %v4214
        %v4220 = vrot.slane %v4219, 4
        %v4222 = vshll.u32 %v4029, 16
        %v4224 = vrot.slane %v4222, 5
        %v4225 = vsel %vm4191, %v4220, %v4224
        %v4226 = vshrl.u32 %v4029, 16
        %v4228 = vrot.slane %v4226, 4
        %v4229 = vor.u32 %v4228, %v4224
        %v4230 = vrot.slane %v4229, 4
        %v4232 = vshll.u32 %v4157, 16
        %v4234 = vrot.slane %v4232, 5
        %v4235 = vsel %vm4191, %v4230, %v4234
        %v4237 = vshrl.u32 %v4030, 16
        %v4239 = vrot.slane %v4237, 4
        %v4240 = vshll.u32 %v4030, 16
        %v4242 = vrot.slane %v4240, 5
        %v4243 = vor.u32 %v4239, %v4242
        %v4244 = vrot.slane %v4243, 4
        %v4246 = vshll.u32 %v4031, 16
        %v4248 = vrot.slane %v4246, 5
        %v4249 = vsel %vm4191, %v4244, %v4248
        %v4250 = vshrl.u32 %v4031, 16
        %v4252 = vrot.slane %v4250, 4
        %v4253 = vor.u32 %v4252, %v4248
        %v4254 = vrot.slane %v4253, 4
        %v4256 = vshll.u32 %v4032, 16
        %v4258 = vrot.slane %v4256, 5
        %v4259 = vsel %vm4191, %v4254, %v4258
        %v4260 = vshrl.u32 %v4032, 16
        %v4262 = vrot.slane %v4260, 4
        %v4263 = vor.u32 %v4262, %v4258
        %v4264 = vrot.slane %v4263, 4
        %v4266 = vshll.u32 %v4033, 16
        %v4268 = vrot.slane %v4266, 5
        %v4269 = vsel %vm4191, %v4264, %v4268
        %v4270 = vshrl.u32 %v4033, 16
        %v4272 = vrot.slane %v4270, 4
        %v4273 = vor.u32 %v4272, %v4268
        %v4274 = vrot.slane %v4273, 4
        %v4276 = vshll.u32 %v4158, 16
        %v4278 = vrot.slane %v4276, 5
        %v4279 = vsel %vm4191, %v4274, %v4278
        %v4281 = vshrl.u32 %v4034, 16
        %v4283 = vrot.slane %v4281, 4
        %v4284 = vshll.u32 %v4034, 16
        %v4286 = vrot.slane %v4284, 5
        %v4287 = vor.u32 %v4283, %v4286
        %v4288 = vrot.slane %v4287, 4
        %v4290 = vshll.u32 %v4035, 16
        %v4292 = vrot.slane %v4290, 5
        %v4293 = vsel %vm4191, %v4288, %v4292
        %v4294 = vshrl.u32 %v4035, 16
        %v4296 = vrot.slane %v4294, 4
        %v4297 = vor.u32 %v4296, %v4292
        %v4298 = vrot.slane %v4297, 4
        %v4300 = vshll.u32 %v4036, 16
        %v4302 = vrot.slane %v4300, 5
        %v4303 = vsel %vm4191, %v4298, %v4302
        %v4304 = vshrl.u32 %v4036, 16
        %v4306 = vrot.slane %v4304, 4
        %v4307 = vor.u32 %v4306, %v4302
        %v4308 = vrot.slane %v4307, 4
        %v4310 = vshll.u32 %v4037, 16
        %v4312 = vrot.slane %v4310, 5
        %v4313 = vsel %vm4191, %v4308, %v4312
        %v4314 = vshrl.u32 %v4037, 16
        %v4316 = vrot.slane %v4314, 4
        %v4317 = vor.u32 %v4316, %v4312
        %v4318 = vrot.slane %v4317, 4
        %v4320 = vshll.u32 %v4159, 16
        %v4322 = vrot.slane %v4320, 5
        %v4323 = vsel %vm4191, %v4318, %v4322
        %v4325 = vshrl.u32 %v4038, 16
        %v4327 = vrot.slane %v4325, 4
        %v4328 = vshll.u32 %v4038, 16
        %v4330 = vrot.slane %v4328, 5
        %v4331 = vor.u32 %v4327, %v4330
        %v4332 = vrot.slane %v4331, 4
        %v4334 = vshll.u32 %v4039, 16
        %v4336 = vrot.slane %v4334, 5
        %v4337 = vsel %vm4191, %v4332, %v4336
        %v4338 = vshrl.u32 %v4039, 16
        %v4340 = vrot.slane %v4338, 4
        %v4341 = vor.u32 %v4340, %v4336
        %v4342 = vrot.slane %v4341, 4
        %v4344 = vshll.u32 %v4040, 16
        %v4346 = vrot.slane %v4344, 5
        %v4347 = vsel %vm4191, %v4342, %v4346
        %v4348 = vshrl.u32 %v4040, 16
        %v4350 = vrot.slane %v4348, 4
        %v4351 = vor.u32 %v4350, %v4346
        %v4352 = vrot.slane %v4351, 4
        %v4354 = vshll.u32 %v4041, 16
        %v4356 = vrot.slane %v4354, 5
        %v4357 = vsel %vm4191, %v4352, %v4356
        %v4358 = vshrl.u32 %v4041, 16
        %v4360 = vrot.slane %v4358, 4
        %v4361 = vor.u32 %v4360, %v4356
        %v4362 = vrot.slane %v4361, 4
        %v4364 = vshll.u32 %v4160, 16
        %v4366 = vrot.slane %v4364, 5
        %v4367 = vsel %vm4191, %v4362, %v4366
        %v4369 = vshrl.u32 %v4042, 16
        %v4371 = vrot.slane %v4369, 4
        %v4372 = vshll.u32 %v4042, 16
        %v4374 = vrot.slane %v4372, 5
        %v4375 = vor.u32 %v4371, %v4374
        %v4376 = vrot.slane %v4375, 4
        %v4378 = vshll.u32 %v4043, 16
        %v4380 = vrot.slane %v4378, 5
        %v4381 = vsel %vm4191, %v4376, %v4380
        %v4382 = vshrl.u32 %v4043, 16
        %v4384 = vrot.slane %v4382, 4
        %v4385 = vor.u32 %v4384, %v4380
        %v4386 = vrot.slane %v4385, 4
        %v4388 = vshll.u32 %v4044, 16
        %v4390 = vrot.slane %v4388, 5
        %v4391 = vsel %vm4191, %v4386, %v4390
        %v4392 = vshrl.u32 %v4044, 16
        %v4394 = vrot.slane %v4392, 4
        %v4395 = vor.u32 %v4394, %v4390
        %v4396 = vrot.slane %v4395, 4
        %v4398 = vshll.u32 %v4045, 16
        %v4400 = vrot.slane %v4398, 5
        %v4401 = vsel %vm4191, %v4396, %v4400
        %v4402 = vshrl.u32 %v4045, 16
        %v4404 = vrot.slane %v4402, 4
        %v4405 = vor.u32 %v4404, %v4400
        %v4406 = vrot.slane %v4405, 4
        %v4408 = vshll.u32 %v4161, 16
        %v4410 = vrot.slane %v4408, 5
        %v4411 = vsel %vm4191, %v4406, %v4410
        %v4413 = vshrl.u32 %v4046, 16
        %v4415 = vrot.slane %v4413, 4
        %v4416 = vshll.u32 %v4046, 16
        %v4418 = vrot.slane %v4416, 5
        %v4419 = vor.u32 %v4415, %v4418
        %v4420 = vrot.slane %v4419, 4
        %v4422 = vshll.u32 %v4047, 16
        %v4424 = vrot.slane %v4422, 5
        %v4425 = vsel %vm4191, %v4420, %v4424
        %v4426 = vshrl.u32 %v4047, 16
        %v4428 = vrot.slane %v4426, 4
        %v4429 = vor.u32 %v4428, %v4424
        %v4430 = vrot.slane %v4429, 4
        %v4432 = vshll.u32 %v4048, 16
        %v4434 = vrot.slane %v4432, 5
        %v4435 = vsel %vm4191, %v4430, %v4434
        %v4436 = vshrl.u32 %v4048, 16
        %v4438 = vrot.slane %v4436, 4
        %v4439 = vor.u32 %v4438, %v4434
        %v4440 = vrot.slane %v4439, 4
        %v4442 = vshll.u32 %v4049, 16
        %v4444 = vrot.slane %v4442, 5
        %v4445 = vsel %vm4191, %v4440, %v4444
        %v4446 = vshrl.u32 %v4049, 16
        %v4448 = vrot.slane %v4446, 4
        %v4449 = vor.u32 %v4448, %v4444
        %v4450 = vrot.slane %v4449, 4
        %v4452 = vshll.u32 %v4162, 16
        %v4454 = vrot.slane %v4452, 5
        %v4455 = vsel %vm4191, %v4450, %v4454
        %v4457 = vshrl.u32 %v4050, 16
        %v4459 = vrot.slane %v4457, 4
        %v4460 = vshll.u32 %v4050, 16
        %v4462 = vrot.slane %v4460, 5
        %v4463 = vor.u32 %v4459, %v4462
        %v4464 = vrot.slane %v4463, 4
        %v4466 = vshll.u32 %v4051, 16
        %v4468 = vrot.slane %v4466, 5
        %v4469 = vsel %vm4191, %v4464, %v4468
        %v4470 = vshrl.u32 %v4051, 16
        %v4472 = vrot.slane %v4470, 4
        %v4473 = vor.u32 %v4472, %v4468
        %v4474 = vrot.slane %v4473, 4
        %v4476 = vshll.u32 %v4052, 16
        %v4478 = vrot.slane %v4476, 5
        %v4479 = vsel %vm4191, %v4474, %v4478
        %v4480 = vshrl.u32 %v4052, 16
        %v4482 = vrot.slane %v4480, 4
        %v4483 = vor.u32 %v4482, %v4478
        %v4484 = vrot.slane %v4483, 4
        %v4486 = vshll.u32 %v4053, 16
        %v4488 = vrot.slane %v4486, 5
        %v4489 = vsel %vm4191, %v4484, %v4488
        %v4490 = vshrl.u32 %v4053, 16
        %v4492 = vrot.slane %v4490, 4
        %v4493 = vor.u32 %v4492, %v4488
        %v4494 = vrot.slane %v4493, 4
        %v4496 = vshll.u32 %v4163, 16
        %v4498 = vrot.slane %v4496, 5
        %v4499 = vsel %vm4191, %v4494, %v4498
        %v4501 = vshrl.u32 %v4054, 16
        %v4503 = vrot.slane %v4501, 4
        %v4504 = vshll.u32 %v4054, 16
        %v4506 = vrot.slane %v4504, 5
        %v4507 = vor.u32 %v4503, %v4506
        %v4508 = vrot.slane %v4507, 4
        %v4510 = vshll.u32 %v4055, 16
        %v4512 = vrot.slane %v4510, 5
        %v4513 = vsel %vm4191, %v4508, %v4512
        %v4514 = vshrl.u32 %v4055, 16
        %v4516 = vrot.slane %v4514, 4
        %v4517 = vor.u32 %v4516, %v4512
        %v4518 = vrot.slane %v4517, 4
        %v4520 = vshll.u32 %v4056, 16
        %v4522 = vrot.slane %v4520, 5
        %v4523 = vsel %vm4191, %v4518, %v4522
        %v4524 = vshrl.u32 %v4056, 16
        %v4526 = vrot.slane %v4524, 4
        %v4527 = vor.u32 %v4526, %v4522
        %v4528 = vrot.slane %v4527, 4
        %v4530 = vshll.u32 %v4057, 16
        %v4532 = vrot.slane %v4530, 5
        %v4533 = vsel %vm4191, %v4528, %v4532
        %v4534 = vshrl.u32 %v4057, 16
        %v4536 = vrot.slane %v4534, 4
        %v4537 = vor.u32 %v4536, %v4532
        %v4538 = vrot.slane %v4537, 4
        %v4540 = vshll.u32 %v4164, 16
        %v4542 = vrot.slane %v4540, 5
        %v4543 = vsel %vm4191, %v4538, %v4542
        %v4545 = vshrl.u32 %v4058, 16
        %v4547 = vrot.slane %v4545, 4
        %v4548 = vshll.u32 %v4058, 16
        %v4550 = vrot.slane %v4548, 5
        %v4551 = vor.u32 %v4547, %v4550
        %v4552 = vrot.slane %v4551, 4
        %v4554 = vshll.u32 %v4059, 16
        %v4556 = vrot.slane %v4554, 5
        %v4557 = vsel %vm4191, %v4552, %v4556
        %v4558 = vshrl.u32 %v4059, 16
        %v4560 = vrot.slane %v4558, 4
        %v4561 = vor.u32 %v4560, %v4556
        %v4562 = vrot.slane %v4561, 4
        %v4564 = vshll.u32 %v4060, 16
        %v4566 = vrot.slane %v4564, 5
        %v4567 = vsel %vm4191, %v4562, %v4566
        %v4568 = vshrl.u32 %v4060, 16
        %v4570 = vrot.slane %v4568, 4
        %v4571 = vor.u32 %v4570, %v4566
        %v4572 = vrot.slane %v4571, 4
        %v4574 = vshll.u32 %v4061, 16
        %v4576 = vrot.slane %v4574, 5
        %v4577 = vsel %vm4191, %v4572, %v4576
        %v4578 = vshrl.u32 %v4061, 16
        %v4580 = vrot.slane %v4578, 4
        %v4581 = vor.u32 %v4580, %v4576
        %v4582 = vrot.slane %v4581, 4
        %v4584 = vshll.u32 %v4165, 16
        %v4586 = vrot.slane %v4584, 5
        %v4587 = vsel %vm4191, %v4582, %v4586
        %v4589 = vshrl.u32 %v4062, 16
        %v4591 = vrot.slane %v4589, 4
        %v4592 = vshll.u32 %v4062, 16
        %v4594 = vrot.slane %v4592, 5
        %v4595 = vor.u32 %v4591, %v4594
        %v4596 = vrot.slane %v4595, 4
        %v4598 = vshll.u32 %v4063, 16
        %v4600 = vrot.slane %v4598, 5
        %v4601 = vsel %vm4191, %v4596, %v4600
        %v4602 = vshrl.u32 %v4063, 16
        %v4604 = vrot.slane %v4602, 4
        %v4605 = vor.u32 %v4604, %v4600
        %v4606 = vrot.slane %v4605, 4
        %v4608 = vshll.u32 %v4064, 16
        %v4610 = vrot.slane %v4608, 5
        %v4611 = vsel %vm4191, %v4606, %v4610
        %v4612 = vshrl.u32 %v4064, 16
        %v4614 = vrot.slane %v4612, 4
        %v4615 = vor.u32 %v4614, %v4610
        %v4616 = vrot.slane %v4615, 4
        %v4618 = vshll.u32 %v4065, 16
        %v4620 = vrot.slane %v4618, 5
        %v4621 = vsel %vm4191, %v4616, %v4620
        %v4622 = vshrl.u32 %v4065, 16
        %v4624 = vrot.slane %v4622, 4
        %v4625 = vor.u32 %v4624, %v4620
        %v4626 = vrot.slane %v4625, 4
        %v4628 = vshll.u32 %v4166, 16
        %v4630 = vrot.slane %v4628, 5
        %v4631 = vsel %vm4191, %v4626, %v4630
        %v4633 = vshrl.u32 %v4066, 16
        %v4635 = vrot.slane %v4633, 4
        %v4636 = vshll.u32 %v4066, 16
        %v4638 = vrot.slane %v4636, 5
        %v4639 = vor.u32 %v4635, %v4638
        %v4640 = vrot.slane %v4639, 4
        %v4642 = vshll.u32 %v4067, 16
        %v4644 = vrot.slane %v4642, 5
        %v4645 = vsel %vm4191, %v4640, %v4644
        %v4646 = vshrl.u32 %v4067, 16
        %v4648 = vrot.slane %v4646, 4
        %v4649 = vor.u32 %v4648, %v4644
        %v4650 = vrot.slane %v4649, 4
        %v4652 = vshll.u32 %v4068, 16
        %v4654 = vrot.slane %v4652, 5
        %v4655 = vsel %vm4191, %v4650, %v4654
        %v4656 = vshrl.u32 %v4068, 16
        %v4658 = vrot.slane %v4656, 4
        %v4659 = vor.u32 %v4658, %v4654
        %v4660 = vrot.slane %v4659, 4
        %v4662 = vshll.u32 %v4069, 16
        %v4664 = vrot.slane %v4662, 5
        %v4665 = vsel %vm4191, %v4660, %v4664
        %v4666 = vshrl.u32 %v4069, 16
        %v4668 = vrot.slane %v4666, 4
        %v4669 = vor.u32 %v4668, %v4664
        %v4670 = vrot.slane %v4669, 4
        %v4672 = vshll.u32 %v4167, 16
        %v4674 = vrot.slane %v4672, 5
        %v4675 = vsel %vm4191, %v4670, %v4674
        %v4677 = vshrl.u32 %v4070, 16
        %v4679 = vrot.slane %v4677, 4
        %v4680 = vshll.u32 %v4070, 16
        %v4682 = vrot.slane %v4680, 5
        %v4683 = vor.u32 %v4679, %v4682
        %v4684 = vrot.slane %v4683, 4
        %v4686 = vshll.u32 %v4071, 16
        %v4688 = vrot.slane %v4686, 5
        %v4689 = vsel %vm4191, %v4684, %v4688
        %v4690 = vshrl.u32 %v4071, 16
        %v4692 = vrot.slane %v4690, 4
        %v4693 = vor.u32 %v4692, %v4688
        %v4694 = vrot.slane %v4693, 4
        %v4696 = vshll.u32 %v4072, 16
        %v4698 = vrot.slane %v4696, 5
        %v4699 = vsel %vm4191, %v4694, %v4698
        %v4700 = vshrl.u32 %v4072, 16
        %v4702 = vrot.slane %v4700, 4
        %v4703 = vor.u32 %v4702, %v4698
        %v4704 = vrot.slane %v4703, 4
        %v4706 = vshll.u32 %v4073, 16
        %v4708 = vrot.slane %v4706, 5
        %v4709 = vsel %vm4191, %v4704, %v4708
        %v4710 = vshrl.u32 %v4073, 16
        %v4712 = vrot.slane %v4710, 4
        %v4713 = vor.u32 %v4712, %v4708
        %v4714 = vrot.slane %v4713, 4
        %v4716 = vshll.u32 %v4168, 16
        %v4718 = vrot.slane %v4716, 5
        %v4719 = vsel %vm4191, %v4714, %v4718
        %v4721 = vshrl.u32 %v4074, 16
        %v4723 = vrot.slane %v4721, 4
        %v4724 = vshll.u32 %v4074, 16
        %v4726 = vrot.slane %v4724, 5
        %v4727 = vor.u32 %v4723, %v4726
        %v4728 = vrot.slane %v4727, 4
        %v4730 = vshll.u32 %v4075, 16
        %v4732 = vrot.slane %v4730, 5
        %v4733 = vsel %vm4191, %v4728, %v4732
        %v4734 = vshrl.u32 %v4075, 16
        %v4736 = vrot.slane %v4734, 4
        %v4737 = vor.u32 %v4736, %v4732
        %v4738 = vrot.slane %v4737, 4
        %v4740 = vshll.u32 %v4076, 16
        %v4742 = vrot.slane %v4740, 5
        %v4743 = vsel %vm4191, %v4738, %v4742
        %v4744 = vshrl.u32 %v4076, 16
        %v4746 = vrot.slane %v4744, 4
        %v4747 = vor.u32 %v4746, %v4742
        %v4748 = vrot.slane %v4747, 4
        %v4750 = vshll.u32 %v4077, 16
        %v4752 = vrot.slane %v4750, 5
        %v4753 = vsel %vm4191, %v4748, %v4752
        %v4754 = vshrl.u32 %v4077, 16
        %v4756 = vrot.slane %v4754, 4
        %v4757 = vor.u32 %v4756, %v4752
        %v4758 = vrot.slane %v4757, 4
        %v4760 = vshll.u32 %v4169, 16
        %v4762 = vrot.slane %v4760, 5
        %v4763 = vsel %vm4191, %v4758, %v4762
        %v4765 = vshrl.u32 %v4078, 16
        %v4767 = vrot.slane %v4765, 4
        %v4768 = vshll.u32 %v4078, 16
        %v4770 = vrot.slane %v4768, 5
        %v4771 = vor.u32 %v4767, %v4770
        %v4772 = vrot.slane %v4771, 4
        %v4774 = vshll.u32 %v4079, 16
        %v4776 = vrot.slane %v4774, 5
        %v4777 = vsel %vm4191, %v4772, %v4776
        %v4778 = vshrl.u32 %v4079, 16
        %v4780 = vrot.slane %v4778, 4
        %v4781 = vor.u32 %v4780, %v4776
        %v4782 = vrot.slane %v4781, 4
        %v4784 = vshll.u32 %v4080, 16
        %v4786 = vrot.slane %v4784, 5
        %v4787 = vsel %vm4191, %v4782, %v4786
        %v4788 = vshrl.u32 %v4080, 16
        %v4790 = vrot.slane %v4788, 4
        %v4791 = vor.u32 %v4790, %v4786
        %v4792 = vrot.slane %v4791, 4
        %v4794 = vshll.u32 %v4081, 16
        %v4796 = vrot.slane %v4794, 5
        %v4797 = vsel %vm4191, %v4792, %v4796
        %v4798 = vshrl.u32 %v4081, 16
        %v4800 = vrot.slane %v4798, 4
        %v4801 = vor.u32 %v4800, %v4796
        %v4802 = vrot.slane %v4801, 4
        %v4804 = vshll.u32 %v4170, 16
        %v4806 = vrot.slane %v4804, 5
        %v4807 = vsel %vm4191, %v4802, %v4806
        %v4809 = vshrl.u32 %v4082, 16
        %v4811 = vrot.slane %v4809, 4
        %v4812 = vshll.u32 %v4082, 16
        %v4814 = vrot.slane %v4812, 5
        %v4815 = vor.u32 %v4811, %v4814
        %v4816 = vrot.slane %v4815, 4
        %v4818 = vshll.u32 %v4083, 16
        %v4820 = vrot.slane %v4818, 5
        %v4821 = vsel %vm4191, %v4816, %v4820
        %v4822 = vshrl.u32 %v4083, 16
        %v4824 = vrot.slane %v4822, 4
        %v4825 = vor.u32 %v4824, %v4820
        %v4826 = vrot.slane %v4825, 4
        %v4828 = vshll.u32 %v4084, 16
        %v4830 = vrot.slane %v4828, 5
        %v4831 = vsel %vm4191, %v4826, %v4830
        %v4832 = vshrl.u32 %v4084, 16
        %v4834 = vrot.slane %v4832, 4
        %v4835 = vor.u32 %v4834, %v4830
        %v4836 = vrot.slane %v4835, 4
        %v4838 = vshll.u32 %v4085, 16
        %v4840 = vrot.slane %v4838, 5
        %v4841 = vsel %vm4191, %v4836, %v4840
        %v4842 = vshrl.u32 %v4085, 16
        %v4844 = vrot.slane %v4842, 4
        %v4845 = vor.u32 %v4844, %v4840
        %v4846 = vrot.slane %v4845, 4
        %v4848 = vshll.u32 %v4171, 16
        %v4850 = vrot.slane %v4848, 5
        %v4851 = vsel %vm4191, %v4846, %v4850
        %v4853 = vshrl.u32 %v4086, 16
        %v4855 = vrot.slane %v4853, 4
        %v4856 = vshll.u32 %v4086, 16
        %v4858 = vrot.slane %v4856, 5
        %v4859 = vor.u32 %v4855, %v4858
        %v4860 = vrot.slane %v4859, 4
        %v4862 = vshll.u32 %v4087, 16
        %v4864 = vrot.slane %v4862, 5
        %v4865 = vsel %vm4191, %v4860, %v4864
        %v4866 = vshrl.u32 %v4087, 16
        %v4868 = vrot.slane %v4866, 4
        %v4869 = vor.u32 %v4868, %v4864
        %v4870 = vrot.slane %v4869, 4
        %v4872 = vshll.u32 %v4088, 16
        %v4874 = vrot.slane %v4872, 5
        %v4875 = vsel %vm4191, %v4870, %v4874
        %v4876 = vshrl.u32 %v4088, 16
        %v4878 = vrot.slane %v4876, 4
        %v4879 = vor.u32 %v4878, %v4874
        %v4880 = vrot.slane %v4879, 4
        %v4882 = vshll.u32 %v4089, 16
        %v4884 = vrot.slane %v4882, 5
        %v4885 = vsel %vm4191, %v4880, %v4884
        %v4886 = vshrl.u32 %v4089, 16
        %v4888 = vrot.slane %v4886, 4
        %v4889 = vor.u32 %v4888, %v4884
        %v4890 = vrot.slane %v4889, 4
        %v4892 = vshll.u32 %v4172, 16
        %v4894 = vrot.slane %v4892, 5
        %v4895 = vsel %vm4191, %v4890, %v4894
        %v4897 = vshrl.u32 %v4090, 16
        %v4899 = vrot.slane %v4897, 4
        %v4900 = vshll.u32 %v4090, 16
        %v4902 = vrot.slane %v4900, 5
        %v4903 = vor.u32 %v4899, %v4902
        %v4904 = vrot.slane %v4903, 4
        %v4906 = vshll.u32 %v4091, 16
        %v4908 = vrot.slane %v4906, 5
        %v4909 = vsel %vm4191, %v4904, %v4908
        %v4910 = vshrl.u32 %v4091, 16
        %v4912 = vrot.slane %v4910, 4
        %v4913 = vor.u32 %v4912, %v4908
        %v4914 = vrot.slane %v4913, 4
        %v4916 = vshll.u32 %v4092, 16
        %v4918 = vrot.slane %v4916, 5
        %v4919 = vsel %vm4191, %v4914, %v4918
        %v4920 = vshrl.u32 %v4092, 16
        %v4922 = vrot.slane %v4920, 4
        %v4923 = vor.u32 %v4922, %v4918
        %v4924 = vrot.slane %v4923, 4
        %v4926 = vshll.u32 %v4093, 16
        %v4928 = vrot.slane %v4926, 5
        %v4929 = vsel %vm4191, %v4924, %v4928
        %v4930 = vshrl.u32 %v4093, 16
        %v4932 = vrot.slane %v4930, 4
        %v4933 = vor.u32 %v4932, %v4928
        %v4934 = vrot.slane %v4933, 4
        %v4936 = vshll.u32 %v4173, 16
        %v4938 = vrot.slane %v4936, 5
        %v4939 = vsel %vm4191, %v4934, %v4938
        %v4941 = vshrl.u32 %v4094, 16
        %v4943 = vrot.slane %v4941, 4
        %v4944 = vshll.u32 %v4094, 16
        %v4946 = vrot.slane %v4944, 5
        %v4947 = vor.u32 %v4943, %v4946
        %v4948 = vrot.slane %v4947, 4
        %v4950 = vshll.u32 %v4095, 16
        %v4952 = vrot.slane %v4950, 5
        %v4953 = vsel %vm4191, %v4948, %v4952
        %v4954 = vshrl.u32 %v4095, 16
        %v4956 = vrot.slane %v4954, 4
        %v4957 = vor.u32 %v4956, %v4952
        %v4958 = vrot.slane %v4957, 4
        %v4960 = vshll.u32 %v4096, 16
        %v4962 = vrot.slane %v4960, 5
        %v4963 = vsel %vm4191, %v4958, %v4962
        %v4964 = vshrl.u32 %v4096, 16
        %v4966 = vrot.slane %v4964, 4
        %v4967 = vor.u32 %v4966, %v4962
        %v4968 = vrot.slane %v4967, 4
        %v4970 = vshll.u32 %v4097, 16
        %v4972 = vrot.slane %v4970, 5
        %v4973 = vsel %vm4191, %v4968, %v4972
        %v4974 = vshrl.u32 %v4097, 16
        %v4976 = vrot.slane %v4974, 4
        %v4977 = vor.u32 %v4976, %v4972
        %v4978 = vrot.slane %v4977, 4
        %v4980 = vshll.u32 %v4174, 16
        %v4982 = vrot.slane %v4980, 5
        %v4983 = vsel %vm4191, %v4978, %v4982
        %v4985 = vshrl.u32 %v4098, 16
        %v4987 = vrot.slane %v4985, 4
        %v4988 = vshll.u32 %v4098, 16
        %v4990 = vrot.slane %v4988, 5
        %v4991 = vor.u32 %v4987, %v4990
        %v4992 = vrot.slane %v4991, 4
        %v4994 = vshll.u32 %v4099, 16
        %v4996 = vrot.slane %v4994, 5
        %v4997 = vsel %vm4191, %v4992, %v4996
        %v4998 = vshrl.u32 %v4099, 16
        %v5000 = vrot.slane %v4998, 4
        %v5001 = vor.u32 %v5000, %v4996
        %v5002 = vrot.slane %v5001, 4
        %v5004 = vshll.u32 %v4100, 16
        %v5006 = vrot.slane %v5004, 5
        %v5007 = vsel %vm4191, %v5002, %v5006
        %v5008 = vshrl.u32 %v4100, 16
        %v5010 = vrot.slane %v5008, 4
        %v5011 = vor.u32 %v5010, %v5006
        %v5012 = vrot.slane %v5011, 4
        %v5014 = vshll.u32 %v4101, 16
        %v5016 = vrot.slane %v5014, 5
        %v5017 = vsel %vm4191, %v5012, %v5016
        %v5018 = vshrl.u32 %v4101, 16
        %v5020 = vrot.slane %v5018, 4
        %v5021 = vor.u32 %v5020, %v5016
        %v5022 = vrot.slane %v5021, 4
        %v5024 = vshll.u32 %v4175, 16
        %v5026 = vrot.slane %v5024, 5
        %v5027 = vsel %vm4191, %v5022, %v5026
        %v5029 = vshrl.u32 %v4102, 16
        %v5031 = vrot.slane %v5029, 4
        %v5032 = vshll.u32 %v4102, 16
        %v5034 = vrot.slane %v5032, 5
        %v5035 = vor.u32 %v5031, %v5034
        %v5036 = vrot.slane %v5035, 4
        %v5038 = vshll.u32 %v4103, 16
        %v5040 = vrot.slane %v5038, 5
        %v5041 = vsel %vm4191, %v5036, %v5040
        %v5042 = vshrl.u32 %v4103, 16
        %v5044 = vrot.slane %v5042, 4
        %v5045 = vor.u32 %v5044, %v5040
        %v5046 = vrot.slane %v5045, 4
        %v5048 = vshll.u32 %v4104, 16
        %v5050 = vrot.slane %v5048, 5
        %v5051 = vsel %vm4191, %v5046, %v5050
        %v5052 = vshrl.u32 %v4104, 16
        %v5054 = vrot.slane %v5052, 4
        %v5055 = vor.u32 %v5054, %v5050
        %v5056 = vrot.slane %v5055, 4
        %v5058 = vshll.u32 %v4105, 16
        %v5060 = vrot.slane %v5058, 5
        %v5061 = vsel %vm4191, %v5056, %v5060
        %v5062 = vshrl.u32 %v4105, 16
        %v5064 = vrot.slane %v5062, 4
        %v5065 = vor.u32 %v5064, %v5060
        %v5066 = vrot.slane %v5065, 4
        %v5068 = vshll.u32 %v4176, 16
        %v5070 = vrot.slane %v5068, 5
        %v5071 = vsel %vm4191, %v5066, %v5070
        %v5073 = vshrl.u32 %v4106, 16
        %v5075 = vrot.slane %v5073, 4
        %v5076 = vshll.u32 %v4106, 16
        %v5078 = vrot.slane %v5076, 5
        %v5079 = vor.u32 %v5075, %v5078
        %v5080 = vrot.slane %v5079, 4
        %v5082 = vshll.u32 %v4107, 16
        %v5084 = vrot.slane %v5082, 5
        %v5085 = vsel %vm4191, %v5080, %v5084
        %v5086 = vshrl.u32 %v4107, 16
        %v5088 = vrot.slane %v5086, 4
        %v5089 = vor.u32 %v5088, %v5084
        %v5090 = vrot.slane %v5089, 4
        %v5092 = vshll.u32 %v4108, 16
        %v5094 = vrot.slane %v5092, 5
        %v5095 = vsel %vm4191, %v5090, %v5094
        %v5096 = vshrl.u32 %v4108, 16
        %v5098 = vrot.slane %v5096, 4
        %v5099 = vor.u32 %v5098, %v5094
        %v5100 = vrot.slane %v5099, 4
        %v5102 = vshll.u32 %v4109, 16
        %v5104 = vrot.slane %v5102, 5
        %v5105 = vsel %vm4191, %v5100, %v5104
        %v5106 = vshrl.u32 %v4109, 16
        %v5108 = vrot.slane %v5106, 4
        %v5109 = vor.u32 %v5108, %v5104
        %v5110 = vrot.slane %v5109, 4
        %v5112 = vshll.u32 %v4177, 16
        %v5114 = vrot.slane %v5112, 5
        %v5115 = vsel %vm4191, %v5110, %v5114
        %v5117 = vshrl.u32 %v4110, 16
        %v5119 = vrot.slane %v5117, 4
        %v5120 = vshll.u32 %v4110, 16
        %v5122 = vrot.slane %v5120, 5
        %v5123 = vor.u32 %v5119, %v5122
        %v5124 = vrot.slane %v5123, 4
        %v5126 = vshll.u32 %v4111, 16
        %v5128 = vrot.slane %v5126, 5
        %v5129 = vsel %vm4191, %v5124, %v5128
        %v5130 = vshrl.u32 %v4111, 16
        %v5132 = vrot.slane %v5130, 4
        %v5133 = vor.u32 %v5132, %v5128
        %v5134 = vrot.slane %v5133, 4
        %v5136 = vshll.u32 %v4112, 16
        %v5138 = vrot.slane %v5136, 5
        %v5139 = vsel %vm4191, %v5134, %v5138
        %v5140 = vshrl.u32 %v4112, 16
        %v5142 = vrot.slane %v5140, 4
        %v5143 = vor.u32 %v5142, %v5138
        %v5144 = vrot.slane %v5143, 4
        %v5146 = vshll.u32 %v4113, 16
        %v5148 = vrot.slane %v5146, 5
        %v5149 = vsel %vm4191, %v5144, %v5148
        %v5150 = vshrl.u32 %v4113, 16
        %v5152 = vrot.slane %v5150, 4
        %v5153 = vor.u32 %v5152, %v5148
        %v5154 = vrot.slane %v5153, 4
        %v5156 = vshll.u32 %v4178, 16
        %v5158 = vrot.slane %v5156, 5
        %v5159 = vsel %vm4191, %v5154, %v5158
        %v5161 = vshrl.u32 %v4114, 16
        %v5163 = vrot.slane %v5161, 4
        %v5164 = vshll.u32 %v4114, 16
        %v5166 = vrot.slane %v5164, 5
        %v5167 = vor.u32 %v5163, %v5166
        %v5168 = vrot.slane %v5167, 4
        %v5170 = vshll.u32 %v4115, 16
        %v5172 = vrot.slane %v5170, 5
        %v5173 = vsel %vm4191, %v5168, %v5172
        %v5174 = vshrl.u32 %v4115, 16
        %v5176 = vrot.slane %v5174, 4
        %v5177 = vor.u32 %v5176, %v5172
        %v5178 = vrot.slane %v5177, 4
        %v5180 = vshll.u32 %v4116, 16
        %v5182 = vrot.slane %v5180, 5
        %v5183 = vsel %vm4191, %v5178, %v5182
        %v5184 = vshrl.u32 %v4116, 16
        %v5186 = vrot.slane %v5184, 4
        %v5187 = vor.u32 %v5186, %v5182
        %v5188 = vrot.slane %v5187, 4
        %v5190 = vshll.u32 %v4117, 16
        %v5192 = vrot.slane %v5190, 5
        %v5193 = vsel %vm4191, %v5188, %v5192
        %v5194 = vshrl.u32 %v4117, 16
        %v5196 = vrot.slane %v5194, 4
        %v5197 = vor.u32 %v5196, %v5192
        %v5198 = vrot.slane %v5197, 4
        %v5200 = vshll.u32 %v4179, 16
        %v5202 = vrot.slane %v5200, 5
        %v5203 = vsel %vm4191, %v5198, %v5202
        %v5205 = vshrl.u32 %v4118, 16
        %v5207 = vrot.slane %v5205, 4
        %v5208 = vshll.u32 %v4118, 16
        %v5210 = vrot.slane %v5208, 5
        %v5211 = vor.u32 %v5207, %v5210
        %v5212 = vrot.slane %v5211, 4
        %v5214 = vshll.u32 %v4119, 16
        %v5216 = vrot.slane %v5214, 5
        %v5217 = vsel %vm4191, %v5212, %v5216
        %v5218 = vshrl.u32 %v4119, 16
        %v5220 = vrot.slane %v5218, 4
        %v5221 = vor.u32 %v5220, %v5216
        %v5222 = vrot.slane %v5221, 4
        %v5224 = vshll.u32 %v4120, 16
        %v5226 = vrot.slane %v5224, 5
        %v5227 = vsel %vm4191, %v5222, %v5226
        %v5228 = vshrl.u32 %v4120, 16
        %v5230 = vrot.slane %v5228, 4
        %v5231 = vor.u32 %v5230, %v5226
        %v5232 = vrot.slane %v5231, 4
        %v5234 = vshll.u32 %v4121, 16
        %v5236 = vrot.slane %v5234, 5
        %v5237 = vsel %vm4191, %v5232, %v5236
        %v5238 = vshrl.u32 %v4121, 16
        %v5240 = vrot.slane %v5238, 4
        %v5241 = vor.u32 %v5240, %v5236
        %v5242 = vrot.slane %v5241, 4
        %v5244 = vshll.u32 %v4180, 16
        %v5246 = vrot.slane %v5244, 5
        %v5247 = vsel %vm4191, %v5242, %v5246
        %v5249 = vshrl.u32 %v4122, 16
        %v5251 = vrot.slane %v5249, 4
        %v5252 = vshll.u32 %v4122, 16
        %v5254 = vrot.slane %v5252, 5
        %v5255 = vor.u32 %v5251, %v5254
        %v5256 = vrot.slane %v5255, 4
        %v5258 = vshll.u32 %v4123, 16
        %v5260 = vrot.slane %v5258, 5
        %v5261 = vsel %vm4191, %v5256, %v5260
        %v5262 = vshrl.u32 %v4123, 16
        %v5264 = vrot.slane %v5262, 4
        %v5265 = vor.u32 %v5264, %v5260
        %v5266 = vrot.slane %v5265, 4
        %v5268 = vshll.u32 %v4124, 16
        %v5270 = vrot.slane %v5268, 5
        %v5271 = vsel %vm4191, %v5266, %v5270
        %v5272 = vshrl.u32 %v4124, 16
        %v5274 = vrot.slane %v5272, 4
        %v5275 = vor.u32 %v5274, %v5270
        %v5276 = vrot.slane %v5275, 4
        %v5278 = vshll.u32 %v4125, 16
        %v5280 = vrot.slane %v5278, 5
        %v5281 = vsel %vm4191, %v5276, %v5280
        %v5282 = vshrl.u32 %v4125, 16
        %v5284 = vrot.slane %v5282, 4
        %v5285 = vor.u32 %v5284, %v5280
        %v5286 = vrot.slane %v5285, 4
        %v5288 = vshll.u32 %v4181, 16
        %v5290 = vrot.slane %v5288, 5
        %v5291 = vsel %vm4191, %v5286, %v5290
        %v5293 = vshrl.u32 %v4126, 16
        %v5295 = vrot.slane %v5293, 4
        %v5296 = vshll.u32 %v4126, 16
        %v5298 = vrot.slane %v5296, 5
        %v5299 = vor.u32 %v5295, %v5298
        %v5300 = vrot.slane %v5299, 4
        %v5302 = vshll.u32 %v4127, 16
        %v5304 = vrot.slane %v5302, 5
        %v5305 = vsel %vm4191, %v5300, %v5304
        %v5306 = vshrl.u32 %v4127, 16
        %v5308 = vrot.slane %v5306, 4
        %v5309 = vor.u32 %v5308, %v5304
        %v5310 = vrot.slane %v5309, 4
        %v5312 = vshll.u32 %v4128, 16
        %v5314 = vrot.slane %v5312, 5
        %v5315 = vsel %vm4191, %v5310, %v5314
        %v5316 = vshrl.u32 %v4128, 16
        %v5318 = vrot.slane %v5316, 4
        %v5319 = vor.u32 %v5318, %v5314
        %v5320 = vrot.slane %v5319, 4
        %v5322 = vshll.u32 %v4129, 16
        %v5324 = vrot.slane %v5322, 5
        %v5325 = vsel %vm4191, %v5320, %v5324
        %v5326 = vshrl.u32 %v4129, 16
        %v5328 = vrot.slane %v5326, 4
        %v5329 = vor.u32 %v5328, %v5324
        %v5330 = vrot.slane %v5329, 4
        %v5332 = vshll.u32 %v4182, 16
        %v5334 = vrot.slane %v5332, 5
        %v5335 = vsel %vm4191, %v5330, %v5334
        %v5337 = vshrl.u32 %v4130, 16
        %v5339 = vrot.slane %v5337, 4
        %v5340 = vshll.u32 %v4130, 16
        %v5342 = vrot.slane %v5340, 5
        %v5343 = vor.u32 %v5339, %v5342
        %v5344 = vrot.slane %v5343, 4
        %v5346 = vshll.u32 %v4131, 16
        %v5348 = vrot.slane %v5346, 5
        %v5349 = vsel %vm4191, %v5344, %v5348
        %v5350 = vshrl.u32 %v4131, 16
        %v5352 = vrot.slane %v5350, 4
        %v5353 = vor.u32 %v5352, %v5348
        %v5354 = vrot.slane %v5353, 4
        %v5356 = vshll.u32 %v4132, 16
        %v5358 = vrot.slane %v5356, 5
        %v5359 = vsel %vm4191, %v5354, %v5358
        %v5360 = vshrl.u32 %v4132, 16
        %v5362 = vrot.slane %v5360, 4
        %v5363 = vor.u32 %v5362, %v5358
        %v5364 = vrot.slane %v5363, 4
        %v5366 = vshll.u32 %v4133, 16
        %v5368 = vrot.slane %v5366, 5
        %v5369 = vsel %vm4191, %v5364, %v5368
        %v5370 = vshrl.u32 %v4133, 16
        %v5372 = vrot.slane %v5370, 4
        %v5373 = vor.u32 %v5372, %v5368
        %v5374 = vrot.slane %v5373, 4
        %v5376 = vshll.u32 %v4183, 16
        %v5378 = vrot.slane %v5376, 5
        %v5379 = vsel %vm4191, %v5374, %v5378
        %v5381 = vshrl.u32 %v4134, 16
        %v5383 = vrot.slane %v5381, 4
        %v5384 = vshll.u32 %v4134, 16
        %v5386 = vrot.slane %v5384, 5
        %v5387 = vor.u32 %v5383, %v5386
        %v5388 = vrot.slane %v5387, 4
        %v5390 = vshll.u32 %v4135, 16
        %v5392 = vrot.slane %v5390, 5
        %v5393 = vsel %vm4191, %v5388, %v5392
        %v5394 = vshrl.u32 %v4135, 16
        %v5396 = vrot.slane %v5394, 4
        %v5397 = vor.u32 %v5396, %v5392
        %v5398 = vrot.slane %v5397, 4
        %v5400 = vshll.u32 %v4136, 16
        %v5402 = vrot.slane %v5400, 5
        %v5403 = vsel %vm4191, %v5398, %v5402
        %v5404 = vshrl.u32 %v4136, 16
        %v5406 = vrot.slane %v5404, 4
        %v5407 = vor.u32 %v5406, %v5402
        %v5408 = vrot.slane %v5407, 4
        %v5410 = vshll.u32 %v4137, 16
        %v5412 = vrot.slane %v5410, 5
        %v5413 = vsel %vm4191, %v5408, %v5412
        %v5414 = vshrl.u32 %v4137, 16
        %v5416 = vrot.slane %v5414, 4
        %v5417 = vor.u32 %v5416, %v5412
        %v5418 = vrot.slane %v5417, 4
        %v5420 = vshll.u32 %v4184, 16
        %v5422 = vrot.slane %v5420, 5
        %v5423 = vsel %vm4191, %v5418, %v5422
        %v5425 = vshrl.u32 %v4138, 16
        %v5427 = vrot.slane %v5425, 4
        %v5428 = vshll.u32 %v4138, 16
        %v5430 = vrot.slane %v5428, 5
        %v5431 = vor.u32 %v5427, %v5430
        %v5432 = vrot.slane %v5431, 4
        %v5434 = vshll.u32 %v4139, 16
        %v5436 = vrot.slane %v5434, 5
        %v5437 = vsel %vm4191, %v5432, %v5436
        %v5438 = vshrl.u32 %v4139, 16
        %v5440 = vrot.slane %v5438, 4
        %v5441 = vor.u32 %v5440, %v5436
        %v5442 = vrot.slane %v5441, 4
        %v5444 = vshll.u32 %v4140, 16
        %v5446 = vrot.slane %v5444, 5
        %v5447 = vsel %vm4191, %v5442, %v5446
        %v5448 = vshrl.u32 %v4140, 16
        %v5450 = vrot.slane %v5448, 4
        %v5451 = vor.u32 %v5450, %v5446
        %v5452 = vrot.slane %v5451, 4
        %v5454 = vshll.u32 %v4141, 16
        %v5456 = vrot.slane %v5454, 5
        %v5457 = vsel %vm4191, %v5452, %v5456
        %v5458 = vshrl.u32 %v4141, 16
        %v5460 = vrot.slane %v5458, 4
        %v5461 = vor.u32 %v5460, %v5456
        %v5462 = vrot.slane %v5461, 4
        %v5464 = vshll.u32 %v4185, 16
        %v5466 = vrot.slane %v5464, 5
        %v5467 = vsel %vm4191, %v5462, %v5466
        %v5469 = vshrl.u32 %v4142, 16
        %v5471 = vrot.slane %v5469, 4
        %v5472 = vshll.u32 %v4142, 16
        %v5474 = vrot.slane %v5472, 5
        %v5475 = vor.u32 %v5471, %v5474
        %v5476 = vrot.slane %v5475, 4
        %v5478 = vshll.u32 %v4143, 16
        %v5480 = vrot.slane %v5478, 5
        %v5481 = vsel %vm4191, %v5476, %v5480
        %v5482 = vshrl.u32 %v4143, 16
        %v5484 = vrot.slane %v5482, 4
        %v5485 = vor.u32 %v5484, %v5480
        %v5486 = vrot.slane %v5485, 4
        %v5488 = vshll.u32 %v4144, 16
        %v5490 = vrot.slane %v5488, 5
        %v5491 = vsel %vm4191, %v5486, %v5490
        %v5492 = vshrl.u32 %v4144, 16
        %v5494 = vrot.slane %v5492, 4
        %v5495 = vor.u32 %v5494, %v5490
        %v5496 = vrot.slane %v5495, 4
        %v5498 = vshll.u32 %v4145, 16
        %v5500 = vrot.slane %v5498, 5
        %v5501 = vsel %vm4191, %v5496, %v5500
        %v5502 = vshrl.u32 %v4145, 16
        %v5504 = vrot.slane %v5502, 4
        %v5505 = vor.u32 %v5504, %v5500
        %v5506 = vrot.slane %v5505, 4
        %v5508 = vshll.u32 %v4186, 16
        %v5510 = vrot.slane %v5508, 5
        %v5511 = vsel %vm4191, %v5506, %v5510
        %v5513 = vshrl.u32 %v4146, 16
        %v5515 = vrot.slane %v5513, 4
        %v5516 = vshll.u32 %v4146, 16
        %v5518 = vrot.slane %v5516, 5
        %v5519 = vor.u32 %v5515, %v5518
        %v5520 = vrot.slane %v5519, 4
        %v5522 = vshll.u32 %v4147, 16
        %v5524 = vrot.slane %v5522, 5
        %v5525 = vsel %vm4191, %v5520, %v5524
        %v5526 = vshrl.u32 %v4147, 16
        %v5528 = vrot.slane %v5526, 4
        %v5529 = vor.u32 %v5528, %v5524
        %v5530 = vrot.slane %v5529, 4
        %v5532 = vshll.u32 %v4148, 16
        %v5534 = vrot.slane %v5532, 5
        %v5535 = vsel %vm4191, %v5530, %v5534
        %v5536 = vshrl.u32 %v4148, 16
        %v5538 = vrot.slane %v5536, 4
        %v5539 = vor.u32 %v5538, %v5534
        %v5540 = vrot.slane %v5539, 4
        %v5542 = vshll.u32 %v4149, 16
        %v5544 = vrot.slane %v5542, 5
        %v5545 = vsel %vm4191, %v5540, %v5544
        %v5546 = vshrl.u32 %v4149, 16
        %v5548 = vrot.slane %v5546, 4
        %v5549 = vor.u32 %v5548, %v5544
        %v5550 = vrot.slane %v5549, 4
        %v5552 = vshll.u32 %v4187, 16
        %v5554 = vrot.slane %v5552, 5
        %v5555 = vsel %vm4191, %v5550, %v5554
        %v5557 = vshrl.u32 %v4150, 16
        %v5559 = vrot.slane %v5557, 4
        %v5560 = vshll.u32 %v4150, 16
        %v5562 = vrot.slane %v5560, 5
        %v5563 = vor.u32 %v5559, %v5562
        %v5564 = vrot.slane %v5563, 4
        %v5566 = vshll.u32 %v4151, 16
        %v5568 = vrot.slane %v5566, 5
        %v5569 = vsel %vm4191, %v5564, %v5568
        %v5570 = vshrl.u32 %v4151, 16
        %v5572 = vrot.slane %v5570, 4
        %v5573 = vor.u32 %v5572, %v5568
        %v5574 = vrot.slane %v5573, 4
        %v5576 = vshll.u32 %v4152, 16
        %v5578 = vrot.slane %v5576, 5
        %v5579 = vsel %vm4191, %v5574, %v5578
        %v5580 = vshrl.u32 %v4152, 16
        %v5582 = vrot.slane %v5580, 4
        %v5583 = vor.u32 %v5582, %v5578
        %v5584 = vrot.slane %v5583, 4
        %v5586 = vshll.u32 %v4153, 16
        %v5588 = vrot.slane %v5586, 5
        %v5589 = vsel %vm4191, %v5584, %v5588
        %v5590 = vshrl.u32 %v4153, 16
        %v5592 = vrot.slane %v5590, 4
        %v5593 = vor.u32 %v5592, %v5588
        %v5594 = vrot.slane %v5593, 4
        %v5596 = vshll.u32 %v4188, 16
        %v5598 = vrot.slane %v5596, 5
        %v5599 = vsel %vm4191, %v5594, %v5598
        %s5600 = scalar_lea.vmem %s210, 12
        %v5601 = vld [vmem:[%s5600] sm:$0xf]
        %v5602 = vld [vmem:[%s5600 + $0x4] sm:$0xf]
        %v5603 = vld [vmem:[%s5600 + $0x8] sm:$0xf]
        %v5604 = vunpack.c.l.b16 %v4205
        %v5605 = vunpack.c.l.b16 %v4215
        %v5606 = vunpack.c.l.b16 %v4225
        %v5607 = vunpack.c.l.b16 %v4235
        %v5608 = vunpack.c.l.b16 %v4249
        %v5609 = vunpack.c.l.b16 %v4259
        %v5610 = vunpack.c.l.b16 %v4269
        %v5611 = vunpack.c.l.b16 %v4279
        %v5612 = vunpack.c.l.b16 %v4293
        %v5613 = vunpack.c.l.b16 %v4303
        %v5614 = vunpack.c.l.b16 %v4313
        %v5615 = vunpack.c.l.b16 %v4323
        %v5616 = vunpack.c.l.b16 %v4337
        %v5617 = vunpack.c.l.b16 %v4347
        %v5618 = vunpack.c.l.b16 %v4357
        %v5619 = vunpack.c.l.b16 %v4367
        %v5620 = vunpack.c.l.b16 %v4381
        %v5621 = vunpack.c.l.b16 %v4391
        %v5622 = vunpack.c.l.b16 %v4401
        %v5623 = vunpack.c.l.b16 %v4411
        %v5624 = vunpack.c.l.b16 %v4425
        %v5625 = vunpack.c.l.b16 %v4435
        %v5626 = vunpack.c.l.b16 %v4445
        %v5627 = vunpack.c.l.b16 %v4455
        %v5628 = vunpack.c.l.b16 %v4469
        %v5629 = vunpack.c.l.b16 %v4479
        %v5630 = vunpack.c.l.b16 %v4489
        %v5631 = vunpack.c.l.b16 %v4499
        %v5632 = vunpack.c.l.b16 %v4513
        %v5633 = vunpack.c.l.b16 %v4523
        %v5634 = vunpack.c.l.b16 %v4533
        %v5635 = vunpack.c.l.b16 %v4543
        %v5636 = vunpack.c.l.b16 %v4557
        %v5637 = vunpack.c.l.b16 %v4567
        %v5638 = vunpack.c.l.b16 %v4577
        %v5639 = vunpack.c.l.b16 %v4587
        %v5640 = vunpack.c.l.b16 %v4601
        %v5641 = vunpack.c.l.b16 %v4611
        %v5642 = vunpack.c.l.b16 %v4621
        %v5643 = vunpack.c.l.b16 %v4631
        %v5644 = vunpack.c.l.b16 %v4645
        %v5645 = vunpack.c.l.b16 %v4655
        %v5646 = vunpack.c.l.b16 %v4665
        %v5647 = vunpack.c.l.b16 %v4675
        %v5648 = vunpack.c.l.b16 %v4689
        %v5649 = vunpack.c.l.b16 %v4699
        %v5650 = vunpack.c.l.b16 %v4709
        %v5651 = vunpack.c.l.b16 %v4719
        %v5652 = vunpack.c.l.b16 %v4733
        %v5653 = vunpack.c.l.b16 %v4743
        %v5654 = vunpack.c.l.b16 %v4753
        %v5655 = vunpack.c.l.b16 %v4763
        %v5656 = vunpack.c.l.b16 %v4777
        %v5657 = vunpack.c.l.b16 %v4787
        %v5658 = vunpack.c.l.b16 %v4797
        %v5659 = vunpack.c.l.b16 %v4807
        %v5660 = vunpack.c.l.b16 %v4821
        %v5661 = vunpack.c.l.b16 %v4831
        %v5662 = vunpack.c.l.b16 %v4841
        %v5663 = vunpack.c.l.b16 %v4851
        %v5664 = vunpack.c.l.b16 %v4865
        %v5665 = vunpack.c.l.b16 %v4875
        %v5666 = vunpack.c.l.b16 %v4885
        %v5667 = vunpack.c.l.b16 %v4895
        %v5668 = vunpack.c.l.b16 %v4909
        %v5669 = vunpack.c.l.b16 %v4919
        %v5670 = vunpack.c.l.b16 %v4929
        %v5671 = vunpack.c.l.b16 %v4939
        %v5672 = vunpack.c.l.b16 %v4953
        %v5673 = vunpack.c.l.b16 %v4963
        %v5674 = vunpack.c.l.b16 %v4973
        %v5675 = vunpack.c.l.b16 %v4983
        %v5676 = vunpack.c.l.b16 %v4997
        %v5677 = vunpack.c.l.b16 %v5007
        %v5678 = vunpack.c.l.b16 %v5017
        %v5679 = vunpack.c.l.b16 %v5027
        %v5680 = vunpack.c.l.b16 %v5041
        %v5681 = vunpack.c.l.b16 %v5051
        %v5682 = vunpack.c.l.b16 %v5061
        %v5683 = vunpack.c.l.b16 %v5071
        %v5684 = vunpack.c.l.b16 %v5085
        %v5685 = vunpack.c.l.b16 %v5095
        %v5686 = vunpack.c.l.b16 %v5105
        %v5687 = vunpack.c.l.b16 %v5115
        %v5688 = vunpack.c.l.b16 %v5129
        %v5689 = vunpack.c.l.b16 %v5139
        %v5690 = vunpack.c.l.b16 %v5149
        %v5691 = vunpack.c.l.b16 %v5159
        %v5692 = vunpack.c.l.b16 %v5173
        %v5693 = vunpack.c.l.b16 %v5183
        %v5694 = vunpack.c.l.b16 %v5193
        %v5695 = vunpack.c.l.b16 %v5203
        %v5696 = vunpack.c.l.b16 %v5217
        %v5697 = vunpack.c.l.b16 %v5227
        %v5698 = vunpack.c.l.b16 %v5237
        %v5699 = vunpack.c.l.b16 %v5247
        %v5700 = vunpack.c.l.b16 %v5261
        %v5701 = vunpack.c.l.b16 %v5271
        %v5702 = vunpack.c.l.b16 %v5281
        %v5703 = vunpack.c.l.b16 %v5291
        %v5704 = vunpack.c.l.b16 %v5305
        %v5705 = vunpack.c.l.b16 %v5315
        %v5706 = vunpack.c.l.b16 %v5325
        %v5707 = vunpack.c.l.b16 %v5335
        %v5708 = vunpack.c.l.b16 %v5349
        %v5709 = vunpack.c.l.b16 %v5359
        %v5710 = vunpack.c.l.b16 %v5369
        %v5711 = vunpack.c.l.b16 %v5379
        %v5712 = vunpack.c.l.b16 %v5393
        %v5713 = vunpack.c.l.b16 %v5403
        %v5714 = vunpack.c.l.b16 %v5413
        %v5715 = vunpack.c.l.b16 %v5423
        %v5716 = vunpack.c.l.b16 %v5437
        %v5717 = vunpack.c.l.b16 %v5447
        %v5718 = vunpack.c.l.b16 %v5457
        %v5719 = vunpack.c.l.b16 %v5467
        %v5720 = vunpack.c.l.b16 %v5481
        %v5721 = vunpack.c.l.b16 %v5491
        %v5722 = vunpack.c.l.b16 %v5501
        %v5723 = vunpack.c.l.b16 %v5511
        %v5724 = vunpack.c.l.b16 %v5525
        %v5725 = vunpack.c.l.b16 %v5535
        %v5726 = vunpack.c.l.b16 %v5545
        %v5727 = vunpack.c.l.b16 %v5555
        %v5728 = vunpack.c.l.b16 %v5569
        %v5729 = vunpack.c.l.b16 %v5579
        %v5730 = vunpack.c.l.b16 %v5589
        %v5731 = vunpack.c.l.b16 %v5599
        %v5732 = vpack.c.b16 %v5605, %v5604
        %v5733 = vpack.c.b16 %v5607, %v5606
        %v5734 = vpack.c.b16 %v5609, %v5608
        %v5735 = vpack.c.b16 %v5611, %v5610
        %v5736 = vpack.c.b16 %v5613, %v5612
        %v5737 = vpack.c.b16 %v5615, %v5614
        %v5738 = vpack.c.b16 %v5617, %v5616
        %v5739 = vpack.c.b16 %v5619, %v5618
        %v5740 = vpack.c.b16 %v5621, %v5620
        %v5741 = vpack.c.b16 %v5623, %v5622
        %v5742 = vpack.c.b16 %v5625, %v5624
        %v5743 = vpack.c.b16 %v5627, %v5626
        %v5744 = vpack.c.b16 %v5629, %v5628
        %v5745 = vpack.c.b16 %v5631, %v5630
        %v5746 = vpack.c.b16 %v5633, %v5632
        %v5747 = vpack.c.b16 %v5635, %v5634
        %v5748 = vpack.c.b16 %v5637, %v5636
        %v5749 = vpack.c.b16 %v5639, %v5638
        %v5750 = vpack.c.b16 %v5641, %v5640
        %v5751 = vpack.c.b16 %v5643, %v5642
        %v5752 = vpack.c.b16 %v5645, %v5644
        %v5753 = vpack.c.b16 %v5647, %v5646
        %v5754 = vpack.c.b16 %v5649, %v5648
        %v5755 = vpack.c.b16 %v5651, %v5650
        %v5756 = vpack.c.b16 %v5653, %v5652
        %v5757 = vpack.c.b16 %v5655, %v5654
        %v5758 = vpack.c.b16 %v5657, %v5656
        %v5759 = vpack.c.b16 %v5659, %v5658
        %v5760 = vpack.c.b16 %v5661, %v5660
        %v5761 = vpack.c.b16 %v5663, %v5662
        %v5762 = vpack.c.b16 %v5665, %v5664
        %v5763 = vpack.c.b16 %v5667, %v5666
        %v5764 = vpack.c.b16 %v5669, %v5668
        %v5765 = vpack.c.b16 %v5671, %v5670
        %v5766 = vpack.c.b16 %v5673, %v5672
        %v5767 = vpack.c.b16 %v5675, %v5674
        %v5768 = vpack.c.b16 %v5677, %v5676
        %v5769 = vpack.c.b16 %v5679, %v5678
        %v5770 = vpack.c.b16 %v5681, %v5680
        %v5771 = vpack.c.b16 %v5683, %v5682
        %v5772 = vpack.c.b16 %v5685, %v5684
        %v5773 = vpack.c.b16 %v5687, %v5686
        %v5774 = vpack.c.b16 %v5689, %v5688
        %v5775 = vpack.c.b16 %v5691, %v5690
        %v5776 = vpack.c.b16 %v5693, %v5692
        %v5777 = vpack.c.b16 %v5695, %v5694
        %v5778 = vpack.c.b16 %v5697, %v5696
        %v5779 = vpack.c.b16 %v5699, %v5698
        %v5780 = vpack.c.b16 %v5701, %v5700
        %v5781 = vpack.c.b16 %v5703, %v5702
        %v5782 = vpack.c.b16 %v5705, %v5704
        %v5783 = vpack.c.b16 %v5707, %v5706
        %v5784 = vpack.c.b16 %v5709, %v5708
        %v5785 = vpack.c.b16 %v5711, %v5710
        %v5786 = vpack.c.b16 %v5713, %v5712
        %v5787 = vpack.c.b16 %v5715, %v5714
        %v5788 = vpack.c.b16 %v5717, %v5716
        %v5789 = vpack.c.b16 %v5719, %v5718
        %v5790 = vpack.c.b16 %v5721, %v5720
        %v5791 = vpack.c.b16 %v5723, %v5722
        %v5792 = vpack.c.b16 %v5725, %v5724
        %v5793 = vpack.c.b16 %v5727, %v5726
        %v5794 = vpack.c.b16 %v5729, %v5728
        %v5795 = vpack.c.b16 %v5731, %v5730
        %v5799 = vunpack.c.l.b16 %v5601
        %v5800 = vunpack.c.l.b16 %v5602
        %v5801 = vunpack.c.l.b16 %v5603
        %v5802 = vpack.c.b16 %v5800, %v5799
        %v5803 = vpack.c.b16 %v5801, %v5801
        %vm5805 = vcmask 195584
        %v5807 = vsel %vm5805, %v5732, 0
        %v5810 = vsel %vm5805, %v5733, 0
        %v5813 = vsel %vm5805, %v5734, 0
        %v5816 = vsel %vm5805, %v5735, 0
        %v5819 = vsel %vm5805, %v5736, 0
        %v5822 = vsel %vm5805, %v5737, 0
        %v5825 = vsel %vm5805, %v5738, 0
        %v5828 = vsel %vm5805, %v5739, 0
        %v5831 = vsel %vm5805, %v5740, 0
        %v5834 = vsel %vm5805, %v5741, 0
        %v5837 = vsel %vm5805, %v5742, 0
        %v5840 = vsel %vm5805, %v5743, 0
        %v5843 = vsel %vm5805, %v5744, 0
        %v5846 = vsel %vm5805, %v5745, 0
        %v5849 = vsel %vm5805, %v5746, 0
        %v5852 = vsel %vm5805, %v5747, 0
        %v5855 = vsel %vm5805, %v5748, 0
        %v5858 = vsel %vm5805, %v5749, 0
        %v5861 = vsel %vm5805, %v5750, 0
        %v5864 = vsel %vm5805, %v5751, 0
        %v5867 = vsel %vm5805, %v5752, 0
        %v5870 = vsel %vm5805, %v5753, 0
        %v5873 = vsel %vm5805, %v5754, 0
        %v5876 = vsel %vm5805, %v5755, 0
        %v5879 = vsel %vm5805, %v5756, 0
        %v5882 = vsel %vm5805, %v5757, 0
        %v5885 = vsel %vm5805, %v5758, 0
        %v5888 = vsel %vm5805, %v5759, 0
        %v5891 = vsel %vm5805, %v5760, 0
        %v5894 = vsel %vm5805, %v5761, 0
        %v5897 = vsel %vm5805, %v5762, 0
        %v5900 = vsel %vm5805, %v5763, 0
        %v5903 = vsel %vm5805, %v5764, 0
        %v5906 = vsel %vm5805, %v5765, 0
        %v5909 = vsel %vm5805, %v5766, 0
        %v5912 = vsel %vm5805, %v5767, 0
        %v5915 = vsel %vm5805, %v5768, 0
        %v5918 = vsel %vm5805, %v5769, 0
        %v5921 = vsel %vm5805, %v5770, 0
        %v5924 = vsel %vm5805, %v5771, 0
        %v5927 = vsel %vm5805, %v5772, 0
        %v5930 = vsel %vm5805, %v5773, 0
        %v5933 = vsel %vm5805, %v5774, 0
        %v5936 = vsel %vm5805, %v5775, 0
        %v5939 = vsel %vm5805, %v5776, 0
        %v5942 = vsel %vm5805, %v5777, 0
        %v5945 = vsel %vm5805, %v5778, 0
        %v5948 = vsel %vm5805, %v5779, 0
        %v5951 = vsel %vm5805, %v5780, 0
        %v5954 = vsel %vm5805, %v5781, 0
        %v5957 = vsel %vm5805, %v5782, 0
        %v5960 = vsel %vm5805, %v5783, 0
        %v5963 = vsel %vm5805, %v5784, 0
        %v5966 = vsel %vm5805, %v5785, 0
        %v5969 = vsel %vm5805, %v5786, 0
        %v5972 = vsel %vm5805, %v5787, 0
        %v5975 = vsel %vm5805, %v5788, 0
        %v5978 = vsel %vm5805, %v5789, 0
        %v5981 = vsel %vm5805, %v5790, 0
        %v5984 = vsel %vm5805, %v5791, 0
        %v5987 = vsel %vm5805, %v5792, 0
        %v5990 = vsel %vm5805, %v5793, 0
        %v5993 = vsel %vm5805, %v5794, 0
        %v5996 = vsel %vm5805, %v5795, 0
        %vm5998 = vcmask 1043456
        %v6000 = vsel %vm5998, %v5803, 0
        %6002 = vmatprep.subr.bf16.mxu0 0
        %6003 = vmatpush1.bf16.msra.mxu0 0
        %6004 = vmatprep.subr.bf16.mxu0 0
        %6005 = vmatpush1.bf16.msra.mxu0 0
        %6006 = vmatprep.subr.bf16.mxu0 0
        %6007 = vmatpush1.bf16.msra.mxu0 0
        %6008 = vmatprep.subr.bf16.mxu0 0
        %6009 = vmatpush1.bf16.msra.mxu0 0
        %6010 = vmatprep.subr.bf16.mxu0 0
        %6011 = vmatpush1.bf16.msra.mxu0 0
        %6012 = vmatprep.subr.bf16.mxu0 0
        %6013 = vmatpush1.bf16.msra.mxu0 0
        %6014 = vmatprep.subr.bf16.mxu0 0
        %6015 = vmatpush1.bf16.msra.mxu0 %v6000
        %6016 = vmatprep.subr.bf16.mxu0 0
        %6017 = vmatpush1.bf16.msra.mxu0 %v5802
        %6018 = vmatprep.subr.bf16.mxu0 0
        %6019 = vmatpush2.bf16.msra.mxu0 0
        %6020 = vmatprep.subr.bf16.mxu0 0
        %6021 = vmatpush2.bf16.msra.mxu0 0
        %6022 = vmatprep.subr.bf16.mxu0 0
        %6023 = vmatpush2.bf16.msra.mxu0 0
        %6024 = vmatprep.subr.bf16.mxu0 0
        %6025 = vmatpush2.bf16.msra.mxu0 0
        %6026 = vmatprep.subr.bf16.mxu0 0
        %6027 = vmatpush2.bf16.msra.mxu0 0
        %6028 = vmatprep.subr.bf16.mxu0 0
        %6029 = vmatpush2.bf16.msra.mxu0 0
        %6030 = vmatprep.subr.bf16.mxu0 0
        %6031 = vmatpush2.bf16.msra.mxu0 0
        %6032 = vmatprep.subr.bf16.mxu0 0
        %6033 = vmatpush2.bf16.msra.mxu0 0
        %6034 = vmatprep.mubr.bf16.mxu0 0
        %6035 = vmatmul.mubr.bf16.gmra.mxu0 %v5807
        %v6036 = vpop.f32.mrf.mxu0
        %v6037 = vadd.f32 0.0, %v6036
        %v6038 = vpop.f32.mrf.mxu0
        %v6039 = vpop.f32.mrf.mxu0
        %v6040 = vadd.f32 0.0, %v6039
        %v6041 = vpop.f32.mrf.mxu0
        %6042 = vmatprep.mubr.bf16.mxu0 0
        %6043 = vmatmul.mubr.bf16.gmra.mxu0 %v5810
        %v6044 = vpop.f32.mrf.mxu0
        %v6045 = vadd.f32 0.0, %v6044
        %v6046 = vpop.f32.mrf.mxu0
        %v6047 = vpop.f32.mrf.mxu0
        %v6048 = vadd.f32 0.0, %v6047
        %v6049 = vpop.f32.mrf.mxu0
        %6050 = vmatprep.mubr.bf16.mxu0 0
        %6051 = vmatmul.mubr.bf16.gmra.mxu0 %v5813
        %v6052 = vpop.f32.mrf.mxu0
        %v6053 = vadd.f32 0.0, %v6052
        %v6054 = vpop.f32.mrf.mxu0
        %v6055 = vpop.f32.mrf.mxu0
        %v6056 = vadd.f32 0.0, %v6055
        %v6057 = vpop.f32.mrf.mxu0
        %6058 = vmatprep.mubr.bf16.mxu0 0
        %6059 = vmatmul.mubr.bf16.gmra.mxu0 %v5816
        %v6060 = vpop.f32.mrf.mxu0
        %v6061 = vadd.f32 0.0, %v6060
        %v6062 = vpop.f32.mrf.mxu0
        %v6063 = vpop.f32.mrf.mxu0
        %v6064 = vadd.f32 0.0, %v6063
        %v6065 = vpop.f32.mrf.mxu0
        %6066 = vmatprep.mubr.bf16.mxu0 0
        %6067 = vmatmul.mubr.bf16.gmra.mxu0 %v5819
        %v6068 = vpop.f32.mrf.mxu0
        %v6069 = vadd.f32 0.0, %v6068
        %v6070 = vpop.f32.mrf.mxu0
        %v6071 = vpop.f32.mrf.mxu0
        %v6072 = vadd.f32 0.0, %v6071
        %v6073 = vpop.f32.mrf.mxu0
        %6074 = vmatprep.mubr.bf16.mxu0 0
        %6075 = vmatmul.mubr.bf16.gmra.mxu0 %v5822
        %v6076 = vpop.f32.mrf.mxu0
        %v6077 = vadd.f32 0.0, %v6076
        %v6078 = vpop.f32.mrf.mxu0
        %v6079 = vpop.f32.mrf.mxu0
        %v6080 = vadd.f32 0.0, %v6079
        %v6081 = vpop.f32.mrf.mxu0
        %6082 = vmatprep.mubr.bf16.mxu0 0
        %6083 = vmatmul.mubr.bf16.gmra.mxu0 %v5825
        %v6084 = vpop.f32.mrf.mxu0
        %v6085 = vadd.f32 0.0, %v6084
        %v6086 = vpop.f32.mrf.mxu0
        %v6087 = vpop.f32.mrf.mxu0
        %v6088 = vadd.f32 0.0, %v6087
        %v6089 = vpop.f32.mrf.mxu0
        %6090 = vmatprep.mubr.bf16.mxu0 0
        %6091 = vmatmul.mubr.bf16.gmra.mxu0 %v5828
        %v6092 = vpop.f32.mrf.mxu0
        %v6093 = vadd.f32 0.0, %v6092
        %v6094 = vpop.f32.mrf.mxu0
        %v6095 = vpop.f32.mrf.mxu0
        %v6096 = vadd.f32 0.0, %v6095
        %v6097 = vpop.f32.mrf.mxu0
        %6098 = vmatprep.mubr.bf16.mxu0 0
        %6099 = vmatmul.mubr.bf16.gmra.mxu0 %v5831
        %v6100 = vpop.f32.mrf.mxu0
        %v6101 = vadd.f32 0.0, %v6100
        %v6102 = vpop.f32.mrf.mxu0
        %v6103 = vpop.f32.mrf.mxu0
        %v6104 = vadd.f32 0.0, %v6103
        %v6105 = vpop.f32.mrf.mxu0
        %6106 = vmatprep.mubr.bf16.mxu0 0
        %6107 = vmatmul.mubr.bf16.gmra.mxu0 %v5834
        %v6108 = vpop.f32.mrf.mxu0
        %v6109 = vadd.f32 0.0, %v6108
        %v6110 = vpop.f32.mrf.mxu0
        %v6111 = vpop.f32.mrf.mxu0
        %v6112 = vadd.f32 0.0, %v6111
        %v6113 = vpop.f32.mrf.mxu0
        %6114 = vmatprep.mubr.bf16.mxu0 0
        %6115 = vmatmul.mubr.bf16.gmra.mxu0 %v5837
        %v6116 = vpop.f32.mrf.mxu0
        %v6117 = vadd.f32 0.0, %v6116
        %v6118 = vpop.f32.mrf.mxu0
        %v6119 = vpop.f32.mrf.mxu0
        %v6120 = vadd.f32 0.0, %v6119
        %v6121 = vpop.f32.mrf.mxu0
        %6122 = vmatprep.mubr.bf16.mxu0 0
        %6123 = vmatmul.mubr.bf16.gmra.mxu0 %v5840
        %v6124 = vpop.f32.mrf.mxu0
        %v6125 = vadd.f32 0.0, %v6124
        %v6126 = vpop.f32.mrf.mxu0
        %v6127 = vpop.f32.mrf.mxu0
        %v6128 = vadd.f32 0.0, %v6127
        %v6129 = vpop.f32.mrf.mxu0
        %6130 = vmatprep.mubr.bf16.mxu0 0
        %6131 = vmatmul.mubr.bf16.gmra.mxu0 %v5843
        %v6132 = vpop.f32.mrf.mxu0
        %v6133 = vadd.f32 0.0, %v6132
        %v6134 = vpop.f32.mrf.mxu0
        %v6135 = vpop.f32.mrf.mxu0
        %v6136 = vadd.f32 0.0, %v6135
        %v6137 = vpop.f32.mrf.mxu0
        %6138 = vmatprep.mubr.bf16.mxu0 0
        %6139 = vmatmul.mubr.bf16.gmra.mxu0 %v5846
        %v6140 = vpop.f32.mrf.mxu0
        %v6141 = vadd.f32 0.0, %v6140
        %v6142 = vpop.f32.mrf.mxu0
        %v6143 = vpop.f32.mrf.mxu0
        %v6144 = vadd.f32 0.0, %v6143
        %v6145 = vpop.f32.mrf.mxu0
        %6146 = vmatprep.mubr.bf16.mxu0 0
        %6147 = vmatmul.mubr.bf16.gmra.mxu0 %v5849
        %v6148 = vpop.f32.mrf.mxu0
        %v6149 = vadd.f32 0.0, %v6148
        %v6150 = vpop.f32.mrf.mxu0
        %v6151 = vpop.f32.mrf.mxu0
        %v6152 = vadd.f32 0.0, %v6151
        %v6153 = vpop.f32.mrf.mxu0
        %6154 = vmatprep.mubr.bf16.mxu0 0
        %6155 = vmatmul.mubr.bf16.gmra.mxu0 %v5852
        %v6156 = vpop.f32.mrf.mxu0
        %v6157 = vadd.f32 0.0, %v6156
        %v6158 = vpop.f32.mrf.mxu0
        %v6159 = vpop.f32.mrf.mxu0
        %v6160 = vadd.f32 0.0, %v6159
        %v6161 = vpop.f32.mrf.mxu0
        %6162 = vmatprep.mubr.bf16.mxu0 0
        %6163 = vmatmul.mubr.bf16.gmra.mxu0 %v5855
        %v6164 = vpop.f32.mrf.mxu0
        %v6165 = vadd.f32 0.0, %v6164
        %v6166 = vpop.f32.mrf.mxu0
        %v6167 = vpop.f32.mrf.mxu0
        %v6168 = vadd.f32 0.0, %v6167
        %v6169 = vpop.f32.mrf.mxu0
        %6170 = vmatprep.mubr.bf16.mxu0 0
        %6171 = vmatmul.mubr.bf16.gmra.mxu0 %v5858
        %v6172 = vpop.f32.mrf.mxu0
        %v6173 = vadd.f32 0.0, %v6172
        %v6174 = vpop.f32.mrf.mxu0
        %v6175 = vpop.f32.mrf.mxu0
        %v6176 = vadd.f32 0.0, %v6175
        %v6177 = vpop.f32.mrf.mxu0
        %6178 = vmatprep.mubr.bf16.mxu0 0
        %6179 = vmatmul.mubr.bf16.gmra.mxu0 %v5861
        %v6180 = vpop.f32.mrf.mxu0
        %v6181 = vadd.f32 0.0, %v6180
        %v6182 = vpop.f32.mrf.mxu0
        %v6183 = vpop.f32.mrf.mxu0
        %v6184 = vadd.f32 0.0, %v6183
        %v6185 = vpop.f32.mrf.mxu0
        %6186 = vmatprep.mubr.bf16.mxu0 0
        %6187 = vmatmul.mubr.bf16.gmra.mxu0 %v5864
        %v6188 = vpop.f32.mrf.mxu0
        %v6189 = vadd.f32 0.0, %v6188
        %v6190 = vpop.f32.mrf.mxu0
        %v6191 = vpop.f32.mrf.mxu0
        %v6192 = vadd.f32 0.0, %v6191
        %v6193 = vpop.f32.mrf.mxu0
        %6194 = vmatprep.mubr.bf16.mxu0 0
        %6195 = vmatmul.mubr.bf16.gmra.mxu0 %v5867
        %v6196 = vpop.f32.mrf.mxu0
        %v6197 = vadd.f32 0.0, %v6196
        %v6198 = vpop.f32.mrf.mxu0
        %v6199 = vpop.f32.mrf.mxu0
        %v6200 = vadd.f32 0.0, %v6199
        %v6201 = vpop.f32.mrf.mxu0
        %6202 = vmatprep.mubr.bf16.mxu0 0
        %6203 = vmatmul.mubr.bf16.gmra.mxu0 %v5870
        %v6204 = vpop.f32.mrf.mxu0
        %v6205 = vadd.f32 0.0, %v6204
        %v6206 = vpop.f32.mrf.mxu0
        %v6207 = vpop.f32.mrf.mxu0
        %v6208 = vadd.f32 0.0, %v6207
        %v6209 = vpop.f32.mrf.mxu0
        %6210 = vmatprep.mubr.bf16.mxu0 0
        %6211 = vmatmul.mubr.bf16.gmra.mxu0 %v5873
        %v6212 = vpop.f32.mrf.mxu0
        %v6213 = vadd.f32 0.0, %v6212
        %v6214 = vpop.f32.mrf.mxu0
        %v6215 = vpop.f32.mrf.mxu0
        %v6216 = vadd.f32 0.0, %v6215
        %v6217 = vpop.f32.mrf.mxu0
        %6218 = vmatprep.mubr.bf16.mxu0 0
        %6219 = vmatmul.mubr.bf16.gmra.mxu0 %v5876
        %v6220 = vpop.f32.mrf.mxu0
        %v6221 = vadd.f32 0.0, %v6220
        %v6222 = vpop.f32.mrf.mxu0
        %v6223 = vpop.f32.mrf.mxu0
        %v6224 = vadd.f32 0.0, %v6223
        %v6225 = vpop.f32.mrf.mxu0
        %6226 = vmatprep.mubr.bf16.mxu0 0
        %6227 = vmatmul.mubr.bf16.gmra.mxu0 %v5879
        %v6228 = vpop.f32.mrf.mxu0
        %v6229 = vadd.f32 0.0, %v6228
        %v6230 = vpop.f32.mrf.mxu0
        %v6231 = vpop.f32.mrf.mxu0
        %v6232 = vadd.f32 0.0, %v6231
        %v6233 = vpop.f32.mrf.mxu0
        %6234 = vmatprep.mubr.bf16.mxu0 0
        %6235 = vmatmul.mubr.bf16.gmra.mxu0 %v5882
        %v6236 = vpop.f32.mrf.mxu0
        %v6237 = vadd.f32 0.0, %v6236
        %v6238 = vpop.f32.mrf.mxu0
        %v6239 = vpop.f32.mrf.mxu0
        %v6240 = vadd.f32 0.0, %v6239
        %v6241 = vpop.f32.mrf.mxu0
        %6242 = vmatprep.mubr.bf16.mxu0 0
        %6243 = vmatmul.mubr.bf16.gmra.mxu0 %v5885
        %v6244 = vpop.f32.mrf.mxu0
        %v6245 = vadd.f32 0.0, %v6244
        %v6246 = vpop.f32.mrf.mxu0
        %v6247 = vpop.f32.mrf.mxu0
        %v6248 = vadd.f32 0.0, %v6247
        %v6249 = vpop.f32.mrf.mxu0
        %6250 = vmatprep.mubr.bf16.mxu0 0
        %6251 = vmatmul.mubr.bf16.gmra.mxu0 %v5888
        %v6252 = vpop.f32.mrf.mxu0
        %v6253 = vadd.f32 0.0, %v6252
        %v6254 = vpop.f32.mrf.mxu0
        %v6255 = vpop.f32.mrf.mxu0
        %v6256 = vadd.f32 0.0, %v6255
        %v6257 = vpop.f32.mrf.mxu0
        %6258 = vmatprep.mubr.bf16.mxu0 0
        %6259 = vmatmul.mubr.bf16.gmra.mxu0 %v5891
        %v6260 = vpop.f32.mrf.mxu0
        %v6261 = vadd.f32 0.0, %v6260
        %v6262 = vpop.f32.mrf.mxu0
        %v6263 = vpop.f32.mrf.mxu0
        %v6264 = vadd.f32 0.0, %v6263
        %v6265 = vpop.f32.mrf.mxu0
        %6266 = vmatprep.mubr.bf16.mxu0 0
        %6267 = vmatmul.mubr.bf16.gmra.mxu0 %v5894
        %v6268 = vpop.f32.mrf.mxu0
        %v6269 = vadd.f32 0.0, %v6268
        %v6270 = vpop.f32.mrf.mxu0
        %v6271 = vpop.f32.mrf.mxu0
        %v6272 = vadd.f32 0.0, %v6271
        %v6273 = vpop.f32.mrf.mxu0
        %6274 = vmatprep.mubr.bf16.mxu0 0
        %6275 = vmatmul.mubr.bf16.gmra.mxu0 %v5897
        %v6276 = vpop.f32.mrf.mxu0
        %v6277 = vadd.f32 0.0, %v6276
        %v6278 = vpop.f32.mrf.mxu0
        %v6279 = vpop.f32.mrf.mxu0
        %v6280 = vadd.f32 0.0, %v6279
        %v6281 = vpop.f32.mrf.mxu0
        %6282 = vmatprep.mubr.bf16.mxu0 0
        %6283 = vmatmul.mubr.bf16.gmra.mxu0 %v5900
        %v6284 = vpop.f32.mrf.mxu0
        %v6285 = vadd.f32 0.0, %v6284
        %v6286 = vpop.f32.mrf.mxu0
        %v6287 = vpop.f32.mrf.mxu0
        %v6288 = vadd.f32 0.0, %v6287
        %v6289 = vpop.f32.mrf.mxu0
        %6290 = vmatprep.mubr.bf16.mxu0 0
        %6291 = vmatmul.mubr.bf16.gmra.mxu0 %v5903
        %v6292 = vpop.f32.mrf.mxu0
        %v6293 = vadd.f32 0.0, %v6292
        %v6294 = vpop.f32.mrf.mxu0
        %v6295 = vpop.f32.mrf.mxu0
        %v6296 = vadd.f32 0.0, %v6295
        %v6297 = vpop.f32.mrf.mxu0
        %6298 = vmatprep.mubr.bf16.mxu0 0
        %6299 = vmatmul.mubr.bf16.gmra.mxu0 %v5906
        %v6300 = vpop.f32.mrf.mxu0
        %v6301 = vadd.f32 0.0, %v6300
        %v6302 = vpop.f32.mrf.mxu0
        %v6303 = vpop.f32.mrf.mxu0
        %v6304 = vadd.f32 0.0, %v6303
        %v6305 = vpop.f32.mrf.mxu0
        %6306 = vmatprep.mubr.bf16.mxu0 0
        %6307 = vmatmul.mubr.bf16.gmra.mxu0 %v5909
        %v6308 = vpop.f32.mrf.mxu0
        %v6309 = vadd.f32 0.0, %v6308
        %v6310 = vpop.f32.mrf.mxu0
        %v6311 = vpop.f32.mrf.mxu0
        %v6312 = vadd.f32 0.0, %v6311
        %v6313 = vpop.f32.mrf.mxu0
        %6314 = vmatprep.mubr.bf16.mxu0 0
        %6315 = vmatmul.mubr.bf16.gmra.mxu0 %v5912
        %v6316 = vpop.f32.mrf.mxu0
        %v6317 = vadd.f32 0.0, %v6316
        %v6318 = vpop.f32.mrf.mxu0
        %v6319 = vpop.f32.mrf.mxu0
        %v6320 = vadd.f32 0.0, %v6319
        %v6321 = vpop.f32.mrf.mxu0
        %6322 = vmatprep.mubr.bf16.mxu0 0
        %6323 = vmatmul.mubr.bf16.gmra.mxu0 %v5915
        %v6324 = vpop.f32.mrf.mxu0
        %v6325 = vadd.f32 0.0, %v6324
        %v6326 = vpop.f32.mrf.mxu0
        %v6327 = vpop.f32.mrf.mxu0
        %v6328 = vadd.f32 0.0, %v6327
        %v6329 = vpop.f32.mrf.mxu0
        %6330 = vmatprep.mubr.bf16.mxu0 0
        %6331 = vmatmul.mubr.bf16.gmra.mxu0 %v5918
        %v6332 = vpop.f32.mrf.mxu0
        %v6333 = vadd.f32 0.0, %v6332
        %v6334 = vpop.f32.mrf.mxu0
        %v6335 = vpop.f32.mrf.mxu0
        %v6336 = vadd.f32 0.0, %v6335
        %v6337 = vpop.f32.mrf.mxu0
        %6338 = vmatprep.mubr.bf16.mxu0 0
        %6339 = vmatmul.mubr.bf16.gmra.mxu0 %v5921
        %v6340 = vpop.f32.mrf.mxu0
        %v6341 = vadd.f32 0.0, %v6340
        %v6342 = vpop.f32.mrf.mxu0
        %v6343 = vpop.f32.mrf.mxu0
        %v6344 = vadd.f32 0.0, %v6343
        %v6345 = vpop.f32.mrf.mxu0
        %6346 = vmatprep.mubr.bf16.mxu0 0
        %6347 = vmatmul.mubr.bf16.gmra.mxu0 %v5924
        %v6348 = vpop.f32.mrf.mxu0
        %v6349 = vadd.f32 0.0, %v6348
        %v6350 = vpop.f32.mrf.mxu0
        %v6351 = vpop.f32.mrf.mxu0
        %v6352 = vadd.f32 0.0, %v6351
        %v6353 = vpop.f32.mrf.mxu0
        %6354 = vmatprep.mubr.bf16.mxu0 0
        %6355 = vmatmul.mubr.bf16.gmra.mxu0 %v5927
        %v6356 = vpop.f32.mrf.mxu0
        %v6357 = vadd.f32 0.0, %v6356
        %v6358 = vpop.f32.mrf.mxu0
        %v6359 = vpop.f32.mrf.mxu0
        %v6360 = vadd.f32 0.0, %v6359
        %v6361 = vpop.f32.mrf.mxu0
        %6362 = vmatprep.mubr.bf16.mxu0 0
        %6363 = vmatmul.mubr.bf16.gmra.mxu0 %v5930
        %v6364 = vpop.f32.mrf.mxu0
        %v6365 = vadd.f32 0.0, %v6364
        %v6366 = vpop.f32.mrf.mxu0
        %v6367 = vpop.f32.mrf.mxu0
        %v6368 = vadd.f32 0.0, %v6367
        %v6369 = vpop.f32.mrf.mxu0
        %6370 = vmatprep.mubr.bf16.mxu0 0
        %6371 = vmatmul.mubr.bf16.gmra.mxu0 %v5933
        %v6372 = vpop.f32.mrf.mxu0
        %v6373 = vadd.f32 0.0, %v6372
        %v6374 = vpop.f32.mrf.mxu0
        %v6375 = vpop.f32.mrf.mxu0
        %v6376 = vadd.f32 0.0, %v6375
        %v6377 = vpop.f32.mrf.mxu0
        %6378 = vmatprep.mubr.bf16.mxu0 0
        %6379 = vmatmul.mubr.bf16.gmra.mxu0 %v5936
        %v6380 = vpop.f32.mrf.mxu0
        %v6381 = vadd.f32 0.0, %v6380
        %v6382 = vpop.f32.mrf.mxu0
        %v6383 = vpop.f32.mrf.mxu0
        %v6384 = vadd.f32 0.0, %v6383
        %v6385 = vpop.f32.mrf.mxu0
        %6386 = vmatprep.mubr.bf16.mxu0 0
        %6387 = vmatmul.mubr.bf16.gmra.mxu0 %v5939
        %v6388 = vpop.f32.mrf.mxu0
        %v6389 = vadd.f32 0.0, %v6388
        %v6390 = vpop.f32.mrf.mxu0
        %v6391 = vpop.f32.mrf.mxu0
        %v6392 = vadd.f32 0.0, %v6391
        %v6393 = vpop.f32.mrf.mxu0
        %6394 = vmatprep.mubr.bf16.mxu0 0
        %6395 = vmatmul.mubr.bf16.gmra.mxu0 %v5942
        %v6396 = vpop.f32.mrf.mxu0
        %v6397 = vadd.f32 0.0, %v6396
        %v6398 = vpop.f32.mrf.mxu0
        %v6399 = vpop.f32.mrf.mxu0
        %v6400 = vadd.f32 0.0, %v6399
        %v6401 = vpop.f32.mrf.mxu0
        %6402 = vmatprep.mubr.bf16.mxu0 0
        %6403 = vmatmul.mubr.bf16.gmra.mxu0 %v5945
        %v6404 = vpop.f32.mrf.mxu0
        %v6405 = vadd.f32 0.0, %v6404
        %v6406 = vpop.f32.mrf.mxu0
        %v6407 = vpop.f32.mrf.mxu0
        %v6408 = vadd.f32 0.0, %v6407
        %v6409 = vpop.f32.mrf.mxu0
        %6410 = vmatprep.mubr.bf16.mxu0 0
        %6411 = vmatmul.mubr.bf16.gmra.mxu0 %v5948
        %v6412 = vpop.f32.mrf.mxu0
        %v6413 = vadd.f32 0.0, %v6412
        %v6414 = vpop.f32.mrf.mxu0
        %v6415 = vpop.f32.mrf.mxu0
        %v6416 = vadd.f32 0.0, %v6415
        %v6417 = vpop.f32.mrf.mxu0
        %6418 = vmatprep.mubr.bf16.mxu0 0
        %6419 = vmatmul.mubr.bf16.gmra.mxu0 %v5951
        %v6420 = vpop.f32.mrf.mxu0
        %v6421 = vadd.f32 0.0, %v6420
        %v6422 = vpop.f32.mrf.mxu0
        %v6423 = vpop.f32.mrf.mxu0
        %v6424 = vadd.f32 0.0, %v6423
        %v6425 = vpop.f32.mrf.mxu0
        %6426 = vmatprep.mubr.bf16.mxu0 0
        %6427 = vmatmul.mubr.bf16.gmra.mxu0 %v5954
        %v6428 = vpop.f32.mrf.mxu0
        %v6429 = vadd.f32 0.0, %v6428
        %v6430 = vpop.f32.mrf.mxu0
        %v6431 = vpop.f32.mrf.mxu0
        %v6432 = vadd.f32 0.0, %v6431
        %v6433 = vpop.f32.mrf.mxu0
        %6434 = vmatprep.mubr.bf16.mxu0 0
        %6435 = vmatmul.mubr.bf16.gmra.mxu0 %v5957
        %v6436 = vpop.f32.mrf.mxu0
        %v6437 = vadd.f32 0.0, %v6436
        %v6438 = vpop.f32.mrf.mxu0
        %v6439 = vpop.f32.mrf.mxu0
        %v6440 = vadd.f32 0.0, %v6439
        %v6441 = vpop.f32.mrf.mxu0
        %6442 = vmatprep.mubr.bf16.mxu0 0
        %6443 = vmatmul.mubr.bf16.gmra.mxu0 %v5960
        %v6444 = vpop.f32.mrf.mxu0
        %v6445 = vadd.f32 0.0, %v6444
        %v6446 = vpop.f32.mrf.mxu0
        %v6447 = vpop.f32.mrf.mxu0
        %v6448 = vadd.f32 0.0, %v6447
        %v6449 = vpop.f32.mrf.mxu0
        %6450 = vmatprep.mubr.bf16.mxu0 0
        %6451 = vmatmul.mubr.bf16.gmra.mxu0 %v5963
        %v6452 = vpop.f32.mrf.mxu0
        %v6453 = vadd.f32 0.0, %v6452
        %v6454 = vpop.f32.mrf.mxu0
        %v6455 = vpop.f32.mrf.mxu0
        %v6456 = vadd.f32 0.0, %v6455
        %v6457 = vpop.f32.mrf.mxu0
        %6458 = vmatprep.mubr.bf16.mxu0 0
        %6459 = vmatmul.mubr.bf16.gmra.mxu0 %v5966
        %v6460 = vpop.f32.mrf.mxu0
        %v6461 = vadd.f32 0.0, %v6460
        %v6462 = vpop.f32.mrf.mxu0
        %v6463 = vpop.f32.mrf.mxu0
        %v6464 = vadd.f32 0.0, %v6463
        %v6465 = vpop.f32.mrf.mxu0
        %6466 = vmatprep.mubr.bf16.mxu0 0
        %6467 = vmatmul.mubr.bf16.gmra.mxu0 %v5969
        %v6468 = vpop.f32.mrf.mxu0
        %v6469 = vadd.f32 0.0, %v6468
        %v6470 = vpop.f32.mrf.mxu0
        %v6471 = vpop.f32.mrf.mxu0
        %v6472 = vadd.f32 0.0, %v6471
        %v6473 = vpop.f32.mrf.mxu0
        %6474 = vmatprep.mubr.bf16.mxu0 0
        %6475 = vmatmul.mubr.bf16.gmra.mxu0 %v5972
        %v6476 = vpop.f32.mrf.mxu0
        %v6477 = vadd.f32 0.0, %v6476
        %v6478 = vpop.f32.mrf.mxu0
        %v6479 = vpop.f32.mrf.mxu0
        %v6480 = vadd.f32 0.0, %v6479
        %v6481 = vpop.f32.mrf.mxu0
        %6482 = vmatprep.mubr.bf16.mxu0 0
        %6483 = vmatmul.mubr.bf16.gmra.mxu0 %v5975
        %v6484 = vpop.f32.mrf.mxu0
        %v6485 = vadd.f32 0.0, %v6484
        %v6486 = vpop.f32.mrf.mxu0
        %v6487 = vpop.f32.mrf.mxu0
        %v6488 = vadd.f32 0.0, %v6487
        %v6489 = vpop.f32.mrf.mxu0
        %6490 = vmatprep.mubr.bf16.mxu0 0
        %6491 = vmatmul.mubr.bf16.gmra.mxu0 %v5978
        %v6492 = vpop.f32.mrf.mxu0
        %v6493 = vadd.f32 0.0, %v6492
        %v6494 = vpop.f32.mrf.mxu0
        %v6495 = vpop.f32.mrf.mxu0
        %v6496 = vadd.f32 0.0, %v6495
        %v6497 = vpop.f32.mrf.mxu0
        %6498 = vmatprep.mubr.bf16.mxu0 0
        %6499 = vmatmul.mubr.bf16.gmra.mxu0 %v5981
        %v6500 = vpop.f32.mrf.mxu0
        %v6501 = vadd.f32 0.0, %v6500
        %v6502 = vpop.f32.mrf.mxu0
        %v6503 = vpop.f32.mrf.mxu0
        %v6504 = vadd.f32 0.0, %v6503
        %v6505 = vpop.f32.mrf.mxu0
        %6506 = vmatprep.mubr.bf16.mxu0 0
        %6507 = vmatmul.mubr.bf16.gmra.mxu0 %v5984
        %v6508 = vpop.f32.mrf.mxu0
        %v6509 = vadd.f32 0.0, %v6508
        %v6510 = vpop.f32.mrf.mxu0
        %v6511 = vpop.f32.mrf.mxu0
        %v6512 = vadd.f32 0.0, %v6511
        %v6513 = vpop.f32.mrf.mxu0
        %6514 = vmatprep.mubr.bf16.mxu0 0
        %6515 = vmatmul.mubr.bf16.gmra.mxu0 %v5987
        %v6516 = vpop.f32.mrf.mxu0
        %v6517 = vadd.f32 0.0, %v6516
        %v6518 = vpop.f32.mrf.mxu0
        %v6519 = vpop.f32.mrf.mxu0
        %v6520 = vadd.f32 0.0, %v6519
        %v6521 = vpop.f32.mrf.mxu0
        %6522 = vmatprep.mubr.bf16.mxu0 0
        %6523 = vmatmul.mubr.bf16.gmra.mxu0 %v5990
        %v6524 = vpop.f32.mrf.mxu0
        %v6525 = vadd.f32 0.0, %v6524
        %v6526 = vpop.f32.mrf.mxu0
        %v6527 = vpop.f32.mrf.mxu0
        %v6528 = vadd.f32 0.0, %v6527
        %v6529 = vpop.f32.mrf.mxu0
        %6530 = vmatprep.mubr.bf16.mxu0 0
        %6531 = vmatmul.mubr.bf16.gmra.mxu0 %v5993
        %v6532 = vpop.f32.mrf.mxu0
        %v6533 = vadd.f32 0.0, %v6532
        %v6534 = vpop.f32.mrf.mxu0
        %v6535 = vpop.f32.mrf.mxu0
        %v6536 = vadd.f32 0.0, %v6535
        %v6537 = vpop.f32.mrf.mxu0
        %6538 = vmatprep.mubr.bf16.mxu0 0
        %6539 = vmatmul.mubr.bf16.gmra.mxu0 %v5996
        %v6540 = vpop.f32.mrf.mxu0
        %v6541 = vadd.f32 0.0, %v6540
        %v6542 = vpop.f32.mrf.mxu0
        %v6543 = vpop.f32.mrf.mxu0
        %v6544 = vadd.f32 0.0, %v6543
        %v6545 = vpop.f32.mrf.mxu0
        %6546 = vdwg.mxu0
        %v6675 = vunpack.c.l.b16 %v4026
        %v6676 = vunpack.c.l.b16 %v4027
        %v6677 = vunpack.c.l.b16 %v4028
        %v6678 = vunpack.c.l.b16 %v4029
        %v6679 = vunpack.c.l.b16 %v4030
        %v6680 = vunpack.c.l.b16 %v4031
        %v6681 = vunpack.c.l.b16 %v4032
        %v6682 = vunpack.c.l.b16 %v4033
        %v6683 = vunpack.c.l.b16 %v4034
        %v6684 = vunpack.c.l.b16 %v4035
        %v6685 = vunpack.c.l.b16 %v4036
        %v6686 = vunpack.c.l.b16 %v4037
        %v6687 = vunpack.c.l.b16 %v4038
        %v6688 = vunpack.c.l.b16 %v4039
        %v6689 = vunpack.c.l.b16 %v4040
        %v6690 = vunpack.c.l.b16 %v4041
        %v6691 = vunpack.c.l.b16 %v4042
        %v6692 = vunpack.c.l.b16 %v4043
        %v6693 = vunpack.c.l.b16 %v4044
        %v6694 = vunpack.c.l.b16 %v4045
        %v6695 = vunpack.c.l.b16 %v4046
        %v6696 = vunpack.c.l.b16 %v4047
        %v6697 = vunpack.c.l.b16 %v4048
        %v6698 = vunpack.c.l.b16 %v4049
        %v6699 = vunpack.c.l.b16 %v4050
        %v6700 = vunpack.c.l.b16 %v4051
        %v6701 = vunpack.c.l.b16 %v4052
        %v6702 = vunpack.c.l.b16 %v4053
        %v6703 = vunpack.c.l.b16 %v4054
        %v6704 = vunpack.c.l.b16 %v4055
        %v6705 = vunpack.c.l.b16 %v4056
        %v6706 = vunpack.c.l.b16 %v4057
        %v6707 = vunpack.c.l.b16 %v4058
        %v6708 = vunpack.c.l.b16 %v4059
        %v6709 = vunpack.c.l.b16 %v4060
        %v6710 = vunpack.c.l.b16 %v4061
        %v6711 = vunpack.c.l.b16 %v4062
        %v6712 = vunpack.c.l.b16 %v4063
        %v6713 = vunpack.c.l.b16 %v4064
        %v6714 = vunpack.c.l.b16 %v4065
        %v6715 = vunpack.c.l.b16 %v4066
        %v6716 = vunpack.c.l.b16 %v4067
        %v6717 = vunpack.c.l.b16 %v4068
        %v6718 = vunpack.c.l.b16 %v4069
        %v6719 = vunpack.c.l.b16 %v4070
        %v6720 = vunpack.c.l.b16 %v4071
        %v6721 = vunpack.c.l.b16 %v4072
        %v6722 = vunpack.c.l.b16 %v4073
        %v6723 = vunpack.c.l.b16 %v4074
        %v6724 = vunpack.c.l.b16 %v4075
        %v6725 = vunpack.c.l.b16 %v4076
        %v6726 = vunpack.c.l.b16 %v4077
        %v6727 = vunpack.c.l.b16 %v4078
        %v6728 = vunpack.c.l.b16 %v4079
        %v6729 = vunpack.c.l.b16 %v4080
        %v6730 = vunpack.c.l.b16 %v4081
        %v6731 = vunpack.c.l.b16 %v4082
        %v6732 = vunpack.c.l.b16 %v4083
        %v6733 = vunpack.c.l.b16 %v4084
        %v6734 = vunpack.c.l.b16 %v4085
        %v6735 = vunpack.c.l.b16 %v4086
        %v6736 = vunpack.c.l.b16 %v4087
        %v6737 = vunpack.c.l.b16 %v4088
        %v6738 = vunpack.c.l.b16 %v4089
        %v6739 = vunpack.c.l.b16 %v4090
        %v6740 = vunpack.c.l.b16 %v4091
        %v6741 = vunpack.c.l.b16 %v4092
        %v6742 = vunpack.c.l.b16 %v4093
        %v6743 = vunpack.c.l.b16 %v4094
        %v6744 = vunpack.c.l.b16 %v4095
        %v6745 = vunpack.c.l.b16 %v4096
        %v6746 = vunpack.c.l.b16 %v4097
        %v6747 = vunpack.c.l.b16 %v4098
        %v6748 = vunpack.c.l.b16 %v4099
        %v6749 = vunpack.c.l.b16 %v4100
        %v6750 = vunpack.c.l.b16 %v4101
        %v6751 = vunpack.c.l.b16 %v4102
        %v6752 = vunpack.c.l.b16 %v4103
        %v6753 = vunpack.c.l.b16 %v4104
        %v6754 = vunpack.c.l.b16 %v4105
        %v6755 = vunpack.c.l.b16 %v4106
        %v6756 = vunpack.c.l.b16 %v4107
        %v6757 = vunpack.c.l.b16 %v4108
        %v6758 = vunpack.c.l.b16 %v4109
        %v6759 = vunpack.c.l.b16 %v4110
        %v6760 = vunpack.c.l.b16 %v4111
        %v6761 = vunpack.c.l.b16 %v4112
        %v6762 = vunpack.c.l.b16 %v4113
        %v6763 = vunpack.c.l.b16 %v4114
        %v6764 = vunpack.c.l.b16 %v4115
        %v6765 = vunpack.c.l.b16 %v4116
        %v6766 = vunpack.c.l.b16 %v4117
        %v6767 = vunpack.c.l.b16 %v4118
        %v6768 = vunpack.c.l.b16 %v4119
        %v6769 = vunpack.c.l.b16 %v4120
        %v6770 = vunpack.c.l.b16 %v4121
        %v6771 = vunpack.c.l.b16 %v4122
        %v6772 = vunpack.c.l.b16 %v4123
        %v6773 = vunpack.c.l.b16 %v4124
        %v6774 = vunpack.c.l.b16 %v4125
        %v6775 = vunpack.c.l.b16 %v4126
        %v6776 = vunpack.c.l.b16 %v4127
        %v6777 = vunpack.c.l.b16 %v4128
        %v6778 = vunpack.c.l.b16 %v4129
        %v6779 = vunpack.c.l.b16 %v4130
        %v6780 = vunpack.c.l.b16 %v4131
        %v6781 = vunpack.c.l.b16 %v4132
        %v6782 = vunpack.c.l.b16 %v4133
        %v6783 = vunpack.c.l.b16 %v4134
        %v6784 = vunpack.c.l.b16 %v4135
        %v6785 = vunpack.c.l.b16 %v4136
        %v6786 = vunpack.c.l.b16 %v4137
        %v6787 = vunpack.c.l.b16 %v4138
        %v6788 = vunpack.c.l.b16 %v4139
        %v6789 = vunpack.c.l.b16 %v4140
        %v6790 = vunpack.c.l.b16 %v4141
        %v6791 = vunpack.c.l.b16 %v4142
        %v6792 = vunpack.c.l.b16 %v4143
        %v6793 = vunpack.c.l.b16 %v4144
        %v6794 = vunpack.c.l.b16 %v4145
        %v6795 = vunpack.c.l.b16 %v4146
        %v6796 = vunpack.c.l.b16 %v4147
        %v6797 = vunpack.c.l.b16 %v4148
        %v6798 = vunpack.c.l.b16 %v4149
        %v6799 = vunpack.c.l.b16 %v4150
        %v6800 = vunpack.c.l.b16 %v4151
        %v6801 = vunpack.c.l.b16 %v4152
        %v6802 = vunpack.c.l.b16 %v4153
        %v6803 = vpack.c.b16 %v6676, %v6675
        %v6804 = vpack.c.b16 %v6678, %v6677
        %v6805 = vpack.c.b16 %v6680, %v6679
        %v6806 = vpack.c.b16 %v6682, %v6681
        %v6807 = vpack.c.b16 %v6684, %v6683
        %v6808 = vpack.c.b16 %v6686, %v6685
        %v6809 = vpack.c.b16 %v6688, %v6687
        %v6810 = vpack.c.b16 %v6690, %v6689
        %v6811 = vpack.c.b16 %v6692, %v6691
        %v6812 = vpack.c.b16 %v6694, %v6693
        %v6813 = vpack.c.b16 %v6696, %v6695
        %v6814 = vpack.c.b16 %v6698, %v6697
        %v6815 = vpack.c.b16 %v6700, %v6699
        %v6816 = vpack.c.b16 %v6702, %v6701
        %v6817 = vpack.c.b16 %v6704, %v6703
        %v6818 = vpack.c.b16 %v6706, %v6705
        %v6819 = vpack.c.b16 %v6708, %v6707
        %v6820 = vpack.c.b16 %v6710, %v6709
        %v6821 = vpack.c.b16 %v6712, %v6711
        %v6822 = vpack.c.b16 %v6714, %v6713
        %v6823 = vpack.c.b16 %v6716, %v6715
        %v6824 = vpack.c.b16 %v6718, %v6717
        %v6825 = vpack.c.b16 %v6720, %v6719
        %v6826 = vpack.c.b16 %v6722, %v6721
        %v6827 = vpack.c.b16 %v6724, %v6723
        %v6828 = vpack.c.b16 %v6726, %v6725
        %v6829 = vpack.c.b16 %v6728, %v6727
        %v6830 = vpack.c.b16 %v6730, %v6729
        %v6831 = vpack.c.b16 %v6732, %v6731
        %v6832 = vpack.c.b16 %v6734, %v6733
        %v6833 = vpack.c.b16 %v6736, %v6735
        %v6834 = vpack.c.b16 %v6738, %v6737
        %v6835 = vpack.c.b16 %v6740, %v6739
        %v6836 = vpack.c.b16 %v6742, %v6741
        %v6837 = vpack.c.b16 %v6744, %v6743
        %v6838 = vpack.c.b16 %v6746, %v6745
        %v6839 = vpack.c.b16 %v6748, %v6747
        %v6840 = vpack.c.b16 %v6750, %v6749
        %v6841 = vpack.c.b16 %v6752, %v6751
        %v6842 = vpack.c.b16 %v6754, %v6753
        %v6843 = vpack.c.b16 %v6756, %v6755
        %v6844 = vpack.c.b16 %v6758, %v6757
        %v6845 = vpack.c.b16 %v6760, %v6759
        %v6846 = vpack.c.b16 %v6762, %v6761
        %v6847 = vpack.c.b16 %v6764, %v6763
        %v6848 = vpack.c.b16 %v6766, %v6765
        %v6849 = vpack.c.b16 %v6768, %v6767
        %v6850 = vpack.c.b16 %v6770, %v6769
        %v6851 = vpack.c.b16 %v6772, %v6771
        %v6852 = vpack.c.b16 %v6774, %v6773
        %v6853 = vpack.c.b16 %v6776, %v6775
        %v6854 = vpack.c.b16 %v6778, %v6777
        %v6855 = vpack.c.b16 %v6780, %v6779
        %v6856 = vpack.c.b16 %v6782, %v6781
        %v6857 = vpack.c.b16 %v6784, %v6783
        %v6858 = vpack.c.b16 %v6786, %v6785
        %v6859 = vpack.c.b16 %v6788, %v6787
        %v6860 = vpack.c.b16 %v6790, %v6789
        %v6861 = vpack.c.b16 %v6792, %v6791
        %v6862 = vpack.c.b16 %v6794, %v6793
        %v6863 = vpack.c.b16 %v6796, %v6795
        %v6864 = vpack.c.b16 %v6798, %v6797
        %v6865 = vpack.c.b16 %v6800, %v6799
        %v6866 = vpack.c.b16 %v6802, %v6801
        %v6870 = vunpack.c.l.b16 %v4154
        %v6871 = vunpack.c.l.b16 %v4155
        %v6872 = vunpack.c.l.b16 %v4156
        %v6873 = vpack.c.b16 %v6871, %v6870
        %v6874 = vpack.c.b16 %v6872, %v6872
        %v6877 = vsel %vm5805, %v6803, 0
        %v6880 = vsel %vm5805, %v6804, 0
        %v6883 = vsel %vm5805, %v6805, 0
        %v6886 = vsel %vm5805, %v6806, 0
        %v6889 = vsel %vm5805, %v6807, 0
        %v6892 = vsel %vm5805, %v6808, 0
        %v6895 = vsel %vm5805, %v6809, 0
        %v6898 = vsel %vm5805, %v6810, 0
        %v6901 = vsel %vm5805, %v6811, 0
        %v6904 = vsel %vm5805, %v6812, 0
        %v6907 = vsel %vm5805, %v6813, 0
        %v6910 = vsel %vm5805, %v6814, 0
        %v6913 = vsel %vm5805, %v6815, 0
        %v6916 = vsel %vm5805, %v6816, 0
        %v6919 = vsel %vm5805, %v6817, 0
        %v6922 = vsel %vm5805, %v6818, 0
        %v6925 = vsel %vm5805, %v6819, 0
        %v6928 = vsel %vm5805, %v6820, 0
        %v6931 = vsel %vm5805, %v6821, 0
        %v6934 = vsel %vm5805, %v6822, 0
        %v6937 = vsel %vm5805, %v6823, 0
        %v6940 = vsel %vm5805, %v6824, 0
        %v6943 = vsel %vm5805, %v6825, 0
        %v6946 = vsel %vm5805, %v6826, 0
        %v6949 = vsel %vm5805, %v6827, 0
        %v6952 = vsel %vm5805, %v6828, 0
        %v6955 = vsel %vm5805, %v6829, 0
        %v6958 = vsel %vm5805, %v6830, 0
        %v6961 = vsel %vm5805, %v6831, 0
        %v6964 = vsel %vm5805, %v6832, 0
        %v6967 = vsel %vm5805, %v6833, 0
        %v6970 = vsel %vm5805, %v6834, 0
        %v6973 = vsel %vm5805, %v6835, 0
        %v6976 = vsel %vm5805, %v6836, 0
        %v6979 = vsel %vm5805, %v6837, 0
        %v6982 = vsel %vm5805, %v6838, 0
        %v6985 = vsel %vm5805, %v6839, 0
        %v6988 = vsel %vm5805, %v6840, 0
        %v6991 = vsel %vm5805, %v6841, 0
        %v6994 = vsel %vm5805, %v6842, 0
        %v6997 = vsel %vm5805, %v6843, 0
        %v7000 = vsel %vm5805, %v6844, 0
        %v7003 = vsel %vm5805, %v6845, 0
        %v7006 = vsel %vm5805, %v6846, 0
        %v7009 = vsel %vm5805, %v6847, 0
        %v7012 = vsel %vm5805, %v6848, 0
        %v7015 = vsel %vm5805, %v6849, 0
        %v7018 = vsel %vm5805, %v6850, 0
        %v7021 = vsel %vm5805, %v6851, 0
        %v7024 = vsel %vm5805, %v6852, 0
        %v7027 = vsel %vm5805, %v6853, 0
        %v7030 = vsel %vm5805, %v6854, 0
        %v7033 = vsel %vm5805, %v6855, 0
        %v7036 = vsel %vm5805, %v6856, 0
        %v7039 = vsel %vm5805, %v6857, 0
        %v7042 = vsel %vm5805, %v6858, 0
        %v7045 = vsel %vm5805, %v6859, 0
        %v7048 = vsel %vm5805, %v6860, 0
        %v7051 = vsel %vm5805, %v6861, 0
        %v7054 = vsel %vm5805, %v6862, 0
        %v7057 = vsel %vm5805, %v6863, 0
        %v7060 = vsel %vm5805, %v6864, 0
        %v7063 = vsel %vm5805, %v6865, 0
        %v7066 = vsel %vm5805, %v6866, 0
        %v7069 = vsel %vm5998, %v6874, 0
        %7071 = vmatprep.subr.bf16.mxu0 0
        %7072 = vmatpush1.bf16.msra.mxu0 0
        %7073 = vmatprep.subr.bf16.mxu0 0
        %7074 = vmatpush1.bf16.msra.mxu0 0
        %7075 = vmatprep.subr.bf16.mxu0 0
        %7076 = vmatpush1.bf16.msra.mxu0 0
        %7077 = vmatprep.subr.bf16.mxu0 0
        %7078 = vmatpush1.bf16.msra.mxu0 0
        %7079 = vmatprep.subr.bf16.mxu0 0
        %7080 = vmatpush1.bf16.msra.mxu0 0
        %7081 = vmatprep.subr.bf16.mxu0 0
        %7082 = vmatpush1.bf16.msra.mxu0 0
        %7083 = vmatprep.subr.bf16.mxu0 0
        %7084 = vmatpush1.bf16.msra.mxu0 %v7069
        %7085 = vmatprep.subr.bf16.mxu0 0
        %7086 = vmatpush1.bf16.msra.mxu0 %v6873
        %7087 = vmatprep.subr.bf16.mxu0 0
        %7088 = vmatpush2.bf16.msra.mxu0 0
        %7089 = vmatprep.subr.bf16.mxu0 0
        %7090 = vmatpush2.bf16.msra.mxu0 0
        %7091 = vmatprep.subr.bf16.mxu0 0
        %7092 = vmatpush2.bf16.msra.mxu0 0
        %7093 = vmatprep.subr.bf16.mxu0 0
        %7094 = vmatpush2.bf16.msra.mxu0 0
        %7095 = vmatprep.subr.bf16.mxu0 0
        %7096 = vmatpush2.bf16.msra.mxu0 0
        %7097 = vmatprep.subr.bf16.mxu0 0
        %7098 = vmatpush2.bf16.msra.mxu0 0
        %7099 = vmatprep.subr.bf16.mxu0 0
        %7100 = vmatpush2.bf16.msra.mxu0 0
        %7101 = vmatprep.subr.bf16.mxu0 0
        %7102 = vmatpush2.bf16.msra.mxu0 0
        %7103 = vmatprep.mubr.bf16.mxu0 0
        %7104 = vmatmul.mubr.bf16.gmra.mxu0 %v6877
        %v7105 = vpop.f32.mrf.mxu0
        %v7106 = vadd.f32 %v6037, %v7105
        %v7107 = vpop.f32.mrf.mxu0
        %v7108 = vpop.f32.mrf.mxu0
        %v7109 = vadd.f32 %v6040, %v7108
        %v7110 = vpop.f32.mrf.mxu0
        %7111 = vmatprep.mubr.bf16.mxu0 0
        %7112 = vmatmul.mubr.bf16.gmra.mxu0 %v6880
        %v7113 = vpop.f32.mrf.mxu0
        %v7114 = vadd.f32 %v6045, %v7113
        %v7115 = vpop.f32.mrf.mxu0
        %v7116 = vpop.f32.mrf.mxu0
        %v7117 = vadd.f32 %v6048, %v7116
        %v7118 = vpop.f32.mrf.mxu0
        %7119 = vmatprep.mubr.bf16.mxu0 0
        %7120 = vmatmul.mubr.bf16.gmra.mxu0 %v6883
        %v7121 = vpop.f32.mrf.mxu0
        %v7122 = vadd.f32 %v6053, %v7121
        %v7123 = vpop.f32.mrf.mxu0
        %v7124 = vpop.f32.mrf.mxu0
        %v7125 = vadd.f32 %v6056, %v7124
        %v7126 = vpop.f32.mrf.mxu0
        %7127 = vmatprep.mubr.bf16.mxu0 0
        %7128 = vmatmul.mubr.bf16.gmra.mxu0 %v6886
        %v7129 = vpop.f32.mrf.mxu0
        %v7130 = vadd.f32 %v6061, %v7129
        %v7131 = vpop.f32.mrf.mxu0
        %v7132 = vpop.f32.mrf.mxu0
        %v7133 = vadd.f32 %v6064, %v7132
        %v7134 = vpop.f32.mrf.mxu0
        %7135 = vmatprep.mubr.bf16.mxu0 0
        %7136 = vmatmul.mubr.bf16.gmra.mxu0 %v6889
        %v7137 = vpop.f32.mrf.mxu0
        %v7138 = vadd.f32 %v6069, %v7137
        %v7139 = vpop.f32.mrf.mxu0
        %v7140 = vpop.f32.mrf.mxu0
        %v7141 = vadd.f32 %v6072, %v7140
        %v7142 = vpop.f32.mrf.mxu0
        %7143 = vmatprep.mubr.bf16.mxu0 0
        %7144 = vmatmul.mubr.bf16.gmra.mxu0 %v6892
        %v7145 = vpop.f32.mrf.mxu0
        %v7146 = vadd.f32 %v6077, %v7145
        %v7147 = vpop.f32.mrf.mxu0
        %v7148 = vpop.f32.mrf.mxu0
        %v7149 = vadd.f32 %v6080, %v7148
        %v7150 = vpop.f32.mrf.mxu0
        %7151 = vmatprep.mubr.bf16.mxu0 0
        %7152 = vmatmul.mubr.bf16.gmra.mxu0 %v6895
        %v7153 = vpop.f32.mrf.mxu0
        %v7154 = vadd.f32 %v6085, %v7153
        %v7155 = vpop.f32.mrf.mxu0
        %v7156 = vpop.f32.mrf.mxu0
        %v7157 = vadd.f32 %v6088, %v7156
        %v7158 = vpop.f32.mrf.mxu0
        %7159 = vmatprep.mubr.bf16.mxu0 0
        %7160 = vmatmul.mubr.bf16.gmra.mxu0 %v6898
        %v7161 = vpop.f32.mrf.mxu0
        %v7162 = vadd.f32 %v6093, %v7161
        %v7163 = vpop.f32.mrf.mxu0
        %v7164 = vpop.f32.mrf.mxu0
        %v7165 = vadd.f32 %v6096, %v7164
        %v7166 = vpop.f32.mrf.mxu0
        %7167 = vmatprep.mubr.bf16.mxu0 0
        %7168 = vmatmul.mubr.bf16.gmra.mxu0 %v6901
        %v7169 = vpop.f32.mrf.mxu0
        %v7170 = vadd.f32 %v6101, %v7169
        %v7171 = vpop.f32.mrf.mxu0
        %v7172 = vpop.f32.mrf.mxu0
        %v7173 = vadd.f32 %v6104, %v7172
        %v7174 = vpop.f32.mrf.mxu0
        %7175 = vmatprep.mubr.bf16.mxu0 0
        %7176 = vmatmul.mubr.bf16.gmra.mxu0 %v6904
        %v7177 = vpop.f32.mrf.mxu0
        %v7178 = vadd.f32 %v6109, %v7177
        %v7179 = vpop.f32.mrf.mxu0
        %v7180 = vpop.f32.mrf.mxu0
        %v7181 = vadd.f32 %v6112, %v7180
        %v7182 = vpop.f32.mrf.mxu0
        %7183 = vmatprep.mubr.bf16.mxu0 0
        %7184 = vmatmul.mubr.bf16.gmra.mxu0 %v6907
        %v7185 = vpop.f32.mrf.mxu0
        %v7186 = vadd.f32 %v6117, %v7185
        %v7187 = vpop.f32.mrf.mxu0
        %v7188 = vpop.f32.mrf.mxu0
        %v7189 = vadd.f32 %v6120, %v7188
        %v7190 = vpop.f32.mrf.mxu0
        %7191 = vmatprep.mubr.bf16.mxu0 0
        %7192 = vmatmul.mubr.bf16.gmra.mxu0 %v6910
        %v7193 = vpop.f32.mrf.mxu0
        %v7194 = vadd.f32 %v6125, %v7193
        %v7195 = vpop.f32.mrf.mxu0
        %v7196 = vpop.f32.mrf.mxu0
        %v7197 = vadd.f32 %v6128, %v7196
        %v7198 = vpop.f32.mrf.mxu0
        %7199 = vmatprep.mubr.bf16.mxu0 0
        %7200 = vmatmul.mubr.bf16.gmra.mxu0 %v6913
        %v7201 = vpop.f32.mrf.mxu0
        %v7202 = vadd.f32 %v6133, %v7201
        %v7203 = vpop.f32.mrf.mxu0
        %v7204 = vpop.f32.mrf.mxu0
        %v7205 = vadd.f32 %v6136, %v7204
        %v7206 = vpop.f32.mrf.mxu0
        %7207 = vmatprep.mubr.bf16.mxu0 0
        %7208 = vmatmul.mubr.bf16.gmra.mxu0 %v6916
        %v7209 = vpop.f32.mrf.mxu0
        %v7210 = vadd.f32 %v6141, %v7209
        %v7211 = vpop.f32.mrf.mxu0
        %v7212 = vpop.f32.mrf.mxu0
        %v7213 = vadd.f32 %v6144, %v7212
        %v7214 = vpop.f32.mrf.mxu0
        %7215 = vmatprep.mubr.bf16.mxu0 0
        %7216 = vmatmul.mubr.bf16.gmra.mxu0 %v6919
        %v7217 = vpop.f32.mrf.mxu0
        %v7218 = vadd.f32 %v6149, %v7217
        %v7219 = vpop.f32.mrf.mxu0
        %v7220 = vpop.f32.mrf.mxu0
        %v7221 = vadd.f32 %v6152, %v7220
        %v7222 = vpop.f32.mrf.mxu0
        %7223 = vmatprep.mubr.bf16.mxu0 0
        %7224 = vmatmul.mubr.bf16.gmra.mxu0 %v6922
        %v7225 = vpop.f32.mrf.mxu0
        %v7226 = vadd.f32 %v6157, %v7225
        %v7227 = vpop.f32.mrf.mxu0
        %v7228 = vpop.f32.mrf.mxu0
        %v7229 = vadd.f32 %v6160, %v7228
        %v7230 = vpop.f32.mrf.mxu0
        %7231 = vmatprep.mubr.bf16.mxu0 0
        %7232 = vmatmul.mubr.bf16.gmra.mxu0 %v6925
        %v7233 = vpop.f32.mrf.mxu0
        %v7234 = vadd.f32 %v6165, %v7233
        %v7235 = vpop.f32.mrf.mxu0
        %v7236 = vpop.f32.mrf.mxu0
        %v7237 = vadd.f32 %v6168, %v7236
        %v7238 = vpop.f32.mrf.mxu0
        %7239 = vmatprep.mubr.bf16.mxu0 0
        %7240 = vmatmul.mubr.bf16.gmra.mxu0 %v6928
        %v7241 = vpop.f32.mrf.mxu0
        %v7242 = vadd.f32 %v6173, %v7241
        %v7243 = vpop.f32.mrf.mxu0
        %v7244 = vpop.f32.mrf.mxu0
        %v7245 = vadd.f32 %v6176, %v7244
        %v7246 = vpop.f32.mrf.mxu0
        %7247 = vmatprep.mubr.bf16.mxu0 0
        %7248 = vmatmul.mubr.bf16.gmra.mxu0 %v6931
        %v7249 = vpop.f32.mrf.mxu0
        %v7250 = vadd.f32 %v6181, %v7249
        %v7251 = vpop.f32.mrf.mxu0
        %v7252 = vpop.f32.mrf.mxu0
        %v7253 = vadd.f32 %v6184, %v7252
        %v7254 = vpop.f32.mrf.mxu0
        %7255 = vmatprep.mubr.bf16.mxu0 0
        %7256 = vmatmul.mubr.bf16.gmra.mxu0 %v6934
        %v7257 = vpop.f32.mrf.mxu0
        %v7258 = vadd.f32 %v6189, %v7257
        %v7259 = vpop.f32.mrf.mxu0
        %v7260 = vpop.f32.mrf.mxu0
        %v7261 = vadd.f32 %v6192, %v7260
        %v7262 = vpop.f32.mrf.mxu0
        %7263 = vmatprep.mubr.bf16.mxu0 0
        %7264 = vmatmul.mubr.bf16.gmra.mxu0 %v6937
        %v7265 = vpop.f32.mrf.mxu0
        %v7266 = vadd.f32 %v6197, %v7265
        %v7267 = vpop.f32.mrf.mxu0
        %v7268 = vpop.f32.mrf.mxu0
        %v7269 = vadd.f32 %v6200, %v7268
        %v7270 = vpop.f32.mrf.mxu0
        %7271 = vmatprep.mubr.bf16.mxu0 0
        %7272 = vmatmul.mubr.bf16.gmra.mxu0 %v6940
        %v7273 = vpop.f32.mrf.mxu0
        %v7274 = vadd.f32 %v6205, %v7273
        %v7275 = vpop.f32.mrf.mxu0
        %v7276 = vpop.f32.mrf.mxu0
        %v7277 = vadd.f32 %v6208, %v7276
        %v7278 = vpop.f32.mrf.mxu0
        %7279 = vmatprep.mubr.bf16.mxu0 0
        %7280 = vmatmul.mubr.bf16.gmra.mxu0 %v6943
        %v7281 = vpop.f32.mrf.mxu0
        %v7282 = vadd.f32 %v6213, %v7281
        %v7283 = vpop.f32.mrf.mxu0
        %v7284 = vpop.f32.mrf.mxu0
        %v7285 = vadd.f32 %v6216, %v7284
        %v7286 = vpop.f32.mrf.mxu0
        %7287 = vmatprep.mubr.bf16.mxu0 0
        %7288 = vmatmul.mubr.bf16.gmra.mxu0 %v6946
        %v7289 = vpop.f32.mrf.mxu0
        %v7290 = vadd.f32 %v6221, %v7289
        %v7291 = vpop.f32.mrf.mxu0
        %v7292 = vpop.f32.mrf.mxu0
        %v7293 = vadd.f32 %v6224, %v7292
        %v7294 = vpop.f32.mrf.mxu0
        %7295 = vmatprep.mubr.bf16.mxu0 0
        %7296 = vmatmul.mubr.bf16.gmra.mxu0 %v6949
        %v7297 = vpop.f32.mrf.mxu0
        %v7298 = vadd.f32 %v6229, %v7297
        %v7299 = vpop.f32.mrf.mxu0
        %v7300 = vpop.f32.mrf.mxu0
        %v7301 = vadd.f32 %v6232, %v7300
        %v7302 = vpop.f32.mrf.mxu0
        %7303 = vmatprep.mubr.bf16.mxu0 0
        %7304 = vmatmul.mubr.bf16.gmra.mxu0 %v6952
        %v7305 = vpop.f32.mrf.mxu0
        %v7306 = vadd.f32 %v6237, %v7305
        %v7307 = vpop.f32.mrf.mxu0
        %v7308 = vpop.f32.mrf.mxu0
        %v7309 = vadd.f32 %v6240, %v7308
        %v7310 = vpop.f32.mrf.mxu0
        %7311 = vmatprep.mubr.bf16.mxu0 0
        %7312 = vmatmul.mubr.bf16.gmra.mxu0 %v6955
        %v7313 = vpop.f32.mrf.mxu0
        %v7314 = vadd.f32 %v6245, %v7313
        %v7315 = vpop.f32.mrf.mxu0
        %v7316 = vpop.f32.mrf.mxu0
        %v7317 = vadd.f32 %v6248, %v7316
        %v7318 = vpop.f32.mrf.mxu0
        %7319 = vmatprep.mubr.bf16.mxu0 0
        %7320 = vmatmul.mubr.bf16.gmra.mxu0 %v6958
        %v7321 = vpop.f32.mrf.mxu0
        %v7322 = vadd.f32 %v6253, %v7321
        %v7323 = vpop.f32.mrf.mxu0
        %v7324 = vpop.f32.mrf.mxu0
        %v7325 = vadd.f32 %v6256, %v7324
        %v7326 = vpop.f32.mrf.mxu0
        %7327 = vmatprep.mubr.bf16.mxu0 0
        %7328 = vmatmul.mubr.bf16.gmra.mxu0 %v6961
        %v7329 = vpop.f32.mrf.mxu0
        %v7330 = vadd.f32 %v6261, %v7329
        %v7331 = vpop.f32.mrf.mxu0
        %v7332 = vpop.f32.mrf.mxu0
        %v7333 = vadd.f32 %v6264, %v7332
        %v7334 = vpop.f32.mrf.mxu0
        %7335 = vmatprep.mubr.bf16.mxu0 0
        %7336 = vmatmul.mubr.bf16.gmra.mxu0 %v6964
        %v7337 = vpop.f32.mrf.mxu0
        %v7338 = vadd.f32 %v6269, %v7337
        %v7339 = vpop.f32.mrf.mxu0
        %v7340 = vpop.f32.mrf.mxu0
        %v7341 = vadd.f32 %v6272, %v7340
        %v7342 = vpop.f32.mrf.mxu0
        %7343 = vmatprep.mubr.bf16.mxu0 0
        %7344 = vmatmul.mubr.bf16.gmra.mxu0 %v6967
        %v7345 = vpop.f32.mrf.mxu0
        %v7346 = vadd.f32 %v6277, %v7345
        %v7347 = vpop.f32.mrf.mxu0
        %v7348 = vpop.f32.mrf.mxu0
        %v7349 = vadd.f32 %v6280, %v7348
        %v7350 = vpop.f32.mrf.mxu0
        %7351 = vmatprep.mubr.bf16.mxu0 0
        %7352 = vmatmul.mubr.bf16.gmra.mxu0 %v6970
        %v7353 = vpop.f32.mrf.mxu0
        %v7354 = vadd.f32 %v6285, %v7353
        %v7355 = vpop.f32.mrf.mxu0
        %v7356 = vpop.f32.mrf.mxu0
        %v7357 = vadd.f32 %v6288, %v7356
        %v7358 = vpop.f32.mrf.mxu0
        %7359 = vmatprep.mubr.bf16.mxu0 0
        %7360 = vmatmul.mubr.bf16.gmra.mxu0 %v6973
        %v7361 = vpop.f32.mrf.mxu0
        %v7362 = vadd.f32 %v6293, %v7361
        %v7363 = vpop.f32.mrf.mxu0
        %v7364 = vpop.f32.mrf.mxu0
        %v7365 = vadd.f32 %v6296, %v7364
        %v7366 = vpop.f32.mrf.mxu0
        %7367 = vmatprep.mubr.bf16.mxu0 0
        %7368 = vmatmul.mubr.bf16.gmra.mxu0 %v6976
        %v7369 = vpop.f32.mrf.mxu0
        %v7370 = vadd.f32 %v6301, %v7369
        %v7371 = vpop.f32.mrf.mxu0
        %v7372 = vpop.f32.mrf.mxu0
        %v7373 = vadd.f32 %v6304, %v7372
        %v7374 = vpop.f32.mrf.mxu0
        %7375 = vmatprep.mubr.bf16.mxu0 0
        %7376 = vmatmul.mubr.bf16.gmra.mxu0 %v6979
        %v7377 = vpop.f32.mrf.mxu0
        %v7378 = vadd.f32 %v6309, %v7377
        %v7379 = vpop.f32.mrf.mxu0
        %v7380 = vpop.f32.mrf.mxu0
        %v7381 = vadd.f32 %v6312, %v7380
        %v7382 = vpop.f32.mrf.mxu0
        %7383 = vmatprep.mubr.bf16.mxu0 0
        %7384 = vmatmul.mubr.bf16.gmra.mxu0 %v6982
        %v7385 = vpop.f32.mrf.mxu0
        %v7386 = vadd.f32 %v6317, %v7385
        %v7387 = vpop.f32.mrf.mxu0
        %v7388 = vpop.f32.mrf.mxu0
        %v7389 = vadd.f32 %v6320, %v7388
        %v7390 = vpop.f32.mrf.mxu0
        %7391 = vmatprep.mubr.bf16.mxu0 0
        %7392 = vmatmul.mubr.bf16.gmra.mxu0 %v6985
        %v7393 = vpop.f32.mrf.mxu0
        %v7394 = vadd.f32 %v6325, %v7393
        %v7395 = vpop.f32.mrf.mxu0
        %v7396 = vpop.f32.mrf.mxu0
        %v7397 = vadd.f32 %v6328, %v7396
        %v7398 = vpop.f32.mrf.mxu0
        %7399 = vmatprep.mubr.bf16.mxu0 0
        %7400 = vmatmul.mubr.bf16.gmra.mxu0 %v6988
        %v7401 = vpop.f32.mrf.mxu0
        %v7402 = vadd.f32 %v6333, %v7401
        %v7403 = vpop.f32.mrf.mxu0
        %v7404 = vpop.f32.mrf.mxu0
        %v7405 = vadd.f32 %v6336, %v7404
        %v7406 = vpop.f32.mrf.mxu0
        %7407 = vmatprep.mubr.bf16.mxu0 0
        %7408 = vmatmul.mubr.bf16.gmra.mxu0 %v6991
        %v7409 = vpop.f32.mrf.mxu0
        %v7410 = vadd.f32 %v6341, %v7409
        %v7411 = vpop.f32.mrf.mxu0
        %v7412 = vpop.f32.mrf.mxu0
        %v7413 = vadd.f32 %v6344, %v7412
        %v7414 = vpop.f32.mrf.mxu0
        %7415 = vmatprep.mubr.bf16.mxu0 0
        %7416 = vmatmul.mubr.bf16.gmra.mxu0 %v6994
        %v7417 = vpop.f32.mrf.mxu0
        %v7418 = vadd.f32 %v6349, %v7417
        %v7419 = vpop.f32.mrf.mxu0
        %v7420 = vpop.f32.mrf.mxu0
        %v7421 = vadd.f32 %v6352, %v7420
        %v7422 = vpop.f32.mrf.mxu0
        %7423 = vmatprep.mubr.bf16.mxu0 0
        %7424 = vmatmul.mubr.bf16.gmra.mxu0 %v6997
        %v7425 = vpop.f32.mrf.mxu0
        %v7426 = vadd.f32 %v6357, %v7425
        %v7427 = vpop.f32.mrf.mxu0
        %v7428 = vpop.f32.mrf.mxu0
        %v7429 = vadd.f32 %v6360, %v7428
        %v7430 = vpop.f32.mrf.mxu0
        %7431 = vmatprep.mubr.bf16.mxu0 0
        %7432 = vmatmul.mubr.bf16.gmra.mxu0 %v7000
        %v7433 = vpop.f32.mrf.mxu0
        %v7434 = vadd.f32 %v6365, %v7433
        %v7435 = vpop.f32.mrf.mxu0
        %v7436 = vpop.f32.mrf.mxu0
        %v7437 = vadd.f32 %v6368, %v7436
        %v7438 = vpop.f32.mrf.mxu0
        %7439 = vmatprep.mubr.bf16.mxu0 0
        %7440 = vmatmul.mubr.bf16.gmra.mxu0 %v7003
        %v7441 = vpop.f32.mrf.mxu0
        %v7442 = vadd.f32 %v6373, %v7441
        %v7443 = vpop.f32.mrf.mxu0
        %v7444 = vpop.f32.mrf.mxu0
        %v7445 = vadd.f32 %v6376, %v7444
        %v7446 = vpop.f32.mrf.mxu0
        %7447 = vmatprep.mubr.bf16.mxu0 0
        %7448 = vmatmul.mubr.bf16.gmra.mxu0 %v7006
        %v7449 = vpop.f32.mrf.mxu0
        %v7450 = vadd.f32 %v6381, %v7449
        %v7451 = vpop.f32.mrf.mxu0
        %v7452 = vpop.f32.mrf.mxu0
        %v7453 = vadd.f32 %v6384, %v7452
        %v7454 = vpop.f32.mrf.mxu0
        %7455 = vmatprep.mubr.bf16.mxu0 0
        %7456 = vmatmul.mubr.bf16.gmra.mxu0 %v7009
        %v7457 = vpop.f32.mrf.mxu0
        %v7458 = vadd.f32 %v6389, %v7457
        %v7459 = vpop.f32.mrf.mxu0
        %v7460 = vpop.f32.mrf.mxu0
        %v7461 = vadd.f32 %v6392, %v7460
        %v7462 = vpop.f32.mrf.mxu0
        %7463 = vmatprep.mubr.bf16.mxu0 0
        %7464 = vmatmul.mubr.bf16.gmra.mxu0 %v7012
        %v7465 = vpop.f32.mrf.mxu0
        %v7466 = vadd.f32 %v6397, %v7465
        %v7467 = vpop.f32.mrf.mxu0
        %v7468 = vpop.f32.mrf.mxu0
        %v7469 = vadd.f32 %v6400, %v7468
        %v7470 = vpop.f32.mrf.mxu0
        %7471 = vmatprep.mubr.bf16.mxu0 0
        %7472 = vmatmul.mubr.bf16.gmra.mxu0 %v7015
        %v7473 = vpop.f32.mrf.mxu0
        %v7474 = vadd.f32 %v6405, %v7473
        %v7475 = vpop.f32.mrf.mxu0
        %v7476 = vpop.f32.mrf.mxu0
        %v7477 = vadd.f32 %v6408, %v7476
        %v7478 = vpop.f32.mrf.mxu0
        %7479 = vmatprep.mubr.bf16.mxu0 0
        %7480 = vmatmul.mubr.bf16.gmra.mxu0 %v7018
        %v7481 = vpop.f32.mrf.mxu0
        %v7482 = vadd.f32 %v6413, %v7481
        %v7483 = vpop.f32.mrf.mxu0
        %v7484 = vpop.f32.mrf.mxu0
        %v7485 = vadd.f32 %v6416, %v7484
        %v7486 = vpop.f32.mrf.mxu0
        %7487 = vmatprep.mubr.bf16.mxu0 0
        %7488 = vmatmul.mubr.bf16.gmra.mxu0 %v7021
        %v7489 = vpop.f32.mrf.mxu0
        %v7490 = vadd.f32 %v6421, %v7489
        %v7491 = vpop.f32.mrf.mxu0
        %v7492 = vpop.f32.mrf.mxu0
        %v7493 = vadd.f32 %v6424, %v7492
        %v7494 = vpop.f32.mrf.mxu0
        %7495 = vmatprep.mubr.bf16.mxu0 0
        %7496 = vmatmul.mubr.bf16.gmra.mxu0 %v7024
        %v7497 = vpop.f32.mrf.mxu0
        %v7498 = vadd.f32 %v6429, %v7497
        %v7499 = vpop.f32.mrf.mxu0
        %v7500 = vpop.f32.mrf.mxu0
        %v7501 = vadd.f32 %v6432, %v7500
        %v7502 = vpop.f32.mrf.mxu0
        %7503 = vmatprep.mubr.bf16.mxu0 0
        %7504 = vmatmul.mubr.bf16.gmra.mxu0 %v7027
        %v7505 = vpop.f32.mrf.mxu0
        %v7506 = vadd.f32 %v6437, %v7505
        %v7507 = vpop.f32.mrf.mxu0
        %v7508 = vpop.f32.mrf.mxu0
        %v7509 = vadd.f32 %v6440, %v7508
        %v7510 = vpop.f32.mrf.mxu0
        %7511 = vmatprep.mubr.bf16.mxu0 0
        %7512 = vmatmul.mubr.bf16.gmra.mxu0 %v7030
        %v7513 = vpop.f32.mrf.mxu0
        %v7514 = vadd.f32 %v6445, %v7513
        %v7515 = vpop.f32.mrf.mxu0
        %v7516 = vpop.f32.mrf.mxu0
        %v7517 = vadd.f32 %v6448, %v7516
        %v7518 = vpop.f32.mrf.mxu0
        %7519 = vmatprep.mubr.bf16.mxu0 0
        %7520 = vmatmul.mubr.bf16.gmra.mxu0 %v7033
        %v7521 = vpop.f32.mrf.mxu0
        %v7522 = vadd.f32 %v6453, %v7521
        %v7523 = vpop.f32.mrf.mxu0
        %v7524 = vpop.f32.mrf.mxu0
        %v7525 = vadd.f32 %v6456, %v7524
        %v7526 = vpop.f32.mrf.mxu0
        %7527 = vmatprep.mubr.bf16.mxu0 0
        %7528 = vmatmul.mubr.bf16.gmra.mxu0 %v7036
        %v7529 = vpop.f32.mrf.mxu0
        %v7530 = vadd.f32 %v6461, %v7529
        %v7531 = vpop.f32.mrf.mxu0
        %v7532 = vpop.f32.mrf.mxu0
        %v7533 = vadd.f32 %v6464, %v7532
        %v7534 = vpop.f32.mrf.mxu0
        %7535 = vmatprep.mubr.bf16.mxu0 0
        %7536 = vmatmul.mubr.bf16.gmra.mxu0 %v7039
        %v7537 = vpop.f32.mrf.mxu0
        %v7538 = vadd.f32 %v6469, %v7537
        %v7539 = vpop.f32.mrf.mxu0
        %v7540 = vpop.f32.mrf.mxu0
        %v7541 = vadd.f32 %v6472, %v7540
        %v7542 = vpop.f32.mrf.mxu0
        %7543 = vmatprep.mubr.bf16.mxu0 0
        %7544 = vmatmul.mubr.bf16.gmra.mxu0 %v7042
        %v7545 = vpop.f32.mrf.mxu0
        %v7546 = vadd.f32 %v6477, %v7545
        %v7547 = vpop.f32.mrf.mxu0
        %v7548 = vpop.f32.mrf.mxu0
        %v7549 = vadd.f32 %v6480, %v7548
        %v7550 = vpop.f32.mrf.mxu0
        %7551 = vmatprep.mubr.bf16.mxu0 0
        %7552 = vmatmul.mubr.bf16.gmra.mxu0 %v7045
        %v7553 = vpop.f32.mrf.mxu0
        %v7554 = vadd.f32 %v6485, %v7553
        %v7555 = vpop.f32.mrf.mxu0
        %v7556 = vpop.f32.mrf.mxu0
        %v7557 = vadd.f32 %v6488, %v7556
        %v7558 = vpop.f32.mrf.mxu0
        %7559 = vmatprep.mubr.bf16.mxu0 0
        %7560 = vmatmul.mubr.bf16.gmra.mxu0 %v7048
        %v7561 = vpop.f32.mrf.mxu0
        %v7562 = vadd.f32 %v6493, %v7561
        %v7563 = vpop.f32.mrf.mxu0
        %v7564 = vpop.f32.mrf.mxu0
        %v7565 = vadd.f32 %v6496, %v7564
        %v7566 = vpop.f32.mrf.mxu0
        %7567 = vmatprep.mubr.bf16.mxu0 0
        %7568 = vmatmul.mubr.bf16.gmra.mxu0 %v7051
        %v7569 = vpop.f32.mrf.mxu0
        %v7570 = vadd.f32 %v6501, %v7569
        %v7571 = vpop.f32.mrf.mxu0
        %v7572 = vpop.f32.mrf.mxu0
        %v7573 = vadd.f32 %v6504, %v7572
        %v7574 = vpop.f32.mrf.mxu0
        %7575 = vmatprep.mubr.bf16.mxu0 0
        %7576 = vmatmul.mubr.bf16.gmra.mxu0 %v7054
        %v7577 = vpop.f32.mrf.mxu0
        %v7578 = vadd.f32 %v6509, %v7577
        %v7579 = vpop.f32.mrf.mxu0
        %v7580 = vpop.f32.mrf.mxu0
        %v7581 = vadd.f32 %v6512, %v7580
        %v7582 = vpop.f32.mrf.mxu0
        %7583 = vmatprep.mubr.bf16.mxu0 0
        %7584 = vmatmul.mubr.bf16.gmra.mxu0 %v7057
        %v7585 = vpop.f32.mrf.mxu0
        %v7586 = vadd.f32 %v6517, %v7585
        %v7587 = vpop.f32.mrf.mxu0
        %v7588 = vpop.f32.mrf.mxu0
        %v7589 = vadd.f32 %v6520, %v7588
        %v7590 = vpop.f32.mrf.mxu0
        %7591 = vmatprep.mubr.bf16.mxu0 0
        %7592 = vmatmul.mubr.bf16.gmra.mxu0 %v7060
        %v7593 = vpop.f32.mrf.mxu0
        %v7594 = vadd.f32 %v6525, %v7593
        %v7595 = vpop.f32.mrf.mxu0
        %v7596 = vpop.f32.mrf.mxu0
        %v7597 = vadd.f32 %v6528, %v7596
        %v7598 = vpop.f32.mrf.mxu0
        %7599 = vmatprep.mubr.bf16.mxu0 0
        %7600 = vmatmul.mubr.bf16.gmra.mxu0 %v7063
        %v7601 = vpop.f32.mrf.mxu0
        %v7602 = vadd.f32 %v6533, %v7601
        %v7603 = vpop.f32.mrf.mxu0
        %v7604 = vpop.f32.mrf.mxu0
        %v7605 = vadd.f32 %v6536, %v7604
        %v7606 = vpop.f32.mrf.mxu0
        %7607 = vmatprep.mubr.bf16.mxu0 0
        %7608 = vmatmul.mubr.bf16.gmra.mxu0 %v7066
        %v7609 = vpop.f32.mrf.mxu0
        %v7610 = vadd.f32 %v6541, %v7609
        %v7611 = vpop.f32.mrf.mxu0
        %v7612 = vpop.f32.mrf.mxu0
        %v7613 = vadd.f32 %v6544, %v7612
        %v7614 = vpop.f32.mrf.mxu0
        %7615 = vdwg.mxu0
        %v7616 = vld [vmem:[#allocation2] sm:$0xe]
        %v7617 = vld [vmem:[#allocation2 + $0x14] sm:$0xe]
        %v7618 = vld [vmem:[#allocation2 + $0x28] sm:$0xe]
        %v7619 = vld [vmem:[#allocation2 + $0x3c] sm:$0xe]
        %v7620 = vld [vmem:[#allocation2 + $0x50] sm:$0xe]
        %v7621 = vld [vmem:[#allocation2 + $0x64] sm:$0xe]
        %v7622 = vld [vmem:[#allocation2 + $0x78] sm:$0xe]
        %v7623 = vld [vmem:[#allocation2 + $0x8c] sm:$0xe]
        %v7624 = vld [vmem:[#allocation2 + $0xa0] sm:$0xe]
        %v7625 = vld [vmem:[#allocation2 + $0xb4] sm:$0xe]
        %v7626 = vld [vmem:[#allocation2 + $0xc8] sm:$0xe]
        %v7627 = vld [vmem:[#allocation2 + $0xdc] sm:$0xe]
        %v7628 = vld [vmem:[#allocation2 + $0xf0] sm:$0xe]
        %v7629 = vld [vmem:[#allocation2 + $0x104] sm:$0xe]
        %v7630 = vld [vmem:[#allocation2 + $0x118] sm:$0xe]
        %v7631 = vld [vmem:[#allocation2 + $0x12c] sm:$0xe]
        %v7632 = vld [vmem:[#allocation2 + $0x140] sm:$0xe]
        %v7633 = vld [vmem:[#allocation2 + $0x154] sm:$0xe]
        %v7634 = vld [vmem:[#allocation2 + $0x168] sm:$0xe]
        %v7635 = vld [vmem:[#allocation2 + $0x17c] sm:$0xe]
        %v7636 = vld [vmem:[#allocation2 + $0x190] sm:$0xe]
        %v7637 = vld [vmem:[#allocation2 + $0x1a4] sm:$0xe]
        %v7638 = vld [vmem:[#allocation2 + $0x1b8] sm:$0xe]
        %v7639 = vld [vmem:[#allocation2 + $0x1cc] sm:$0xe]
        %v7640 = vld [vmem:[#allocation2 + $0x1e0] sm:$0xe]
        %v7641 = vld [vmem:[#allocation2 + $0x1f4] sm:$0xe]
        %v7642 = vld [vmem:[#allocation2 + $0x208] sm:$0xe]
        %v7643 = vld [vmem:[#allocation2 + $0x21c] sm:$0xe]
        %v7644 = vld [vmem:[#allocation2 + $0x230] sm:$0xe]
        %v7645 = vld [vmem:[#allocation2 + $0x244] sm:$0xe]
        %v7646 = vld [vmem:[#allocation2 + $0x258] sm:$0xe]
        %v7647 = vld [vmem:[#allocation2 + $0x26c] sm:$0xe]
        %vm7712 = vcmask 1042432
        %vm7713 = vcmask 1046532
        %vm7714 = vmor %vm7712, %vm7713
        %v7715 = vrot.slane %v7616, 5
        %v7716 = vrot.slane %v7715, 4
        %v7717 = vrot.slane %v4027, 5
        %v7718 = vsel %vm7714, %v7716, %v7717
        %v7719 = vrot.slane %v7717, 4
        %v7720 = vrot.slane %v4028, 5
        %v7721 = vsel %vm7714, %v7719, %v7720
        %v7722 = vrot.slane %v7720, 4
        %v7723 = vrot.slane %v4029, 5
        %v7724 = vsel %vm7714, %v7722, %v7723
        %v7725 = vrot.slane %v7723, 4
        %v7726 = vrot.slane %v4157, 5
        %v7727 = vsel %vm7714, %v7725, %v7726
        %v7728 = vrot.slane %v7617, 5
        %v7729 = vrot.slane %v7728, 4
        %v7730 = vrot.slane %v4031, 5
        %v7731 = vsel %vm7714, %v7729, %v7730
        %v7732 = vrot.slane %v7730, 4
        %v7733 = vrot.slane %v4032, 5
        %v7734 = vsel %vm7714, %v7732, %v7733
        %v7735 = vrot.slane %v7733, 4
        %v7736 = vrot.slane %v4033, 5
        %v7737 = vsel %vm7714, %v7735, %v7736
        %v7738 = vrot.slane %v7736, 4
        %v7739 = vrot.slane %v4158, 5
        %v7740 = vsel %vm7714, %v7738, %v7739
        %v7741 = vrot.slane %v7618, 5
        %v7742 = vrot.slane %v7741, 4
        %v7743 = vrot.slane %v4035, 5
        %v7744 = vsel %vm7714, %v7742, %v7743
        %v7745 = vrot.slane %v7743, 4
        %v7746 = vrot.slane %v4036, 5
        %v7747 = vsel %vm7714, %v7745, %v7746
        %v7748 = vrot.slane %v7746, 4
        %v7749 = vrot.slane %v4037, 5
        %v7750 = vsel %vm7714, %v7748, %v7749
        %v7751 = vrot.slane %v7749, 4
        %v7752 = vrot.slane %v4159, 5
        %v7753 = vsel %vm7714, %v7751, %v7752
        %v7754 = vrot.slane %v7619, 5
        %v7755 = vrot.slane %v7754, 4
        %v7756 = vrot.slane %v4039, 5
        %v7757 = vsel %vm7714, %v7755, %v7756
        %v7758 = vrot.slane %v7756, 4
        %v7759 = vrot.slane %v4040, 5
        %v7760 = vsel %vm7714, %v7758, %v7759
        %v7761 = vrot.slane %v7759, 4
        %v7762 = vrot.slane %v4041, 5
        %v7763 = vsel %vm7714, %v7761, %v7762
        %v7764 = vrot.slane %v7762, 4
        %v7765 = vrot.slane %v4160, 5
        %v7766 = vsel %vm7714, %v7764, %v7765
        %v7767 = vrot.slane %v7620, 5
        %v7768 = vrot.slane %v7767, 4
        %v7769 = vrot.slane %v4043, 5
        %v7770 = vsel %vm7714, %v7768, %v7769
        %v7771 = vrot.slane %v7769, 4
        %v7772 = vrot.slane %v4044, 5
        %v7773 = vsel %vm7714, %v7771, %v7772
        %v7774 = vrot.slane %v7772, 4
        %v7775 = vrot.slane %v4045, 5
        %v7776 = vsel %vm7714, %v7774, %v7775
        %v7777 = vrot.slane %v7775, 4
        %v7778 = vrot.slane %v4161, 5
        %v7779 = vsel %vm7714, %v7777, %v7778
        %v7780 = vrot.slane %v7621, 5
        %v7781 = vrot.slane %v7780, 4
        %v7782 = vrot.slane %v4047, 5
        %v7783 = vsel %vm7714, %v7781, %v7782
        %v7784 = vrot.slane %v7782, 4
        %v7785 = vrot.slane %v4048, 5
        %v7786 = vsel %vm7714, %v7784, %v7785
        %v7787 = vrot.slane %v7785, 4
        %v7788 = vrot.slane %v4049, 5
        %v7789 = vsel %vm7714, %v7787, %v7788
        %v7790 = vrot.slane %v7788, 4
        %v7791 = vrot.slane %v4162, 5
        %v7792 = vsel %vm7714, %v7790, %v7791
        %v7793 = vrot.slane %v7622, 5
        %v7794 = vrot.slane %v7793, 4
        %v7795 = vrot.slane %v4051, 5
        %v7796 = vsel %vm7714, %v7794, %v7795
        %v7797 = vrot.slane %v7795, 4
        %v7798 = vrot.slane %v4052, 5
        %v7799 = vsel %vm7714, %v7797, %v7798
        %v7800 = vrot.slane %v7798, 4
        %v7801 = vrot.slane %v4053, 5
        %v7802 = vsel %vm7714, %v7800, %v7801
        %v7803 = vrot.slane %v7801, 4
        %v7804 = vrot.slane %v4163, 5
        %v7805 = vsel %vm7714, %v7803, %v7804
        %v7806 = vrot.slane %v7623, 5
        %v7807 = vrot.slane %v7806, 4
        %v7808 = vrot.slane %v4055, 5
        %v7809 = vsel %vm7714, %v7807, %v7808
        %v7810 = vrot.slane %v7808, 4
        %v7811 = vrot.slane %v4056, 5
        %v7812 = vsel %vm7714, %v7810, %v7811
        %v7813 = vrot.slane %v7811, 4
        %v7814 = vrot.slane %v4057, 5
        %v7815 = vsel %vm7714, %v7813, %v7814
        %v7816 = vrot.slane %v7814, 4
        %v7817 = vrot.slane %v4164, 5
        %v7818 = vsel %vm7714, %v7816, %v7817
        %v7819 = vrot.slane %v7624, 5
        %v7820 = vrot.slane %v7819, 4
        %v7821 = vrot.slane %v4059, 5
        %v7822 = vsel %vm7714, %v7820, %v7821
        %v7823 = vrot.slane %v7821, 4
        %v7824 = vrot.slane %v4060, 5
        %v7825 = vsel %vm7714, %v7823, %v7824
        %v7826 = vrot.slane %v7824, 4
        %v7827 = vrot.slane %v4061, 5
        %v7828 = vsel %vm7714, %v7826, %v7827
        %v7829 = vrot.slane %v7827, 4
        %v7830 = vrot.slane %v4165, 5
        %v7831 = vsel %vm7714, %v7829, %v7830
        %v7832 = vrot.slane %v7625, 5
        %v7833 = vrot.slane %v7832, 4
        %v7834 = vrot.slane %v4063, 5
        %v7835 = vsel %vm7714, %v7833, %v7834
        %v7836 = vrot.slane %v7834, 4
        %v7837 = vrot.slane %v4064, 5
        %v7838 = vsel %vm7714, %v7836, %v7837
        %v7839 = vrot.slane %v7837, 4
        %v7840 = vrot.slane %v4065, 5
        %v7841 = vsel %vm7714, %v7839, %v7840
        %v7842 = vrot.slane %v7840, 4
        %v7843 = vrot.slane %v4166, 5
        %v7844 = vsel %vm7714, %v7842, %v7843
        %v7845 = vrot.slane %v7626, 5
        %v7846 = vrot.slane %v7845, 4
        %v7847 = vrot.slane %v4067, 5
        %v7848 = vsel %vm7714, %v7846, %v7847
        %v7849 = vrot.slane %v7847, 4
        %v7850 = vrot.slane %v4068, 5
        %v7851 = vsel %vm7714, %v7849, %v7850
        %v7852 = vrot.slane %v7850, 4
        %v7853 = vrot.slane %v4069, 5
        %v7854 = vsel %vm7714, %v7852, %v7853
        %v7855 = vrot.slane %v7853, 4
        %v7856 = vrot.slane %v4167, 5
        %v7857 = vsel %vm7714, %v7855, %v7856
        %v7858 = vrot.slane %v7627, 5
        %v7859 = vrot.slane %v7858, 4
        %v7860 = vrot.slane %v4071, 5
        %v7861 = vsel %vm7714, %v7859, %v7860
        %v7862 = vrot.slane %v7860, 4
        %v7863 = vrot.slane %v4072, 5
        %v7864 = vsel %vm7714, %v7862, %v7863
        %v7865 = vrot.slane %v7863, 4
        %v7866 = vrot.slane %v4073, 5
        %v7867 = vsel %vm7714, %v7865, %v7866
        %v7868 = vrot.slane %v7866, 4
        %v7869 = vrot.slane %v4168, 5
        %v7870 = vsel %vm7714, %v7868, %v7869
        %v7871 = vrot.slane %v7628, 5
        %v7872 = vrot.slane %v7871, 4
        %v7873 = vrot.slane %v4075, 5
        %v7874 = vsel %vm7714, %v7872, %v7873
        %v7875 = vrot.slane %v7873, 4
        %v7876 = vrot.slane %v4076, 5
        %v7877 = vsel %vm7714, %v7875, %v7876
        %v7878 = vrot.slane %v7876, 4
        %v7879 = vrot.slane %v4077, 5
        %v7880 = vsel %vm7714, %v7878, %v7879
        %v7881 = vrot.slane %v7879, 4
        %v7882 = vrot.slane %v4169, 5
        %v7883 = vsel %vm7714, %v7881, %v7882
        %v7884 = vrot.slane %v7629, 5
        %v7885 = vrot.slane %v7884, 4
        %v7886 = vrot.slane %v4079, 5
        %v7887 = vsel %vm7714, %v7885, %v7886
        %v7888 = vrot.slane %v7886, 4
        %v7889 = vrot.slane %v4080, 5
        %v7890 = vsel %vm7714, %v7888, %v7889
        %v7891 = vrot.slane %v7889, 4
        %v7892 = vrot.slane %v4081, 5
        %v7893 = vsel %vm7714, %v7891, %v7892
        %v7894 = vrot.slane %v7892, 4
        %v7895 = vrot.slane %v4170, 5
        %v7896 = vsel %vm7714, %v7894, %v7895
        %v7897 = vrot.slane %v7630, 5
        %v7898 = vrot.slane %v7897, 4
        %v7899 = vrot.slane %v4083, 5
        %v7900 = vsel %vm7714, %v7898, %v7899
        %v7901 = vrot.slane %v7899, 4
        %v7902 = vrot.slane %v4084, 5
        %v7903 = vsel %vm7714, %v7901, %v7902
        %v7904 = vrot.slane %v7902, 4
        %v7905 = vrot.slane %v4085, 5
        %v7906 = vsel %vm7714, %v7904, %v7905
        %v7907 = vrot.slane %v7905, 4
        %v7908 = vrot.slane %v4171, 5
        %v7909 = vsel %vm7714, %v7907, %v7908
        %v7910 = vrot.slane %v7631, 5
        %v7911 = vrot.slane %v7910, 4
        %v7912 = vrot.slane %v4087, 5
        %v7913 = vsel %vm7714, %v7911, %v7912
        %v7914 = vrot.slane %v7912, 4
        %v7915 = vrot.slane %v4088, 5
        %v7916 = vsel %vm7714, %v7914, %v7915
        %v7917 = vrot.slane %v7915, 4
        %v7918 = vrot.slane %v4089, 5
        %v7919 = vsel %vm7714, %v7917, %v7918
        %v7920 = vrot.slane %v7918, 4
        %v7921 = vrot.slane %v4172, 5
        %v7922 = vsel %vm7714, %v7920, %v7921
        %v7923 = vrot.slane %v7632, 5
        %v7924 = vrot.slane %v7923, 4
        %v7925 = vrot.slane %v4091, 5
        %v7926 = vsel %vm7714, %v7924, %v7925
        %v7927 = vrot.slane %v7925, 4
        %v7928 = vrot.slane %v4092, 5
        %v7929 = vsel %vm7714, %v7927, %v7928
        %v7930 = vrot.slane %v7928, 4
        %v7931 = vrot.slane %v4093, 5
        %v7932 = vsel %vm7714, %v7930, %v7931
        %v7933 = vrot.slane %v7931, 4
        %v7934 = vrot.slane %v4173, 5
        %v7935 = vsel %vm7714, %v7933, %v7934
        %v7936 = vrot.slane %v7633, 5
        %v7937 = vrot.slane %v7936, 4
        %v7938 = vrot.slane %v4095, 5
        %v7939 = vsel %vm7714, %v7937, %v7938
        %v7940 = vrot.slane %v7938, 4
        %v7941 = vrot.slane %v4096, 5
        %v7942 = vsel %vm7714, %v7940, %v7941
        %v7943 = vrot.slane %v7941, 4
        %v7944 = vrot.slane %v4097, 5
        %v7945 = vsel %vm7714, %v7943, %v7944
        %v7946 = vrot.slane %v7944, 4
        %v7947 = vrot.slane %v4174, 5
        %v7948 = vsel %vm7714, %v7946, %v7947
        %v7949 = vrot.slane %v7634, 5
        %v7950 = vrot.slane %v7949, 4
        %v7951 = vrot.slane %v4099, 5
        %v7952 = vsel %vm7714, %v7950, %v7951
        %v7953 = vrot.slane %v7951, 4
        %v7954 = vrot.slane %v4100, 5
        %v7955 = vsel %vm7714, %v7953, %v7954
        %v7956 = vrot.slane %v7954, 4
        %v7957 = vrot.slane %v4101, 5
        %v7958 = vsel %vm7714, %v7956, %v7957
        %v7959 = vrot.slane %v7957, 4
        %v7960 = vrot.slane %v4175, 5
        %v7961 = vsel %vm7714, %v7959, %v7960
        %v7962 = vrot.slane %v7635, 5
        %v7963 = vrot.slane %v7962, 4
        %v7964 = vrot.slane %v4103, 5
        %v7965 = vsel %vm7714, %v7963, %v7964
        %v7966 = vrot.slane %v7964, 4
        %v7967 = vrot.slane %v4104, 5
        %v7968 = vsel %vm7714, %v7966, %v7967
        %v7969 = vrot.slane %v7967, 4
        %v7970 = vrot.slane %v4105, 5
        %v7971 = vsel %vm7714, %v7969, %v7970
        %v7972 = vrot.slane %v7970, 4
        %v7973 = vrot.slane %v4176, 5
        %v7974 = vsel %vm7714, %v7972, %v7973
        %v7975 = vrot.slane %v7636, 5
        %v7976 = vrot.slane %v7975, 4
        %v7977 = vrot.slane %v4107, 5
        %v7978 = vsel %vm7714, %v7976, %v7977
        %v7979 = vrot.slane %v7977, 4
        %v7980 = vrot.slane %v4108, 5
        %v7981 = vsel %vm7714, %v7979, %v7980
        %v7982 = vrot.slane %v7980, 4
        %v7983 = vrot.slane %v4109, 5
        %v7984 = vsel %vm7714, %v7982, %v7983
        %v7985 = vrot.slane %v7983, 4
        %v7986 = vrot.slane %v4177, 5
        %v7987 = vsel %vm7714, %v7985, %v7986
        %v7988 = vrot.slane %v7637, 5
        %v7989 = vrot.slane %v7988, 4
        %v7990 = vrot.slane %v4111, 5
        %v7991 = vsel %vm7714, %v7989, %v7990
        %v7992 = vrot.slane %v7990, 4
        %v7993 = vrot.slane %v4112, 5
        %v7994 = vsel %vm7714, %v7992, %v7993
        %v7995 = vrot.slane %v7993, 4
        %v7996 = vrot.slane %v4113, 5
        %v7997 = vsel %vm7714, %v7995, %v7996
        %v7998 = vrot.slane %v7996, 4
        %v7999 = vrot.slane %v4178, 5
        %v8000 = vsel %vm7714, %v7998, %v7999
        %v8001 = vrot.slane %v7638, 5
        %v8002 = vrot.slane %v8001, 4
        %v8003 = vrot.slane %v4115, 5
        %v8004 = vsel %vm7714, %v8002, %v8003
        %v8005 = vrot.slane %v8003, 4
        %v8006 = vrot.slane %v4116, 5
        %v8007 = vsel %vm7714, %v8005, %v8006
        %v8008 = vrot.slane %v8006, 4
        %v8009 = vrot.slane %v4117, 5
        %v8010 = vsel %vm7714, %v8008, %v8009
        %v8011 = vrot.slane %v8009, 4
        %v8012 = vrot.slane %v4179, 5
        %v8013 = vsel %vm7714, %v8011, %v8012
        %v8014 = vrot.slane %v7639, 5
        %v8015 = vrot.slane %v8014, 4
        %v8016 = vrot.slane %v4119, 5
        %v8017 = vsel %vm7714, %v8015, %v8016
        %v8018 = vrot.slane %v8016, 4
        %v8019 = vrot.slane %v4120, 5
        %v8020 = vsel %vm7714, %v8018, %v8019
        %v8021 = vrot.slane %v8019, 4
        %v8022 = vrot.slane %v4121, 5
        %v8023 = vsel %vm7714, %v8021, %v8022
        %v8024 = vrot.slane %v8022, 4
        %v8025 = vrot.slane %v4180, 5
        %v8026 = vsel %vm7714, %v8024, %v8025
        %v8027 = vrot.slane %v7640, 5
        %v8028 = vrot.slane %v8027, 4
        %v8029 = vrot.slane %v4123, 5
        %v8030 = vsel %vm7714, %v8028, %v8029
        %v8031 = vrot.slane %v8029, 4
        %v8032 = vrot.slane %v4124, 5
        %v8033 = vsel %vm7714, %v8031, %v8032
        %v8034 = vrot.slane %v8032, 4
        %v8035 = vrot.slane %v4125, 5
        %v8036 = vsel %vm7714, %v8034, %v8035
        %v8037 = vrot.slane %v8035, 4
        %v8038 = vrot.slane %v4181, 5
        %v8039 = vsel %vm7714, %v8037, %v8038
        %v8040 = vrot.slane %v7641, 5
        %v8041 = vrot.slane %v8040, 4
        %v8042 = vrot.slane %v4127, 5
        %v8043 = vsel %vm7714, %v8041, %v8042
        %v8044 = vrot.slane %v8042, 4
        %v8045 = vrot.slane %v4128, 5
        %v8046 = vsel %vm7714, %v8044, %v8045
        %v8047 = vrot.slane %v8045, 4
        %v8048 = vrot.slane %v4129, 5
        %v8049 = vsel %vm7714, %v8047, %v8048
        %v8050 = vrot.slane %v8048, 4
        %v8051 = vrot.slane %v4182, 5
        %v8052 = vsel %vm7714, %v8050, %v8051
        %v8053 = vrot.slane %v7642, 5
        %v8054 = vrot.slane %v8053, 4
        %v8055 = vrot.slane %v4131, 5
        %v8056 = vsel %vm7714, %v8054, %v8055
        %v8057 = vrot.slane %v8055, 4
        %v8058 = vrot.slane %v4132, 5
        %v8059 = vsel %vm7714, %v8057, %v8058
        %v8060 = vrot.slane %v8058, 4
        %v8061 = vrot.slane %v4133, 5
        %v8062 = vsel %vm7714, %v8060, %v8061
        %v8063 = vrot.slane %v8061, 4
        %v8064 = vrot.slane %v4183, 5
        %v8065 = vsel %vm7714, %v8063, %v8064
        %v8066 = vrot.slane %v7643, 5
        %v8067 = vrot.slane %v8066, 4
        %v8068 = vrot.slane %v4135, 5
        %v8069 = vsel %vm7714, %v8067, %v8068
        %v8070 = vrot.slane %v8068, 4
        %v8071 = vrot.slane %v4136, 5
        %v8072 = vsel %vm7714, %v8070, %v8071
        %v8073 = vrot.slane %v8071, 4
        %v8074 = vrot.slane %v4137, 5
        %v8075 = vsel %vm7714, %v8073, %v8074
        %v8076 = vrot.slane %v8074, 4
        %v8077 = vrot.slane %v4184, 5
        %v8078 = vsel %vm7714, %v8076, %v8077
        %v8079 = vrot.slane %v7644, 5
        %v8080 = vrot.slane %v8079, 4
        %v8081 = vrot.slane %v4139, 5
        %v8082 = vsel %vm7714, %v8080, %v8081
        %v8083 = vrot.slane %v8081, 4
        %v8084 = vrot.slane %v4140, 5
        %v8085 = vsel %vm7714, %v8083, %v8084
        %v8086 = vrot.slane %v8084, 4
        %v8087 = vrot.slane %v4141, 5
        %v8088 = vsel %vm7714, %v8086, %v8087
        %v8089 = vrot.slane %v8087, 4
        %v8090 = vrot.slane %v4185, 5
        %v8091 = vsel %vm7714, %v8089, %v8090
        %v8092 = vrot.slane %v7645, 5
        %v8093 = vrot.slane %v8092, 4
        %v8094 = vrot.slane %v4143, 5
        %v8095 = vsel %vm7714, %v8093, %v8094
        %v8096 = vrot.slane %v8094, 4
        %v8097 = vrot.slane %v4144, 5
        %v8098 = vsel %vm7714, %v8096, %v8097
        %v8099 = vrot.slane %v8097, 4
        %v8100 = vrot.slane %v4145, 5
        %v8101 = vsel %vm7714, %v8099, %v8100
        %v8102 = vrot.slane %v8100, 4
        %v8103 = vrot.slane %v4186, 5
        %v8104 = vsel %vm7714, %v8102, %v8103
        %v8105 = vrot.slane %v7646, 5
        %v8106 = vrot.slane %v8105, 4
        %v8107 = vrot.slane %v4147, 5
        %v8108 = vsel %vm7714, %v8106, %v8107
        %v8109 = vrot.slane %v8107, 4
        %v8110 = vrot.slane %v4148, 5
        %v8111 = vsel %vm7714, %v8109, %v8110
        %v8112 = vrot.slane %v8110, 4
        %v8113 = vrot.slane %v4149, 5
        %v8114 = vsel %vm7714, %v8112, %v8113
        %v8115 = vrot.slane %v8113, 4
        %v8116 = vrot.slane %v4187, 5
        %v8117 = vsel %vm7714, %v8115, %v8116
        %v8118 = vrot.slane %v7647, 5
        %v8119 = vrot.slane %v8118, 4
        %v8120 = vrot.slane %v4151, 5
        %v8121 = vsel %vm7714, %v8119, %v8120
        %v8122 = vrot.slane %v8120, 4
        %v8123 = vrot.slane %v4152, 5
        %v8124 = vsel %vm7714, %v8122, %v8123
        %v8125 = vrot.slane %v8123, 4
        %v8126 = vrot.slane %v4153, 5
        %v8127 = vsel %vm7714, %v8125, %v8126
        %v8128 = vrot.slane %v8126, 4
        %v8129 = vrot.slane %v4188, 5
        %v8130 = vsel %vm7714, %v8128, %v8129
        %s8131 = scalar_lea.vmem %s210, 24
        %v8132 = vld [vmem:[%s8131] sm:$0xf]
        %v8133 = vld [vmem:[%s8131 + $0x4] sm:$0xf]
        %v8134 = vld [vmem:[%s8131 + $0x8] sm:$0xf]
        %v8135 = vunpack.c.l.b16 %v7718
        %v8136 = vunpack.c.l.b16 %v7721
        %v8137 = vunpack.c.l.b16 %v7724
        %v8138 = vunpack.c.l.b16 %v7727
        %v8139 = vunpack.c.l.b16 %v7731
        %v8140 = vunpack.c.l.b16 %v7734
        %v8141 = vunpack.c.l.b16 %v7737
        %v8142 = vunpack.c.l.b16 %v7740
        %v8143 = vunpack.c.l.b16 %v7744
        %v8144 = vunpack.c.l.b16 %v7747
        %v8145 = vunpack.c.l.b16 %v7750
        %v8146 = vunpack.c.l.b16 %v7753
        %v8147 = vunpack.c.l.b16 %v7757
        %v8148 = vunpack.c.l.b16 %v7760
        %v8149 = vunpack.c.l.b16 %v7763
        %v8150 = vunpack.c.l.b16 %v7766
        %v8151 = vunpack.c.l.b16 %v7770
        %v8152 = vunpack.c.l.b16 %v7773
        %v8153 = vunpack.c.l.b16 %v7776
        %v8154 = vunpack.c.l.b16 %v7779
        %v8155 = vunpack.c.l.b16 %v7783
        %v8156 = vunpack.c.l.b16 %v7786
        %v8157 = vunpack.c.l.b16 %v7789
        %v8158 = vunpack.c.l.b16 %v7792
        %v8159 = vunpack.c.l.b16 %v7796
        %v8160 = vunpack.c.l.b16 %v7799
        %v8161 = vunpack.c.l.b16 %v7802
        %v8162 = vunpack.c.l.b16 %v7805
        %v8163 = vunpack.c.l.b16 %v7809
        %v8164 = vunpack.c.l.b16 %v7812
        %v8165 = vunpack.c.l.b16 %v7815
        %v8166 = vunpack.c.l.b16 %v7818
        %v8167 = vunpack.c.l.b16 %v7822
        %v8168 = vunpack.c.l.b16 %v7825
        %v8169 = vunpack.c.l.b16 %v7828
        %v8170 = vunpack.c.l.b16 %v7831
        %v8171 = vunpack.c.l.b16 %v7835
        %v8172 = vunpack.c.l.b16 %v7838
        %v8173 = vunpack.c.l.b16 %v7841
        %v8174 = vunpack.c.l.b16 %v7844
        %v8175 = vunpack.c.l.b16 %v7848
        %v8176 = vunpack.c.l.b16 %v7851
        %v8177 = vunpack.c.l.b16 %v7854
        %v8178 = vunpack.c.l.b16 %v7857
        %v8179 = vunpack.c.l.b16 %v7861
        %v8180 = vunpack.c.l.b16 %v7864
        %v8181 = vunpack.c.l.b16 %v7867
        %v8182 = vunpack.c.l.b16 %v7870
        %v8183 = vunpack.c.l.b16 %v7874
        %v8184 = vunpack.c.l.b16 %v7877
        %v8185 = vunpack.c.l.b16 %v7880
        %v8186 = vunpack.c.l.b16 %v7883
        %v8187 = vunpack.c.l.b16 %v7887
        %v8188 = vunpack.c.l.b16 %v7890
        %v8189 = vunpack.c.l.b16 %v7893
        %v8190 = vunpack.c.l.b16 %v7896
        %v8191 = vunpack.c.l.b16 %v7900
        %v8192 = vunpack.c.l.b16 %v7903
        %v8193 = vunpack.c.l.b16 %v7906
        %v8194 = vunpack.c.l.b16 %v7909
        %v8195 = vunpack.c.l.b16 %v7913
        %v8196 = vunpack.c.l.b16 %v7916
        %v8197 = vunpack.c.l.b16 %v7919
        %v8198 = vunpack.c.l.b16 %v7922
        %v8199 = vunpack.c.l.b16 %v7926
        %v8200 = vunpack.c.l.b16 %v7929
        %v8201 = vunpack.c.l.b16 %v7932
        %v8202 = vunpack.c.l.b16 %v7935
        %v8203 = vunpack.c.l.b16 %v7939
        %v8204 = vunpack.c.l.b16 %v7942
        %v8205 = vunpack.c.l.b16 %v7945
        %v8206 = vunpack.c.l.b16 %v7948
        %v8207 = vunpack.c.l.b16 %v7952
        %v8208 = vunpack.c.l.b16 %v7955
        %v8209 = vunpack.c.l.b16 %v7958
        %v8210 = vunpack.c.l.b16 %v7961
        %v8211 = vunpack.c.l.b16 %v7965
        %v8212 = vunpack.c.l.b16 %v7968
        %v8213 = vunpack.c.l.b16 %v7971
        %v8214 = vunpack.c.l.b16 %v7974
        %v8215 = vunpack.c.l.b16 %v7978
        %v8216 = vunpack.c.l.b16 %v7981
        %v8217 = vunpack.c.l.b16 %v7984
        %v8218 = vunpack.c.l.b16 %v7987
        %v8219 = vunpack.c.l.b16 %v7991
        %v8220 = vunpack.c.l.b16 %v7994
        %v8221 = vunpack.c.l.b16 %v7997
        %v8222 = vunpack.c.l.b16 %v8000
        %v8223 = vunpack.c.l.b16 %v8004
        %v8224 = vunpack.c.l.b16 %v8007
        %v8225 = vunpack.c.l.b16 %v8010
        %v8226 = vunpack.c.l.b16 %v8013
        %v8227 = vunpack.c.l.b16 %v8017
        %v8228 = vunpack.c.l.b16 %v8020
        %v8229 = vunpack.c.l.b16 %v8023
        %v8230 = vunpack.c.l.b16 %v8026
        %v8231 = vunpack.c.l.b16 %v8030
        %v8232 = vunpack.c.l.b16 %v8033
        %v8233 = vunpack.c.l.b16 %v8036
        %v8234 = vunpack.c.l.b16 %v8039
        %v8235 = vunpack.c.l.b16 %v8043
        %v8236 = vunpack.c.l.b16 %v8046
        %v8237 = vunpack.c.l.b16 %v8049
        %v8238 = vunpack.c.l.b16 %v8052
        %v8239 = vunpack.c.l.b16 %v8056
        %v8240 = vunpack.c.l.b16 %v8059
        %v8241 = vunpack.c.l.b16 %v8062
        %v8242 = vunpack.c.l.b16 %v8065
        %v8243 = vunpack.c.l.b16 %v8069
        %v8244 = vunpack.c.l.b16 %v8072
        %v8245 = vunpack.c.l.b16 %v8075
        %v8246 = vunpack.c.l.b16 %v8078
        %v8247 = vunpack.c.l.b16 %v8082
        %v8248 = vunpack.c.l.b16 %v8085
        %v8249 = vunpack.c.l.b16 %v8088
        %v8250 = vunpack.c.l.b16 %v8091
        %v8251 = vunpack.c.l.b16 %v8095
        %v8252 = vunpack.c.l.b16 %v8098
        %v8253 = vunpack.c.l.b16 %v8101
        %v8254 = vunpack.c.l.b16 %v8104
        %v8255 = vunpack.c.l.b16 %v8108
        %v8256 = vunpack.c.l.b16 %v8111
        %v8257 = vunpack.c.l.b16 %v8114
        %v8258 = vunpack.c.l.b16 %v8117
        %v8259 = vunpack.c.l.b16 %v8121
        %v8260 = vunpack.c.l.b16 %v8124
        %v8261 = vunpack.c.l.b16 %v8127
        %v8262 = vunpack.c.l.b16 %v8130
        %v8263 = vpack.c.b16 %v8136, %v8135
        %v8264 = vpack.c.b16 %v8138, %v8137
        %v8265 = vpack.c.b16 %v8140, %v8139
        %v8266 = vpack.c.b16 %v8142, %v8141
        %v8267 = vpack.c.b16 %v8144, %v8143
        %v8268 = vpack.c.b16 %v8146, %v8145
        %v8269 = vpack.c.b16 %v8148, %v8147
        %v8270 = vpack.c.b16 %v8150, %v8149
        %v8271 = vpack.c.b16 %v8152, %v8151
        %v8272 = vpack.c.b16 %v8154, %v8153
        %v8273 = vpack.c.b16 %v8156, %v8155
        %v8274 = vpack.c.b16 %v8158, %v8157
        %v8275 = vpack.c.b16 %v8160, %v8159
        %v8276 = vpack.c.b16 %v8162, %v8161
        %v8277 = vpack.c.b16 %v8164, %v8163
        %v8278 = vpack.c.b16 %v8166, %v8165
        %v8279 = vpack.c.b16 %v8168, %v8167
        %v8280 = vpack.c.b16 %v8170, %v8169
        %v8281 = vpack.c.b16 %v8172, %v8171
        %v8282 = vpack.c.b16 %v8174, %v8173
        %v8283 = vpack.c.b16 %v8176, %v8175
        %v8284 = vpack.c.b16 %v8178, %v8177
        %v8285 = vpack.c.b16 %v8180, %v8179
        %v8286 = vpack.c.b16 %v8182, %v8181
        %v8287 = vpack.c.b16 %v8184, %v8183
        %v8288 = vpack.c.b16 %v8186, %v8185
        %v8289 = vpack.c.b16 %v8188, %v8187
        %v8290 = vpack.c.b16 %v8190, %v8189
        %v8291 = vpack.c.b16 %v8192, %v8191
        %v8292 = vpack.c.b16 %v8194, %v8193
        %v8293 = vpack.c.b16 %v8196, %v8195
        %v8294 = vpack.c.b16 %v8198, %v8197
        %v8295 = vpack.c.b16 %v8200, %v8199
        %v8296 = vpack.c.b16 %v8202, %v8201
        %v8297 = vpack.c.b16 %v8204, %v8203
        %v8298 = vpack.c.b16 %v8206, %v8205
        %v8299 = vpack.c.b16 %v8208, %v8207
        %v8300 = vpack.c.b16 %v8210, %v8209
        %v8301 = vpack.c.b16 %v8212, %v8211
        %v8302 = vpack.c.b16 %v8214, %v8213
        %v8303 = vpack.c.b16 %v8216, %v8215
        %v8304 = vpack.c.b16 %v8218, %v8217
        %v8305 = vpack.c.b16 %v8220, %v8219
        %v8306 = vpack.c.b16 %v8222, %v8221
        %v8307 = vpack.c.b16 %v8224, %v8223
        %v8308 = vpack.c.b16 %v8226, %v8225
        %v8309 = vpack.c.b16 %v8228, %v8227
        %v8310 = vpack.c.b16 %v8230, %v8229
        %v8311 = vpack.c.b16 %v8232, %v8231
        %v8312 = vpack.c.b16 %v8234, %v8233
        %v8313 = vpack.c.b16 %v8236, %v8235
        %v8314 = vpack.c.b16 %v8238, %v8237
        %v8315 = vpack.c.b16 %v8240, %v8239
        %v8316 = vpack.c.b16 %v8242, %v8241
        %v8317 = vpack.c.b16 %v8244, %v8243
        %v8318 = vpack.c.b16 %v8246, %v8245
        %v8319 = vpack.c.b16 %v8248, %v8247
        %v8320 = vpack.c.b16 %v8250, %v8249
        %v8321 = vpack.c.b16 %v8252, %v8251
        %v8322 = vpack.c.b16 %v8254, %v8253
        %v8323 = vpack.c.b16 %v8256, %v8255
        %v8324 = vpack.c.b16 %v8258, %v8257
        %v8325 = vpack.c.b16 %v8260, %v8259
        %v8326 = vpack.c.b16 %v8262, %v8261
        %v8330 = vunpack.c.l.b16 %v8132
        %v8331 = vunpack.c.l.b16 %v8133
        %v8332 = vunpack.c.l.b16 %v8134
        %v8333 = vpack.c.b16 %v8331, %v8330
        %v8334 = vpack.c.b16 %v8332, %v8332
        %v8337 = vsel %vm5805, %v8263, 0
        %v8340 = vsel %vm5805, %v8264, 0
        %v8343 = vsel %vm5805, %v8265, 0
        %v8346 = vsel %vm5805, %v8266, 0
        %v8349 = vsel %vm5805, %v8267, 0
        %v8352 = vsel %vm5805, %v8268, 0
        %v8355 = vsel %vm5805, %v8269, 0
        %v8358 = vsel %vm5805, %v8270, 0
        %v8361 = vsel %vm5805, %v8271, 0
        %v8364 = vsel %vm5805, %v8272, 0
        %v8367 = vsel %vm5805, %v8273, 0
        %v8370 = vsel %vm5805, %v8274, 0
        %v8373 = vsel %vm5805, %v8275, 0
        %v8376 = vsel %vm5805, %v8276, 0
        %v8379 = vsel %vm5805, %v8277, 0
        %v8382 = vsel %vm5805, %v8278, 0
        %v8385 = vsel %vm5805, %v8279, 0
        %v8388 = vsel %vm5805, %v8280, 0
        %v8391 = vsel %vm5805, %v8281, 0
        %v8394 = vsel %vm5805, %v8282, 0
        %v8397 = vsel %vm5805, %v8283, 0
        %v8400 = vsel %vm5805, %v8284, 0
        %v8403 = vsel %vm5805, %v8285, 0
        %v8406 = vsel %vm5805, %v8286, 0
        %v8409 = vsel %vm5805, %v8287, 0
        %v8412 = vsel %vm5805, %v8288, 0
        %v8415 = vsel %vm5805, %v8289, 0
        %v8418 = vsel %vm5805, %v8290, 0
        %v8421 = vsel %vm5805, %v8291, 0
        %v8424 = vsel %vm5805, %v8292, 0
        %v8427 = vsel %vm5805, %v8293, 0
        %v8430 = vsel %vm5805, %v8294, 0
        %v8433 = vsel %vm5805, %v8295, 0
        %v8436 = vsel %vm5805, %v8296, 0
        %v8439 = vsel %vm5805, %v8297, 0
        %v8442 = vsel %vm5805, %v8298, 0
        %v8445 = vsel %vm5805, %v8299, 0
        %v8448 = vsel %vm5805, %v8300, 0
        %v8451 = vsel %vm5805, %v8301, 0
        %v8454 = vsel %vm5805, %v8302, 0
        %v8457 = vsel %vm5805, %v8303, 0
        %v8460 = vsel %vm5805, %v8304, 0
        %v8463 = vsel %vm5805, %v8305, 0
        %v8466 = vsel %vm5805, %v8306, 0
        %v8469 = vsel %vm5805, %v8307, 0
        %v8472 = vsel %vm5805, %v8308, 0
        %v8475 = vsel %vm5805, %v8309, 0
        %v8478 = vsel %vm5805, %v8310, 0
        %v8481 = vsel %vm5805, %v8311, 0
        %v8484 = vsel %vm5805, %v8312, 0
        %v8487 = vsel %vm5805, %v8313, 0
        %v8490 = vsel %vm5805, %v8314, 0
        %v8493 = vsel %vm5805, %v8315, 0
        %v8496 = vsel %vm5805, %v8316, 0
        %v8499 = vsel %vm5805, %v8317, 0
        %v8502 = vsel %vm5805, %v8318, 0
        %v8505 = vsel %vm5805, %v8319, 0
        %v8508 = vsel %vm5805, %v8320, 0
        %v8511 = vsel %vm5805, %v8321, 0
        %v8514 = vsel %vm5805, %v8322, 0
        %v8517 = vsel %vm5805, %v8323, 0
        %v8520 = vsel %vm5805, %v8324, 0
        %v8523 = vsel %vm5805, %v8325, 0
        %v8526 = vsel %vm5805, %v8326, 0
        %v8529 = vsel %vm5998, %v8334, 0
        %8531 = vmatprep.subr.bf16.mxu0 0
        %8532 = vmatpush1.bf16.msra.mxu0 0
        %8533 = vmatprep.subr.bf16.mxu0 0
        %8534 = vmatpush1.bf16.msra.mxu0 0
        %8535 = vmatprep.subr.bf16.mxu0 0
        %8536 = vmatpush1.bf16.msra.mxu0 0
        %8537 = vmatprep.subr.bf16.mxu0 0
        %8538 = vmatpush1.bf16.msra.mxu0 0
        %8539 = vmatprep.subr.bf16.mxu0 0
        %8540 = vmatpush1.bf16.msra.mxu0 0
        %8541 = vmatprep.subr.bf16.mxu0 0
        %8542 = vmatpush1.bf16.msra.mxu0 0
        %8543 = vmatprep.subr.bf16.mxu0 0
        %8544 = vmatpush1.bf16.msra.mxu0 %v8529
        %8545 = vmatprep.subr.bf16.mxu0 0
        %8546 = vmatpush1.bf16.msra.mxu0 %v8333
        %8547 = vmatprep.subr.bf16.mxu0 0
        %8548 = vmatpush2.bf16.msra.mxu0 0
        %8549 = vmatprep.subr.bf16.mxu0 0
        %8550 = vmatpush2.bf16.msra.mxu0 0
        %8551 = vmatprep.subr.bf16.mxu0 0
        %8552 = vmatpush2.bf16.msra.mxu0 0
        %8553 = vmatprep.subr.bf16.mxu0 0
        %8554 = vmatpush2.bf16.msra.mxu0 0
        %8555 = vmatprep.subr.bf16.mxu0 0
        %8556 = vmatpush2.bf16.msra.mxu0 0
        %8557 = vmatprep.subr.bf16.mxu0 0
        %8558 = vmatpush2.bf16.msra.mxu0 0
        %8559 = vmatprep.subr.bf16.mxu0 0
        %8560 = vmatpush2.bf16.msra.mxu0 0
        %8561 = vmatprep.subr.bf16.mxu0 0
        %8562 = vmatpush2.bf16.msra.mxu0 0
        %8563 = vmatprep.mubr.bf16.mxu0 0
        %8564 = vmatmul.mubr.bf16.gmra.mxu0 %v8337
        %v8565 = vpop.f32.mrf.mxu0
        %v8566 = vadd.f32 0.0, %v8565
        %v8567 = vpop.f32.mrf.mxu0
        %v8568 = vpop.f32.mrf.mxu0
        %v8569 = vadd.f32 0.0, %v8568
        %v8570 = vpop.f32.mrf.mxu0
        %8571 = vmatprep.mubr.bf16.mxu0 0
        %8572 = vmatmul.mubr.bf16.gmra.mxu0 %v8340
        %v8573 = vpop.f32.mrf.mxu0
        %v8574 = vadd.f32 0.0, %v8573
        %v8575 = vpop.f32.mrf.mxu0
        %v8576 = vpop.f32.mrf.mxu0
        %v8577 = vadd.f32 0.0, %v8576
        %v8578 = vpop.f32.mrf.mxu0
        %8579 = vmatprep.mubr.bf16.mxu0 0
        %8580 = vmatmul.mubr.bf16.gmra.mxu0 %v8343
        %v8581 = vpop.f32.mrf.mxu0
        %v8582 = vadd.f32 0.0, %v8581
        %v8583 = vpop.f32.mrf.mxu0
        %v8584 = vpop.f32.mrf.mxu0
        %v8585 = vadd.f32 0.0, %v8584
        %v8586 = vpop.f32.mrf.mxu0
        %8587 = vmatprep.mubr.bf16.mxu0 0
        %8588 = vmatmul.mubr.bf16.gmra.mxu0 %v8346
        %v8589 = vpop.f32.mrf.mxu0
        %v8590 = vadd.f32 0.0, %v8589
        %v8591 = vpop.f32.mrf.mxu0
        %v8592 = vpop.f32.mrf.mxu0
        %v8593 = vadd.f32 0.0, %v8592
        %v8594 = vpop.f32.mrf.mxu0
        %8595 = vmatprep.mubr.bf16.mxu0 0
        %8596 = vmatmul.mubr.bf16.gmra.mxu0 %v8349
        %v8597 = vpop.f32.mrf.mxu0
        %v8598 = vadd.f32 0.0, %v8597
        %v8599 = vpop.f32.mrf.mxu0
        %v8600 = vpop.f32.mrf.mxu0
        %v8601 = vadd.f32 0.0, %v8600
        %v8602 = vpop.f32.mrf.mxu0
        %8603 = vmatprep.mubr.bf16.mxu0 0
        %8604 = vmatmul.mubr.bf16.gmra.mxu0 %v8352
        %v8605 = vpop.f32.mrf.mxu0
        %v8606 = vadd.f32 0.0, %v8605
        %v8607 = vpop.f32.mrf.mxu0
        %v8608 = vpop.f32.mrf.mxu0
        %v8609 = vadd.f32 0.0, %v8608
        %v8610 = vpop.f32.mrf.mxu0
        %8611 = vmatprep.mubr.bf16.mxu0 0
        %8612 = vmatmul.mubr.bf16.gmra.mxu0 %v8355
        %v8613 = vpop.f32.mrf.mxu0
        %v8614 = vadd.f32 0.0, %v8613
        %v8615 = vpop.f32.mrf.mxu0
        %v8616 = vpop.f32.mrf.mxu0
        %v8617 = vadd.f32 0.0, %v8616
        %v8618 = vpop.f32.mrf.mxu0
        %8619 = vmatprep.mubr.bf16.mxu0 0
        %8620 = vmatmul.mubr.bf16.gmra.mxu0 %v8358
        %v8621 = vpop.f32.mrf.mxu0
        %v8622 = vadd.f32 0.0, %v8621
        %v8623 = vpop.f32.mrf.mxu0
        %v8624 = vpop.f32.mrf.mxu0
        %v8625 = vadd.f32 0.0, %v8624
        %v8626 = vpop.f32.mrf.mxu0
        %8627 = vmatprep.mubr.bf16.mxu0 0
        %8628 = vmatmul.mubr.bf16.gmra.mxu0 %v8361
        %v8629 = vpop.f32.mrf.mxu0
        %v8630 = vadd.f32 0.0, %v8629
        %v8631 = vpop.f32.mrf.mxu0
        %v8632 = vpop.f32.mrf.mxu0
        %v8633 = vadd.f32 0.0, %v8632
        %v8634 = vpop.f32.mrf.mxu0
        %8635 = vmatprep.mubr.bf16.mxu0 0
        %8636 = vmatmul.mubr.bf16.gmra.mxu0 %v8364
        %v8637 = vpop.f32.mrf.mxu0
        %v8638 = vadd.f32 0.0, %v8637
        %v8639 = vpop.f32.mrf.mxu0
        %v8640 = vpop.f32.mrf.mxu0
        %v8641 = vadd.f32 0.0, %v8640
        %v8642 = vpop.f32.mrf.mxu0
        %8643 = vmatprep.mubr.bf16.mxu0 0
        %8644 = vmatmul.mubr.bf16.gmra.mxu0 %v8367
        %v8645 = vpop.f32.mrf.mxu0
        %v8646 = vadd.f32 0.0, %v8645
        %v8647 = vpop.f32.mrf.mxu0
        %v8648 = vpop.f32.mrf.mxu0
        %v8649 = vadd.f32 0.0, %v8648
        %v8650 = vpop.f32.mrf.mxu0
        %8651 = vmatprep.mubr.bf16.mxu0 0
        %8652 = vmatmul.mubr.bf16.gmra.mxu0 %v8370
        %v8653 = vpop.f32.mrf.mxu0
        %v8654 = vadd.f32 0.0, %v8653
        %v8655 = vpop.f32.mrf.mxu0
        %v8656 = vpop.f32.mrf.mxu0
        %v8657 = vadd.f32 0.0, %v8656
        %v8658 = vpop.f32.mrf.mxu0
        %8659 = vmatprep.mubr.bf16.mxu0 0
        %8660 = vmatmul.mubr.bf16.gmra.mxu0 %v8373
        %v8661 = vpop.f32.mrf.mxu0
        %v8662 = vadd.f32 0.0, %v8661
        %v8663 = vpop.f32.mrf.mxu0
        %v8664 = vpop.f32.mrf.mxu0
        %v8665 = vadd.f32 0.0, %v8664
        %v8666 = vpop.f32.mrf.mxu0
        %8667 = vmatprep.mubr.bf16.mxu0 0
        %8668 = vmatmul.mubr.bf16.gmra.mxu0 %v8376
        %v8669 = vpop.f32.mrf.mxu0
        %v8670 = vadd.f32 0.0, %v8669
        %v8671 = vpop.f32.mrf.mxu0
        %v8672 = vpop.f32.mrf.mxu0
        %v8673 = vadd.f32 0.0, %v8672
        %v8674 = vpop.f32.mrf.mxu0
        %8675 = vmatprep.mubr.bf16.mxu0 0
        %8676 = vmatmul.mubr.bf16.gmra.mxu0 %v8379
        %v8677 = vpop.f32.mrf.mxu0
        %v8678 = vadd.f32 0.0, %v8677
        %v8679 = vpop.f32.mrf.mxu0
        %v8680 = vpop.f32.mrf.mxu0
        %v8681 = vadd.f32 0.0, %v8680
        %v8682 = vpop.f32.mrf.mxu0
        %8683 = vmatprep.mubr.bf16.mxu0 0
        %8684 = vmatmul.mubr.bf16.gmra.mxu0 %v8382
        %v8685 = vpop.f32.mrf.mxu0
        %v8686 = vadd.f32 0.0, %v8685
        %v8687 = vpop.f32.mrf.mxu0
        %v8688 = vpop.f32.mrf.mxu0
        %v8689 = vadd.f32 0.0, %v8688
        %v8690 = vpop.f32.mrf.mxu0
        %8691 = vmatprep.mubr.bf16.mxu0 0
        %8692 = vmatmul.mubr.bf16.gmra.mxu0 %v8385
        %v8693 = vpop.f32.mrf.mxu0
        %v8694 = vadd.f32 0.0, %v8693
        %v8695 = vpop.f32.mrf.mxu0
        %v8696 = vpop.f32.mrf.mxu0
        %v8697 = vadd.f32 0.0, %v8696
        %v8698 = vpop.f32.mrf.mxu0
        %8699 = vmatprep.mubr.bf16.mxu0 0
        %8700 = vmatmul.mubr.bf16.gmra.mxu0 %v8388
        %v8701 = vpop.f32.mrf.mxu0
        %v8702 = vadd.f32 0.0, %v8701
        %v8703 = vpop.f32.mrf.mxu0
        %v8704 = vpop.f32.mrf.mxu0
        %v8705 = vadd.f32 0.0, %v8704
        %v8706 = vpop.f32.mrf.mxu0
        %8707 = vmatprep.mubr.bf16.mxu0 0
        %8708 = vmatmul.mubr.bf16.gmra.mxu0 %v8391
        %v8709 = vpop.f32.mrf.mxu0
        %v8710 = vadd.f32 0.0, %v8709
        %v8711 = vpop.f32.mrf.mxu0
        %v8712 = vpop.f32.mrf.mxu0
        %v8713 = vadd.f32 0.0, %v8712
        %v8714 = vpop.f32.mrf.mxu0
        %8715 = vmatprep.mubr.bf16.mxu0 0
        %8716 = vmatmul.mubr.bf16.gmra.mxu0 %v8394
        %v8717 = vpop.f32.mrf.mxu0
        %v8718 = vadd.f32 0.0, %v8717
        %v8719 = vpop.f32.mrf.mxu0
        %v8720 = vpop.f32.mrf.mxu0
        %v8721 = vadd.f32 0.0, %v8720
        %v8722 = vpop.f32.mrf.mxu0
        %8723 = vmatprep.mubr.bf16.mxu0 0
        %8724 = vmatmul.mubr.bf16.gmra.mxu0 %v8397
        %v8725 = vpop.f32.mrf.mxu0
        %v8726 = vadd.f32 0.0, %v8725
        %v8727 = vpop.f32.mrf.mxu0
        %v8728 = vpop.f32.mrf.mxu0
        %v8729 = vadd.f32 0.0, %v8728
        %v8730 = vpop.f32.mrf.mxu0
        %8731 = vmatprep.mubr.bf16.mxu0 0
        %8732 = vmatmul.mubr.bf16.gmra.mxu0 %v8400
        %v8733 = vpop.f32.mrf.mxu0
        %v8734 = vadd.f32 0.0, %v8733
        %v8735 = vpop.f32.mrf.mxu0
        %v8736 = vpop.f32.mrf.mxu0
        %v8737 = vadd.f32 0.0, %v8736
        %v8738 = vpop.f32.mrf.mxu0
        %8739 = vmatprep.mubr.bf16.mxu0 0
        %8740 = vmatmul.mubr.bf16.gmra.mxu0 %v8403
        %v8741 = vpop.f32.mrf.mxu0
        %v8742 = vadd.f32 0.0, %v8741
        %v8743 = vpop.f32.mrf.mxu0
        %v8744 = vpop.f32.mrf.mxu0
        %v8745 = vadd.f32 0.0, %v8744
        %v8746 = vpop.f32.mrf.mxu0
        %8747 = vmatprep.mubr.bf16.mxu0 0
        %8748 = vmatmul.mubr.bf16.gmra.mxu0 %v8406
        %v8749 = vpop.f32.mrf.mxu0
        %v8750 = vadd.f32 0.0, %v8749
        %v8751 = vpop.f32.mrf.mxu0
        %v8752 = vpop.f32.mrf.mxu0
        %v8753 = vadd.f32 0.0, %v8752
        %v8754 = vpop.f32.mrf.mxu0
        %8755 = vmatprep.mubr.bf16.mxu0 0
        %8756 = vmatmul.mubr.bf16.gmra.mxu0 %v8409
        %v8757 = vpop.f32.mrf.mxu0
        %v8758 = vadd.f32 0.0, %v8757
        %v8759 = vpop.f32.mrf.mxu0
        %v8760 = vpop.f32.mrf.mxu0
        %v8761 = vadd.f32 0.0, %v8760
        %v8762 = vpop.f32.mrf.mxu0
        %8763 = vmatprep.mubr.bf16.mxu0 0
        %8764 = vmatmul.mubr.bf16.gmra.mxu0 %v8412
        %v8765 = vpop.f32.mrf.mxu0
        %v8766 = vadd.f32 0.0, %v8765
        %v8767 = vpop.f32.mrf.mxu0
        %v8768 = vpop.f32.mrf.mxu0
        %v8769 = vadd.f32 0.0, %v8768
        %v8770 = vpop.f32.mrf.mxu0
        %8771 = vmatprep.mubr.bf16.mxu0 0
        %8772 = vmatmul.mubr.bf16.gmra.mxu0 %v8415
        %v8773 = vpop.f32.mrf.mxu0
        %v8774 = vadd.f32 0.0, %v8773
        %v8775 = vpop.f32.mrf.mxu0
        %v8776 = vpop.f32.mrf.mxu0
        %v8777 = vadd.f32 0.0, %v8776
        %v8778 = vpop.f32.mrf.mxu0
        %8779 = vmatprep.mubr.bf16.mxu0 0
        %8780 = vmatmul.mubr.bf16.gmra.mxu0 %v8418
        %v8781 = vpop.f32.mrf.mxu0
        %v8782 = vadd.f32 0.0, %v8781
        %v8783 = vpop.f32.mrf.mxu0
        %v8784 = vpop.f32.mrf.mxu0
        %v8785 = vadd.f32 0.0, %v8784
        %v8786 = vpop.f32.mrf.mxu0
        %8787 = vmatprep.mubr.bf16.mxu0 0
        %8788 = vmatmul.mubr.bf16.gmra.mxu0 %v8421
        %v8789 = vpop.f32.mrf.mxu0
        %v8790 = vadd.f32 0.0, %v8789
        %v8791 = vpop.f32.mrf.mxu0
        %v8792 = vpop.f32.mrf.mxu0
        %v8793 = vadd.f32 0.0, %v8792
        %v8794 = vpop.f32.mrf.mxu0
        %8795 = vmatprep.mubr.bf16.mxu0 0
        %8796 = vmatmul.mubr.bf16.gmra.mxu0 %v8424
        %v8797 = vpop.f32.mrf.mxu0
        %v8798 = vadd.f32 0.0, %v8797
        %v8799 = vpop.f32.mrf.mxu0
        %v8800 = vpop.f32.mrf.mxu0
        %v8801 = vadd.f32 0.0, %v8800
        %v8802 = vpop.f32.mrf.mxu0
        %8803 = vmatprep.mubr.bf16.mxu0 0
        %8804 = vmatmul.mubr.bf16.gmra.mxu0 %v8427
        %v8805 = vpop.f32.mrf.mxu0
        %v8806 = vadd.f32 0.0, %v8805
        %v8807 = vpop.f32.mrf.mxu0
        %v8808 = vpop.f32.mrf.mxu0
        %v8809 = vadd.f32 0.0, %v8808
        %v8810 = vpop.f32.mrf.mxu0
        %8811 = vmatprep.mubr.bf16.mxu0 0
        %8812 = vmatmul.mubr.bf16.gmra.mxu0 %v8430
        %v8813 = vpop.f32.mrf.mxu0
        %v8814 = vadd.f32 0.0, %v8813
        %v8815 = vpop.f32.mrf.mxu0
        %v8816 = vpop.f32.mrf.mxu0
        %v8817 = vadd.f32 0.0, %v8816
        %v8818 = vpop.f32.mrf.mxu0
        %8819 = vmatprep.mubr.bf16.mxu0 0
        %8820 = vmatmul.mubr.bf16.gmra.mxu0 %v8433
        %v8821 = vpop.f32.mrf.mxu0
        %v8822 = vadd.f32 0.0, %v8821
        %v8823 = vpop.f32.mrf.mxu0
        %v8824 = vpop.f32.mrf.mxu0
        %v8825 = vadd.f32 0.0, %v8824
        %v8826 = vpop.f32.mrf.mxu0
        %8827 = vmatprep.mubr.bf16.mxu0 0
        %8828 = vmatmul.mubr.bf16.gmra.mxu0 %v8436
        %v8829 = vpop.f32.mrf.mxu0
        %v8830 = vadd.f32 0.0, %v8829
        %v8831 = vpop.f32.mrf.mxu0
        %v8832 = vpop.f32.mrf.mxu0
        %v8833 = vadd.f32 0.0, %v8832
        %v8834 = vpop.f32.mrf.mxu0
        %8835 = vmatprep.mubr.bf16.mxu0 0
        %8836 = vmatmul.mubr.bf16.gmra.mxu0 %v8439
        %v8837 = vpop.f32.mrf.mxu0
        %v8838 = vadd.f32 0.0, %v8837
        %v8839 = vpop.f32.mrf.mxu0
        %v8840 = vpop.f32.mrf.mxu0
        %v8841 = vadd.f32 0.0, %v8840
        %v8842 = vpop.f32.mrf.mxu0
        %8843 = vmatprep.mubr.bf16.mxu0 0
        %8844 = vmatmul.mubr.bf16.gmra.mxu0 %v8442
        %v8845 = vpop.f32.mrf.mxu0
        %v8846 = vadd.f32 0.0, %v8845
        %v8847 = vpop.f32.mrf.mxu0
        %v8848 = vpop.f32.mrf.mxu0
        %v8849 = vadd.f32 0.0, %v8848
        %v8850 = vpop.f32.mrf.mxu0
        %8851 = vmatprep.mubr.bf16.mxu0 0
        %8852 = vmatmul.mubr.bf16.gmra.mxu0 %v8445
        %v8853 = vpop.f32.mrf.mxu0
        %v8854 = vadd.f32 0.0, %v8853
        %v8855 = vpop.f32.mrf.mxu0
        %v8856 = vpop.f32.mrf.mxu0
        %v8857 = vadd.f32 0.0, %v8856
        %v8858 = vpop.f32.mrf.mxu0
        %8859 = vmatprep.mubr.bf16.mxu0 0
        %8860 = vmatmul.mubr.bf16.gmra.mxu0 %v8448
        %v8861 = vpop.f32.mrf.mxu0
        %v8862 = vadd.f32 0.0, %v8861
        %v8863 = vpop.f32.mrf.mxu0
        %v8864 = vpop.f32.mrf.mxu0
        %v8865 = vadd.f32 0.0, %v8864
        %v8866 = vpop.f32.mrf.mxu0
        %8867 = vmatprep.mubr.bf16.mxu0 0
        %8868 = vmatmul.mubr.bf16.gmra.mxu0 %v8451
        %v8869 = vpop.f32.mrf.mxu0
        %v8870 = vadd.f32 0.0, %v8869
        %v8871 = vpop.f32.mrf.mxu0
        %v8872 = vpop.f32.mrf.mxu0
        %v8873 = vadd.f32 0.0, %v8872
        %v8874 = vpop.f32.mrf.mxu0
        %8875 = vmatprep.mubr.bf16.mxu0 0
        %8876 = vmatmul.mubr.bf16.gmra.mxu0 %v8454
        %v8877 = vpop.f32.mrf.mxu0
        %v8878 = vadd.f32 0.0, %v8877
        %v8879 = vpop.f32.mrf.mxu0
        %v8880 = vpop.f32.mrf.mxu0
        %v8881 = vadd.f32 0.0, %v8880
        %v8882 = vpop.f32.mrf.mxu0
        %8883 = vmatprep.mubr.bf16.mxu0 0
        %8884 = vmatmul.mubr.bf16.gmra.mxu0 %v8457
        %v8885 = vpop.f32.mrf.mxu0
        %v8886 = vadd.f32 0.0, %v8885
        %v8887 = vpop.f32.mrf.mxu0
        %v8888 = vpop.f32.mrf.mxu0
        %v8889 = vadd.f32 0.0, %v8888
        %v8890 = vpop.f32.mrf.mxu0
        %8891 = vmatprep.mubr.bf16.mxu0 0
        %8892 = vmatmul.mubr.bf16.gmra.mxu0 %v8460
        %v8893 = vpop.f32.mrf.mxu0
        %v8894 = vadd.f32 0.0, %v8893
        %v8895 = vpop.f32.mrf.mxu0
        %v8896 = vpop.f32.mrf.mxu0
        %v8897 = vadd.f32 0.0, %v8896
        %v8898 = vpop.f32.mrf.mxu0
        %8899 = vmatprep.mubr.bf16.mxu0 0
        %8900 = vmatmul.mubr.bf16.gmra.mxu0 %v8463
        %v8901 = vpop.f32.mrf.mxu0
        %v8902 = vadd.f32 0.0, %v8901
        %v8903 = vpop.f32.mrf.mxu0
        %v8904 = vpop.f32.mrf.mxu0
        %v8905 = vadd.f32 0.0, %v8904
        %v8906 = vpop.f32.mrf.mxu0
        %8907 = vmatprep.mubr.bf16.mxu0 0
        %8908 = vmatmul.mubr.bf16.gmra.mxu0 %v8466
        %v8909 = vpop.f32.mrf.mxu0
        %v8910 = vadd.f32 0.0, %v8909
        %v8911 = vpop.f32.mrf.mxu0
        %v8912 = vpop.f32.mrf.mxu0
        %v8913 = vadd.f32 0.0, %v8912
        %v8914 = vpop.f32.mrf.mxu0
        %8915 = vmatprep.mubr.bf16.mxu0 0
        %8916 = vmatmul.mubr.bf16.gmra.mxu0 %v8469
        %v8917 = vpop.f32.mrf.mxu0
        %v8918 = vadd.f32 0.0, %v8917
        %v8919 = vpop.f32.mrf.mxu0
        %v8920 = vpop.f32.mrf.mxu0
        %v8921 = vadd.f32 0.0, %v8920
        %v8922 = vpop.f32.mrf.mxu0
        %8923 = vmatprep.mubr.bf16.mxu0 0
        %8924 = vmatmul.mubr.bf16.gmra.mxu0 %v8472
        %v8925 = vpop.f32.mrf.mxu0
        %v8926 = vadd.f32 0.0, %v8925
        %v8927 = vpop.f32.mrf.mxu0
        %v8928 = vpop.f32.mrf.mxu0
        %v8929 = vadd.f32 0.0, %v8928
        %v8930 = vpop.f32.mrf.mxu0
        %8931 = vmatprep.mubr.bf16.mxu0 0
        %8932 = vmatmul.mubr.bf16.gmra.mxu0 %v8475
        %v8933 = vpop.f32.mrf.mxu0
        %v8934 = vadd.f32 0.0, %v8933
        %v8935 = vpop.f32.mrf.mxu0
        %v8936 = vpop.f32.mrf.mxu0
        %v8937 = vadd.f32 0.0, %v8936
        %v8938 = vpop.f32.mrf.mxu0
        %8939 = vmatprep.mubr.bf16.mxu0 0
        %8940 = vmatmul.mubr.bf16.gmra.mxu0 %v8478
        %v8941 = vpop.f32.mrf.mxu0
        %v8942 = vadd.f32 0.0, %v8941
        %v8943 = vpop.f32.mrf.mxu0
        %v8944 = vpop.f32.mrf.mxu0
        %v8945 = vadd.f32 0.0, %v8944
        %v8946 = vpop.f32.mrf.mxu0
        %8947 = vmatprep.mubr.bf16.mxu0 0
        %8948 = vmatmul.mubr.bf16.gmra.mxu0 %v8481
        %v8949 = vpop.f32.mrf.mxu0
        %v8950 = vadd.f32 0.0, %v8949
        %v8951 = vpop.f32.mrf.mxu0
        %v8952 = vpop.f32.mrf.mxu0
        %v8953 = vadd.f32 0.0, %v8952
        %v8954 = vpop.f32.mrf.mxu0
        %8955 = vmatprep.mubr.bf16.mxu0 0
        %8956 = vmatmul.mubr.bf16.gmra.mxu0 %v8484
        %v8957 = vpop.f32.mrf.mxu0
        %v8958 = vadd.f32 0.0, %v8957
        %v8959 = vpop.f32.mrf.mxu0
        %v8960 = vpop.f32.mrf.mxu0
        %v8961 = vadd.f32 0.0, %v8960
        %v8962 = vpop.f32.mrf.mxu0
        %8963 = vmatprep.mubr.bf16.mxu0 0
        %8964 = vmatmul.mubr.bf16.gmra.mxu0 %v8487
        %v8965 = vpop.f32.mrf.mxu0
        %v8966 = vadd.f32 0.0, %v8965
        %v8967 = vpop.f32.mrf.mxu0
        %v8968 = vpop.f32.mrf.mxu0
        %v8969 = vadd.f32 0.0, %v8968
        %v8970 = vpop.f32.mrf.mxu0
        %8971 = vmatprep.mubr.bf16.mxu0 0
        %8972 = vmatmul.mubr.bf16.gmra.mxu0 %v8490
        %v8973 = vpop.f32.mrf.mxu0
        %v8974 = vadd.f32 0.0, %v8973
        %v8975 = vpop.f32.mrf.mxu0
        %v8976 = vpop.f32.mrf.mxu0
        %v8977 = vadd.f32 0.0, %v8976
        %v8978 = vpop.f32.mrf.mxu0
        %8979 = vmatprep.mubr.bf16.mxu0 0
        %8980 = vmatmul.mubr.bf16.gmra.mxu0 %v8493
        %v8981 = vpop.f32.mrf.mxu0
        %v8982 = vadd.f32 0.0, %v8981
        %v8983 = vpop.f32.mrf.mxu0
        %v8984 = vpop.f32.mrf.mxu0
        %v8985 = vadd.f32 0.0, %v8984
        %v8986 = vpop.f32.mrf.mxu0
        %8987 = vmatprep.mubr.bf16.mxu0 0
        %8988 = vmatmul.mubr.bf16.gmra.mxu0 %v8496
        %v8989 = vpop.f32.mrf.mxu0
        %v8990 = vadd.f32 0.0, %v8989
        %v8991 = vpop.f32.mrf.mxu0
        %v8992 = vpop.f32.mrf.mxu0
        %v8993 = vadd.f32 0.0, %v8992
        %v8994 = vpop.f32.mrf.mxu0
        %8995 = vmatprep.mubr.bf16.mxu0 0
        %8996 = vmatmul.mubr.bf16.gmra.mxu0 %v8499
        %v8997 = vpop.f32.mrf.mxu0
        %v8998 = vadd.f32 0.0, %v8997
        %v8999 = vpop.f32.mrf.mxu0
        %v9000 = vpop.f32.mrf.mxu0
        %v9001 = vadd.f32 0.0, %v9000
        %v9002 = vpop.f32.mrf.mxu0
        %9003 = vmatprep.mubr.bf16.mxu0 0
        %9004 = vmatmul.mubr.bf16.gmra.mxu0 %v8502
        %v9005 = vpop.f32.mrf.mxu0
        %v9006 = vadd.f32 0.0, %v9005
        %v9007 = vpop.f32.mrf.mxu0
        %v9008 = vpop.f32.mrf.mxu0
        %v9009 = vadd.f32 0.0, %v9008
        %v9010 = vpop.f32.mrf.mxu0
        %9011 = vmatprep.mubr.bf16.mxu0 0
        %9012 = vmatmul.mubr.bf16.gmra.mxu0 %v8505
        %v9013 = vpop.f32.mrf.mxu0
        %v9014 = vadd.f32 0.0, %v9013
        %v9015 = vpop.f32.mrf.mxu0
        %v9016 = vpop.f32.mrf.mxu0
        %v9017 = vadd.f32 0.0, %v9016
        %v9018 = vpop.f32.mrf.mxu0
        %9019 = vmatprep.mubr.bf16.mxu0 0
        %9020 = vmatmul.mubr.bf16.gmra.mxu0 %v8508
        %v9021 = vpop.f32.mrf.mxu0
        %v9022 = vadd.f32 0.0, %v9021
        %v9023 = vpop.f32.mrf.mxu0
        %v9024 = vpop.f32.mrf.mxu0
        %v9025 = vadd.f32 0.0, %v9024
        %v9026 = vpop.f32.mrf.mxu0
        %9027 = vmatprep.mubr.bf16.mxu0 0
        %9028 = vmatmul.mubr.bf16.gmra.mxu0 %v8511
        %v9029 = vpop.f32.mrf.mxu0
        %v9030 = vadd.f32 0.0, %v9029
        %v9031 = vpop.f32.mrf.mxu0
        %v9032 = vpop.f32.mrf.mxu0
        %v9033 = vadd.f32 0.0, %v9032
        %v9034 = vpop.f32.mrf.mxu0
        %9035 = vmatprep.mubr.bf16.mxu0 0
        %9036 = vmatmul.mubr.bf16.gmra.mxu0 %v8514
        %v9037 = vpop.f32.mrf.mxu0
        %v9038 = vadd.f32 0.0, %v9037
        %v9039 = vpop.f32.mrf.mxu0
        %v9040 = vpop.f32.mrf.mxu0
        %v9041 = vadd.f32 0.0, %v9040
        %v9042 = vpop.f32.mrf.mxu0
        %9043 = vmatprep.mubr.bf16.mxu0 0
        %9044 = vmatmul.mubr.bf16.gmra.mxu0 %v8517
        %v9045 = vpop.f32.mrf.mxu0
        %v9046 = vadd.f32 0.0, %v9045
        %v9047 = vpop.f32.mrf.mxu0
        %v9048 = vpop.f32.mrf.mxu0
        %v9049 = vadd.f32 0.0, %v9048
        %v9050 = vpop.f32.mrf.mxu0
        %9051 = vmatprep.mubr.bf16.mxu0 0
        %9052 = vmatmul.mubr.bf16.gmra.mxu0 %v8520
        %v9053 = vpop.f32.mrf.mxu0
        %v9054 = vadd.f32 0.0, %v9053
        %v9055 = vpop.f32.mrf.mxu0
        %v9056 = vpop.f32.mrf.mxu0
        %v9057 = vadd.f32 0.0, %v9056
        %v9058 = vpop.f32.mrf.mxu0
        %9059 = vmatprep.mubr.bf16.mxu0 0
        %9060 = vmatmul.mubr.bf16.gmra.mxu0 %v8523
        %v9061 = vpop.f32.mrf.mxu0
        %v9062 = vadd.f32 0.0, %v9061
        %v9063 = vpop.f32.mrf.mxu0
        %v9064 = vpop.f32.mrf.mxu0
        %v9065 = vadd.f32 0.0, %v9064
        %v9066 = vpop.f32.mrf.mxu0
        %9067 = vmatprep.mubr.bf16.mxu0 0
        %9068 = vmatmul.mubr.bf16.gmra.mxu0 %v8526
        %v9069 = vpop.f32.mrf.mxu0
        %v9070 = vadd.f32 0.0, %v9069
        %v9071 = vpop.f32.mrf.mxu0
        %v9072 = vpop.f32.mrf.mxu0
        %v9073 = vadd.f32 0.0, %v9072
        %v9074 = vpop.f32.mrf.mxu0
        %9075 = vdwg.mxu0
        %v9076 = vadd.f32 %v7106, %v8566
        %v9077 = vadd.f32 %v7109, %v8569
        %v9078 = vadd.f32 %v7114, %v8574
        %v9079 = vadd.f32 %v7117, %v8577
        %v9080 = vadd.f32 %v7122, %v8582
        %v9081 = vadd.f32 %v7125, %v8585
        %v9082 = vadd.f32 %v7130, %v8590
        %v9083 = vadd.f32 %v7133, %v8593
        %v9084 = vadd.f32 %v7138, %v8598
        %v9085 = vadd.f32 %v7141, %v8601
        %v9086 = vadd.f32 %v7146, %v8606
        %v9087 = vadd.f32 %v7149, %v8609
        %v9088 = vadd.f32 %v7154, %v8614
        %v9089 = vadd.f32 %v7157, %v8617
        %v9090 = vadd.f32 %v7162, %v8622
        %v9091 = vadd.f32 %v7165, %v8625
        %v9092 = vadd.f32 %v7170, %v8630
        %v9093 = vadd.f32 %v7173, %v8633
        %v9094 = vadd.f32 %v7178, %v8638
        %v9095 = vadd.f32 %v7181, %v8641
        %v9096 = vadd.f32 %v7186, %v8646
        %v9097 = vadd.f32 %v7189, %v8649
        %v9098 = vadd.f32 %v7194, %v8654
        %v9099 = vadd.f32 %v7197, %v8657
        %v9100 = vadd.f32 %v7202, %v8662
        %v9101 = vadd.f32 %v7205, %v8665
        %v9102 = vadd.f32 %v7210, %v8670
        %v9103 = vadd.f32 %v7213, %v8673
        %v9104 = vadd.f32 %v7218, %v8678
        %v9105 = vadd.f32 %v7221, %v8681
        %v9106 = vadd.f32 %v7226, %v8686
        %v9107 = vadd.f32 %v7229, %v8689
        %v9108 = vadd.f32 %v7234, %v8694
        %v9109 = vadd.f32 %v7237, %v8697
        %v9110 = vadd.f32 %v7242, %v8702
        %v9111 = vadd.f32 %v7245, %v8705
        %v9112 = vadd.f32 %v7250, %v8710
        %v9113 = vadd.f32 %v7253, %v8713
        %v9114 = vadd.f32 %v7258, %v8718
        %v9115 = vadd.f32 %v7261, %v8721
        %v9116 = vadd.f32 %v7266, %v8726
        %v9117 = vadd.f32 %v7269, %v8729
        %v9118 = vadd.f32 %v7274, %v8734
        %v9119 = vadd.f32 %v7277, %v8737
        %v9120 = vadd.f32 %v7282, %v8742
        %v9121 = vadd.f32 %v7285, %v8745
        %v9122 = vadd.f32 %v7290, %v8750
        %v9123 = vadd.f32 %v7293, %v8753
        %v9124 = vadd.f32 %v7298, %v8758
        %v9125 = vadd.f32 %v7301, %v8761
        %v9126 = vadd.f32 %v7306, %v8766
        %v9127 = vadd.f32 %v7309, %v8769
        %v9128 = vadd.f32 %v7314, %v8774
        %v9129 = vadd.f32 %v7317, %v8777
        %v9130 = vadd.f32 %v7322, %v8782
        %v9131 = vadd.f32 %v7325, %v8785
        %v9132 = vadd.f32 %v7330, %v8790
        %v9133 = vadd.f32 %v7333, %v8793
        %v9134 = vadd.f32 %v7338, %v8798
        %v9135 = vadd.f32 %v7341, %v8801
        %v9136 = vadd.f32 %v7346, %v8806
        %v9137 = vadd.f32 %v7349, %v8809
        %v9138 = vadd.f32 %v7354, %v8814
        %v9139 = vadd.f32 %v7357, %v8817
        %v9140 = vadd.f32 %v7362, %v8822
        %v9141 = vadd.f32 %v7365, %v8825
        %v9142 = vadd.f32 %v7370, %v8830
        %v9143 = vadd.f32 %v7373, %v8833
        %v9144 = vadd.f32 %v7378, %v8838
        %v9145 = vadd.f32 %v7381, %v8841
        %v9146 = vadd.f32 %v7386, %v8846
        %v9147 = vadd.f32 %v7389, %v8849
        %v9148 = vadd.f32 %v7394, %v8854
        %v9149 = vadd.f32 %v7397, %v8857
        %v9150 = vadd.f32 %v7402, %v8862
        %v9151 = vadd.f32 %v7405, %v8865
        %v9152 = vadd.f32 %v7410, %v8870
        %v9153 = vadd.f32 %v7413, %v8873
        %v9154 = vadd.f32 %v7418, %v8878
        %v9155 = vadd.f32 %v7421, %v8881
        %v9156 = vadd.f32 %v7426, %v8886
        %v9157 = vadd.f32 %v7429, %v8889
        %v9158 = vadd.f32 %v7434, %v8894
        %v9159 = vadd.f32 %v7437, %v8897
        %v9160 = vadd.f32 %v7442, %v8902
        %v9161 = vadd.f32 %v7445, %v8905
        %v9162 = vadd.f32 %v7450, %v8910
        %v9163 = vadd.f32 %v7453, %v8913
        %v9164 = vadd.f32 %v7458, %v8918
        %v9165 = vadd.f32 %v7461, %v8921
        %v9166 = vadd.f32 %v7466, %v8926
        %v9167 = vadd.f32 %v7469, %v8929
        %v9168 = vadd.f32 %v7474, %v8934
        %v9169 = vadd.f32 %v7477, %v8937
        %v9170 = vadd.f32 %v7482, %v8942
        %v9171 = vadd.f32 %v7485, %v8945
        %v9172 = vadd.f32 %v7490, %v8950
        %v9173 = vadd.f32 %v7493, %v8953
        %v9174 = vadd.f32 %v7498, %v8958
        %v9175 = vadd.f32 %v7501, %v8961
        %v9176 = vadd.f32 %v7506, %v8966
        %v9177 = vadd.f32 %v7509, %v8969
        %v9178 = vadd.f32 %v7514, %v8974
        %v9179 = vadd.f32 %v7517, %v8977
        %v9180 = vadd.f32 %v7522, %v8982
        %v9181 = vadd.f32 %v7525, %v8985
        %v9182 = vadd.f32 %v7530, %v8990
        %v9183 = vadd.f32 %v7533, %v8993
        %v9184 = vadd.f32 %v7538, %v8998
        %v9185 = vadd.f32 %v7541, %v9001
        %v9186 = vadd.f32 %v7546, %v9006
        %v9187 = vadd.f32 %v7549, %v9009
        %v9188 = vadd.f32 %v7554, %v9014
        %v9189 = vadd.f32 %v7557, %v9017
        %v9190 = vadd.f32 %v7562, %v9022
        %v9191 = vadd.f32 %v7565, %v9025
        %v9192 = vadd.f32 %v7570, %v9030
        %v9193 = vadd.f32 %v7573, %v9033
        %v9194 = vadd.f32 %v7578, %v9038
        %v9195 = vadd.f32 %v7581, %v9041
        %v9196 = vadd.f32 %v7586, %v9046
        %v9197 = vadd.f32 %v7589, %v9049
        %v9198 = vadd.f32 %v7594, %v9054
        %v9199 = vadd.f32 %v7597, %v9057
        %v9200 = vadd.f32 %v7602, %v9062
        %v9201 = vadd.f32 %v7605, %v9065
        %v9202 = vadd.f32 %v7610, %v9070
        %v9203 = vadd.f32 %v7613, %v9073
        %v9205 = vlaneseq
        %v9206 = vshrl.u32 %v9205, 7
        %v9207 = vsub.s32 0, %v9206
        %v9208 = vrot.slane %v4025, %v9207
        %v9210 = vadd.f32 %v9076, %v9208
        %v9211 = vadd.f32 %v9077, %v9208
        %v9212 = vadd.f32 %v9078, %v9208
        %v9213 = vadd.f32 %v9079, %v9208
        %v9214 = vadd.f32 %v9080, %v9208
        %v9215 = vadd.f32 %v9081, %v9208
        %v9216 = vadd.f32 %v9082, %v9208
        %v9217 = vadd.f32 %v9083, %v9208
        %v9218 = vadd.f32 %v9084, %v9208
        %v9219 = vadd.f32 %v9085, %v9208
        %v9220 = vadd.f32 %v9086, %v9208
        %v9221 = vadd.f32 %v9087, %v9208
        %v9222 = vadd.f32 %v9088, %v9208
        %v9223 = vadd.f32 %v9089, %v9208
        %v9224 = vadd.f32 %v9090, %v9208
        %v9225 = vadd.f32 %v9091, %v9208
        %v9226 = vadd.f32 %v9092, %v9208
        %v9227 = vadd.f32 %v9093, %v9208
        %v9228 = vadd.f32 %v9094, %v9208
        %v9229 = vadd.f32 %v9095, %v9208
        %v9230 = vadd.f32 %v9096, %v9208
        %v9231 = vadd.f32 %v9097, %v9208
        %v9232 = vadd.f32 %v9098, %v9208
        %v9233 = vadd.f32 %v9099, %v9208
        %v9234 = vadd.f32 %v9100, %v9208
        %v9235 = vadd.f32 %v9101, %v9208
        %v9236 = vadd.f32 %v9102, %v9208
        %v9237 = vadd.f32 %v9103, %v9208
        %v9238 = vadd.f32 %v9104, %v9208
        %v9239 = vadd.f32 %v9105, %v9208
        %v9240 = vadd.f32 %v9106, %v9208
        %v9241 = vadd.f32 %v9107, %v9208
        %v9242 = vadd.f32 %v9108, %v9208
        %v9243 = vadd.f32 %v9109, %v9208
        %v9244 = vadd.f32 %v9110, %v9208
        %v9245 = vadd.f32 %v9111, %v9208
        %v9246 = vadd.f32 %v9112, %v9208
        %v9247 = vadd.f32 %v9113, %v9208
        %v9248 = vadd.f32 %v9114, %v9208
        %v9249 = vadd.f32 %v9115, %v9208
        %v9250 = vadd.f32 %v9116, %v9208
        %v9251 = vadd.f32 %v9117, %v9208
        %v9252 = vadd.f32 %v9118, %v9208
        %v9253 = vadd.f32 %v9119, %v9208
        %v9254 = vadd.f32 %v9120, %v9208
        %v9255 = vadd.f32 %v9121, %v9208
        %v9256 = vadd.f32 %v9122, %v9208
        %v9257 = vadd.f32 %v9123, %v9208
        %v9258 = vadd.f32 %v9124, %v9208
        %v9259 = vadd.f32 %v9125, %v9208
        %v9260 = vadd.f32 %v9126, %v9208
        %v9261 = vadd.f32 %v9127, %v9208
        %v9262 = vadd.f32 %v9128, %v9208
        %v9263 = vadd.f32 %v9129, %v9208
        %v9264 = vadd.f32 %v9130, %v9208
        %v9265 = vadd.f32 %v9131, %v9208
        %v9266 = vadd.f32 %v9132, %v9208
        %v9267 = vadd.f32 %v9133, %v9208
        %v9268 = vadd.f32 %v9134, %v9208
        %v9269 = vadd.f32 %v9135, %v9208
        %v9270 = vadd.f32 %v9136, %v9208
        %v9271 = vadd.f32 %v9137, %v9208
        %v9272 = vadd.f32 %v9138, %v9208
        %v9273 = vadd.f32 %v9139, %v9208
        %v9274 = vadd.f32 %v9140, %v9208
        %v9275 = vadd.f32 %v9141, %v9208
        %v9276 = vadd.f32 %v9142, %v9208
        %v9277 = vadd.f32 %v9143, %v9208
        %v9278 = vadd.f32 %v9144, %v9208
        %v9279 = vadd.f32 %v9145, %v9208
        %v9280 = vadd.f32 %v9146, %v9208
        %v9281 = vadd.f32 %v9147, %v9208
        %v9282 = vadd.f32 %v9148, %v9208
        %v9283 = vadd.f32 %v9149, %v9208
        %v9284 = vadd.f32 %v9150, %v9208
        %v9285 = vadd.f32 %v9151, %v9208
        %v9286 = vadd.f32 %v9152, %v9208
        %v9287 = vadd.f32 %v9153, %v9208
        %v9288 = vadd.f32 %v9154, %v9208
        %v9289 = vadd.f32 %v9155, %v9208
        %v9290 = vadd.f32 %v9156, %v9208
        %v9291 = vadd.f32 %v9157, %v9208
        %v9292 = vadd.f32 %v9158, %v9208
        %v9293 = vadd.f32 %v9159, %v9208
        %v9294 = vadd.f32 %v9160, %v9208
        %v9295 = vadd.f32 %v9161, %v9208
        %v9296 = vadd.f32 %v9162, %v9208
        %v9297 = vadd.f32 %v9163, %v9208
        %v9298 = vadd.f32 %v9164, %v9208
        %v9299 = vadd.f32 %v9165, %v9208
        %v9300 = vadd.f32 %v9166, %v9208
        %v9301 = vadd.f32 %v9167, %v9208
        %v9302 = vadd.f32 %v9168, %v9208
        %v9303 = vadd.f32 %v9169, %v9208
        %v9304 = vadd.f32 %v9170, %v9208
        %v9305 = vadd.f32 %v9171, %v9208
        %v9306 = vadd.f32 %v9172, %v9208
        %v9307 = vadd.f32 %v9173, %v9208
        %v9308 = vadd.f32 %v9174, %v9208
        %v9309 = vadd.f32 %v9175, %v9208
        %v9310 = vadd.f32 %v9176, %v9208
        %v9311 = vadd.f32 %v9177, %v9208
        %v9312 = vadd.f32 %v9178, %v9208
        %v9313 = vadd.f32 %v9179, %v9208
        %v9314 = vadd.f32 %v9180, %v9208
        %v9315 = vadd.f32 %v9181, %v9208
        %v9316 = vadd.f32 %v9182, %v9208
        %v9317 = vadd.f32 %v9183, %v9208
        %v9318 = vadd.f32 %v9184, %v9208
        %v9319 = vadd.f32 %v9185, %v9208
        %v9320 = vadd.f32 %v9186, %v9208
        %v9321 = vadd.f32 %v9187, %v9208
        %v9322 = vadd.f32 %v9188, %v9208
        %v9323 = vadd.f32 %v9189, %v9208
        %v9324 = vadd.f32 %v9190, %v9208
        %v9325 = vadd.f32 %v9191, %v9208
        %v9326 = vadd.f32 %v9192, %v9208
        %v9327 = vadd.f32 %v9193, %v9208
        %v9328 = vadd.f32 %v9194, %v9208
        %v9329 = vadd.f32 %v9195, %v9208
        %v9330 = vadd.f32 %v9196, %v9208
        %v9331 = vadd.f32 %v9197, %v9208
        %v9332 = vadd.f32 %v9198, %v9208
        %v9333 = vadd.f32 %v9199, %v9208
        %v9334 = vadd.f32 %v9200, %v9208
        %v9335 = vadd.f32 %v9201, %v9208
        %v9336 = vadd.f32 %v9202, %v9208
        %v9337 = vadd.f32 %v9203, %v9208
        %v9338 = vmax.f32 %v9210, 0.0
        %v9339 = vmax.f32 %v9211, 0.0
        %v9340 = vmax.f32 %v9212, 0.0
        %v9341 = vmax.f32 %v9213, 0.0
        %v9342 = vmax.f32 %v9214, 0.0
        %v9343 = vmax.f32 %v9215, 0.0
        %v9344 = vmax.f32 %v9216, 0.0
        %v9345 = vmax.f32 %v9217, 0.0
        %v9346 = vmax.f32 %v9218, 0.0
        %v9347 = vmax.f32 %v9219, 0.0
        %v9348 = vmax.f32 %v9220, 0.0
        %v9349 = vmax.f32 %v9221, 0.0
        %v9350 = vmax.f32 %v9222, 0.0
        %v9351 = vmax.f32 %v9223, 0.0
        %v9352 = vmax.f32 %v9224, 0.0
        %v9353 = vmax.f32 %v9225, 0.0
        %v9354 = vmax.f32 %v9226, 0.0
        %v9355 = vmax.f32 %v9227, 0.0
        %v9356 = vmax.f32 %v9228, 0.0
        %v9357 = vmax.f32 %v9229, 0.0
        %v9358 = vmax.f32 %v9230, 0.0
        %v9359 = vmax.f32 %v9231, 0.0
        %v9360 = vmax.f32 %v9232, 0.0
        %v9361 = vmax.f32 %v9233, 0.0
        %v9362 = vmax.f32 %v9234, 0.0
        %v9363 = vmax.f32 %v9235, 0.0
        %v9364 = vmax.f32 %v9236, 0.0
        %v9365 = vmax.f32 %v9237, 0.0
        %v9366 = vmax.f32 %v9238, 0.0
        %v9367 = vmax.f32 %v9239, 0.0
        %v9368 = vmax.f32 %v9240, 0.0
        %v9369 = vmax.f32 %v9241, 0.0
        %v9370 = vmax.f32 %v9242, 0.0
        %v9371 = vmax.f32 %v9243, 0.0
        %v9372 = vmax.f32 %v9244, 0.0
        %v9373 = vmax.f32 %v9245, 0.0
        %v9374 = vmax.f32 %v9246, 0.0
        %v9375 = vmax.f32 %v9247, 0.0
        %v9376 = vmax.f32 %v9248, 0.0
        %v9377 = vmax.f32 %v9249, 0.0
        %v9378 = vmax.f32 %v9250, 0.0
        %v9379 = vmax.f32 %v9251, 0.0
        %v9380 = vmax.f32 %v9252, 0.0
        %v9381 = vmax.f32 %v9253, 0.0
        %v9382 = vmax.f32 %v9254, 0.0
        %v9383 = vmax.f32 %v9255, 0.0
        %v9384 = vmax.f32 %v9256, 0.0
        %v9385 = vmax.f32 %v9257, 0.0
        %v9386 = vmax.f32 %v9258, 0.0
        %v9387 = vmax.f32 %v9259, 0.0
        %v9388 = vmax.f32 %v9260, 0.0
        %v9389 = vmax.f32 %v9261, 0.0
        %v9390 = vmax.f32 %v9262, 0.0
        %v9391 = vmax.f32 %v9263, 0.0
        %v9392 = vmax.f32 %v9264, 0.0
        %v9393 = vmax.f32 %v9265, 0.0
        %v9394 = vmax.f32 %v9266, 0.0
        %v9395 = vmax.f32 %v9267, 0.0
        %v9396 = vmax.f32 %v9268, 0.0
        %v9397 = vmax.f32 %v9269, 0.0
        %v9398 = vmax.f32 %v9270, 0.0
        %v9399 = vmax.f32 %v9271, 0.0
        %v9400 = vmax.f32 %v9272, 0.0
        %v9401 = vmax.f32 %v9273, 0.0
        %v9402 = vmax.f32 %v9274, 0.0
        %v9403 = vmax.f32 %v9275, 0.0
        %v9404 = vmax.f32 %v9276, 0.0
        %v9405 = vmax.f32 %v9277, 0.0
        %v9406 = vmax.f32 %v9278, 0.0
        %v9407 = vmax.f32 %v9279, 0.0
        %v9408 = vmax.f32 %v9280, 0.0
        %v9409 = vmax.f32 %v9281, 0.0
        %v9410 = vmax.f32 %v9282, 0.0
        %v9411 = vmax.f32 %v9283, 0.0
        %v9412 = vmax.f32 %v9284, 0.0
        %v9413 = vmax.f32 %v9285, 0.0
        %v9414 = vmax.f32 %v9286, 0.0
        %v9415 = vmax.f32 %v9287, 0.0
        %v9416 = vmax.f32 %v9288, 0.0
        %v9417 = vmax.f32 %v9289, 0.0
        %v9418 = vmax.f32 %v9290, 0.0
        %v9419 = vmax.f32 %v9291, 0.0
        %v9420 = vmax.f32 %v9292, 0.0
        %v9421 = vmax.f32 %v9293, 0.0
        %v9422 = vmax.f32 %v9294, 0.0
        %v9423 = vmax.f32 %v9295, 0.0
        %v9424 = vmax.f32 %v9296, 0.0
        %v9425 = vmax.f32 %v9297, 0.0
        %v9426 = vmax.f32 %v9298, 0.0
        %v9427 = vmax.f32 %v9299, 0.0
        %v9428 = vmax.f32 %v9300, 0.0
        %v9429 = vmax.f32 %v9301, 0.0
        %v9430 = vmax.f32 %v9302, 0.0
        %v9431 = vmax.f32 %v9303, 0.0
        %v9432 = vmax.f32 %v9304, 0.0
        %v9433 = vmax.f32 %v9305, 0.0
        %v9434 = vmax.f32 %v9306, 0.0
        %v9435 = vmax.f32 %v9307, 0.0
        %v9436 = vmax.f32 %v9308, 0.0
        %v9437 = vmax.f32 %v9309, 0.0
        %v9438 = vmax.f32 %v9310, 0.0
        %v9439 = vmax.f32 %v9311, 0.0
        %v9440 = vmax.f32 %v9312, 0.0
        %v9441 = vmax.f32 %v9313, 0.0
        %v9442 = vmax.f32 %v9314, 0.0
        %v9443 = vmax.f32 %v9315, 0.0
        %v9444 = vmax.f32 %v9316, 0.0
        %v9445 = vmax.f32 %v9317, 0.0
        %v9446 = vmax.f32 %v9318, 0.0
        %v9447 = vmax.f32 %v9319, 0.0
        %v9448 = vmax.f32 %v9320, 0.0
        %v9449 = vmax.f32 %v9321, 0.0
        %v9450 = vmax.f32 %v9322, 0.0
        %v9451 = vmax.f32 %v9323, 0.0
        %v9452 = vmax.f32 %v9324, 0.0
        %v9453 = vmax.f32 %v9325, 0.0
        %v9454 = vmax.f32 %v9326, 0.0
        %v9455 = vmax.f32 %v9327, 0.0
        %v9456 = vmax.f32 %v9328, 0.0
        %v9457 = vmax.f32 %v9329, 0.0
        %v9458 = vmax.f32 %v9330, 0.0
        %v9459 = vmax.f32 %v9331, 0.0
        %v9460 = vmax.f32 %v9332, 0.0
        %v9461 = vmax.f32 %v9333, 0.0
        %v9462 = vmax.f32 %v9334, 0.0
        %v9463 = vmax.f32 %v9335, 0.0
        %v9464 = vmax.f32 %v9336, 0.0
        %v9465 = vmax.f32 %v9337, 0.0
        %vm9466 = vcmask 523264
        %9467 = vst.msk [vmem:[%s201] sm:$0xff] %vm9466, %v9338
        %9468 = vst.msk [vmem:[%s201 + $0x8] sm:$0xff] %vm9466, %v9339
        %9469 = vst.msk [vmem:[%s201 + $0x10] sm:$0xff] %vm9466, %v9340
        %9470 = vst.msk [vmem:[%s201 + $0x18] sm:$0xff] %vm9466, %v9341
        %9471 = vst.msk [vmem:[%s201 + $0x20] sm:$0xff] %vm9466, %v9342
        %9472 = vst.msk [vmem:[%s201 + $0x28] sm:$0xff] %vm9466, %v9343
        %9473 = vst.msk [vmem:[%s201 + $0x30] sm:$0xff] %vm9466, %v9344
        %9474 = vst.msk [vmem:[%s201 + $0x38] sm:$0xff] %vm9466, %v9345
        %9475 = vst.msk [vmem:[%s201 + $0x40] sm:$0xff] %vm9466, %v9346
        %9476 = vst.msk [vmem:[%s201 + $0x48] sm:$0xff] %vm9466, %v9347
        %9477 = vst.msk [vmem:[%s201 + $0x50] sm:$0xff] %vm9466, %v9348
        %9478 = vst.msk [vmem:[%s201 + $0x58] sm:$0xff] %vm9466, %v9349
        %9479 = vst.msk [vmem:[%s201 + $0x60] sm:$0xff] %vm9466, %v9350
        %9480 = vst.msk [vmem:[%s201 + $0x68] sm:$0xff] %vm9466, %v9351
        %9481 = vst.msk [vmem:[%s201 + $0x70] sm:$0xff] %vm9466, %v9352
        %9482 = vst.msk [vmem:[%s201 + $0x78] sm:$0xff] %vm9466, %v9353
        %9483 = vst.msk [vmem:[%s201 + $0x80] sm:$0xff] %vm9466, %v9354
        %9484 = vst.msk [vmem:[%s201 + $0x88] sm:$0xff] %vm9466, %v9355
        %9485 = vst.msk [vmem:[%s201 + $0x90] sm:$0xff] %vm9466, %v9356
        %9486 = vst.msk [vmem:[%s201 + $0x98] sm:$0xff] %vm9466, %v9357
        %9487 = vst.msk [vmem:[%s201 + $0xa0] sm:$0xff] %vm9466, %v9358
        %9488 = vst.msk [vmem:[%s201 + $0xa8] sm:$0xff] %vm9466, %v9359
        %9489 = vst.msk [vmem:[%s201 + $0xb0] sm:$0xff] %vm9466, %v9360
        %9490 = vst.msk [vmem:[%s201 + $0xb8] sm:$0xff] %vm9466, %v9361
        %9491 = vst.msk [vmem:[%s201 + $0xc0] sm:$0xff] %vm9466, %v9362
        %9492 = vst.msk [vmem:[%s201 + $0xc8] sm:$0xff] %vm9466, %v9363
        %9493 = vst.msk [vmem:[%s201 + $0xd0] sm:$0xff] %vm9466, %v9364
        %9494 = vst.msk [vmem:[%s201 + $0xd8] sm:$0xff] %vm9466, %v9365
        %9495 = vst.msk [vmem:[%s201 + $0xe0] sm:$0xff] %vm9466, %v9366
        %9496 = vst.msk [vmem:[%s201 + $0xe8] sm:$0xff] %vm9466, %v9367
        %9497 = vst.msk [vmem:[%s201 + $0xf0] sm:$0xff] %vm9466, %v9368
        %9498 = vst.msk [vmem:[%s201 + $0xf8] sm:$0xff] %vm9466, %v9369
        %9499 = vst.msk [vmem:[%s201 + $0x100] sm:$0xff] %vm9466, %v9370
        %9500 = vst.msk [vmem:[%s201 + $0x108] sm:$0xff] %vm9466, %v9371
        %9501 = vst.msk [vmem:[%s201 + $0x110] sm:$0xff] %vm9466, %v9372
        %9502 = vst.msk [vmem:[%s201 + $0x118] sm:$0xff] %vm9466, %v9373
        %9503 = vst.msk [vmem:[%s201 + $0x120] sm:$0xff] %vm9466, %v9374
        %9504 = vst.msk [vmem:[%s201 + $0x128] sm:$0xff] %vm9466, %v9375
        %9505 = vst.msk [vmem:[%s201 + $0x130] sm:$0xff] %vm9466, %v9376
        %9506 = vst.msk [vmem:[%s201 + $0x138] sm:$0xff] %vm9466, %v9377
        %9507 = vst.msk [vmem:[%s201 + $0x140] sm:$0xff] %vm9466, %v9378
        %9508 = vst.msk [vmem:[%s201 + $0x148] sm:$0xff] %vm9466, %v9379
        %9509 = vst.msk [vmem:[%s201 + $0x150] sm:$0xff] %vm9466, %v9380
        %9510 = vst.msk [vmem:[%s201 + $0x158] sm:$0xff] %vm9466, %v9381
        %9511 = vst.msk [vmem:[%s201 + $0x160] sm:$0xff] %vm9466, %v9382
        %9512 = vst.msk [vmem:[%s201 + $0x168] sm:$0xff] %vm9466, %v9383
        %9513 = vst.msk [vmem:[%s201 + $0x170] sm:$0xff] %vm9466, %v9384
        %9514 = vst.msk [vmem:[%s201 + $0x178] sm:$0xff] %vm9466, %v9385
        %9515 = vst.msk [vmem:[%s201 + $0x180] sm:$0xff] %vm9466, %v9386
        %9516 = vst.msk [vmem:[%s201 + $0x188] sm:$0xff] %vm9466, %v9387
        %9517 = vst.msk [vmem:[%s201 + $0x190] sm:$0xff] %vm9466, %v9388
        %9518 = vst.msk [vmem:[%s201 + $0x198] sm:$0xff] %vm9466, %v9389
        %9519 = vst.msk [vmem:[%s201 + $0x1a0] sm:$0xff] %vm9466, %v9390
        %9520 = vst.msk [vmem:[%s201 + $0x1a8] sm:$0xff] %vm9466, %v9391
        %9521 = vst.msk [vmem:[%s201 + $0x1b0] sm:$0xff] %vm9466, %v9392
        %9522 = vst.msk [vmem:[%s201 + $0x1b8] sm:$0xff] %vm9466, %v9393
        %9523 = vst.msk [vmem:[%s201 + $0x1c0] sm:$0xff] %vm9466, %v9394
        %9524 = vst.msk [vmem:[%s201 + $0x1c8] sm:$0xff] %vm9466, %v9395
        %9525 = vst.msk [vmem:[%s201 + $0x1d0] sm:$0xff] %vm9466, %v9396
        %9526 = vst.msk [vmem:[%s201 + $0x1d8] sm:$0xff] %vm9466, %v9397
        %9527 = vst.msk [vmem:[%s201 + $0x1e0] sm:$0xff] %vm9466, %v9398
        %9528 = vst.msk [vmem:[%s201 + $0x1e8] sm:$0xff] %vm9466, %v9399
        %9529 = vst.msk [vmem:[%s201 + $0x1f0] sm:$0xff] %vm9466, %v9400
        %9530 = vst.msk [vmem:[%s201 + $0x1f8] sm:$0xff] %vm9466, %v9401
        %9531 = vst.msk [vmem:[%s201 + $0x200] sm:$0xff] %vm9466, %v9402
        %9532 = vst.msk [vmem:[%s201 + $0x208] sm:$0xff] %vm9466, %v9403
        %9533 = vst.msk [vmem:[%s201 + $0x210] sm:$0xff] %vm9466, %v9404
        %9534 = vst.msk [vmem:[%s201 + $0x218] sm:$0xff] %vm9466, %v9405
        %9535 = vst.msk [vmem:[%s201 + $0x220] sm:$0xff] %vm9466, %v9406
        %9536 = vst.msk [vmem:[%s201 + $0x228] sm:$0xff] %vm9466, %v9407
        %9537 = vst.msk [vmem:[%s201 + $0x230] sm:$0xff] %vm9466, %v9408
        %9538 = vst.msk [vmem:[%s201 + $0x238] sm:$0xff] %vm9466, %v9409
        %9539 = vst.msk [vmem:[%s201 + $0x240] sm:$0xff] %vm9466, %v9410
        %9540 = vst.msk [vmem:[%s201 + $0x248] sm:$0xff] %vm9466, %v9411
        %9541 = vst.msk [vmem:[%s201 + $0x250] sm:$0xff] %vm9466, %v9412
        %9542 = vst.msk [vmem:[%s201 + $0x258] sm:$0xff] %vm9466, %v9413
        %9543 = vst.msk [vmem:[%s201 + $0x260] sm:$0xff] %vm9466, %v9414
        %9544 = vst.msk [vmem:[%s201 + $0x268] sm:$0xff] %vm9466, %v9415
        %9545 = vst.msk [vmem:[%s201 + $0x270] sm:$0xff] %vm9466, %v9416
        %9546 = vst.msk [vmem:[%s201 + $0x278] sm:$0xff] %vm9466, %v9417
        %9547 = vst.msk [vmem:[%s201 + $0x280] sm:$0xff] %vm9466, %v9418
        %9548 = vst.msk [vmem:[%s201 + $0x288] sm:$0xff] %vm9466, %v9419
        %9549 = vst.msk [vmem:[%s201 + $0x290] sm:$0xff] %vm9466, %v9420
        %9550 = vst.msk [vmem:[%s201 + $0x298] sm:$0xff] %vm9466, %v9421
        %9551 = vst.msk [vmem:[%s201 + $0x2a0] sm:$0xff] %vm9466, %v9422
        %9552 = vst.msk [vmem:[%s201 + $0x2a8] sm:$0xff] %vm9466, %v9423
        %9553 = vst.msk [vmem:[%s201 + $0x2b0] sm:$0xff] %vm9466, %v9424
        %9554 = vst.msk [vmem:[%s201 + $0x2b8] sm:$0xff] %vm9466, %v9425
        %9555 = vst.msk [vmem:[%s201 + $0x2c0] sm:$0xff] %vm9466, %v9426
        %9556 = vst.msk [vmem:[%s201 + $0x2c8] sm:$0xff] %vm9466, %v9427
        %9557 = vst.msk [vmem:[%s201 + $0x2d0] sm:$0xff] %vm9466, %v9428
        %9558 = vst.msk [vmem:[%s201 + $0x2d8] sm:$0xff] %vm9466, %v9429
        %9559 = vst.msk [vmem:[%s201 + $0x2e0] sm:$0xff] %vm9466, %v9430
        %9560 = vst.msk [vmem:[%s201 + $0x2e8] sm:$0xff] %vm9466, %v9431
        %9561 = vst.msk [vmem:[%s201 + $0x2f0] sm:$0xff] %vm9466, %v9432
        %9562 = vst.msk [vmem:[%s201 + $0x2f8] sm:$0xff] %vm9466, %v9433
        %9563 = vst.msk [vmem:[%s201 + $0x300] sm:$0xff] %vm9466, %v9434
        %9564 = vst.msk [vmem:[%s201 + $0x308] sm:$0xff] %vm9466, %v9435
        %9565 = vst.msk [vmem:[%s201 + $0x310] sm:$0xff] %vm9466, %v9436
        %9566 = vst.msk [vmem:[%s201 + $0x318] sm:$0xff] %vm9466, %v9437
        %9567 = vst.msk [vmem:[%s201 + $0x320] sm:$0xff] %vm9466, %v9438
        %9568 = vst.msk [vmem:[%s201 + $0x328] sm:$0xff] %vm9466, %v9439
        %9569 = vst.msk [vmem:[%s201 + $0x330] sm:$0xff] %vm9466, %v9440
        %9570 = vst.msk [vmem:[%s201 + $0x338] sm:$0xff] %vm9466, %v9441
        %9571 = vst.msk [vmem:[%s201 + $0x340] sm:$0xff] %vm9466, %v9442
        %9572 = vst.msk [vmem:[%s201 + $0x348] sm:$0xff] %vm9466, %v9443
        %9573 = vst.msk [vmem:[%s201 + $0x350] sm:$0xff] %vm9466, %v9444
        %9574 = vst.msk [vmem:[%s201 + $0x358] sm:$0xff] %vm9466, %v9445
        %9575 = vst.msk [vmem:[%s201 + $0x360] sm:$0xff] %vm9466, %v9446
        %9576 = vst.msk [vmem:[%s201 + $0x368] sm:$0xff] %vm9466, %v9447
        %9577 = vst.msk [vmem:[%s201 + $0x370] sm:$0xff] %vm9466, %v9448
        %9578 = vst.msk [vmem:[%s201 + $0x378] sm:$0xff] %vm9466, %v9449
        %9579 = vst.msk [vmem:[%s201 + $0x380] sm:$0xff] %vm9466, %v9450
        %9580 = vst.msk [vmem:[%s201 + $0x388] sm:$0xff] %vm9466, %v9451
        %9581 = vst.msk [vmem:[%s201 + $0x390] sm:$0xff] %vm9466, %v9452
        %9582 = vst.msk [vmem:[%s201 + $0x398] sm:$0xff] %vm9466, %v9453
        %9583 = vst.msk [vmem:[%s201 + $0x3a0] sm:$0xff] %vm9466, %v9454
        %9584 = vst.msk [vmem:[%s201 + $0x3a8] sm:$0xff] %vm9466, %v9455
        %9585 = vst.msk [vmem:[%s201 + $0x3b0] sm:$0xff] %vm9466, %v9456
        %9586 = vst.msk [vmem:[%s201 + $0x3b8] sm:$0xff] %vm9466, %v9457
        %9587 = vst.msk [vmem:[%s201 + $0x3c0] sm:$0xff] %vm9466, %v9458
        %9588 = vst.msk [vmem:[%s201 + $0x3c8] sm:$0xff] %vm9466, %v9459
        %9589 = vst.msk [vmem:[%s201 + $0x3d0] sm:$0xff] %vm9466, %v9460
        %9590 = vst.msk [vmem:[%s201 + $0x3d8] sm:$0xff] %vm9466, %v9461
        %9591 = vst.msk [vmem:[%s201 + $0x3e0] sm:$0xff] %vm9466, %v9462
        %9592 = vst.msk [vmem:[%s201 + $0x3e8] sm:$0xff] %vm9466, %v9463
        %9593 = vst.msk [vmem:[%s201 + $0x3f0] sm:$0xff] %vm9466, %v9464
        %9594 = vst.msk [vmem:[%s201 + $0x3f8] sm:$0xff] %vm9466, %v9465
        %s9595 = sand.u32 %s117, 1
        %s9596 = scalar_lea.sflag [#allocation4], %s9595
        %s9597 = sand.u32 %s117, 1
        %s9598 = smul.addr %s9597, 1024
        %s9599 = scalar_lea.vmem [#allocation3], %s9598
        // Predicated region
        $region37: #{tpu_custom_call.1} parent=31 // pred_check
          %p9600 = pneg %p127
        $region38: #{tpu_custom_call.1} parent=31 // pred_check_branch
          %9602 = sbr.rel (%p9600) target = $region40
        $region39: #{tpu_custom_call.1} parent=31 // pred_region
          %s9604 = ssub.s32 16384, 16384
          %9605 = vsyncadd %s9596, %s9604
          %s9606 = smul.addr %s21, 128
          %s9607 = sadd.s32 %s22, %s9606
          %s9608 = smul.addr %s9607, 128
          %s9609 = scalar_lea.hbm %s3, %s9608
          %s9610 = sshll.u32 %s9599, 4
          %s9611 = int_to_ptr.vmem [resolvable:$true] %s9610
          %9616 = dma.vmem_to_hbm [thread:$0]  %s9611, 16384, %s9609, %s9596, 128, 128, 8
        $region40: #{tpu_custom_call.1} parent=31 // pred_fallthru
          _
      $region32: #{tpu_custom_call.1} parent=5 // pred_fallthru
        _
      %p9617 = scmp.le.s32.totalorder 2, %s12
      // Predicated region
      $region41: #{tpu_custom_call.1} parent=5 // pred_check
        %p9618 = pneg %p9617
      $region42: #{tpu_custom_call.1} parent=5 // pred_check_branch
        %9620 = sbr.rel (%p9618) target = $region44
      $region43: #{tpu_custom_call.1} parent=5 // pred_region
        %s9621 = ssub.s32 %s12, 2
        // Predicated region
        $region45: #{tpu_custom_call.1} parent=43 // pred_check
          %p9622 = pneg %p133
        $region46: #{tpu_custom_call.1} parent=43 // pred_check_branch
          %9624 = sbr.rel (%p9622) target = $region48
        $region47: #{tpu_custom_call.1} parent=43 // pred_region
          %s9625 = sand.u32 %s118, 1
          %s9626 = scalar_lea.sflag [#allocation4], %s9625
          %s9627 = sand.u32 %s118, 1
          %s9628 = smul.addr %s9627, 1024
          %s9629 = scalar_lea.vmem [#allocation3], %s9628
          %9630 = dma.done %s9626, 16384
        $region48: #{tpu_custom_call.1} parent=43 // pred_fallthru
          _
      $region44: #{tpu_custom_call.1} parent=5 // pred_fallthru
        _
    $region6: #{tpu_custom_call.1} parent=1 // loop_footer
      %s16 = sadd.s32 1, %s12
    $region7: #{tpu_custom_call.1} parent=1 // loop_footer_branch
      %11 = sbr.rel target = $region3
    $region8: #{tpu_custom_call.1} parent=1 // loop_exit
      _
    %9631 = vsyncpa [#allocation4], 1
    %s9632 = scalar_lea.sflag [#allocation4], 1
    %9633 = vsyncpa %s9632, 1

</llo_original>
